<compile_context>
chip_gen: v6e
topology: v6e:2x2x1
jax: 0.10.0
libtpu: 0.0.40
codegen_flags: <defaults>
</compile_context>

<pallas_src>
import jax
import jax.numpy as jnp
from jax import lax
from jax.experimental import pallas as pl
from jax.experimental.pallas import tpu as pltpu

# --- module constants (from the PyTorch source) ---
BLOCK_SIZE = 64
N_EMBD = 384
NUM_HEADS = 6
HEAD_SIZE = N_EMBD // NUM_HEADS   # 64
N_LAYER = 6
FF_HIDDEN = 4 * N_EMBD            # 1536
LN_EPS = 1e-5                     # torch.nn.LayerNorm default
NEG_MASK = -1e30                  # finite large-negative causal mask


def _layernorm(x, gamma, beta):
    """f32 LayerNorm over the last axis (biased variance, eps=1e-5)."""
    mu = jnp.mean(x, axis=-1, keepdims=True)
    xc = x - mu
    var = jnp.mean(xc * xc, axis=-1, keepdims=True)
    return xc * lax.rsqrt(var + LN_EPS) * gamma + beta


# ---------------------------------------------------------------------------
# Fused transformer Block kernel:  x + MHA(LN1(x)),  then  + FFN(LN2(.))
# ---------------------------------------------------------------------------
def _block_kernel(x_ref, ln1_g_ref, ln1_b_ref, ln2_g_ref, ln2_b_ref,
                  wqkv_ref, wproj_ref, bproj_ref,
                  wff1_ref, bff1_ref, wff2_ref, bff2_ref,
                  o_ref, heads_ref):
    x = x_ref[0]                                       # (T, C) f32
    T = x.shape[0]

    # ---- LayerNorm 1 + fused Q/K/V projection (one wide bf16 matmul) ----
    xn = _layernorm(x, ln1_g_ref[...], ln1_b_ref[...])
    qkv = jnp.dot(xn.astype(jnp.bfloat16), wqkv_ref[...],
                  preferred_element_type=jnp.float32)  # (T, 3C) f32

    # causal (tril) mask, finite negative so no row can ever NaN
    row = lax.broadcasted_iota(jnp.int32, (T, T), 0)
    col = lax.broadcasted_iota(jnp.int32, (T, T), 1)
    causal = col <= row
    # NOTE: the PyTorch Head scales by C**-0.5 with C = n_embd (x's channel
    # dim), NOT head_size**-0.5.  Match that exactly.
    scale = jnp.float32(N_EMBD) ** -0.5

    # all heads inside one grid step (python-unrolled); outputs go to a VMEM slab
    for h in range(NUM_HEADS):
        q = qkv[:, h * HEAD_SIZE:(h + 1) * HEAD_SIZE]
        k = qkv[:, N_EMBD + h * HEAD_SIZE:N_EMBD + (h + 1) * HEAD_SIZE]
        v = qkv[:, 2 * N_EMBD + h * HEAD_SIZE:2 * N_EMBD + (h + 1) * HEAD_SIZE]
        # contract over head_size directly (no explicit k transpose)
        s = lax.dot_general(q.astype(jnp.bfloat16), k.astype(jnp.bfloat16),
                            dimension_numbers=(((1,), (1,)), ((), ())),
                            preferred_element_type=jnp.float32) * scale
        s = jnp.where(causal, s, jnp.float32(NEG_MASK))
        s = s - s.max(axis=-1, keepdims=True)
        p = jnp.exp(s)
        p = p * pl.reciprocal(p.sum(axis=-1, keepdims=True), approx=True)
        # TODO(synk): training-mode attention dropout (p=0.2) not emitted (eval).
        head_out = jnp.dot(p.astype(jnp.bfloat16), v.astype(jnp.bfloat16),
                           preferred_element_type=jnp.float32)       # (T, hs)
        heads_ref[:, h * HEAD_SIZE:(h + 1) * HEAD_SIZE] = head_out

    # single (T,C)@(C,C) output projection over all heads + residual
    attn = jnp.dot(heads_ref[...].astype(jnp.bfloat16), wproj_ref[...],
                   preferred_element_type=jnp.float32) + bproj_ref[...]
    x = x + attn

    # ---- LayerNorm 2 + FeedForward (Linear/ReLU/Linear) + residual ----
    xn2 = _layernorm(x, ln2_g_ref[...], ln2_b_ref[...])
    h1 = jnp.dot(xn2.astype(jnp.bfloat16), wff1_ref[...],
                 preferred_element_type=jnp.float32) + bff1_ref[...]
    h1 = jnp.maximum(h1, 0.0)
    ff = jnp.dot(h1.astype(jnp.bfloat16), wff2_ref[...],
                 preferred_element_type=jnp.float32) + bff2_ref[...]

    o_ref[0] = x + ff                                  # lane-dense (T, 384) store


def transformer_block(x, blk):
    B, T, C = x.shape
    xmap = lambda b: (b, 0, 0)
    cmap = lambda b: (0, 0)       # constant -> weights DMA'd once, VMEM-resident
    return pl.pallas_call(
        _block_kernel,
        out_shape=jax.ShapeDtypeStruct((B, T, C), jnp.float32),
        grid_spec=pltpu.PrefetchScalarGridSpec(
            num_scalar_prefetch=0,
            grid=(B,),
            in_specs=[
                pl.BlockSpec((1, T, C), xmap),           # x
                pl.BlockSpec((1, C), cmap),              # ln1 gamma
                pl.BlockSpec((1, C), cmap),              # ln1 beta
                pl.BlockSpec((1, C), cmap),              # ln2 gamma
                pl.BlockSpec((1, C), cmap),              # ln2 beta
                pl.BlockSpec((C, 3 * C), cmap),          # packed Wqkv (bf16)
                pl.BlockSpec((C, C), cmap),              # proj.weight.T (bf16)
                pl.BlockSpec((1, C), cmap),              # proj bias
                pl.BlockSpec((C, FF_HIDDEN), cmap),      # ff1.weight.T (bf16)
                pl.BlockSpec((1, FF_HIDDEN), cmap),      # ff1 bias
                pl.BlockSpec((FF_HIDDEN, C), cmap),      # ff2.weight.T (bf16)
                pl.BlockSpec((1, C), cmap),              # ff2 bias
            ],
            out_specs=pl.BlockSpec((1, T, C), xmap),
            scratch_shapes=[pltpu.VMEM((T, C), jnp.float32)],   # head-output slab
        ),
        compiler_params=pltpu.CompilerParams(
            dimension_semantics=("parallel",),           # batch across cores (v7x)
        ),
    )(x,
      blk["ln1_g"], blk["ln1_b"], blk["ln2_g"], blk["ln2_b"],
      blk["wqkv"], blk["wproj_t"], blk["bproj"],
      blk["wff1_t"], blk["bff1"], blk["wff2_t"], blk["bff2"])


# ---------------------------------------------------------------------------
# lm_head kernel (NOTE: the PyTorch forward skips layer_norm_final; so do we)
# ---------------------------------------------------------------------------
def _lm_head_kernel(x_ref, w_ref, b_ref, o_ref):
    o_ref[0] = jnp.dot(x_ref[0].astype(jnp.bfloat16), w_ref[...],
                       preferred_element_type=jnp.float32) + b_ref[...]


def lm_head(x, w_lm_t_pad, b_lm_pad, vocab_size):
    B, T, C = x.shape
    Vp = w_lm_t_pad.shape[1]
    logits_pad = pl.pallas_call(
        _lm_head_kernel,
        out_shape=jax.ShapeDtypeStruct((B, T, Vp), jnp.float32),
        grid_spec=pltpu.PrefetchScalarGridSpec(
            num_scalar_prefetch=0,
            grid=(B,),
            in_specs=[
                pl.BlockSpec((1, T, C), lambda b: (b, 0, 0)),
                pl.BlockSpec((C, Vp), lambda b: (0, 0)),
                pl.BlockSpec((1, Vp), lambda b: (0, 0)),
            ],
            out_specs=pl.BlockSpec((1, T, Vp), lambda b: (b, 0, 0)),
        ),
        compiler_params=pltpu.CompilerParams(
            dimension_semantics=("parallel",),
        ),
    )(x, w_lm_t_pad, b_lm_pad)
    return logits_pad[:, :, :vocab_size]      # drop vocab lane padding


# ---------------------------------------------------------------------------
# Full model forward (targets=None path -> returns logits)
# ---------------------------------------------------------------------------
def bigram_lm_forward(packed, idx):
    B, T = idx.shape
    assert T <= BLOCK_SIZE
    # TODO(synk): token/position embedding row-gather left to XLA (jnp.take);
    # a scalar-prefetch pl.Element gather would add B*T grid-step overheads.
    x = jnp.take(packed["tok_emb"], idx, axis=0) + packed["pos_emb"][:T]
    for blk in packed["blocks"]:
        x = transformer_block(x, blk)
    return lm_head(x, packed["w_lm_t"], packed["b_lm"], packed["vocab"])


# ---------------------------------------------------------------------------
# Parameter construction (PyTorch layout) and kernel-side packing
# ---------------------------------------------------------------------------
def init_params(key, vocab_size):
    keys = jax.random.split(key, 2 + N_LAYER + 2)
    w_scale = 0.02
    params = {
        "tok_emb": jax.random.normal(keys[0], (vocab_size, N_EMBD), jnp.float32),
        "pos_emb": jax.random.normal(keys[1], (BLOCK_SIZE, N_EMBD), jnp.float32),
        "w_lm": w_scale * jax.random.normal(keys[2 + N_LAYER], (vocab_size, N_EMBD), jnp.float32),
        "b_lm": w_scale * jax.random.normal(keys[3 + N_LAYER], (vocab_size,), jnp.float32),
        "blocks": [],
    }
    for layer in range(N_LAYER):
        ks = jax.random.split(keys[2 + layer], 13)
        params["blocks"].append({
            "ln1_g": 1.0 + 0.1 * jax.random.normal(ks[0], (N_EMBD,), jnp.float32),
            "ln1_b": 0.1 * jax.random.normal(ks[1], (N_EMBD,), jnp.float32),
            "ln2_g": 1.0 + 0.1 * jax.random.normal(ks[2], (N_EMBD,), jnp.float32),
            "ln2_b": 0.1 * jax.random.normal(ks[3], (N_EMBD,), jnp.float32),
            # nn.Linear(n_embd, head_size, bias=False).weight is (hs, C); stacked per head.
            "wq": w_scale * jax.random.normal(ks[4], (NUM_HEADS, HEAD_SIZE, N_EMBD), jnp.float32),
            "wk": w_scale * jax.random.normal(ks[5], (NUM_HEADS, HEAD_SIZE, N_EMBD), jnp.float32),
            "wv": w_scale * jax.random.normal(ks[6], (NUM_HEADS, HEAD_SIZE, N_EMBD), jnp.float32),
            "wproj": w_scale * jax.random.normal(ks[7], (N_EMBD, N_EMBD), jnp.float32),
            "bproj": w_scale * jax.random.normal(ks[8], (N_EMBD,), jnp.float32),
            "wff1": w_scale * jax.random.normal(ks[9], (FF_HIDDEN, N_EMBD), jnp.float32),
            "bff1": w_scale * jax.random.normal(ks[10], (FF_HIDDEN,), jnp.float32),
            "wff2": w_scale * jax.random.normal(ks[11], (N_EMBD, FF_HIDDEN), jnp.float32),
            "bff2": w_scale * jax.random.normal(ks[12], (N_EMBD,), jnp.float32),
        })
    return params


def pack_params(params):
    vocab = params["w_lm"].shape[0]
    vpad = pl.cdiv(vocab, 128) * 128          # lane-dense lm_head output

    def heads_t(w):                           # (H, hs, C) -> (C, H*hs), head-major cols
        return jnp.concatenate([w[h].T for h in range(NUM_HEADS)], axis=1)

    packed_blocks = []
    for blk in params["blocks"]:
        wqkv = jnp.concatenate(
            [heads_t(blk["wq"]), heads_t(blk["wk"]), heads_t(blk["wv"])], axis=1)
        packed_blocks.append({
            "ln1_g": blk["ln1_g"].reshape(1, N_EMBD),
            "ln1_b": blk["ln1_b"].reshape(1, N_EMBD),
            "ln2_g": blk["ln2_g"].reshape(1, N_EMBD),
            "ln2_b": blk["ln2_b"].reshape(1, N_EMBD),
            "wqkv": wqkv.astype(jnp.bfloat16),                     # (C, 3C)
            "wproj_t": blk["wproj"].T.astype(jnp.bfloat16),        # (C, C)
            "bproj": blk["bproj"].reshape(1, N_EMBD),
            "wff1_t": blk["wff1"].T.astype(jnp.bfloat16),          # (C, 4C)
            "bff1": blk["bff1"].reshape(1, FF_HIDDEN),
            "wff2_t": blk["wff2"].T.astype(jnp.bfloat16),          # (4C, C)
            "bff2": blk["bff2"].reshape(1, N_EMBD),
        })

    return {
        "tok_emb": params["tok_emb"],
        "pos_emb": params["pos_emb"],
        "blocks": packed_blocks,
        "w_lm_t": jnp.pad(params["w_lm"].T,
                          ((0, 0), (0, vpad - vocab))).astype(jnp.bfloat16),
        "b_lm": jnp.pad(params["b_lm"], (0, vpad - vocab)).reshape(1, vpad),
        "vocab": vocab,
    }


# ---------------------------------------------------------------------------
# Pure-JAX f32 reference (direct transcription of the PyTorch forward)
# ---------------------------------------------------------------------------
def _reference_forward(params, idx):
    B, T = idx.shape
    x = params["tok_emb"][idx] + params["pos_emb"][:T]

    def ln(v, g, b):
        mu = v.mean(-1, keepdims=True)
        var = ((v - mu) ** 2).mean(-1, keepdims=True)
        return (v - mu) / jnp.sqrt(var + LN_EPS) * g + b

    mask = jnp.tril(jnp.ones((T, T))) == 0
    for blk in params["blocks"]:
        xn = ln(x, blk["ln1_g"], blk["ln1_b"])
        heads = []
        for h in range(NUM_HEADS):
            q = xn @ blk["wq"][h].T
            k = xn @ blk["wk"][h].T
            v = xn @ blk["wv"][h].T
            w = (q @ jnp.swapaxes(k, -2, -1)) * (N_EMBD ** -0.5)
            w = jnp.where(mask, -jnp.inf, w)
            w = jax.nn.softmax(w, axis=-1)
            heads.append(w @ v)
        x = x + (jnp.concatenate(heads, axis=-1) @ blk["wproj"].T + blk["bproj"])
        xn2 = ln(x, blk["ln2_g"], blk["ln2_b"])
        x = x + (jax.nn.relu(xn2 @ blk["wff1"].T + blk["bff1"]) @ blk["wff2"].T
                 + blk["bff2"])
    # The PyTorch forward does NOT apply layer_norm_final before lm_head.
    return x @ params["w_lm"].T + params["b_lm"]


if __name__ == "__main__":
    B, T = 2, 8          # small batch / sequence; T <= block_size (64)
    VOCAB = 65

    key = jax.random.PRNGKey(0)
    kparams, kidx = jax.random.split(key)
    params = init_params(kparams, VOCAB)
    idx = jax.random.randint(kidx, (B, T), 0, VOCAB, dtype=jnp.int32)

    packed = pack_params(params)
    logits = jax.block_until_ready(bigram_lm_forward(packed, idx))

    ref = _reference_forward(params, idx)
    assert logits.shape == (B, T, VOCAB)
    max_err = float(jnp.max(jnp.abs(logits - ref)))
    # bf16 MXU operands (f32 accumulation) across 6 layers -> loose tolerance.
    assert jnp.allclose(logits, ref, atol=1e-1, rtol=1e-1), \
        f"mismatch vs reference (max |delta| = {max_err})"
    print("KERNEL_OK")
</pallas_src>

<mosaic_0001>
module attributes {stable_mosaic.version = 11 : i64} {
  func.func @_block_kernel(%arg0: i32, %arg1: memref<1x8x384xf32, #tpu.memory_space<vmem>>, %arg2: memref<1x384xf32, #tpu.memory_space<vmem>>, %arg3: memref<1x384xf32, #tpu.memory_space<vmem>>, %arg4: memref<1x384xf32, #tpu.memory_space<vmem>>, %arg5: memref<1x384xf32, #tpu.memory_space<vmem>>, %arg6: memref<384x1152xbf16, #tpu.memory_space<vmem>>, %arg7: memref<384x384xbf16, #tpu.memory_space<vmem>>, %arg8: memref<1x384xf32, #tpu.memory_space<vmem>>, %arg9: memref<384x1536xbf16, #tpu.memory_space<vmem>>, %arg10: memref<1x1536xf32, #tpu.memory_space<vmem>>, %arg11: memref<1536x384xbf16, #tpu.memory_space<vmem>>, %arg12: memref<1x384xf32, #tpu.memory_space<vmem>>, %arg13: memref<1x8x384xf32, #tpu.memory_space<vmem>>, %arg14: memref<8x384xf32, #tpu.memory_space<vmem>>) attributes {dimension_semantics = [#tpu.dimension_semantics<parallel>], iteration_bounds = array<i64: 2>, scalar_prefetch = 0 : i64, scratch_operands = 1 : i64, tpu.core_type = #tpu.core_type<tc>, window_params = [{transform_indices = @transform_0, window_bounds = array<i64: 1, 8, 384>}, {pipeline_mode = #tpu.pipeline_mode<synchronous>, transform_indices = @transform_1, window_bounds = array<i64: 1, 384>}, {pipeline_mode = #tpu.pipeline_mode<synchronous>, transform_indices = @transform_2, window_bounds = array<i64: 1, 384>}, {pipeline_mode = #tpu.pipeline_mode<synchronous>, transform_indices = @transform_3, window_bounds = array<i64: 1, 384>}, {pipeline_mode = #tpu.pipeline_mode<synchronous>, transform_indices = @transform_4, window_bounds = array<i64: 1, 384>}, {pipeline_mode = #tpu.pipeline_mode<synchronous>, transform_indices = @transform_5, window_bounds = array<i64: 384, 1152>}, {pipeline_mode = #tpu.pipeline_mode<synchronous>, transform_indices = @transform_6, window_bounds = array<i64: 384, 384>}, {pipeline_mode = #tpu.pipeline_mode<synchronous>, transform_indices = @transform_7, window_bounds = array<i64: 1, 384>}, {pipeline_mode = #tpu.pipeline_mode<synchronous>, transform_indices = @transform_8, window_bounds = array<i64: 384, 1536>}, {pipeline_mode = #tpu.pipeline_mode<synchronous>, transform_indices = @transform_9, window_bounds = array<i64: 1, 1536>}, {pipeline_mode = #tpu.pipeline_mode<synchronous>, transform_indices = @transform_10, window_bounds = array<i64: 1536, 384>}, {pipeline_mode = #tpu.pipeline_mode<synchronous>, transform_indices = @transform_11, window_bounds = array<i64: 1, 384>}, {transform_indices = @transform_12, window_bounds = array<i64: 1, 8, 384>}]} {
    %c0 = arith.constant 0 : index
    %c0_0 = arith.constant 0 : index
    %c0_1 = arith.constant 0 : index
    %0 = vector.load %arg1[%c0, %c0_0, %c0_1] : memref<1x8x384xf32, #tpu.memory_space<vmem>>, vector<1x8x384xf32>
    %1 = vector.shape_cast %0 : vector<1x8x384xf32> to vector<8x384xf32>
    %c0_2 = arith.constant 0 : index
    %c0_3 = arith.constant 0 : index
    %2 = vector.load %arg2[%c0_2, %c0_3] : memref<1x384xf32, #tpu.memory_space<vmem>>, vector<1x384xf32>
    %c0_4 = arith.constant 0 : index
    %c0_5 = arith.constant 0 : index
    %3 = vector.load %arg3[%c0_4, %c0_5] : memref<1x384xf32, #tpu.memory_space<vmem>>, vector<1x384xf32>
    %cst = arith.constant dense<0.000000e+00> : vector<8xf32>
    %4 = vector.multi_reduction <add>, %1, %cst [1] : vector<8x384xf32> to vector<8xf32>
    %5 = vector.shape_cast %4 : vector<8xf32> to vector<8x1xf32>
    %cst_6 = arith.constant 3.840000e+02 : f32
    %6 = vector.broadcast %cst_6 : f32 to vector<8x1xf32>
    %7 = arith.divf %5, %6 : vector<8x1xf32>
    %8 = vector.broadcast %7 : vector<8x1xf32> to vector<8x384xf32>
    %9 = arith.subf %1, %8 : vector<8x384xf32>
    %10 = arith.mulf %9, %9 : vector<8x384xf32>
    %cst_7 = arith.constant dense<0.000000e+00> : vector<8xf32>
    %11 = vector.multi_reduction <add>, %10, %cst_7 [1] : vector<8x384xf32> to vector<8xf32>
    %12 = vector.shape_cast %11 : vector<8xf32> to vector<8x1xf32>
    %cst_8 = arith.constant 3.840000e+02 : f32
    %13 = vector.broadcast %cst_8 : f32 to vector<8x1xf32>
    %14 = arith.divf %12, %13 : vector<8x1xf32>
    %cst_9 = arith.constant 9.99999974E-6 : f32
    %15 = vector.broadcast %cst_9 : f32 to vector<8x1xf32>
    %16 = arith.addf %14, %15 : vector<8x1xf32>
    %17 = math.rsqrt %16 : vector<8x1xf32>
    %18 = vector.broadcast %17 : vector<8x1xf32> to vector<8x384xf32>
    %19 = arith.mulf %9, %18 : vector<8x384xf32>
    %20 = vector.broadcast %2 : vector<1x384xf32> to vector<8x384xf32>
    %21 = arith.mulf %19, %20 : vector<8x384xf32>
    %22 = vector.broadcast %3 : vector<1x384xf32> to vector<8x384xf32>
    %23 = arith.addf %21, %22 : vector<8x384xf32>
    %24 = arith.truncf %23 : vector<8x384xf32> to vector<8x384xbf16>
    %c0_10 = arith.constant 0 : index
    %c0_11 = arith.constant 0 : index
    %25 = vector.load %arg6[%c0_10, %c0_11] : memref<384x1152xbf16, #tpu.memory_space<vmem>>, vector<384x1152xbf16>
    %cst_12 = arith.constant dense<0.000000e+00> : vector<8x1152xf32>
    %26 = tpu.matmul %24, %25, %cst_12 {dimension_numbers = #tpu.dot_dimension_numbers<[1], [0], [0], [1], [0, 0, 1, 1], [], []>} : vector<8x384xbf16>, vector<384x1152xbf16>, vector<8x1152xf32> -> vector<8x1152xf32>
    %27 = tpu.iota {dimensions = array<i32: 0>} : vector<8x8xi32>
    %28 = tpu.iota {dimensions = array<i32: 1>} : vector<8x8xi32>
    %29 = arith.cmpi sle, %28, %27 : vector<8x8xi32>
    %cst_13 = arith.constant 3.840000e+02 : f32
    %cst_14 = arith.constant -5.000000e-01 : f32
    %30 = math.powf %cst_13, %cst_14 : f32
    %31 = vector.extract_strided_slice %26 {offsets = [0, 0], sizes = [8, 64], strides = [1, 1]} : vector<8x1152xf32> to vector<8x64xf32>
    %32 = vector.extract_strided_slice %26 {offsets = [0, 384], sizes = [8, 64], strides = [1, 1]} : vector<8x1152xf32> to vector<8x64xf32>
    %33 = vector.extract_strided_slice %26 {offsets = [0, 768], sizes = [8, 64], strides = [1, 1]} : vector<8x1152xf32> to vector<8x64xf32>
    %34 = arith.truncf %31 : vector<8x64xf32> to vector<8x64xbf16>
    %35 = arith.truncf %32 : vector<8x64xf32> to vector<8x64xbf16>
    %cst_15 = arith.constant dense<0.000000e+00> : vector<8x8xf32>
    %36 = tpu.matmul %34, %35, %cst_15 {dimension_numbers = #tpu.dot_dimension_numbers<[1], [1], [0], [0], [0, 0, 1, 0], [], []>} : vector<8x64xbf16>, vector<8x64xbf16>, vector<8x8xf32> -> vector<8x8xf32>
    %37 = vector.broadcast %30 : f32 to vector<8x8xf32>
    %38 = arith.mulf %36, %37 : vector<8x8xf32>
    %cst_16 = arith.constant -1.000000e+30 : f32
    %39 = vector.broadcast %cst_16 : f32 to vector<8x8xf32>
    %40 = arith.select %29, %38, %39 : vector<8x8xi1>, vector<8x8xf32>
    %cst_17 = arith.constant dense<0xFF800000> : vector<8xf32>
    %41 = vector.multi_reduction <maximumf>, %40, %cst_17 [1] : vector<8x8xf32> to vector<8xf32>
    %42 = vector.shape_cast %41 : vector<8xf32> to vector<8x1xf32>
    %43 = vector.broadcast %42 : vector<8x1xf32> to vector<8x8xf32>
    %44 = arith.subf %40, %43 : vector<8x8xf32>
    %45 = math.exp %44 : vector<8x8xf32>
    %cst_18 = arith.constant dense<0.000000e+00> : vector<8xf32>
    %46 = vector.multi_reduction <add>, %45, %cst_18 [1] : vector<8x8xf32> to vector<8xf32>
    %47 = vector.shape_cast %46 : vector<8xf32> to vector<8x1xf32>
    %48 = tpu.reciprocal %47 {approx = true} : vector<8x1xf32> -> vector<8x1xf32>
    %49 = vector.broadcast %48 : vector<8x1xf32> to vector<8x8xf32>
    %50 = arith.mulf %45, %49 : vector<8x8xf32>
    %51 = arith.truncf %50 : vector<8x8xf32> to vector<8x8xbf16>
    %52 = arith.truncf %33 : vector<8x64xf32> to vector<8x64xbf16>
    %cst_19 = arith.constant dense<0.000000e+00> : vector<8x64xf32>
    %53 = tpu.matmul %51, %52, %cst_19 {dimension_numbers = #tpu.dot_dimension_numbers<[1], [0], [0], [1], [0, 0, 1, 1], [], []>} : vector<8x8xbf16>, vector<8x64xbf16>, vector<8x64xf32> -> vector<8x64xf32>
    %c0_20 = arith.constant 0 : index
    %c0_21 = arith.constant 0 : index
    %54 = vector.load %arg14[%c0_20, %c0_21] : memref<8x384xf32, #tpu.memory_space<vmem>>, vector<8x64xf32>
    tpu.vector_store %arg14[%c0_20, %c0_21], %53 {strides = array<i32>} : memref<8x384xf32, #tpu.memory_space<vmem>>, vector<8x64xf32>,
    %55 = vector.extract_strided_slice %26 {offsets = [0, 64], sizes = [8, 64], strides = [1, 1]} : vector<8x1152xf32> to vector<8x64xf32>
    %56 = vector.extract_strided_slice %26 {offsets = [0, 448], sizes = [8, 64], strides = [1, 1]} : vector<8x1152xf32> to vector<8x64xf32>
    %57 = vector.extract_strided_slice %26 {offsets = [0, 832], sizes = [8, 64], strides = [1, 1]} : vector<8x1152xf32> to vector<8x64xf32>
    %58 = arith.truncf %55 : vector<8x64xf32> to vector<8x64xbf16>
    %59 = arith.truncf %56 : vector<8x64xf32> to vector<8x64xbf16>
    %cst_22 = arith.constant dense<0.000000e+00> : vector<8x8xf32>
    %60 = tpu.matmul %58, %59, %cst_22 {dimension_numbers = #tpu.dot_dimension_numbers<[1], [1], [0], [0], [0, 0, 1, 0], [], []>} : vector<8x64xbf16>, vector<8x64xbf16>, vector<8x8xf32> -> vector<8x8xf32>
    %61 = vector.broadcast %30 : f32 to vector<8x8xf32>
    %62 = arith.mulf %60, %61 : vector<8x8xf32>
    %cst_23 = arith.constant -1.000000e+30 : f32
    %63 = vector.broadcast %cst_23 : f32 to vector<8x8xf32>
    %64 = arith.select %29, %62, %63 : vector<8x8xi1>, vector<8x8xf32>
    %cst_24 = arith.constant dense<0xFF800000> : vector<8xf32>
    %65 = vector.multi_reduction <maximumf>, %64, %cst_24 [1] : vector<8x8xf32> to vector<8xf32>
    %66 = vector.shape_cast %65 : vector<8xf32> to vector<8x1xf32>
    %67 = vector.broadcast %66 : vector<8x1xf32> to vector<8x8xf32>
    %68 = arith.subf %64, %67 : vector<8x8xf32>
    %69 = math.exp %68 : vector<8x8xf32>
    %cst_25 = arith.constant dense<0.000000e+00> : vector<8xf32>
    %70 = vector.multi_reduction <add>, %69, %cst_25 [1] : vector<8x8xf32> to vector<8xf32>
    %71 = vector.shape_cast %70 : vector<8xf32> to vector<8x1xf32>
    %72 = tpu.reciprocal %71 {approx = true} : vector<8x1xf32> -> vector<8x1xf32>
    %73 = vector.broadcast %72 : vector<8x1xf32> to vector<8x8xf32>
    %74 = arith.mulf %69, %73 : vector<8x8xf32>
    %75 = arith.truncf %74 : vector<8x8xf32> to vector<8x8xbf16>
    %76 = arith.truncf %57 : vector<8x64xf32> to vector<8x64xbf16>
    %cst_26 = arith.constant dense<0.000000e+00> : vector<8x64xf32>
    %77 = tpu.matmul %75, %76, %cst_26 {dimension_numbers = #tpu.dot_dimension_numbers<[1], [0], [0], [1], [0, 0, 1, 1], [], []>} : vector<8x8xbf16>, vector<8x64xbf16>, vector<8x64xf32> -> vector<8x64xf32>
    %c0_27 = arith.constant 0 : index
    %c64 = arith.constant 64 : index
    %78 = vector.load %arg14[%c0_27, %c64] : memref<8x384xf32, #tpu.memory_space<vmem>>, vector<8x64xf32>
    tpu.vector_store %arg14[%c0_27, %c64], %77 {strides = array<i32>} : memref<8x384xf32, #tpu.memory_space<vmem>>, vector<8x64xf32>,
    %79 = vector.extract_strided_slice %26 {offsets = [0, 128], sizes = [8, 64], strides = [1, 1]} : vector<8x1152xf32> to vector<8x64xf32>
    %80 = vector.extract_strided_slice %26 {offsets = [0, 512], sizes = [8, 64], strides = [1, 1]} : vector<8x1152xf32> to vector<8x64xf32>
    %81 = vector.extract_strided_slice %26 {offsets = [0, 896], sizes = [8, 64], strides = [1, 1]} : vector<8x1152xf32> to vector<8x64xf32>
    %82 = arith.truncf %79 : vector<8x64xf32> to vector<8x64xbf16>
    %83 = arith.truncf %80 : vector<8x64xf32> to vector<8x64xbf16>
    %cst_28 = arith.constant dense<0.000000e+00> : vector<8x8xf32>
    %84 = tpu.matmul %82, %83, %cst_28 {dimension_numbers = #tpu.dot_dimension_numbers<[1], [1], [0], [0], [0, 0, 1, 0], [], []>} : vector<8x64xbf16>, vector<8x64xbf16>, vector<8x8xf32> -> vector<8x8xf32>
    %85 = vector.broadcast %30 : f32 to vector<8x8xf32>
    %86 = arith.mulf %84, %85 : vector<8x8xf32>
    %cst_29 = arith.constant -1.000000e+30 : f32
    %87 = vector.broadcast %cst_29 : f32 to vector<8x8xf32>
    %88 = arith.select %29, %86, %87 : vector<8x8xi1>, vector<8x8xf32>
    %cst_30 = arith.constant dense<0xFF800000> : vector<8xf32>
    %89 = vector.multi_reduction <maximumf>, %88, %cst_30 [1] : vector<8x8xf32> to vector<8xf32>
    %90 = vector.shape_cast %89 : vector<8xf32> to vector<8x1xf32>
    %91 = vector.broadcast %90 : vector<8x1xf32> to vector<8x8xf32>
    %92 = arith.subf %88, %91 : vector<8x8xf32>
    %93 = math.exp %92 : vector<8x8xf32>
    %cst_31 = arith.constant dense<0.000000e+00> : vector<8xf32>
    %94 = vector.multi_reduction <add>, %93, %cst_31 [1] : vector<8x8xf32> to vector<8xf32>
    %95 = vector.shape_cast %94 : vector<8xf32> to vector<8x1xf32>
    %96 = tpu.reciprocal %95 {approx = true} : vector<8x1xf32> -> vector<8x1xf32>
    %97 = vector.broadcast %96 : vector<8x1xf32> to vector<8x8xf32>
    %98 = arith.mulf %93, %97 : vector<8x8xf32>
    %99 = arith.truncf %98 : vector<8x8xf32> to vector<8x8xbf16>
    %100 = arith.truncf %81 : vector<8x64xf32> to vector<8x64xbf16>
    %cst_32 = arith.constant dense<0.000000e+00> : vector<8x64xf32>
    %101 = tpu.matmul %99, %100, %cst_32 {dimension_numbers = #tpu.dot_dimension_numbers<[1], [0], [0], [1], [0, 0, 1, 1], [], []>} : vector<8x8xbf16>, vector<8x64xbf16>, vector<8x64xf32> -> vector<8x64xf32>
    %c0_33 = arith.constant 0 : index
    %c128 = arith.constant 128 : index
    %102 = vector.load %arg14[%c0_33, %c128] : memref<8x384xf32, #tpu.memory_space<vmem>>, vector<8x64xf32>
    tpu.vector_store %arg14[%c0_33, %c128], %101 {strides = array<i32>} : memref<8x384xf32, #tpu.memory_space<vmem>>, vector<8x64xf32>,
    %103 = vector.extract_strided_slice %26 {offsets = [0, 192], sizes = [8, 64], strides = [1, 1]} : vector<8x1152xf32> to vector<8x64xf32>
    %104 = vector.extract_strided_slice %26 {offsets = [0, 576], sizes = [8, 64], strides = [1, 1]} : vector<8x1152xf32> to vector<8x64xf32>
    %105 = vector.extract_strided_slice %26 {offsets = [0, 960], sizes = [8, 64], strides = [1, 1]} : vector<8x1152xf32> to vector<8x64xf32>
    %106 = arith.truncf %103 : vector<8x64xf32> to vector<8x64xbf16>
    %107 = arith.truncf %104 : vector<8x64xf32> to vector<8x64xbf16>
    %cst_34 = arith.constant dense<0.000000e+00> : vector<8x8xf32>
    %108 = tpu.matmul %106, %107, %cst_34 {dimension_numbers = #tpu.dot_dimension_numbers<[1], [1], [0], [0], [0, 0, 1, 0], [], []>} : vector<8x64xbf16>, vector<8x64xbf16>, vector<8x8xf32> -> vector<8x8xf32>
    %109 = vector.broadcast %30 : f32 to vector<8x8xf32>
    %110 = arith.mulf %108, %109 : vector<8x8xf32>
    %cst_35 = arith.constant -1.000000e+30 : f32
    %111 = vector.broadcast %cst_35 : f32 to vector<8x8xf32>
    %112 = arith.select %29, %110, %111 : vector<8x8xi1>, vector<8x8xf32>
    %cst_36 = arith.constant dense<0xFF800000> : vector<8xf32>
    %113 = vector.multi_reduction <maximumf>, %112, %cst_36 [1] : vector<8x8xf32> to vector<8xf32>
    %114 = vector.shape_cast %113 : vector<8xf32> to vector<8x1xf32>
    %115 = vector.broadcast %114 : vector<8x1xf32> to vector<8x8xf32>
    %116 = arith.subf %112, %115 : vector<8x8xf32>
    %117 = math.exp %116 : vector<8x8xf32>
    %cst_37 = arith.constant dense<0.000000e+00> : vector<8xf32>
    %118 = vector.multi_reduction <add>, %117, %cst_37 [1] : vector<8x8xf32> to vector<8xf32>
    %119 = vector.shape_cast %118 : vector<8xf32> to vector<8x1xf32>
    %120 = tpu.reciprocal %119 {approx = true} : vector<8x1xf32> -> vector<8x1xf32>
    %121 = vector.broadcast %120 : vector<8x1xf32> to vector<8x8xf32>
    %122 = arith.mulf %117, %121 : vector<8x8xf32>
    %123 = arith.truncf %122 : vector<8x8xf32> to vector<8x8xbf16>
    %124 = arith.truncf %105 : vector<8x64xf32> to vector<8x64xbf16>
    %cst_38 = arith.constant dense<0.000000e+00> : vector<8x64xf32>
    %125 = tpu.matmul %123, %124, %cst_38 {dimension_numbers = #tpu.dot_dimension_numbers<[1], [0], [0], [1], [0, 0, 1, 1], [], []>} : vector<8x8xbf16>, vector<8x64xbf16>, vector<8x64xf32> -> vector<8x64xf32>
    %c0_39 = arith.constant 0 : index
    %c192 = arith.constant 192 : index
    %126 = vector.load %arg14[%c0_39, %c192] : memref<8x384xf32, #tpu.memory_space<vmem>>, vector<8x64xf32>
    tpu.vector_store %arg14[%c0_39, %c192], %125 {strides = array<i32>} : memref<8x384xf32, #tpu.memory_space<vmem>>, vector<8x64xf32>,
    %127 = vector.extract_strided_slice %26 {offsets = [0, 256], sizes = [8, 64], strides = [1, 1]} : vector<8x1152xf32> to vector<8x64xf32>
    %128 = vector.extract_strided_slice %26 {offsets = [0, 640], sizes = [8, 64], strides = [1, 1]} : vector<8x1152xf32> to vector<8x64xf32>
    %129 = vector.extract_strided_slice %26 {offsets = [0, 1024], sizes = [8, 64], strides = [1, 1]} : vector<8x1152xf32> to vector<8x64xf32>
    %130 = arith.truncf %127 : vector<8x64xf32> to vector<8x64xbf16>
    %131 = arith.truncf %128 : vector<8x64xf32> to vector<8x64xbf16>
    %cst_40 = arith.constant dense<0.000000e+00> : vector<8x8xf32>
    %132 = tpu.matmul %130, %131, %cst_40 {dimension_numbers = #tpu.dot_dimension_numbers<[1], [1], [0], [0], [0, 0, 1, 0], [], []>} : vector<8x64xbf16>, vector<8x64xbf16>, vector<8x8xf32> -> vector<8x8xf32>
    %133 = vector.broadcast %30 : f32 to vector<8x8xf32>
    %134 = arith.mulf %132, %133 : vector<8x8xf32>
    %cst_41 = arith.constant -1.000000e+30 : f32
    %135 = vector.broadcast %cst_41 : f32 to vector<8x8xf32>
    %136 = arith.select %29, %134, %135 : vector<8x8xi1>, vector<8x8xf32>
    %cst_42 = arith.constant dense<0xFF800000> : vector<8xf32>
    %137 = vector.multi_reduction <maximumf>, %136, %cst_42 [1] : vector<8x8xf32> to vector<8xf32>
    %138 = vector.shape_cast %137 : vector<8xf32> to vector<8x1xf32>
    %139 = vector.broadcast %138 : vector<8x1xf32> to vector<8x8xf32>
    %140 = arith.subf %136, %139 : vector<8x8xf32>
    %141 = math.exp %140 : vector<8x8xf32>
    %cst_43 = arith.constant dense<0.000000e+00> : vector<8xf32>
    %142 = vector.multi_reduction <add>, %141, %cst_43 [1] : vector<8x8xf32> to vector<8xf32>
    %143 = vector.shape_cast %142 : vector<8xf32> to vector<8x1xf32>
    %144 = tpu.reciprocal %143 {approx = true} : vector<8x1xf32> -> vector<8x1xf32>
    %145 = vector.broadcast %144 : vector<8x1xf32> to vector<8x8xf32>
    %146 = arith.mulf %141, %145 : vector<8x8xf32>
    %147 = arith.truncf %146 : vector<8x8xf32> to vector<8x8xbf16>
    %148 = arith.truncf %129 : vector<8x64xf32> to vector<8x64xbf16>
    %cst_44 = arith.constant dense<0.000000e+00> : vector<8x64xf32>
    %149 = tpu.matmul %147, %148, %cst_44 {dimension_numbers = #tpu.dot_dimension_numbers<[1], [0], [0], [1], [0, 0, 1, 1], [], []>} : vector<8x8xbf16>, vector<8x64xbf16>, vector<8x64xf32> -> vector<8x64xf32>
    %c0_45 = arith.constant 0 : index
    %c256 = arith.constant 256 : index
    %150 = vector.load %arg14[%c0_45, %c256] : memref<8x384xf32, #tpu.memory_space<vmem>>, vector<8x64xf32>
    tpu.vector_store %arg14[%c0_45, %c256], %149 {strides = array<i32>} : memref<8x384xf32, #tpu.memory_space<vmem>>, vector<8x64xf32>,
    %151 = vector.extract_strided_slice %26 {offsets = [0, 320], sizes = [8, 64], strides = [1, 1]} : vector<8x1152xf32> to vector<8x64xf32>
    %152 = vector.extract_strided_slice %26 {offsets = [0, 704], sizes = [8, 64], strides = [1, 1]} : vector<8x1152xf32> to vector<8x64xf32>
    %153 = vector.extract_strided_slice %26 {offsets = [0, 1088], sizes = [8, 64], strides = [1, 1]} : vector<8x1152xf32> to vector<8x64xf32>
    %154 = arith.truncf %151 : vector<8x64xf32> to vector<8x64xbf16>
    %155 = arith.truncf %152 : vector<8x64xf32> to vector<8x64xbf16>
    %cst_46 = arith.constant dense<0.000000e+00> : vector<8x8xf32>
    %156 = tpu.matmul %154, %155, %cst_46 {dimension_numbers = #tpu.dot_dimension_numbers<[1], [1], [0], [0], [0, 0, 1, 0], [], []>} : vector<8x64xbf16>, vector<8x64xbf16>, vector<8x8xf32> -> vector<8x8xf32>
    %157 = vector.broadcast %30 : f32 to vector<8x8xf32>
    %158 = arith.mulf %156, %157 : vector<8x8xf32>
    %cst_47 = arith.constant -1.000000e+30 : f32
    %159 = vector.broadcast %cst_47 : f32 to vector<8x8xf32>
    %160 = arith.select %29, %158, %159 : vector<8x8xi1>, vector<8x8xf32>
    %cst_48 = arith.constant dense<0xFF800000> : vector<8xf32>
    %161 = vector.multi_reduction <maximumf>, %160, %cst_48 [1] : vector<8x8xf32> to vector<8xf32>
    %162 = vector.shape_cast %161 : vector<8xf32> to vector<8x1xf32>
    %163 = vector.broadcast %162 : vector<8x1xf32> to vector<8x8xf32>
    %164 = arith.subf %160, %163 : vector<8x8xf32>
    %165 = math.exp %164 : vector<8x8xf32>
    %cst_49 = arith.constant dense<0.000000e+00> : vector<8xf32>
    %166 = vector.multi_reduction <add>, %165, %cst_49 [1] : vector<8x8xf32> to vector<8xf32>
    %167 = vector.shape_cast %166 : vector<8xf32> to vector<8x1xf32>
    %168 = tpu.reciprocal %167 {approx = true} : vector<8x1xf32> -> vector<8x1xf32>
    %169 = vector.broadcast %168 : vector<8x1xf32> to vector<8x8xf32>
    %170 = arith.mulf %165, %169 : vector<8x8xf32>
    %171 = arith.truncf %170 : vector<8x8xf32> to vector<8x8xbf16>
    %172 = arith.truncf %153 : vector<8x64xf32> to vector<8x64xbf16>
    %cst_50 = arith.constant dense<0.000000e+00> : vector<8x64xf32>
    %173 = tpu.matmul %171, %172, %cst_50 {dimension_numbers = #tpu.dot_dimension_numbers<[1], [0], [0], [1], [0, 0, 1, 1], [], []>} : vector<8x8xbf16>, vector<8x64xbf16>, vector<8x64xf32> -> vector<8x64xf32>
    %c0_51 = arith.constant 0 : index
    %c320 = arith.constant 320 : index
    %174 = vector.load %arg14[%c0_51, %c320] : memref<8x384xf32, #tpu.memory_space<vmem>>, vector<8x64xf32>
    tpu.vector_store %arg14[%c0_51, %c320], %173 {strides = array<i32>} : memref<8x384xf32, #tpu.memory_space<vmem>>, vector<8x64xf32>,
    %c0_52 = arith.constant 0 : index
    %c0_53 = arith.constant 0 : index
    %175 = vector.load %arg14[%c0_52, %c0_53] : memref<8x384xf32, #tpu.memory_space<vmem>>, vector<8x384xf32>
    %176 = arith.truncf %175 : vector<8x384xf32> to vector<8x384xbf16>
    %c0_54 = arith.constant 0 : index
    %c0_55 = arith.constant 0 : index
    %177 = vector.load %arg7[%c0_54, %c0_55] : memref<384x384xbf16, #tpu.memory_space<vmem>>, vector<384x384xbf16>
    %cst_56 = arith.constant dense<0.000000e+00> : vector<8x384xf32>
    %178 = tpu.matmul %176, %177, %cst_56 {dimension_numbers = #tpu.dot_dimension_numbers<[1], [0], [0], [1], [0, 0, 1, 1], [], []>} : vector<8x384xbf16>, vector<384x384xbf16>, vector<8x384xf32> -> vector<8x384xf32>
    %c0_57 = arith.constant 0 : index
    %c0_58 = arith.constant 0 : index
    %179 = vector.load %arg8[%c0_57, %c0_58] : memref<1x384xf32, #tpu.memory_space<vmem>>, vector<1x384xf32>
    %180 = vector.broadcast %179 : vector<1x384xf32> to vector<8x384xf32>
    %181 = arith.addf %178, %180 : vector<8x384xf32>
    %182 = arith.addf %1, %181 : vector<8x384xf32>
    %c0_59 = arith.constant 0 : index
    %c0_60 = arith.constant 0 : index
    %183 = vector.load %arg4[%c0_59, %c0_60] : memref<1x384xf32, #tpu.memory_space<vmem>>, vector<1x384xf32>
    %c0_61 = arith.constant 0 : index
    %c0_62 = arith.constant 0 : index
    %184 = vector.load %arg5[%c0_61, %c0_62] : memref<1x384xf32, #tpu.memory_space<vmem>>, vector<1x384xf32>
    %cst_63 = arith.constant dense<0.000000e+00> : vector<8xf32>
    %185 = vector.multi_reduction <add>, %182, %cst_63 [1] : vector<8x384xf32> to vector<8xf32>
    %186 = vector.shape_cast %185 : vector<8xf32> to vector<8x1xf32>
    %cst_64 = arith.constant 3.840000e+02 : f32
    %187 = vector.broadcast %cst_64 : f32 to vector<8x1xf32>
    %188 = arith.divf %186, %187 : vector<8x1xf32>
    %189 = vector.broadcast %188 : vector<8x1xf32> to vector<8x384xf32>
    %190 = arith.subf %182, %189 : vector<8x384xf32>
    %191 = arith.mulf %190, %190 : vector<8x384xf32>
    %cst_65 = arith.constant dense<0.000000e+00> : vector<8xf32>
    %192 = vector.multi_reduction <add>, %191, %cst_65 [1] : vector<8x384xf32> to vector<8xf32>
    %193 = vector.shape_cast %192 : vector<8xf32> to vector<8x1xf32>
    %cst_66 = arith.constant 3.840000e+02 : f32
    %194 = vector.broadcast %cst_66 : f32 to vector<8x1xf32>
    %195 = arith.divf %193, %194 : vector<8x1xf32>
    %cst_67 = arith.constant 9.99999974E-6 : f32
    %196 = vector.broadcast %cst_67 : f32 to vector<8x1xf32>
    %197 = arith.addf %195, %196 : vector<8x1xf32>
    %198 = math.rsqrt %197 : vector<8x1xf32>
    %199 = vector.broadcast %198 : vector<8x1xf32> to vector<8x384xf32>
    %200 = arith.mulf %190, %199 : vector<8x384xf32>
    %201 = vector.broadcast %183 : vector<1x384xf32> to vector<8x384xf32>
    %202 = arith.mulf %200, %201 : vector<8x384xf32>
    %203 = vector.broadcast %184 : vector<1x384xf32> to vector<8x384xf32>
    %204 = arith.addf %202, %203 : vector<8x384xf32>
    %205 = arith.truncf %204 : vector<8x384xf32> to vector<8x384xbf16>
    %c0_68 = arith.constant 0 : index
    %c0_69 = arith.constant 0 : index
    %206 = vector.load %arg9[%c0_68, %c0_69] : memref<384x1536xbf16, #tpu.memory_space<vmem>>, vector<384x1536xbf16>
    %cst_70 = arith.constant dense<0.000000e+00> : vector<8x1536xf32>
    %207 = tpu.matmul %205, %206, %cst_70 {dimension_numbers = #tpu.dot_dimension_numbers<[1], [0], [0], [1], [0, 0, 1, 1], [], []>} : vector<8x384xbf16>, vector<384x1536xbf16>, vector<8x1536xf32> -> vector<8x1536xf32>
    %c0_71 = arith.constant 0 : index
    %c0_72 = arith.constant 0 : index
    %208 = vector.load %arg10[%c0_71, %c0_72] : memref<1x1536xf32, #tpu.memory_space<vmem>>, vector<1x1536xf32>
    %209 = vector.broadcast %208 : vector<1x1536xf32> to vector<8x1536xf32>
    %210 = arith.addf %207, %209 : vector<8x1536xf32>
    %cst_73 = arith.constant 0.000000e+00 : f32
    %211 = vector.broadcast %cst_73 : f32 to vector<8x1536xf32>
    %212 = arith.maximumf %210, %211 : vector<8x1536xf32>
    %213 = arith.truncf %212 : vector<8x1536xf32> to vector<8x1536xbf16>
    %c0_74 = arith.constant 0 : index
    %c0_75 = arith.constant 0 : index
    %214 = vector.load %arg11[%c0_74, %c0_75] : memref<1536x384xbf16, #tpu.memory_space<vmem>>, vector<1536x384xbf16>
    %cst_76 = arith.constant dense<0.000000e+00> : vector<8x384xf32>
    %215 = tpu.matmul %213, %214, %cst_76 {dimension_numbers = #tpu.dot_dimension_numbers<[1], [0], [0], [1], [0, 0, 1, 1], [], []>} : vector<8x1536xbf16>, vector<1536x384xbf16>, vector<8x384xf32> -> vector<8x384xf32>
    %c0_77 = arith.constant 0 : index
    %c0_78 = arith.constant 0 : index
    %216 = vector.load %arg12[%c0_77, %c0_78] : memref<1x384xf32, #tpu.memory_space<vmem>>, vector<1x384xf32>
    %217 = vector.broadcast %216 : vector<1x384xf32> to vector<8x384xf32>
    %218 = arith.addf %215, %217 : vector<8x384xf32>
    %219 = arith.addf %182, %218 : vector<8x384xf32>
    %c0_79 = arith.constant 0 : index
    %c0_80 = arith.constant 0 : index
    %c0_81 = arith.constant 0 : index
    %220 = vector.load %arg13[%c0_79, %c0_80, %c0_81] : memref<1x8x384xf32, #tpu.memory_space<vmem>>, vector<1x8x384xf32>
    %221 = vector.shape_cast %220 : vector<1x8x384xf32> to vector<8x384xf32>
    %222 = vector.shape_cast %219 : vector<8x384xf32> to vector<1x8x384xf32>
    tpu.vector_store %arg13[%c0_79, %c0_80, %c0_81], %222 {strides = array<i32>} : memref<1x8x384xf32, #tpu.memory_space<vmem>>, vector<1x8x384xf32>,
    return
  }
  func.func @transform_0(%arg0: i32) -> (i32, i32, i32) {
    %c0_i32 = arith.constant 0 : i32
    %c0_i32_0 = arith.constant 0 : i32
    %c0_i32_1 = arith.constant 0 : i32
    return %arg0, %c0_i32, %c0_i32_0 : i32, i32, i32
  }
  func.func @transform_1(%arg0: i32) -> (i32, i32) {
    %c0_i32 = arith.constant 0 : i32
    %c0_i32_0 = arith.constant 0 : i32
    %c0_i32_1 = arith.constant 0 : i32
    return %c0_i32, %c0_i32_0 : i32, i32
  }
  func.func @transform_2(%arg0: i32) -> (i32, i32) {
    %c0_i32 = arith.constant 0 : i32
    %c0_i32_0 = arith.constant 0 : i32
    %c0_i32_1 = arith.constant 0 : i32
    return %c0_i32, %c0_i32_0 : i32, i32
  }
  func.func @transform_3(%arg0: i32) -> (i32, i32) {
    %c0_i32 = arith.constant 0 : i32
    %c0_i32_0 = arith.constant 0 : i32
    %c0_i32_1 = arith.constant 0 : i32
    return %c0_i32, %c0_i32_0 : i32, i32
  }
  func.func @transform_4(%arg0: i32) -> (i32, i32) {
    %c0_i32 = arith.constant 0 : i32
    %c0_i32_0 = arith.constant 0 : i32
    %c0_i32_1 = arith.constant 0 : i32
    return %c0_i32, %c0_i32_0 : i32, i32
  }
  func.func @transform_5(%arg0: i32) -> (i32, i32) {
    %c0_i32 = arith.constant 0 : i32
    %c0_i32_0 = arith.constant 0 : i32
    %c0_i32_1 = arith.constant 0 : i32
    return %c0_i32, %c0_i32_0 : i32, i32
  }
  func.func @transform_6(%arg0: i32) -> (i32, i32) {
    %c0_i32 = arith.constant 0 : i32
    %c0_i32_0 = arith.constant 0 : i32
    %c0_i32_1 = arith.constant 0 : i32
    return %c0_i32, %c0_i32_0 : i32, i32
  }
  func.func @transform_7(%arg0: i32) -> (i32, i32) {
    %c0_i32 = arith.constant 0 : i32
    %c0_i32_0 = arith.constant 0 : i32
    %c0_i32_1 = arith.constant 0 : i32
    return %c0_i32, %c0_i32_0 : i32, i32
  }
  func.func @transform_8(%arg0: i32) -> (i32, i32) {
    %c0_i32 = arith.constant 0 : i32
    %c0_i32_0 = arith.constant 0 : i32
    %c0_i32_1 = arith.constant 0 : i32
    return %c0_i32, %c0_i32_0 : i32, i32
  }
  func.func @transform_9(%arg0: i32) -> (i32, i32) {
    %c0_i32 = arith.constant 0 : i32
    %c0_i32_0 = arith.constant 0 : i32
    %c0_i32_1 = arith.constant 0 : i32
    return %c0_i32, %c0_i32_0 : i32, i32
  }
  func.func @transform_10(%arg0: i32) -> (i32, i32) {
    %c0_i32 = arith.constant 0 : i32
    %c0_i32_0 = arith.constant 0 : i32
    %c0_i32_1 = arith.constant 0 : i32
    return %c0_i32, %c0_i32_0 : i32, i32
  }
  func.func @transform_11(%arg0: i32) -> (i32, i32) {
    %c0_i32 = arith.constant 0 : i32
    %c0_i32_0 = arith.constant 0 : i32
    %c0_i32_1 = arith.constant 0 : i32
    return %c0_i32, %c0_i32_0 : i32, i32
  }
  func.func @transform_12(%arg0: i32) -> (i32, i32, i32) {
    %c0_i32 = arith.constant 0 : i32
    %c0_i32_0 = arith.constant 0 : i32
    %c0_i32_1 = arith.constant 0 : i32
    return %arg0, %c0_i32, %c0_i32_0 : i32, i32, i32
  }
}

</mosaic_0001>

<llo_original>
// kernel: tpu_custom_call.1
$region0: #{tpu_custom_call.1}
  #allocation0 [shape = 'u32[]', space=smem, size = 0x4, offset = 0x4, fixed_abs, tag = 'smem constant byte address 0x4 - core index']
  #allocation1 [shape = 'u32[144,128]{1,0:T(1,128)}', space=vmem, size = 0x12000, scoped, tag = 'internal scratch']
  #allocation2 [shape = 'f32[8,384]{1,0:T(8,128)}', space=vmem, size = 0x3000, scoped, tag = 'scratch operand']
  %s0 = inlined_call_operand.hbm [shape: f32[2,8,384], index: 0, kind: input, shape index: {}]
  %s1 = inlined_call_operand.hbm [shape: f32[1,384], index: 1, kind: input, shape index: {}]
  %s2 = inlined_call_operand.hbm [shape: f32[1,384], index: 2, kind: input, shape index: {}]
  %s3 = inlined_call_operand.hbm [shape: f32[1,384], index: 3, kind: input, shape index: {}]
  %s4 = inlined_call_operand.hbm [shape: f32[1,384], index: 4, kind: input, shape index: {}]
  %s5 = inlined_call_operand.hbm [shape: bf16[384,1152], index: 5, kind: input, shape index: {}]
  %s6 = inlined_call_operand.hbm [shape: bf16[384,384], index: 6, kind: input, shape index: {}]
  %s7 = inlined_call_operand.hbm [shape: f32[1,384], index: 7, kind: input, shape index: {}]
  %s8 = inlined_call_operand.hbm [shape: bf16[384,1536], index: 8, kind: input, shape index: {}]
  %s9 = inlined_call_operand.hbm [shape: f32[1,1536], index: 9, kind: input, shape index: {}]
  %s10 = inlined_call_operand.hbm [shape: bf16[1536,384], index: 10, kind: input, shape index: {}]
  %s11 = inlined_call_operand.hbm [shape: f32[1,384], index: 11, kind: input, shape index: {}]
  %s12 = inlined_call_operand.hbm [shape: f32[2,8,384], index: 12, kind: output, shape index: {}]
  %s13 = sld [smem:[#allocation0]]
  $region129: #{tpu_custom_call.1} parent=0
    _
  %s15 = ssub.s32 1, %s13
  %s16 = scalar_select 0, %s15, %s13
  $region1: #{tpu_custom_call.1} parent=0
    #allocation3 [shape = 'u8[24576]{0}', space=vmem, size = 0x6000, scoped, tag = 'input window, operand 0']
    #allocation4 [shape = 's32[2]{0}', space=sflag, size = 0x8, scoped, tag = 'scoped memory for tpu_custom_call.1']
    #allocation5 [shape = 's32[2]{0}', space=sflag, size = 0x8, scoped, tag = 'scoped memory for tpu_custom_call.1']
    #allocation6 [shape = 'u8[1536]{0}', space=vmem, size = 0x800, scoped, tag = 'input window, operand 1, single buffered']
    #allocation7 [shape = 's32[1]{0}', space=sflag, size = 0x4, scoped, tag = 'scoped memory for tpu_custom_call.1']
    #allocation8 [shape = 'u8[1536]{0}', space=vmem, size = 0x800, scoped, tag = 'input window, operand 2, single buffered']
    #allocation9 [shape = 'u8[1536]{0}', space=vmem, size = 0x800, scoped, tag = 'input window, operand 3, single buffered']
    #allocation10 [shape = 's32[1]{0}', space=sflag, size = 0x4, scoped, tag = 'scoped memory for tpu_custom_call.1']
    #allocation11 [shape = 'u8[1536]{0}', space=vmem, size = 0x800, scoped, tag = 'input window, operand 4, single buffered']
    #allocation12 [shape = 'u8[884736]{0}', space=vmem, size = 0xd8000, scoped, tag = 'input window, operand 5, single buffered']
    #allocation13 [shape = 's32[1]{0}', space=sflag, size = 0x4, scoped, tag = 'scoped memory for tpu_custom_call.1']
    #allocation14 [shape = 'u8[294912]{0}', space=vmem, size = 0x48000, scoped, tag = 'input window, operand 6, single buffered']
    #allocation15 [shape = 'u8[1536]{0}', space=vmem, size = 0x800, scoped, tag = 'input window, operand 7, single buffered']
    #allocation16 [shape = 's32[1]{0}', space=sflag, size = 0x4, scoped, tag = 'scoped memory for tpu_custom_call.1']
    #allocation17 [shape = 'u8[1179648]{0}', space=vmem, size = 0x120000, scoped, tag = 'input window, operand 8, single buffered']
    #allocation18 [shape = 'u8[6144]{0}', space=vmem, size = 0x1800, scoped, tag = 'input window, operand 9, single buffered']
    #allocation19 [shape = 's32[1]{0}', space=sflag, size = 0x4, scoped, tag = 'scoped memory for tpu_custom_call.1']
    #allocation20 [shape = 'u8[1179648]{0}', space=vmem, size = 0x120000, scoped, tag = 'input window, operand 10, single buffered']
    #allocation21 [shape = 'u8[1536]{0}', space=vmem, size = 0x800, scoped, tag = 'input window, operand 11, single buffered']
    #allocation22 [shape = 's32[1]{0}', space=sflag, size = 0x4, scoped, tag = 'scoped memory for tpu_custom_call.1']
    #allocation23 [shape = 'u8[24576]{0}', space=vmem, size = 0x6000, scoped, tag = 'output window, operand 0']
    %17 = vsyncpa [#allocation4], 0
    %s18 = scalar_lea.sflag [#allocation4], 1
    %19 = vsyncpa %s18, 0
    %20 = vsyncpa [#allocation7], 0
    %21 = vsyncpa [#allocation10], 0
    %22 = vsyncpa [#allocation13], 0
    %23 = vsyncpa [#allocation16], 0
    %24 = vsyncpa [#allocation19], 0
    %25 = vsyncpa [#allocation22], 0
    %26 = vsyncpa [#allocation5], 0
    %s27 = scalar_lea.sflag [#allocation5], 1
    %28 = vsyncpa %s27, 0
    loop: start=0, step=1, limit=4
    $region2: #{tpu_custom_call.1} parent=1 // loop_pre_header
      _
    $region3: #{tpu_custom_call.1} parent=1 // loop_header
      %s30 = sphi 0, %s34
      %p31 = scmp.ge.s32.totalorder %s30, 4
      %s40 = sphi 0, %s42
      %s43 = sphi 0, %s40
      %s44 = sphi 0, %s43
      %s60 = sphi 0, %s44
      %s64 = sphi 0, %s64
      %s66 = sphi 0, %s64
      %s67 = sphi 0, %s66
      %s81 = sphi 0, %s67
      %s85 = sphi 0, %s85
      %s87 = sphi 0, %s85
      %s88 = sphi 0, %s87
      %s102 = sphi 0, %s88
      %s106 = sphi 0, %s106
      %s108 = sphi 0, %s106
      %s109 = sphi 0, %s108
      %s123 = sphi 0, %s109
      %s127 = sphi 0, %s127
      %s129 = sphi 0, %s127
      %s130 = sphi 0, %s129
      %s144 = sphi 0, %s130
      %s148 = sphi 0, %s148
      %s150 = sphi 0, %s148
      %s151 = sphi 0, %s150
      %s165 = sphi 0, %s151
      %s169 = sphi 0, %s169
      %s171 = sphi 0, %s169
      %s172 = sphi 0, %s171
      %s186 = sphi 0, %s172
      %s190 = sphi 0, %s190
      %s192 = sphi 0, %s190
      %s193 = sphi 0, %s192
      %s207 = sphi 0, %s193
      %s211 = sphi 0, %s211
      %s213 = sphi 0, %s211
      %s214 = sphi 0, %s213
      %s228 = sphi 0, %s214
      %s232 = sphi 0, %s232
      %s234 = sphi 0, %s232
      %s235 = sphi 0, %s234
      %s249 = sphi 0, %s235
      %s253 = sphi 0, %s253
      %s255 = sphi 0, %s253
      %s256 = sphi 0, %s255
      %s270 = sphi 0, %s256
      %s274 = sphi 0, %s274
      %s276 = sphi 0, %s274
      %s277 = sphi 0, %s276
      %s291 = sphi 0, %s277
      %s297 = sphi 0, %s299
      %s300 = sphi 0, %s297
      %s301 = sphi 0, %s300
      %s317 = sphi 0, %s301
    $region4: #{tpu_custom_call.1} parent=1 // loop_header_branch
      %33 = sbr.rel (%p31) target = $region8
    $region5: #{tpu_custom_call.1} parent=1 // loop_body
      %s35 = ssub.s32 %s30, 1
      %s36 = ssub.s32 %s30, 2
      %s37 = sadd.s32 %s30, 1
      %s38 = ssub.s32 %s30, %s37
      %p39 = scmp.eq.s32.totalorder %s38, 0
      %s41 = sadd.s32 %s40, 1
      %s42 = scalar_select %p39, %s40, %s41
      %p45 = pneg %p39
      %p46 = scmp.eq.s32.totalorder %s30, 1
      %p47 = por %p45, %p46
      %p48 = scmp.ne.s32.totalorder %s40, %s43
      %p49 = scmp.eq.s32.totalorder %s30, 0
      %p50 = por %p48, %p49
      %p51 = scmp.ne.s32.totalorder %s40, %s43
      %p52 = scmp.eq.s32.totalorder %s35, 1
      %p53 = por %p51, %p52
      %p54 = scmp.ne.s32.totalorder %s43, %s44
      %p55 = scmp.eq.s32.totalorder %s35, 0
      %p56 = por %p54, %p55
      %p57 = scmp.ne.s32.totalorder %s43, %s44
      %p58 = scmp.eq.s32.totalorder %s36, 1
      %p59 = por %p57, %p58
      %p61 = scmp.ne.s32.totalorder %s44, %s60
      %p62 = scmp.eq.s32.totalorder %s36, 0
      %p63 = por %p61, %p62
      %s65 = sadd.s32 %s64, 1
      %p68 = scmp.eq.s32.totalorder %s30, 1
      %p69 = scmp.ne.s32.totalorder %s64, %s66
      %p70 = scmp.eq.s32.totalorder %s30, 0
      %p71 = por %p69, %p70
      %p72 = scmp.ne.s32.totalorder %s64, %s66
      %p73 = scmp.eq.s32.totalorder %s35, 1
      %p74 = por %p72, %p73
      %p75 = scmp.ne.s32.totalorder %s66, %s67
      %p76 = scmp.eq.s32.totalorder %s35, 0
      %p77 = por %p75, %p76
      %p78 = scmp.ne.s32.totalorder %s66, %s67
      %p79 = scmp.eq.s32.totalorder %s36, 1
      %p80 = por %p78, %p79
      %p82 = scmp.ne.s32.totalorder %s67, %s81
      %p83 = scmp.eq.s32.totalorder %s36, 0
      %p84 = por %p82, %p83
      %s86 = sadd.s32 %s85, 1
      %p89 = scmp.eq.s32.totalorder %s30, 1
      %p90 = scmp.ne.s32.totalorder %s85, %s87
      %p91 = scmp.eq.s32.totalorder %s30, 0
      %p92 = por %p90, %p91
      %p93 = scmp.ne.s32.totalorder %s85, %s87
      %p94 = scmp.eq.s32.totalorder %s35, 1
      %p95 = por %p93, %p94
      %p96 = scmp.ne.s32.totalorder %s87, %s88
      %p97 = scmp.eq.s32.totalorder %s35, 0
      %p98 = por %p96, %p97
      %p99 = scmp.ne.s32.totalorder %s87, %s88
      %p100 = scmp.eq.s32.totalorder %s36, 1
      %p101 = por %p99, %p100
      %p103 = scmp.ne.s32.totalorder %s88, %s102
      %p104 = scmp.eq.s32.totalorder %s36, 0
      %p105 = por %p103, %p104
      %s107 = sadd.s32 %s106, 1
      %p110 = scmp.eq.s32.totalorder %s30, 1
      %p111 = scmp.ne.s32.totalorder %s106, %s108
      %p112 = scmp.eq.s32.totalorder %s30, 0
      %p113 = por %p111, %p112
      %p114 = scmp.ne.s32.totalorder %s106, %s108
      %p115 = scmp.eq.s32.totalorder %s35, 1
      %p116 = por %p114, %p115
      %p117 = scmp.ne.s32.totalorder %s108, %s109
      %p118 = scmp.eq.s32.totalorder %s35, 0
      %p119 = por %p117, %p118
      %p120 = scmp.ne.s32.totalorder %s108, %s109
      %p121 = scmp.eq.s32.totalorder %s36, 1
      %p122 = por %p120, %p121
      %p124 = scmp.ne.s32.totalorder %s109, %s123
      %p125 = scmp.eq.s32.totalorder %s36, 0
      %p126 = por %p124, %p125
      %s128 = sadd.s32 %s127, 1
      %p131 = scmp.eq.s32.totalorder %s30, 1
      %p132 = scmp.ne.s32.totalorder %s127, %s129
      %p133 = scmp.eq.s32.totalorder %s30, 0
      %p134 = por %p132, %p133
      %p135 = scmp.ne.s32.totalorder %s127, %s129
      %p136 = scmp.eq.s32.totalorder %s35, 1
      %p137 = por %p135, %p136
      %p138 = scmp.ne.s32.totalorder %s129, %s130
      %p139 = scmp.eq.s32.totalorder %s35, 0
      %p140 = por %p138, %p139
      %p141 = scmp.ne.s32.totalorder %s129, %s130
      %p142 = scmp.eq.s32.totalorder %s36, 1
      %p143 = por %p141, %p142
      %p145 = scmp.ne.s32.totalorder %s130, %s144
      %p146 = scmp.eq.s32.totalorder %s36, 0
      %p147 = por %p145, %p146
      %s149 = sadd.s32 %s148, 1
      %p152 = scmp.eq.s32.totalorder %s30, 1
      %p153 = scmp.ne.s32.totalorder %s148, %s150
      %p154 = scmp.eq.s32.totalorder %s30, 0
      %p155 = por %p153, %p154
      %p156 = scmp.ne.s32.totalorder %s148, %s150
      %p157 = scmp.eq.s32.totalorder %s35, 1
      %p158 = por %p156, %p157
      %p159 = scmp.ne.s32.totalorder %s150, %s151
      %p160 = scmp.eq.s32.totalorder %s35, 0
      %p161 = por %p159, %p160
      %p162 = scmp.ne.s32.totalorder %s150, %s151
      %p163 = scmp.eq.s32.totalorder %s36, 1
      %p164 = por %p162, %p163
      %p166 = scmp.ne.s32.totalorder %s151, %s165
      %p167 = scmp.eq.s32.totalorder %s36, 0
      %p168 = por %p166, %p167
      %s170 = sadd.s32 %s169, 1
      %p173 = scmp.eq.s32.totalorder %s30, 1
      %p174 = scmp.ne.s32.totalorder %s169, %s171
      %p175 = scmp.eq.s32.totalorder %s30, 0
      %p176 = por %p174, %p175
      %p177 = scmp.ne.s32.totalorder %s169, %s171
      %p178 = scmp.eq.s32.totalorder %s35, 1
      %p179 = por %p177, %p178
      %p180 = scmp.ne.s32.totalorder %s171, %s172
      %p181 = scmp.eq.s32.totalorder %s35, 0
      %p182 = por %p180, %p181
      %p183 = scmp.ne.s32.totalorder %s171, %s172
      %p184 = scmp.eq.s32.totalorder %s36, 1
      %p185 = por %p183, %p184
      %p187 = scmp.ne.s32.totalorder %s172, %s186
      %p188 = scmp.eq.s32.totalorder %s36, 0
      %p189 = por %p187, %p188
      %s191 = sadd.s32 %s190, 1
      %p194 = scmp.eq.s32.totalorder %s30, 1
      %p195 = scmp.ne.s32.totalorder %s190, %s192
      %p196 = scmp.eq.s32.totalorder %s30, 0
      %p197 = por %p195, %p196
      %p198 = scmp.ne.s32.totalorder %s190, %s192
      %p199 = scmp.eq.s32.totalorder %s35, 1
      %p200 = por %p198, %p199
      %p201 = scmp.ne.s32.totalorder %s192, %s193
      %p202 = scmp.eq.s32.totalorder %s35, 0
      %p203 = por %p201, %p202
      %p204 = scmp.ne.s32.totalorder %s192, %s193
      %p205 = scmp.eq.s32.totalorder %s36, 1
      %p206 = por %p204, %p205
      %p208 = scmp.ne.s32.totalorder %s193, %s207
      %p209 = scmp.eq.s32.totalorder %s36, 0
      %p210 = por %p208, %p209
      %s212 = sadd.s32 %s211, 1
      %p215 = scmp.eq.s32.totalorder %s30, 1
      %p216 = scmp.ne.s32.totalorder %s211, %s213
      %p217 = scmp.eq.s32.totalorder %s30, 0
      %p218 = por %p216, %p217
      %p219 = scmp.ne.s32.totalorder %s211, %s213
      %p220 = scmp.eq.s32.totalorder %s35, 1
      %p221 = por %p219, %p220
      %p222 = scmp.ne.s32.totalorder %s213, %s214
      %p223 = scmp.eq.s32.totalorder %s35, 0
      %p224 = por %p222, %p223
      %p225 = scmp.ne.s32.totalorder %s213, %s214
      %p226 = scmp.eq.s32.totalorder %s36, 1
      %p227 = por %p225, %p226
      %p229 = scmp.ne.s32.totalorder %s214, %s228
      %p230 = scmp.eq.s32.totalorder %s36, 0
      %p231 = por %p229, %p230
      %s233 = sadd.s32 %s232, 1
      %p236 = scmp.eq.s32.totalorder %s30, 1
      %p237 = scmp.ne.s32.totalorder %s232, %s234
      %p238 = scmp.eq.s32.totalorder %s30, 0
      %p239 = por %p237, %p238
      %p240 = scmp.ne.s32.totalorder %s232, %s234
      %p241 = scmp.eq.s32.totalorder %s35, 1
      %p242 = por %p240, %p241
      %p243 = scmp.ne.s32.totalorder %s234, %s235
      %p244 = scmp.eq.s32.totalorder %s35, 0
      %p245 = por %p243, %p244
      %p246 = scmp.ne.s32.totalorder %s234, %s235
      %p247 = scmp.eq.s32.totalorder %s36, 1
      %p248 = por %p246, %p247
      %p250 = scmp.ne.s32.totalorder %s235, %s249
      %p251 = scmp.eq.s32.totalorder %s36, 0
      %p252 = por %p250, %p251
      %s254 = sadd.s32 %s253, 1
      %p257 = scmp.eq.s32.totalorder %s30, 1
      %p258 = scmp.ne.s32.totalorder %s253, %s255
      %p259 = scmp.eq.s32.totalorder %s30, 0
      %p260 = por %p258, %p259
      %p261 = scmp.ne.s32.totalorder %s253, %s255
      %p262 = scmp.eq.s32.totalorder %s35, 1
      %p263 = por %p261, %p262
      %p264 = scmp.ne.s32.totalorder %s255, %s256
      %p265 = scmp.eq.s32.totalorder %s35, 0
      %p266 = por %p264, %p265
      %p267 = scmp.ne.s32.totalorder %s255, %s256
      %p268 = scmp.eq.s32.totalorder %s36, 1
      %p269 = por %p267, %p268
      %p271 = scmp.ne.s32.totalorder %s256, %s270
      %p272 = scmp.eq.s32.totalorder %s36, 0
      %p273 = por %p271, %p272
      %s275 = sadd.s32 %s274, 1
      %p278 = scmp.eq.s32.totalorder %s30, 1
      %p279 = scmp.ne.s32.totalorder %s274, %s276
      %p280 = scmp.eq.s32.totalorder %s30, 0
      %p281 = por %p279, %p280
      %p282 = scmp.ne.s32.totalorder %s274, %s276
      %p283 = scmp.eq.s32.totalorder %s35, 1
      %p284 = por %p282, %p283
      %p285 = scmp.ne.s32.totalorder %s276, %s277
      %p286 = scmp.eq.s32.totalorder %s35, 0
      %p287 = por %p285, %p286
      %p288 = scmp.ne.s32.totalorder %s276, %s277
      %p289 = scmp.eq.s32.totalorder %s36, 1
      %p290 = por %p288, %p289
      %p292 = scmp.ne.s32.totalorder %s277, %s291
      %p293 = scmp.eq.s32.totalorder %s36, 0
      %p294 = por %p292, %p293
      %s295 = ssub.s32 %s30, %s37
      %p296 = scmp.eq.s32.totalorder %s295, 0
      %s298 = sadd.s32 %s297, 1
      %s299 = scalar_select %p296, %s297, %s298
      %p302 = pneg %p296
      %p303 = scmp.eq.s32.totalorder %s30, 1
      %p304 = por %p302, %p303
      %p305 = scmp.ne.s32.totalorder %s297, %s300
      %p306 = scmp.eq.s32.totalorder %s30, 0
      %p307 = por %p305, %p306
      %p308 = scmp.ne.s32.totalorder %s297, %s300
      %p309 = scmp.eq.s32.totalorder %s35, 1
      %p310 = por %p308, %p309
      %p311 = scmp.ne.s32.totalorder %s300, %s301
      %p312 = scmp.eq.s32.totalorder %s35, 0
      %p313 = por %p311, %p312
      %p314 = scmp.ne.s32.totalorder %s300, %s301
      %p315 = scmp.eq.s32.totalorder %s36, 1
      %p316 = por %p314, %p315
      %p318 = scmp.ne.s32.totalorder %s301, %s317
      %p319 = scmp.eq.s32.totalorder %s36, 0
      %p320 = por %p318, %p319
      %p321 = scmp.le.s32.totalorder 1, %s30
      %p322 = scmp.lt.s32.totalorder %s30, 3
      %p323 = pnand %p321, %p322
      %p324 = pneg %p323
      // Predicated region
      $region9: #{tpu_custom_call.1} parent=5 // pred_check
        _
      $region10: #{tpu_custom_call.1} parent=5 // pred_check_branch
        %326 = sbr.rel (%p323) target = $region12
      $region11: #{tpu_custom_call.1} parent=5 // pred_region
        %s327 = ssub.s32 %s30, 1
        // Predicated region
        $region13: #{tpu_custom_call.1} parent=11 // pred_check
          %p328 = pneg %p77
        $region14: #{tpu_custom_call.1} parent=11 // pred_check_branch
          %330 = sbr.rel (%p328) target = $region16
        $region15: #{tpu_custom_call.1} parent=11 // pred_region
          %s332 = ssub.s32 48, 48
          %333 = vsyncadd [#allocation7], %s332
          %s335 = sshll.u32 [#allocation6], 4
          %s336 = int_to_ptr.vmem [resolvable:$true] %s335
          %338 = dma.hbm_to_vmem [thread:$0]  %s1, 48, %s336, [#allocation7]
        $region16: #{tpu_custom_call.1} parent=11 // pred_fallthru
          _
        // Predicated region
        $region17: #{tpu_custom_call.1} parent=11 // pred_check
          %p339 = pneg %p98
        $region18: #{tpu_custom_call.1} parent=11 // pred_check_branch
          %341 = sbr.rel (%p339) target = $region20
        $region19: #{tpu_custom_call.1} parent=11 // pred_region
          %s343 = ssub.s32 48, 48
          %344 = vsyncadd [#allocation7], %s343
          %s346 = sshll.u32 [#allocation8], 4
          %s347 = int_to_ptr.vmem [resolvable:$true] %s346
          %349 = dma.hbm_to_vmem [thread:$0]  %s2, 48, %s347, [#allocation7]
        $region20: #{tpu_custom_call.1} parent=11 // pred_fallthru
          _
        // Predicated region
        $region21: #{tpu_custom_call.1} parent=11 // pred_check
          %p350 = pneg %p119
        $region22: #{tpu_custom_call.1} parent=11 // pred_check_branch
          %352 = sbr.rel (%p350) target = $region24
        $region23: #{tpu_custom_call.1} parent=11 // pred_region
          %s354 = ssub.s32 48, 48
          %355 = vsyncadd [#allocation10], %s354
          %s357 = sshll.u32 [#allocation9], 4
          %s358 = int_to_ptr.vmem [resolvable:$true] %s357
          %360 = dma.hbm_to_vmem [thread:$0]  %s3, 48, %s358, [#allocation10]
        $region24: #{tpu_custom_call.1} parent=11 // pred_fallthru
          _
        // Predicated region
        $region25: #{tpu_custom_call.1} parent=11 // pred_check
          %p361 = pneg %p140
        $region26: #{tpu_custom_call.1} parent=11 // pred_check_branch
          %363 = sbr.rel (%p361) target = $region28
        $region27: #{tpu_custom_call.1} parent=11 // pred_region
          %s365 = ssub.s32 48, 48
          %366 = vsyncadd [#allocation10], %s365
          %s368 = sshll.u32 [#allocation11], 4
          %s369 = int_to_ptr.vmem [resolvable:$true] %s368
          %371 = dma.hbm_to_vmem [thread:$0]  %s4, 48, %s369, [#allocation10]
        $region28: #{tpu_custom_call.1} parent=11 // pred_fallthru
          _
        // Predicated region
        $region29: #{tpu_custom_call.1} parent=11 // pred_check
          %p372 = pneg %p161
        $region30: #{tpu_custom_call.1} parent=11 // pred_check_branch
          %374 = sbr.rel (%p372) target = $region32
        $region31: #{tpu_custom_call.1} parent=11 // pred_region
          %s376 = ssub.s32 27648, 27648
          %377 = vsyncadd [#allocation13], %s376
          %s378 = sshll.u32 [#allocation12], 4
          %s379 = int_to_ptr.vmem [resolvable:$true] %s378
          %384 = dma.hbm_to_vmem [thread:$0]  %s5, 27648, %s379, [#allocation13], 576, 576, 36
        $region32: #{tpu_custom_call.1} parent=11 // pred_fallthru
          _
        // Predicated region
        $region33: #{tpu_custom_call.1} parent=11 // pred_check
          %p385 = pneg %p182
        $region34: #{tpu_custom_call.1} parent=11 // pred_check_branch
          %387 = sbr.rel (%p385) target = $region36
        $region35: #{tpu_custom_call.1} parent=11 // pred_region
          %s389 = ssub.s32 9216, 9216
          %390 = vsyncadd [#allocation13], %s389
          %s391 = sshll.u32 [#allocation14], 4
          %s392 = int_to_ptr.vmem [resolvable:$true] %s391
          %397 = dma.hbm_to_vmem [thread:$0]  %s6, 9216, %s392, [#allocation13], 192, 192, 12
        $region36: #{tpu_custom_call.1} parent=11 // pred_fallthru
          _
        // Predicated region
        $region37: #{tpu_custom_call.1} parent=11 // pred_check
          %p398 = pneg %p203
        $region38: #{tpu_custom_call.1} parent=11 // pred_check_branch
          %400 = sbr.rel (%p398) target = $region40
        $region39: #{tpu_custom_call.1} parent=11 // pred_region
          %s402 = ssub.s32 48, 48
          %403 = vsyncadd [#allocation16], %s402
          %s405 = sshll.u32 [#allocation15], 4
          %s406 = int_to_ptr.vmem [resolvable:$true] %s405
          %408 = dma.hbm_to_vmem [thread:$0]  %s7, 48, %s406, [#allocation16]
        $region40: #{tpu_custom_call.1} parent=11 // pred_fallthru
          _
        // Predicated region
        $region41: #{tpu_custom_call.1} parent=11 // pred_check
          %p409 = pneg %p224
        $region42: #{tpu_custom_call.1} parent=11 // pred_check_branch
          %411 = sbr.rel (%p409) target = $region44
        $region43: #{tpu_custom_call.1} parent=11 // pred_region
          %s413 = ssub.s32 36864, 36864
          %414 = vsyncadd [#allocation16], %s413
          %s415 = sshll.u32 [#allocation17], 4
          %s416 = int_to_ptr.vmem [resolvable:$true] %s415
          %421 = dma.hbm_to_vmem [thread:$0]  %s8, 36864, %s416, [#allocation16], 768, 768, 48
        $region44: #{tpu_custom_call.1} parent=11 // pred_fallthru
          _
        // Predicated region
        $region45: #{tpu_custom_call.1} parent=11 // pred_check
          %p422 = pneg %p245
        $region46: #{tpu_custom_call.1} parent=11 // pred_check_branch
          %424 = sbr.rel (%p422) target = $region48
        $region47: #{tpu_custom_call.1} parent=11 // pred_region
          %s426 = ssub.s32 192, 192
          %427 = vsyncadd [#allocation19], %s426
          %s429 = sshll.u32 [#allocation18], 4
          %s430 = int_to_ptr.vmem [resolvable:$true] %s429
          %432 = dma.hbm_to_vmem [thread:$0]  %s9, 192, %s430, [#allocation19]
        $region48: #{tpu_custom_call.1} parent=11 // pred_fallthru
          _
        // Predicated region
        $region49: #{tpu_custom_call.1} parent=11 // pred_check
          %p433 = pneg %p266
        $region50: #{tpu_custom_call.1} parent=11 // pred_check_branch
          %435 = sbr.rel (%p433) target = $region52
        $region51: #{tpu_custom_call.1} parent=11 // pred_region
          %s437 = ssub.s32 36864, 36864
          %438 = vsyncadd [#allocation19], %s437
          %s439 = sshll.u32 [#allocation20], 4
          %s440 = int_to_ptr.vmem [resolvable:$true] %s439
          %445 = dma.hbm_to_vmem [thread:$0]  %s10, 36864, %s440, [#allocation19], 192, 192, 12
        $region52: #{tpu_custom_call.1} parent=11 // pred_fallthru
          _
        // Predicated region
        $region53: #{tpu_custom_call.1} parent=11 // pred_check
          %p446 = pneg %p287
        $region54: #{tpu_custom_call.1} parent=11 // pred_check_branch
          %448 = sbr.rel (%p446) target = $region56
        $region55: #{tpu_custom_call.1} parent=11 // pred_region
          %s450 = ssub.s32 48, 48
          %451 = vsyncadd [#allocation22], %s450
          %s453 = sshll.u32 [#allocation21], 4
          %s454 = int_to_ptr.vmem [resolvable:$true] %s453
          %456 = dma.hbm_to_vmem [thread:$0]  %s11, 48, %s454, [#allocation22]
        $region56: #{tpu_custom_call.1} parent=11 // pred_fallthru
          _
      $region12: #{tpu_custom_call.1} parent=5 // pred_fallthru
        _
      %p457 = scmp.lt.s32.totalorder %s30, 2
      // Predicated region
      $region57: #{tpu_custom_call.1} parent=5 // pred_check
        %p458 = pneg %p457
      $region58: #{tpu_custom_call.1} parent=5 // pred_check_branch
        %460 = sbr.rel (%p458) target = $region60
      $region59: #{tpu_custom_call.1} parent=5 // pred_region
        // Predicated region
        $region61: #{tpu_custom_call.1} parent=59 // pred_check
          %p461 = pneg %p50
        $region62: #{tpu_custom_call.1} parent=59 // pred_check_branch
          %463 = sbr.rel (%p461) target = $region64
        $region63: #{tpu_custom_call.1} parent=59 // pred_region
          %s464 = sand.u32 %s40, 1
          %s465 = scalar_lea.sflag [#allocation4], %s464
          %s466 = sand.u32 %s40, 1
          %s467 = smul.addr %s466, 24
          %s468 = scalar_lea.vmem [#allocation3], %s467
          %s470 = ssub.s32 384, 384
          %471 = vsyncadd %s465, %s470
          %s472 = smul.addr %s30, 3
          %s473 = smul.addr %s472, 128
          %s474 = scalar_lea.hbm %s0, %s473
          %s476 = sshll.u32 %s468, 4
          %s477 = int_to_ptr.vmem [resolvable:$true] %s476
          %479 = dma.hbm_to_vmem [thread:$0]  %s474, 384, %s477, %s465
        $region64: #{tpu_custom_call.1} parent=59 // pred_fallthru
          _
      $region60: #{tpu_custom_call.1} parent=5 // pred_fallthru
        _
      %p480 = scmp.le.s32.totalorder 1, %s30
      %p481 = scmp.lt.s32.totalorder %s30, 3
      %p482 = pnand %p480, %p481
      %p483 = pneg %p482
      // Predicated region
      $region65: #{tpu_custom_call.1} parent=5 // pred_check
        _
      $region66: #{tpu_custom_call.1} parent=5 // pred_check_branch
        %485 = sbr.rel (%p482) target = $region68
      $region67: #{tpu_custom_call.1} parent=5 // pred_region
        %s486 = ssub.s32 %s30, 1
        %s487 = sand.u32 %s43, 1
        %s488 = scalar_lea.sflag [#allocation4], %s487
        %s489 = sand.u32 %s43, 1
        %s490 = smul.addr %s489, 24
        %s491 = scalar_lea.vmem [#allocation3], %s490
        // Predicated region
        $region69: #{tpu_custom_call.1} parent=67 // pred_check
          %p492 = pneg %p56
        $region70: #{tpu_custom_call.1} parent=67 // pred_check_branch
          %494 = sbr.rel (%p492) target = $region72
        $region71: #{tpu_custom_call.1} parent=67 // pred_region
          %495 = dma.done %s488, 384
        $region72: #{tpu_custom_call.1} parent=67 // pred_fallthru
          _
        // Predicated region
        $region73: #{tpu_custom_call.1} parent=67 // pred_check
          %p496 = pneg %p77
        $region74: #{tpu_custom_call.1} parent=67 // pred_check_branch
          %498 = sbr.rel (%p496) target = $region76
        $region75: #{tpu_custom_call.1} parent=67 // pred_region
          %499 = dma.done [#allocation7], 48
        $region76: #{tpu_custom_call.1} parent=67 // pred_fallthru
          _
        // Predicated region
        $region77: #{tpu_custom_call.1} parent=67 // pred_check
          %p500 = pneg %p98
        $region78: #{tpu_custom_call.1} parent=67 // pred_check_branch
          %502 = sbr.rel (%p500) target = $region80
        $region79: #{tpu_custom_call.1} parent=67 // pred_region
          %503 = dma.done [#allocation7], 48
        $region80: #{tpu_custom_call.1} parent=67 // pred_fallthru
          _
        // Predicated region
        $region81: #{tpu_custom_call.1} parent=67 // pred_check
          %p504 = pneg %p119
        $region82: #{tpu_custom_call.1} parent=67 // pred_check_branch
          %506 = sbr.rel (%p504) target = $region84
        $region83: #{tpu_custom_call.1} parent=67 // pred_region
          %507 = dma.done [#allocation10], 48
        $region84: #{tpu_custom_call.1} parent=67 // pred_fallthru
          _
        // Predicated region
        $region85: #{tpu_custom_call.1} parent=67 // pred_check
          %p508 = pneg %p140
        $region86: #{tpu_custom_call.1} parent=67 // pred_check_branch
          %510 = sbr.rel (%p508) target = $region88
        $region87: #{tpu_custom_call.1} parent=67 // pred_region
          %511 = dma.done [#allocation10], 48
        $region88: #{tpu_custom_call.1} parent=67 // pred_fallthru
          _
        // Predicated region
        $region89: #{tpu_custom_call.1} parent=67 // pred_check
          %p512 = pneg %p161
        $region90: #{tpu_custom_call.1} parent=67 // pred_check_branch
          %514 = sbr.rel (%p512) target = $region92
        $region91: #{tpu_custom_call.1} parent=67 // pred_region
          %515 = dma.done [#allocation13], 27648
        $region92: #{tpu_custom_call.1} parent=67 // pred_fallthru
          _
        // Predicated region
        $region93: #{tpu_custom_call.1} parent=67 // pred_check
          %p516 = pneg %p182
        $region94: #{tpu_custom_call.1} parent=67 // pred_check_branch
          %518 = sbr.rel (%p516) target = $region96
        $region95: #{tpu_custom_call.1} parent=67 // pred_region
          %519 = dma.done [#allocation13], 9216
        $region96: #{tpu_custom_call.1} parent=67 // pred_fallthru
          _
        // Predicated region
        $region97: #{tpu_custom_call.1} parent=67 // pred_check
          %p520 = pneg %p203
        $region98: #{tpu_custom_call.1} parent=67 // pred_check_branch
          %522 = sbr.rel (%p520) target = $region100
        $region99: #{tpu_custom_call.1} parent=67 // pred_region
          %523 = dma.done [#allocation16], 48
        $region100: #{tpu_custom_call.1} parent=67 // pred_fallthru
          _
        // Predicated region
        $region101: #{tpu_custom_call.1} parent=67 // pred_check
          %p524 = pneg %p224
        $region102: #{tpu_custom_call.1} parent=67 // pred_check_branch
          %526 = sbr.rel (%p524) target = $region104
        $region103: #{tpu_custom_call.1} parent=67 // pred_region
          %527 = dma.done [#allocation16], 36864
        $region104: #{tpu_custom_call.1} parent=67 // pred_fallthru
          _
        // Predicated region
        $region105: #{tpu_custom_call.1} parent=67 // pred_check
          %p528 = pneg %p245
        $region106: #{tpu_custom_call.1} parent=67 // pred_check_branch
          %530 = sbr.rel (%p528) target = $region108
        $region107: #{tpu_custom_call.1} parent=67 // pred_region
          %531 = dma.done [#allocation19], 192
        $region108: #{tpu_custom_call.1} parent=67 // pred_fallthru
          _
        // Predicated region
        $region109: #{tpu_custom_call.1} parent=67 // pred_check
          %p532 = pneg %p266
        $region110: #{tpu_custom_call.1} parent=67 // pred_check_branch
          %534 = sbr.rel (%p532) target = $region112
        $region111: #{tpu_custom_call.1} parent=67 // pred_region
          %535 = dma.done [#allocation19], 36864
        $region112: #{tpu_custom_call.1} parent=67 // pred_fallthru
          _
        // Predicated region
        $region113: #{tpu_custom_call.1} parent=67 // pred_check
          %p536 = pneg %p287
        $region114: #{tpu_custom_call.1} parent=67 // pred_check_branch
          %538 = sbr.rel (%p536) target = $region116
        $region115: #{tpu_custom_call.1} parent=67 // pred_region
          %539 = dma.done [#allocation22], 48
        $region116: #{tpu_custom_call.1} parent=67 // pred_fallthru
          _
        %s540 = sand.u32 %s43, 1
        %s541 = scalar_lea.sflag [#allocation4], %s540
        %s542 = sand.u32 %s43, 1
        %s543 = smul.addr %s542, 24
        %s544 = scalar_lea.vmem [#allocation3], %s543
        %p545 = pneg %p56
        %p546 = pneg %p53
        %p547 = pneg %p77
        %p548 = pneg %p74
        %p549 = pneg %p98
        %p550 = pneg %p95
        %p551 = pneg %p119
        %p552 = pneg %p116
        %p553 = pneg %p140
        %p554 = pneg %p137
        %p555 = pneg %p161
        %p556 = pneg %p158
        %p557 = pneg %p182
        %p558 = pneg %p179
        %p559 = pneg %p203
        %p560 = pneg %p200
        %p561 = pneg %p224
        %p562 = pneg %p221
        %p563 = pneg %p245
        %p564 = pneg %p242
        %p565 = pneg %p266
        %p566 = pneg %p263
        %p567 = pneg %p287
        %p568 = pneg %p284
        %p569 = pneg %p313
        %p570 = pneg %p310
        %s571 = sand.u32 %s300, 1
        %s572 = scalar_lea.sflag [#allocation5], %s571
        %s573 = sand.u32 %s300, 1
        %s574 = smul.addr %s573, 24
        %s575 = scalar_lea.vmem [#allocation23], %s574
        %v577 = vld [vmem:[%s491] sm:$0xff]
        %v578 = vld [vmem:[%s491 + $0x8] sm:$0xff]
        %v579 = vld [vmem:[%s491 + $0x10] sm:$0xff]
        %v580 = vld [vmem:[#allocation6] sm:$0x7]
        %v581 = vld [vmem:[#allocation8] sm:$0x7]
        %v582 = vadd.f32 %v577, %v578
        %v583 = vadd.f32 %v582, %v579
        %584 = vadd.xlane.f32.xlu0 %v583
        %v585 = vpop.xlane.xlu0 %584
        %v586 = vrcp.pop 384.0
        %v587 = vmul.f32 %v585, %v586
        %v588 = vsub.f32 %v577, %v587
        %v589 = vsub.f32 %v578, %v587
        %v590 = vsub.f32 %v579, %v587
        %v591 = vmul.f32 %v588, %v588
        %v592 = vmul.f32 %v589, %v589
        %v593 = vmul.f32 %v590, %v590
        %v594 = vadd.f32 %v591, %v592
        %v595 = vadd.f32 %v594, %v593
        %596 = vadd.xlane.f32.xlu0 %v595
        %v597 = vpop.xlane.xlu0 %596
        %v598 = vmul.f32 %v597, %v586
        %v599 = vadd.f32 %v598, 1e-05
        %v600 = vrsqrt.pop %v599
        %v601 = vmul.f32 %v588, %v600
        %v602 = vmul.f32 %v589, %v600
        %v603 = vmul.f32 %v590, %v600
        %v605 = vlaneseq
        %v606 = vshrl.u32 %v605, 7
        %v607 = vsub.s32 0, %v606
        %v608 = vrot.slane %v580, %v607
        %v609 = vlaneseq
        %v610 = vshrl.u32 %v609, 7
        %v611 = vsub.s32 1, %v610
        %v612 = vrot.slane %v580, %v611
        %v613 = vlaneseq
        %v614 = vshrl.u32 %v613, 7
        %v615 = vsub.s32 2, %v614
        %v616 = vrot.slane %v580, %v615
        %v620 = vmul.f32 %v601, %v608
        %v621 = vmul.f32 %v602, %v612
        %v622 = vmul.f32 %v603, %v616
        %v624 = vlaneseq
        %v625 = vshrl.u32 %v624, 7
        %v626 = vsub.s32 0, %v625
        %v627 = vrot.slane %v581, %v626
        %v628 = vlaneseq
        %v629 = vshrl.u32 %v628, 7
        %v630 = vsub.s32 1, %v629
        %v631 = vrot.slane %v581, %v630
        %v632 = vlaneseq
        %v633 = vshrl.u32 %v632, 7
        %v634 = vsub.s32 2, %v633
        %v635 = vrot.slane %v581, %v634
        %v639 = vadd.f32 %v620, %v627
        %v640 = vadd.f32 %v621, %v631
        %v641 = vadd.f32 %v622, %v635
        %v642 = vpack.c.bf16 %v639, %v639
        %v643 = vpack.c.bf16 %v640, %v640
        %v644 = vpack.c.bf16 %v641, %v641
        %v645 = vld [vmem:[#allocation12] sm:$0xff]
        %v646 = vld [vmem:[#allocation12 + $0x8] sm:$0xff]
        %v647 = vld [vmem:[#allocation12 + $0x10] sm:$0xff]
        %v648 = vld [vmem:[#allocation12 + $0x18] sm:$0xff]
        %v649 = vld [vmem:[#allocation12 + $0x20] sm:$0xf]
        %v650 = vld [vmem:[#allocation12 + $0x24] sm:$0xff]
        %v651 = vld [vmem:[#allocation12 + $0x2c] sm:$0xff]
        %v652 = vld [vmem:[#allocation12 + $0x34] sm:$0xff]
        %v653 = vld [vmem:[#allocation12 + $0x3c] sm:$0xff]
        %v654 = vld [vmem:[#allocation12 + $0x44] sm:$0xf]
        %v655 = vld [vmem:[#allocation12 + $0x48] sm:$0xff]
        %v656 = vld [vmem:[#allocation12 + $0x50] sm:$0xff]
        %v657 = vld [vmem:[#allocation12 + $0x58] sm:$0xff]
        %v658 = vld [vmem:[#allocation12 + $0x60] sm:$0xff]
        %v659 = vld [vmem:[#allocation12 + $0x68] sm:$0xf]
        %v660 = vld [vmem:[#allocation12 + $0x6c] sm:$0xff]
        %v661 = vld [vmem:[#allocation12 + $0x74] sm:$0xff]
        %v662 = vld [vmem:[#allocation12 + $0x7c] sm:$0xff]
        %v663 = vld [vmem:[#allocation12 + $0x84] sm:$0xff]
        %v664 = vld [vmem:[#allocation12 + $0x8c] sm:$0xf]
        %v665 = vld [vmem:[#allocation12 + $0x90] sm:$0xff]
        %v666 = vld [vmem:[#allocation12 + $0x98] sm:$0xff]
        %v667 = vld [vmem:[#allocation12 + $0xa0] sm:$0xff]
        %v668 = vld [vmem:[#allocation12 + $0xa8] sm:$0xff]
        %v669 = vld [vmem:[#allocation12 + $0xb0] sm:$0xf]
        %v670 = vld [vmem:[#allocation12 + $0xb4] sm:$0xff]
        %v671 = vld [vmem:[#allocation12 + $0xbc] sm:$0xff]
        %v672 = vld [vmem:[#allocation12 + $0xc4] sm:$0xff]
        %v673 = vld [vmem:[#allocation12 + $0xcc] sm:$0xff]
        %v674 = vld [vmem:[#allocation12 + $0xd4] sm:$0xf]
        %v675 = vld [vmem:[#allocation12 + $0xd8] sm:$0xff]
        %v676 = vld [vmem:[#allocation12 + $0xe0] sm:$0xff]
        %v677 = vld [vmem:[#allocation12 + $0xe8] sm:$0xff]
        %v678 = vld [vmem:[#allocation12 + $0xf0] sm:$0xff]
        %v679 = vld [vmem:[#allocation12 + $0xf8] sm:$0xf]
        %v680 = vld [vmem:[#allocation12 + $0xfc] sm:$0xff]
        %v681 = vld [vmem:[#allocation12 + $0x104] sm:$0xff]
        %v682 = vld [vmem:[#allocation12 + $0x10c] sm:$0xff]
        %v683 = vld [vmem:[#allocation12 + $0x114] sm:$0xff]
        %v684 = vld [vmem:[#allocation12 + $0x11c] sm:$0xf]
        %v685 = vld [vmem:[#allocation12 + $0x120] sm:$0xff]
        %v686 = vld [vmem:[#allocation12 + $0x128] sm:$0xff]
        %v687 = vld [vmem:[#allocation12 + $0x130] sm:$0xff]
        %v688 = vld [vmem:[#allocation12 + $0x138] sm:$0xff]
        %v689 = vld [vmem:[#allocation12 + $0x140] sm:$0xf]
        %v690 = vld [vmem:[#allocation12 + $0x144] sm:$0xff]
        %v691 = vld [vmem:[#allocation12 + $0x14c] sm:$0xff]
        %v692 = vld [vmem:[#allocation12 + $0x154] sm:$0xff]
        %v693 = vld [vmem:[#allocation12 + $0x15c] sm:$0xff]
        %v694 = vld [vmem:[#allocation12 + $0x164] sm:$0xf]
        %v695 = vld [vmem:[#allocation12 + $0x168] sm:$0xff]
        %v696 = vld [vmem:[#allocation12 + $0x170] sm:$0xff]
        %v697 = vld [vmem:[#allocation12 + $0x178] sm:$0xff]
        %v698 = vld [vmem:[#allocation12 + $0x180] sm:$0xff]
        %v699 = vld [vmem:[#allocation12 + $0x188] sm:$0xf]
        %v700 = vld [vmem:[#allocation12 + $0x18c] sm:$0xff]
        %v701 = vld [vmem:[#allocation12 + $0x194] sm:$0xff]
        %v702 = vld [vmem:[#allocation12 + $0x19c] sm:$0xff]
        %v703 = vld [vmem:[#allocation12 + $0x1a4] sm:$0xff]
        %v704 = vld [vmem:[#allocation12 + $0x1ac] sm:$0xf]
        %v705 = vld [vmem:[#allocation12 + $0x1b0] sm:$0xff]
        %v706 = vld [vmem:[#allocation12 + $0x1b8] sm:$0xff]
        %v707 = vld [vmem:[#allocation12 + $0x1c0] sm:$0xff]
        %v708 = vld [vmem:[#allocation12 + $0x1c8] sm:$0xff]
        %v709 = vld [vmem:[#allocation12 + $0x1d0] sm:$0xf]
        %v710 = vld [vmem:[#allocation12 + $0x1d4] sm:$0xff]
        %v711 = vld [vmem:[#allocation12 + $0x1dc] sm:$0xff]
        %v712 = vld [vmem:[#allocation12 + $0x1e4] sm:$0xff]
        %v713 = vld [vmem:[#allocation12 + $0x1ec] sm:$0xff]
        %v714 = vld [vmem:[#allocation12 + $0x1f4] sm:$0xf]
        %v715 = vld [vmem:[#allocation12 + $0x1f8] sm:$0xff]
        %v716 = vld [vmem:[#allocation12 + $0x200] sm:$0xff]
        %v717 = vld [vmem:[#allocation12 + $0x208] sm:$0xff]
        %v718 = vld [vmem:[#allocation12 + $0x210] sm:$0xff]
        %v719 = vld [vmem:[#allocation12 + $0x218] sm:$0xf]
        %v720 = vld [vmem:[#allocation12 + $0x21c] sm:$0xff]
        %v721 = vld [vmem:[#allocation12 + $0x224] sm:$0xff]
        %v722 = vld [vmem:[#allocation12 + $0x22c] sm:$0xff]
        %v723 = vld [vmem:[#allocation12 + $0x234] sm:$0xff]
        %v724 = vld [vmem:[#allocation12 + $0x23c] sm:$0xf]
        %v725 = vld [vmem:[#allocation12 + $0x240] sm:$0xff]
        %v726 = vld [vmem:[#allocation12 + $0x248] sm:$0xff]
        %v727 = vld [vmem:[#allocation12 + $0x250] sm:$0xff]
        %v728 = vld [vmem:[#allocation12 + $0x258] sm:$0xff]
        %v729 = vld [vmem:[#allocation12 + $0x260] sm:$0xf]
        %v730 = vld [vmem:[#allocation12 + $0x264] sm:$0xff]
        %v731 = vld [vmem:[#allocation12 + $0x26c] sm:$0xff]
        %v732 = vld [vmem:[#allocation12 + $0x274] sm:$0xff]
        %v733 = vld [vmem:[#allocation12 + $0x27c] sm:$0xff]
        %v734 = vld [vmem:[#allocation12 + $0x284] sm:$0xf]
        %v735 = vld [vmem:[#allocation12 + $0x288] sm:$0xff]
        %v736 = vld [vmem:[#allocation12 + $0x290] sm:$0xff]
        %v737 = vld [vmem:[#allocation12 + $0x298] sm:$0xff]
        %v738 = vld [vmem:[#allocation12 + $0x2a0] sm:$0xff]
        %v739 = vld [vmem:[#allocation12 + $0x2a8] sm:$0xf]
        %v740 = vld [vmem:[#allocation12 + $0x2ac] sm:$0xff]
        %v741 = vld [vmem:[#allocation12 + $0x2b4] sm:$0xff]
        %v742 = vld [vmem:[#allocation12 + $0x2bc] sm:$0xff]
        %v743 = vld [vmem:[#allocation12 + $0x2c4] sm:$0xff]
        %v744 = vld [vmem:[#allocation12 + $0x2cc] sm:$0xf]
        %v745 = vld [vmem:[#allocation12 + $0x2d0] sm:$0xff]
        %v746 = vld [vmem:[#allocation12 + $0x2d8] sm:$0xff]
        %v747 = vld [vmem:[#allocation12 + $0x2e0] sm:$0xff]
        %v748 = vld [vmem:[#allocation12 + $0x2e8] sm:$0xff]
        %v749 = vld [vmem:[#allocation12 + $0x2f0] sm:$0xf]
        %v750 = vld [vmem:[#allocation12 + $0x2f4] sm:$0xff]
        %v751 = vld [vmem:[#allocation12 + $0x2fc] sm:$0xff]
        %v752 = vld [vmem:[#allocation12 + $0x304] sm:$0xff]
        %v753 = vld [vmem:[#allocation12 + $0x30c] sm:$0xff]
        %v754 = vld [vmem:[#allocation12 + $0x314] sm:$0xf]
        %v755 = vld [vmem:[#allocation12 + $0x318] sm:$0xff]
        %v756 = vld [vmem:[#allocation12 + $0x320] sm:$0xff]
        %v757 = vld [vmem:[#allocation12 + $0x328] sm:$0xff]
        %v758 = vld [vmem:[#allocation12 + $0x330] sm:$0xff]
        %v759 = vld [vmem:[#allocation12 + $0x338] sm:$0xf]
        %v760 = vld [vmem:[#allocation12 + $0x33c] sm:$0xff]
        %v761 = vld [vmem:[#allocation12 + $0x344] sm:$0xff]
        %v762 = vld [vmem:[#allocation12 + $0x34c] sm:$0xff]
        %v763 = vld [vmem:[#allocation12 + $0x354] sm:$0xff]
        %v764 = vld [vmem:[#allocation12 + $0x35c] sm:$0xf]
        %v765 = vld [vmem:[#allocation12 + $0x360] sm:$0xff]
        %v766 = vld [vmem:[#allocation12 + $0x368] sm:$0xff]
        %v767 = vld [vmem:[#allocation12 + $0x370] sm:$0xff]
        %v768 = vld [vmem:[#allocation12 + $0x378] sm:$0xff]
        %v769 = vld [vmem:[#allocation12 + $0x380] sm:$0xf]
        %v770 = vld [vmem:[#allocation12 + $0x384] sm:$0xff]
        %v771 = vld [vmem:[#allocation12 + $0x38c] sm:$0xff]
        %v772 = vld [vmem:[#allocation12 + $0x394] sm:$0xff]
        %v773 = vld [vmem:[#allocation12 + $0x39c] sm:$0xff]
        %v774 = vld [vmem:[#allocation12 + $0x3a4] sm:$0xf]
        %v775 = vld [vmem:[#allocation12 + $0x3a8] sm:$0xff]
        %v776 = vld [vmem:[#allocation12 + $0x3b0] sm:$0xff]
        %v777 = vld [vmem:[#allocation12 + $0x3b8] sm:$0xff]
        %v778 = vld [vmem:[#allocation12 + $0x3c0] sm:$0xff]
        %v779 = vld [vmem:[#allocation12 + $0x3c8] sm:$0xf]
        %v780 = vld [vmem:[#allocation12 + $0x3cc] sm:$0xff]
        %v781 = vld [vmem:[#allocation12 + $0x3d4] sm:$0xff]
        %v782 = vld [vmem:[#allocation12 + $0x3dc] sm:$0xff]
        %v783 = vld [vmem:[#allocation12 + $0x3e4] sm:$0xff]
        %v784 = vld [vmem:[#allocation12 + $0x3ec] sm:$0xf]
        %v785 = vld [vmem:[#allocation12 + $0x3f0] sm:$0xff]
        %v786 = vld [vmem:[#allocation12 + $0x3f8] sm:$0xff]
        %v787 = vld [vmem:[#allocation12 + $0x400] sm:$0xff]
        %v788 = vld [vmem:[#allocation12 + $0x408] sm:$0xff]
        %v789 = vld [vmem:[#allocation12 + $0x410] sm:$0xf]
        %v790 = vld [vmem:[#allocation12 + $0x414] sm:$0xff]
        %v791 = vld [vmem:[#allocation12 + $0x41c] sm:$0xff]
        %v792 = vld [vmem:[#allocation12 + $0x424] sm:$0xff]
        %v793 = vld [vmem:[#allocation12 + $0x42c] sm:$0xff]
        %v794 = vld [vmem:[#allocation12 + $0x434] sm:$0xf]
        %v795 = vld [vmem:[#allocation12 + $0x438] sm:$0xff]
        %v796 = vld [vmem:[#allocation12 + $0x440] sm:$0xff]
        %v797 = vld [vmem:[#allocation12 + $0x448] sm:$0xff]
        %v798 = vld [vmem:[#allocation12 + $0x450] sm:$0xff]
        %v799 = vld [vmem:[#allocation12 + $0x458] sm:$0xf]
        %v800 = vld [vmem:[#allocation12 + $0x45c] sm:$0xff]
        %v801 = vld [vmem:[#allocation12 + $0x464] sm:$0xff]
        %v802 = vld [vmem:[#allocation12 + $0x46c] sm:$0xff]
        %v803 = vld [vmem:[#allocation12 + $0x474] sm:$0xff]
        %v804 = vld [vmem:[#allocation12 + $0x47c] sm:$0xf]
        %v805 = vld [vmem:[#allocation12 + $0x480] sm:$0xff]
        %v806 = vld [vmem:[#allocation12 + $0x488] sm:$0xff]
        %v807 = vld [vmem:[#allocation12 + $0x490] sm:$0xff]
        %v808 = vld [vmem:[#allocation12 + $0x498] sm:$0xff]
        %v809 = vld [vmem:[#allocation12 + $0x4a0] sm:$0xf]
        %v810 = vld [vmem:[#allocation12 + $0x4a4] sm:$0xff]
        %v811 = vld [vmem:[#allocation12 + $0x4ac] sm:$0xff]
        %v812 = vld [vmem:[#allocation12 + $0x4b4] sm:$0xff]
        %v813 = vld [vmem:[#allocation12 + $0x4bc] sm:$0xff]
        %v814 = vld [vmem:[#allocation12 + $0x4c4] sm:$0xf]
        %v815 = vld [vmem:[#allocation12 + $0x4c8] sm:$0xff]
        %v816 = vld [vmem:[#allocation12 + $0x4d0] sm:$0xff]
        %v817 = vld [vmem:[#allocation12 + $0x4d8] sm:$0xff]
        %v818 = vld [vmem:[#allocation12 + $0x4e0] sm:$0xff]
        %v819 = vld [vmem:[#allocation12 + $0x4e8] sm:$0xf]
        %v820 = vld [vmem:[#allocation12 + $0x4ec] sm:$0xff]
        %v821 = vld [vmem:[#allocation12 + $0x4f4] sm:$0xff]
        %v822 = vld [vmem:[#allocation12 + $0x4fc] sm:$0xff]
        %v823 = vld [vmem:[#allocation12 + $0x504] sm:$0xff]
        %v824 = vld [vmem:[#allocation12 + $0x50c] sm:$0xf]
        %v825 = vld [vmem:[#allocation12 + $0x510] sm:$0xff]
        %v826 = vld [vmem:[#allocation12 + $0x518] sm:$0xff]
        %v827 = vld [vmem:[#allocation12 + $0x520] sm:$0xff]
        %v828 = vld [vmem:[#allocation12 + $0x528] sm:$0xff]
        %v829 = vld [vmem:[#allocation12 + $0x530] sm:$0xf]
        %v830 = vld [vmem:[#allocation12 + $0x534] sm:$0xff]
        %v831 = vld [vmem:[#allocation12 + $0x53c] sm:$0xff]
        %v832 = vld [vmem:[#allocation12 + $0x544] sm:$0xff]
        %v833 = vld [vmem:[#allocation12 + $0x54c] sm:$0xff]
        %v834 = vld [vmem:[#allocation12 + $0x554] sm:$0xf]
        %v835 = vld [vmem:[#allocation12 + $0x558] sm:$0xff]
        %v836 = vld [vmem:[#allocation12 + $0x560] sm:$0xff]
        %v837 = vld [vmem:[#allocation12 + $0x568] sm:$0xff]
        %v838 = vld [vmem:[#allocation12 + $0x570] sm:$0xff]
        %v839 = vld [vmem:[#allocation12 + $0x578] sm:$0xf]
        %v840 = vld [vmem:[#allocation12 + $0x57c] sm:$0xff]
        %v841 = vld [vmem:[#allocation12 + $0x584] sm:$0xff]
        %v842 = vld [vmem:[#allocation12 + $0x58c] sm:$0xff]
        %v843 = vld [vmem:[#allocation12 + $0x594] sm:$0xff]
        %v844 = vld [vmem:[#allocation12 + $0x59c] sm:$0xf]
        %v845 = vld [vmem:[#allocation12 + $0x5a0] sm:$0xff]
        %v846 = vld [vmem:[#allocation12 + $0x5a8] sm:$0xff]
        %v847 = vld [vmem:[#allocation12 + $0x5b0] sm:$0xff]
        %v848 = vld [vmem:[#allocation12 + $0x5b8] sm:$0xff]
        %v849 = vld [vmem:[#allocation12 + $0x5c0] sm:$0xf]
        %v850 = vld [vmem:[#allocation12 + $0x5c4] sm:$0xff]
        %v851 = vld [vmem:[#allocation12 + $0x5cc] sm:$0xff]
        %v852 = vld [vmem:[#allocation12 + $0x5d4] sm:$0xff]
        %v853 = vld [vmem:[#allocation12 + $0x5dc] sm:$0xff]
        %v854 = vld [vmem:[#allocation12 + $0x5e4] sm:$0xf]
        %v855 = vld [vmem:[#allocation12 + $0x5e8] sm:$0xff]
        %v856 = vld [vmem:[#allocation12 + $0x5f0] sm:$0xff]
        %v857 = vld [vmem:[#allocation12 + $0x5f8] sm:$0xff]
        %v858 = vld [vmem:[#allocation12 + $0x600] sm:$0xff]
        %v859 = vld [vmem:[#allocation12 + $0x608] sm:$0xf]
        %v860 = vld [vmem:[#allocation12 + $0x60c] sm:$0xff]
        %v861 = vld [vmem:[#allocation12 + $0x614] sm:$0xff]
        %v862 = vld [vmem:[#allocation12 + $0x61c] sm:$0xff]
        %v863 = vld [vmem:[#allocation12 + $0x624] sm:$0xff]
        %v864 = vld [vmem:[#allocation12 + $0x62c] sm:$0xf]
        %v865 = vld [vmem:[#allocation12 + $0x630] sm:$0xff]
        %v866 = vld [vmem:[#allocation12 + $0x638] sm:$0xff]
        %v867 = vld [vmem:[#allocation12 + $0x640] sm:$0xff]
        %v868 = vld [vmem:[#allocation12 + $0x648] sm:$0xff]
        %v869 = vld [vmem:[#allocation12 + $0x650] sm:$0xf]
        %v870 = vld [vmem:[#allocation12 + $0x654] sm:$0xff]
        %v871 = vld [vmem:[#allocation12 + $0x65c] sm:$0xff]
        %v872 = vld [vmem:[#allocation12 + $0x664] sm:$0xff]
        %v873 = vld [vmem:[#allocation12 + $0x66c] sm:$0xff]
        %v874 = vld [vmem:[#allocation12 + $0x674] sm:$0xf]
        %v875 = vld [vmem:[#allocation12 + $0x678] sm:$0xff]
        %v876 = vld [vmem:[#allocation12 + $0x680] sm:$0xff]
        %v877 = vld [vmem:[#allocation12 + $0x688] sm:$0xff]
        %v878 = vld [vmem:[#allocation12 + $0x690] sm:$0xff]
        %v879 = vld [vmem:[#allocation12 + $0x698] sm:$0xf]
        %v880 = vld [vmem:[#allocation12 + $0x69c] sm:$0xff]
        %v881 = vld [vmem:[#allocation12 + $0x6a4] sm:$0xff]
        %v882 = vld [vmem:[#allocation12 + $0x6ac] sm:$0xff]
        %v883 = vld [vmem:[#allocation12 + $0x6b4] sm:$0xff]
        %v884 = vld [vmem:[#allocation12 + $0x6bc] sm:$0xf]
        %v1125 = vunpack.c.l.b16 %v645
        %v1126 = vunpack.c.h.b16 %v645
        %v1127 = vunpack.c.l.b16 %v646
        %v1128 = vunpack.c.h.b16 %v646
        %v1129 = vunpack.c.l.b16 %v647
        %v1130 = vunpack.c.h.b16 %v647
        %v1131 = vunpack.c.l.b16 %v648
        %v1132 = vunpack.c.h.b16 %v648
        %v1133 = vunpack.c.l.b16 %v649
        %v1134 = vunpack.c.l.b16 %v650
        %v1135 = vunpack.c.h.b16 %v650
        %v1136 = vunpack.c.l.b16 %v651
        %v1137 = vunpack.c.h.b16 %v651
        %v1138 = vunpack.c.l.b16 %v652
        %v1139 = vunpack.c.h.b16 %v652
        %v1140 = vunpack.c.l.b16 %v653
        %v1141 = vunpack.c.h.b16 %v653
        %v1142 = vunpack.c.l.b16 %v654
        %v1143 = vunpack.c.l.b16 %v655
        %v1144 = vunpack.c.h.b16 %v655
        %v1145 = vunpack.c.l.b16 %v656
        %v1146 = vunpack.c.h.b16 %v656
        %v1147 = vunpack.c.l.b16 %v657
        %v1148 = vunpack.c.h.b16 %v657
        %v1149 = vunpack.c.l.b16 %v658
        %v1150 = vunpack.c.h.b16 %v658
        %v1151 = vunpack.c.l.b16 %v659
        %v1152 = vunpack.c.l.b16 %v660
        %v1153 = vunpack.c.h.b16 %v660
        %v1154 = vunpack.c.l.b16 %v661
        %v1155 = vunpack.c.h.b16 %v661
        %v1156 = vunpack.c.l.b16 %v662
        %v1157 = vunpack.c.h.b16 %v662
        %v1158 = vunpack.c.l.b16 %v663
        %v1159 = vunpack.c.h.b16 %v663
        %v1160 = vunpack.c.l.b16 %v664
        %v1161 = vunpack.c.l.b16 %v665
        %v1162 = vunpack.c.h.b16 %v665
        %v1163 = vunpack.c.l.b16 %v666
        %v1164 = vunpack.c.h.b16 %v666
        %v1165 = vunpack.c.l.b16 %v667
        %v1166 = vunpack.c.h.b16 %v667
        %v1167 = vunpack.c.l.b16 %v668
        %v1168 = vunpack.c.h.b16 %v668
        %v1169 = vunpack.c.l.b16 %v669
        %v1170 = vunpack.c.l.b16 %v670
        %v1171 = vunpack.c.h.b16 %v670
        %v1172 = vunpack.c.l.b16 %v671
        %v1173 = vunpack.c.h.b16 %v671
        %v1174 = vunpack.c.l.b16 %v672
        %v1175 = vunpack.c.h.b16 %v672
        %v1176 = vunpack.c.l.b16 %v673
        %v1177 = vunpack.c.h.b16 %v673
        %v1178 = vunpack.c.l.b16 %v674
        %v1179 = vunpack.c.l.b16 %v675
        %v1180 = vunpack.c.h.b16 %v675
        %v1181 = vunpack.c.l.b16 %v676
        %v1182 = vunpack.c.h.b16 %v676
        %v1183 = vunpack.c.l.b16 %v677
        %v1184 = vunpack.c.h.b16 %v677
        %v1185 = vunpack.c.l.b16 %v678
        %v1186 = vunpack.c.h.b16 %v678
        %v1187 = vunpack.c.l.b16 %v679
        %v1188 = vunpack.c.l.b16 %v680
        %v1189 = vunpack.c.h.b16 %v680
        %v1190 = vunpack.c.l.b16 %v681
        %v1191 = vunpack.c.h.b16 %v681
        %v1192 = vunpack.c.l.b16 %v682
        %v1193 = vunpack.c.h.b16 %v682
        %v1194 = vunpack.c.l.b16 %v683
        %v1195 = vunpack.c.h.b16 %v683
        %v1196 = vunpack.c.l.b16 %v684
        %v1197 = vunpack.c.l.b16 %v685
        %v1198 = vunpack.c.h.b16 %v685
        %v1199 = vunpack.c.l.b16 %v686
        %v1200 = vunpack.c.h.b16 %v686
        %v1201 = vunpack.c.l.b16 %v687
        %v1202 = vunpack.c.h.b16 %v687
        %v1203 = vunpack.c.l.b16 %v688
        %v1204 = vunpack.c.h.b16 %v688
        %v1205 = vunpack.c.l.b16 %v689
        %v1206 = vunpack.c.l.b16 %v690
        %v1207 = vunpack.c.h.b16 %v690
        %v1208 = vunpack.c.l.b16 %v691
        %v1209 = vunpack.c.h.b16 %v691
        %v1210 = vunpack.c.l.b16 %v692
        %v1211 = vunpack.c.h.b16 %v692
        %v1212 = vunpack.c.l.b16 %v693
        %v1213 = vunpack.c.h.b16 %v693
        %v1214 = vunpack.c.l.b16 %v694
        %v1215 = vunpack.c.l.b16 %v695
        %v1216 = vunpack.c.h.b16 %v695
        %v1217 = vunpack.c.l.b16 %v696
        %v1218 = vunpack.c.h.b16 %v696
        %v1219 = vunpack.c.l.b16 %v697
        %v1220 = vunpack.c.h.b16 %v697
        %v1221 = vunpack.c.l.b16 %v698
        %v1222 = vunpack.c.h.b16 %v698
        %v1223 = vunpack.c.l.b16 %v699
        %v1224 = vunpack.c.l.b16 %v700
        %v1225 = vunpack.c.h.b16 %v700
        %v1226 = vunpack.c.l.b16 %v701
        %v1227 = vunpack.c.h.b16 %v701
        %v1228 = vunpack.c.l.b16 %v702
        %v1229 = vunpack.c.h.b16 %v702
        %v1230 = vunpack.c.l.b16 %v703
        %v1231 = vunpack.c.h.b16 %v703
        %v1232 = vunpack.c.l.b16 %v704
        %v1233 = vunpack.c.l.b16 %v705
        %v1234 = vunpack.c.h.b16 %v705
        %v1235 = vunpack.c.l.b16 %v706
        %v1236 = vunpack.c.h.b16 %v706
        %v1237 = vunpack.c.l.b16 %v707
        %v1238 = vunpack.c.h.b16 %v707
        %v1239 = vunpack.c.l.b16 %v708
        %v1240 = vunpack.c.h.b16 %v708
        %v1241 = vunpack.c.l.b16 %v709
        %v1242 = vunpack.c.l.b16 %v710
        %v1243 = vunpack.c.h.b16 %v710
        %v1244 = vunpack.c.l.b16 %v711
        %v1245 = vunpack.c.h.b16 %v711
        %v1246 = vunpack.c.l.b16 %v712
        %v1247 = vunpack.c.h.b16 %v712
        %v1248 = vunpack.c.l.b16 %v713
        %v1249 = vunpack.c.h.b16 %v713
        %v1250 = vunpack.c.l.b16 %v714
        %v1251 = vunpack.c.l.b16 %v715
        %v1252 = vunpack.c.h.b16 %v715
        %v1253 = vunpack.c.l.b16 %v716
        %v1254 = vunpack.c.h.b16 %v716
        %v1255 = vunpack.c.l.b16 %v717
        %v1256 = vunpack.c.h.b16 %v717
        %v1257 = vunpack.c.l.b16 %v718
        %v1258 = vunpack.c.h.b16 %v718
        %v1259 = vunpack.c.l.b16 %v719
        %v1260 = vunpack.c.l.b16 %v720
        %v1261 = vunpack.c.h.b16 %v720
        %v1262 = vunpack.c.l.b16 %v721
        %v1263 = vunpack.c.h.b16 %v721
        %v1264 = vunpack.c.l.b16 %v722
        %v1265 = vunpack.c.h.b16 %v722
        %v1266 = vunpack.c.l.b16 %v723
        %v1267 = vunpack.c.h.b16 %v723
        %v1268 = vunpack.c.l.b16 %v724
        %v1269 = vunpack.c.l.b16 %v725
        %v1270 = vunpack.c.h.b16 %v725
        %v1271 = vunpack.c.l.b16 %v726
        %v1272 = vunpack.c.h.b16 %v726
        %v1273 = vunpack.c.l.b16 %v727
        %v1274 = vunpack.c.h.b16 %v727
        %v1275 = vunpack.c.l.b16 %v728
        %v1276 = vunpack.c.h.b16 %v728
        %v1277 = vunpack.c.l.b16 %v729
        %v1278 = vunpack.c.l.b16 %v730
        %v1279 = vunpack.c.h.b16 %v730
        %v1280 = vunpack.c.l.b16 %v731
        %v1281 = vunpack.c.h.b16 %v731
        %v1282 = vunpack.c.l.b16 %v732
        %v1283 = vunpack.c.h.b16 %v732
        %v1284 = vunpack.c.l.b16 %v733
        %v1285 = vunpack.c.h.b16 %v733
        %v1286 = vunpack.c.l.b16 %v734
        %v1287 = vunpack.c.l.b16 %v735
        %v1288 = vunpack.c.h.b16 %v735
        %v1289 = vunpack.c.l.b16 %v736
        %v1290 = vunpack.c.h.b16 %v736
        %v1291 = vunpack.c.l.b16 %v737
        %v1292 = vunpack.c.h.b16 %v737
        %v1293 = vunpack.c.l.b16 %v738
        %v1294 = vunpack.c.h.b16 %v738
        %v1295 = vunpack.c.l.b16 %v739
        %v1296 = vunpack.c.l.b16 %v740
        %v1297 = vunpack.c.h.b16 %v740
        %v1298 = vunpack.c.l.b16 %v741
        %v1299 = vunpack.c.h.b16 %v741
        %v1300 = vunpack.c.l.b16 %v742
        %v1301 = vunpack.c.h.b16 %v742
        %v1302 = vunpack.c.l.b16 %v743
        %v1303 = vunpack.c.h.b16 %v743
        %v1304 = vunpack.c.l.b16 %v744
        %v1305 = vunpack.c.l.b16 %v745
        %v1306 = vunpack.c.h.b16 %v745
        %v1307 = vunpack.c.l.b16 %v746
        %v1308 = vunpack.c.h.b16 %v746
        %v1309 = vunpack.c.l.b16 %v747
        %v1310 = vunpack.c.h.b16 %v747
        %v1311 = vunpack.c.l.b16 %v748
        %v1312 = vunpack.c.h.b16 %v748
        %v1313 = vunpack.c.l.b16 %v749
        %v1314 = vunpack.c.l.b16 %v750
        %v1315 = vunpack.c.h.b16 %v750
        %v1316 = vunpack.c.l.b16 %v751
        %v1317 = vunpack.c.h.b16 %v751
        %v1318 = vunpack.c.l.b16 %v752
        %v1319 = vunpack.c.h.b16 %v752
        %v1320 = vunpack.c.l.b16 %v753
        %v1321 = vunpack.c.h.b16 %v753
        %v1322 = vunpack.c.l.b16 %v754
        %v1323 = vunpack.c.l.b16 %v755
        %v1324 = vunpack.c.h.b16 %v755
        %v1325 = vunpack.c.l.b16 %v756
        %v1326 = vunpack.c.h.b16 %v756
        %v1327 = vunpack.c.l.b16 %v757
        %v1328 = vunpack.c.h.b16 %v757
        %v1329 = vunpack.c.l.b16 %v758
        %v1330 = vunpack.c.h.b16 %v758
        %v1331 = vunpack.c.l.b16 %v759
        %v1332 = vunpack.c.l.b16 %v760
        %v1333 = vunpack.c.h.b16 %v760
        %v1334 = vunpack.c.l.b16 %v761
        %v1335 = vunpack.c.h.b16 %v761
        %v1336 = vunpack.c.l.b16 %v762
        %v1337 = vunpack.c.h.b16 %v762
        %v1338 = vunpack.c.l.b16 %v763
        %v1339 = vunpack.c.h.b16 %v763
        %v1340 = vunpack.c.l.b16 %v764
        %v1341 = vunpack.c.l.b16 %v765
        %v1342 = vunpack.c.h.b16 %v765
        %v1343 = vunpack.c.l.b16 %v766
        %v1344 = vunpack.c.h.b16 %v766
        %v1345 = vunpack.c.l.b16 %v767
        %v1346 = vunpack.c.h.b16 %v767
        %v1347 = vunpack.c.l.b16 %v768
        %v1348 = vunpack.c.h.b16 %v768
        %v1349 = vunpack.c.l.b16 %v769
        %v1350 = vunpack.c.l.b16 %v770
        %v1351 = vunpack.c.h.b16 %v770
        %v1352 = vunpack.c.l.b16 %v771
        %v1353 = vunpack.c.h.b16 %v771
        %v1354 = vunpack.c.l.b16 %v772
        %v1355 = vunpack.c.h.b16 %v772
        %v1356 = vunpack.c.l.b16 %v773
        %v1357 = vunpack.c.h.b16 %v773
        %v1358 = vunpack.c.l.b16 %v774
        %v1359 = vunpack.c.l.b16 %v775
        %v1360 = vunpack.c.h.b16 %v775
        %v1361 = vunpack.c.l.b16 %v776
        %v1362 = vunpack.c.h.b16 %v776
        %v1363 = vunpack.c.l.b16 %v777
        %v1364 = vunpack.c.h.b16 %v777
        %v1365 = vunpack.c.l.b16 %v778
        %v1366 = vunpack.c.h.b16 %v778
        %v1367 = vunpack.c.l.b16 %v779
        %v1368 = vunpack.c.l.b16 %v780
        %v1369 = vunpack.c.h.b16 %v780
        %v1370 = vunpack.c.l.b16 %v781
        %v1371 = vunpack.c.h.b16 %v781
        %v1372 = vunpack.c.l.b16 %v782
        %v1373 = vunpack.c.h.b16 %v782
        %v1374 = vunpack.c.l.b16 %v783
        %v1375 = vunpack.c.h.b16 %v783
        %v1376 = vunpack.c.l.b16 %v784
        %v1377 = vunpack.c.l.b16 %v785
        %v1378 = vunpack.c.h.b16 %v785
        %v1379 = vunpack.c.l.b16 %v786
        %v1380 = vunpack.c.h.b16 %v786
        %v1381 = vunpack.c.l.b16 %v787
        %v1382 = vunpack.c.h.b16 %v787
        %v1383 = vunpack.c.l.b16 %v788
        %v1384 = vunpack.c.h.b16 %v788
        %v1385 = vunpack.c.l.b16 %v789
        %v1386 = vunpack.c.l.b16 %v790
        %v1387 = vunpack.c.h.b16 %v790
        %v1388 = vunpack.c.l.b16 %v791
        %v1389 = vunpack.c.h.b16 %v791
        %v1390 = vunpack.c.l.b16 %v792
        %v1391 = vunpack.c.h.b16 %v792
        %v1392 = vunpack.c.l.b16 %v793
        %v1393 = vunpack.c.h.b16 %v793
        %v1394 = vunpack.c.l.b16 %v794
        %v1395 = vunpack.c.l.b16 %v795
        %v1396 = vunpack.c.h.b16 %v795
        %v1397 = vunpack.c.l.b16 %v796
        %v1398 = vunpack.c.h.b16 %v796
        %v1399 = vunpack.c.l.b16 %v797
        %v1400 = vunpack.c.h.b16 %v797
        %v1401 = vunpack.c.l.b16 %v798
        %v1402 = vunpack.c.h.b16 %v798
        %v1403 = vunpack.c.l.b16 %v799
        %v1404 = vunpack.c.l.b16 %v800
        %v1405 = vunpack.c.h.b16 %v800
        %v1406 = vunpack.c.l.b16 %v801
        %v1407 = vunpack.c.h.b16 %v801
        %v1408 = vunpack.c.l.b16 %v802
        %v1409 = vunpack.c.h.b16 %v802
        %v1410 = vunpack.c.l.b16 %v803
        %v1411 = vunpack.c.h.b16 %v803
        %v1412 = vunpack.c.l.b16 %v804
        %v1413 = vunpack.c.l.b16 %v805
        %v1414 = vunpack.c.h.b16 %v805
        %v1415 = vunpack.c.l.b16 %v806
        %v1416 = vunpack.c.h.b16 %v806
        %v1417 = vunpack.c.l.b16 %v807
        %v1418 = vunpack.c.h.b16 %v807
        %v1419 = vunpack.c.l.b16 %v808
        %v1420 = vunpack.c.h.b16 %v808
        %v1421 = vunpack.c.l.b16 %v809
        %v1422 = vunpack.c.l.b16 %v810
        %v1423 = vunpack.c.h.b16 %v810
        %v1424 = vunpack.c.l.b16 %v811
        %v1425 = vunpack.c.h.b16 %v811
        %v1426 = vunpack.c.l.b16 %v812
        %v1427 = vunpack.c.h.b16 %v812
        %v1428 = vunpack.c.l.b16 %v813
        %v1429 = vunpack.c.h.b16 %v813
        %v1430 = vunpack.c.l.b16 %v814
        %v1431 = vunpack.c.l.b16 %v815
        %v1432 = vunpack.c.h.b16 %v815
        %v1433 = vunpack.c.l.b16 %v816
        %v1434 = vunpack.c.h.b16 %v816
        %v1435 = vunpack.c.l.b16 %v817
        %v1436 = vunpack.c.h.b16 %v817
        %v1437 = vunpack.c.l.b16 %v818
        %v1438 = vunpack.c.h.b16 %v818
        %v1439 = vunpack.c.l.b16 %v819
        %v1440 = vunpack.c.l.b16 %v820
        %v1441 = vunpack.c.h.b16 %v820
        %v1442 = vunpack.c.l.b16 %v821
        %v1443 = vunpack.c.h.b16 %v821
        %v1444 = vunpack.c.l.b16 %v822
        %v1445 = vunpack.c.h.b16 %v822
        %v1446 = vunpack.c.l.b16 %v823
        %v1447 = vunpack.c.h.b16 %v823
        %v1448 = vunpack.c.l.b16 %v824
        %v1449 = vunpack.c.l.b16 %v825
        %v1450 = vunpack.c.h.b16 %v825
        %v1451 = vunpack.c.l.b16 %v826
        %v1452 = vunpack.c.h.b16 %v826
        %v1453 = vunpack.c.l.b16 %v827
        %v1454 = vunpack.c.h.b16 %v827
        %v1455 = vunpack.c.l.b16 %v828
        %v1456 = vunpack.c.h.b16 %v828
        %v1457 = vunpack.c.l.b16 %v829
        %v1458 = vunpack.c.l.b16 %v830
        %v1459 = vunpack.c.h.b16 %v830
        %v1460 = vunpack.c.l.b16 %v831
        %v1461 = vunpack.c.h.b16 %v831
        %v1462 = vunpack.c.l.b16 %v832
        %v1463 = vunpack.c.h.b16 %v832
        %v1464 = vunpack.c.l.b16 %v833
        %v1465 = vunpack.c.h.b16 %v833
        %v1466 = vunpack.c.l.b16 %v834
        %v1467 = vunpack.c.l.b16 %v835
        %v1468 = vunpack.c.h.b16 %v835
        %v1469 = vunpack.c.l.b16 %v836
        %v1470 = vunpack.c.h.b16 %v836
        %v1471 = vunpack.c.l.b16 %v837
        %v1472 = vunpack.c.h.b16 %v837
        %v1473 = vunpack.c.l.b16 %v838
        %v1474 = vunpack.c.h.b16 %v838
        %v1475 = vunpack.c.l.b16 %v839
        %v1476 = vunpack.c.l.b16 %v840
        %v1477 = vunpack.c.h.b16 %v840
        %v1478 = vunpack.c.l.b16 %v841
        %v1479 = vunpack.c.h.b16 %v841
        %v1480 = vunpack.c.l.b16 %v842
        %v1481 = vunpack.c.h.b16 %v842
        %v1482 = vunpack.c.l.b16 %v843
        %v1483 = vunpack.c.h.b16 %v843
        %v1484 = vunpack.c.l.b16 %v844
        %v1485 = vunpack.c.l.b16 %v845
        %v1486 = vunpack.c.h.b16 %v845
        %v1487 = vunpack.c.l.b16 %v846
        %v1488 = vunpack.c.h.b16 %v846
        %v1489 = vunpack.c.l.b16 %v847
        %v1490 = vunpack.c.h.b16 %v847
        %v1491 = vunpack.c.l.b16 %v848
        %v1492 = vunpack.c.h.b16 %v848
        %v1493 = vunpack.c.l.b16 %v849
        %v1494 = vunpack.c.l.b16 %v850
        %v1495 = vunpack.c.h.b16 %v850
        %v1496 = vunpack.c.l.b16 %v851
        %v1497 = vunpack.c.h.b16 %v851
        %v1498 = vunpack.c.l.b16 %v852
        %v1499 = vunpack.c.h.b16 %v852
        %v1500 = vunpack.c.l.b16 %v853
        %v1501 = vunpack.c.h.b16 %v853
        %v1502 = vunpack.c.l.b16 %v854
        %v1503 = vunpack.c.l.b16 %v855
        %v1504 = vunpack.c.h.b16 %v855
        %v1505 = vunpack.c.l.b16 %v856
        %v1506 = vunpack.c.h.b16 %v856
        %v1507 = vunpack.c.l.b16 %v857
        %v1508 = vunpack.c.h.b16 %v857
        %v1509 = vunpack.c.l.b16 %v858
        %v1510 = vunpack.c.h.b16 %v858
        %v1511 = vunpack.c.l.b16 %v859
        %v1512 = vunpack.c.l.b16 %v860
        %v1513 = vunpack.c.h.b16 %v860
        %v1514 = vunpack.c.l.b16 %v861
        %v1515 = vunpack.c.h.b16 %v861
        %v1516 = vunpack.c.l.b16 %v862
        %v1517 = vunpack.c.h.b16 %v862
        %v1518 = vunpack.c.l.b16 %v863
        %v1519 = vunpack.c.h.b16 %v863
        %v1520 = vunpack.c.l.b16 %v864
        %v1521 = vunpack.c.l.b16 %v865
        %v1522 = vunpack.c.h.b16 %v865
        %v1523 = vunpack.c.l.b16 %v866
        %v1524 = vunpack.c.h.b16 %v866
        %v1525 = vunpack.c.l.b16 %v867
        %v1526 = vunpack.c.h.b16 %v867
        %v1527 = vunpack.c.l.b16 %v868
        %v1528 = vunpack.c.h.b16 %v868
        %v1529 = vunpack.c.l.b16 %v869
        %v1530 = vunpack.c.l.b16 %v870
        %v1531 = vunpack.c.h.b16 %v870
        %v1532 = vunpack.c.l.b16 %v871
        %v1533 = vunpack.c.h.b16 %v871
        %v1534 = vunpack.c.l.b16 %v872
        %v1535 = vunpack.c.h.b16 %v872
        %v1536 = vunpack.c.l.b16 %v873
        %v1537 = vunpack.c.h.b16 %v873
        %v1538 = vunpack.c.l.b16 %v874
        %v1539 = vunpack.c.l.b16 %v875
        %v1540 = vunpack.c.h.b16 %v875
        %v1541 = vunpack.c.l.b16 %v876
        %v1542 = vunpack.c.h.b16 %v876
        %v1543 = vunpack.c.l.b16 %v877
        %v1544 = vunpack.c.h.b16 %v877
        %v1545 = vunpack.c.l.b16 %v878
        %v1546 = vunpack.c.h.b16 %v878
        %v1547 = vunpack.c.l.b16 %v879
        %v1548 = vunpack.c.l.b16 %v880
        %v1549 = vunpack.c.h.b16 %v880
        %v1550 = vunpack.c.l.b16 %v881
        %v1551 = vunpack.c.h.b16 %v881
        %v1552 = vunpack.c.l.b16 %v882
        %v1553 = vunpack.c.h.b16 %v882
        %v1554 = vunpack.c.l.b16 %v883
        %v1555 = vunpack.c.h.b16 %v883
        %v1556 = vunpack.c.l.b16 %v884
        %v1557 = vpack.c.b16 %v1134, %v1125
        %v1558 = vpack.c.b16 %v1135, %v1126
        %v1559 = vpack.c.b16 %v1136, %v1127
        %v1560 = vpack.c.b16 %v1137, %v1128
        %v1561 = vpack.c.b16 %v1138, %v1129
        %v1562 = vpack.c.b16 %v1139, %v1130
        %v1563 = vpack.c.b16 %v1140, %v1131
        %v1564 = vpack.c.b16 %v1141, %v1132
        %v1565 = vpack.c.b16 %v1142, %v1133
        %v1566 = vpack.c.b16 %v1152, %v1143
        %v1567 = vpack.c.b16 %v1153, %v1144
        %v1568 = vpack.c.b16 %v1154, %v1145
        %v1569 = vpack.c.b16 %v1155, %v1146
        %v1570 = vpack.c.b16 %v1156, %v1147
        %v1571 = vpack.c.b16 %v1157, %v1148
        %v1572 = vpack.c.b16 %v1158, %v1149
        %v1573 = vpack.c.b16 %v1159, %v1150
        %v1574 = vpack.c.b16 %v1160, %v1151
        %v1575 = vpack.c.b16 %v1170, %v1161
        %v1576 = vpack.c.b16 %v1171, %v1162
        %v1577 = vpack.c.b16 %v1172, %v1163
        %v1578 = vpack.c.b16 %v1173, %v1164
        %v1579 = vpack.c.b16 %v1174, %v1165
        %v1580 = vpack.c.b16 %v1175, %v1166
        %v1581 = vpack.c.b16 %v1176, %v1167
        %v1582 = vpack.c.b16 %v1177, %v1168
        %v1583 = vpack.c.b16 %v1178, %v1169
        %v1584 = vpack.c.b16 %v1188, %v1179
        %v1585 = vpack.c.b16 %v1189, %v1180
        %v1586 = vpack.c.b16 %v1190, %v1181
        %v1587 = vpack.c.b16 %v1191, %v1182
        %v1588 = vpack.c.b16 %v1192, %v1183
        %v1589 = vpack.c.b16 %v1193, %v1184
        %v1590 = vpack.c.b16 %v1194, %v1185
        %v1591 = vpack.c.b16 %v1195, %v1186
        %v1592 = vpack.c.b16 %v1196, %v1187
        %v1593 = vpack.c.b16 %v1206, %v1197
        %v1594 = vpack.c.b16 %v1207, %v1198
        %v1595 = vpack.c.b16 %v1208, %v1199
        %v1596 = vpack.c.b16 %v1209, %v1200
        %v1597 = vpack.c.b16 %v1210, %v1201
        %v1598 = vpack.c.b16 %v1211, %v1202
        %v1599 = vpack.c.b16 %v1212, %v1203
        %v1600 = vpack.c.b16 %v1213, %v1204
        %v1601 = vpack.c.b16 %v1214, %v1205
        %v1602 = vpack.c.b16 %v1224, %v1215
        %v1603 = vpack.c.b16 %v1225, %v1216
        %v1604 = vpack.c.b16 %v1226, %v1217
        %v1605 = vpack.c.b16 %v1227, %v1218
        %v1606 = vpack.c.b16 %v1228, %v1219
        %v1607 = vpack.c.b16 %v1229, %v1220
        %v1608 = vpack.c.b16 %v1230, %v1221
        %v1609 = vpack.c.b16 %v1231, %v1222
        %v1610 = vpack.c.b16 %v1232, %v1223
        %v1611 = vpack.c.b16 %v1242, %v1233
        %v1612 = vpack.c.b16 %v1243, %v1234
        %v1613 = vpack.c.b16 %v1244, %v1235
        %v1614 = vpack.c.b16 %v1245, %v1236
        %v1615 = vpack.c.b16 %v1246, %v1237
        %v1616 = vpack.c.b16 %v1247, %v1238
        %v1617 = vpack.c.b16 %v1248, %v1239
        %v1618 = vpack.c.b16 %v1249, %v1240
        %v1619 = vpack.c.b16 %v1250, %v1241
        %v1620 = vpack.c.b16 %v1260, %v1251
        %v1621 = vpack.c.b16 %v1261, %v1252
        %v1622 = vpack.c.b16 %v1262, %v1253
        %v1623 = vpack.c.b16 %v1263, %v1254
        %v1624 = vpack.c.b16 %v1264, %v1255
        %v1625 = vpack.c.b16 %v1265, %v1256
        %v1626 = vpack.c.b16 %v1266, %v1257
        %v1627 = vpack.c.b16 %v1267, %v1258
        %v1628 = vpack.c.b16 %v1268, %v1259
        %v1629 = vpack.c.b16 %v1278, %v1269
        %v1630 = vpack.c.b16 %v1279, %v1270
        %v1631 = vpack.c.b16 %v1280, %v1271
        %v1632 = vpack.c.b16 %v1281, %v1272
        %v1633 = vpack.c.b16 %v1282, %v1273
        %v1634 = vpack.c.b16 %v1283, %v1274
        %v1635 = vpack.c.b16 %v1284, %v1275
        %v1636 = vpack.c.b16 %v1285, %v1276
        %v1637 = vpack.c.b16 %v1286, %v1277
        %v1638 = vpack.c.b16 %v1296, %v1287
        %v1639 = vpack.c.b16 %v1297, %v1288
        %v1640 = vpack.c.b16 %v1298, %v1289
        %v1641 = vpack.c.b16 %v1299, %v1290
        %v1642 = vpack.c.b16 %v1300, %v1291
        %v1643 = vpack.c.b16 %v1301, %v1292
        %v1644 = vpack.c.b16 %v1302, %v1293
        %v1645 = vpack.c.b16 %v1303, %v1294
        %v1646 = vpack.c.b16 %v1304, %v1295
        %v1647 = vpack.c.b16 %v1314, %v1305
        %v1648 = vpack.c.b16 %v1315, %v1306
        %v1649 = vpack.c.b16 %v1316, %v1307
        %v1650 = vpack.c.b16 %v1317, %v1308
        %v1651 = vpack.c.b16 %v1318, %v1309
        %v1652 = vpack.c.b16 %v1319, %v1310
        %v1653 = vpack.c.b16 %v1320, %v1311
        %v1654 = vpack.c.b16 %v1321, %v1312
        %v1655 = vpack.c.b16 %v1322, %v1313
        %v1656 = vpack.c.b16 %v1332, %v1323
        %v1657 = vpack.c.b16 %v1333, %v1324
        %v1658 = vpack.c.b16 %v1334, %v1325
        %v1659 = vpack.c.b16 %v1335, %v1326
        %v1660 = vpack.c.b16 %v1336, %v1327
        %v1661 = vpack.c.b16 %v1337, %v1328
        %v1662 = vpack.c.b16 %v1338, %v1329
        %v1663 = vpack.c.b16 %v1339, %v1330
        %v1664 = vpack.c.b16 %v1340, %v1331
        %v1665 = vpack.c.b16 %v1350, %v1341
        %v1666 = vpack.c.b16 %v1351, %v1342
        %v1667 = vpack.c.b16 %v1352, %v1343
        %v1668 = vpack.c.b16 %v1353, %v1344
        %v1669 = vpack.c.b16 %v1354, %v1345
        %v1670 = vpack.c.b16 %v1355, %v1346
        %v1671 = vpack.c.b16 %v1356, %v1347
        %v1672 = vpack.c.b16 %v1357, %v1348
        %v1673 = vpack.c.b16 %v1358, %v1349
        %v1674 = vpack.c.b16 %v1368, %v1359
        %v1675 = vpack.c.b16 %v1369, %v1360
        %v1676 = vpack.c.b16 %v1370, %v1361
        %v1677 = vpack.c.b16 %v1371, %v1362
        %v1678 = vpack.c.b16 %v1372, %v1363
        %v1679 = vpack.c.b16 %v1373, %v1364
        %v1680 = vpack.c.b16 %v1374, %v1365
        %v1681 = vpack.c.b16 %v1375, %v1366
        %v1682 = vpack.c.b16 %v1376, %v1367
        %v1683 = vpack.c.b16 %v1386, %v1377
        %v1684 = vpack.c.b16 %v1387, %v1378
        %v1685 = vpack.c.b16 %v1388, %v1379
        %v1686 = vpack.c.b16 %v1389, %v1380
        %v1687 = vpack.c.b16 %v1390, %v1381
        %v1688 = vpack.c.b16 %v1391, %v1382
        %v1689 = vpack.c.b16 %v1392, %v1383
        %v1690 = vpack.c.b16 %v1393, %v1384
        %v1691 = vpack.c.b16 %v1394, %v1385
        %v1692 = vpack.c.b16 %v1404, %v1395
        %v1693 = vpack.c.b16 %v1405, %v1396
        %v1694 = vpack.c.b16 %v1406, %v1397
        %v1695 = vpack.c.b16 %v1407, %v1398
        %v1696 = vpack.c.b16 %v1408, %v1399
        %v1697 = vpack.c.b16 %v1409, %v1400
        %v1698 = vpack.c.b16 %v1410, %v1401
        %v1699 = vpack.c.b16 %v1411, %v1402
        %v1700 = vpack.c.b16 %v1412, %v1403
        %v1701 = vpack.c.b16 %v1422, %v1413
        %v1702 = vpack.c.b16 %v1423, %v1414
        %v1703 = vpack.c.b16 %v1424, %v1415
        %v1704 = vpack.c.b16 %v1425, %v1416
        %v1705 = vpack.c.b16 %v1426, %v1417
        %v1706 = vpack.c.b16 %v1427, %v1418
        %v1707 = vpack.c.b16 %v1428, %v1419
        %v1708 = vpack.c.b16 %v1429, %v1420
        %v1709 = vpack.c.b16 %v1430, %v1421
        %v1710 = vpack.c.b16 %v1440, %v1431
        %v1711 = vpack.c.b16 %v1441, %v1432
        %v1712 = vpack.c.b16 %v1442, %v1433
        %v1713 = vpack.c.b16 %v1443, %v1434
        %v1714 = vpack.c.b16 %v1444, %v1435
        %v1715 = vpack.c.b16 %v1445, %v1436
        %v1716 = vpack.c.b16 %v1446, %v1437
        %v1717 = vpack.c.b16 %v1447, %v1438
        %v1718 = vpack.c.b16 %v1448, %v1439
        %v1719 = vpack.c.b16 %v1458, %v1449
        %v1720 = vpack.c.b16 %v1459, %v1450
        %v1721 = vpack.c.b16 %v1460, %v1451
        %v1722 = vpack.c.b16 %v1461, %v1452
        %v1723 = vpack.c.b16 %v1462, %v1453
        %v1724 = vpack.c.b16 %v1463, %v1454
        %v1725 = vpack.c.b16 %v1464, %v1455
        %v1726 = vpack.c.b16 %v1465, %v1456
        %v1727 = vpack.c.b16 %v1466, %v1457
        %v1728 = vpack.c.b16 %v1476, %v1467
        %v1729 = vpack.c.b16 %v1477, %v1468
        %v1730 = vpack.c.b16 %v1478, %v1469
        %v1731 = vpack.c.b16 %v1479, %v1470
        %v1732 = vpack.c.b16 %v1480, %v1471
        %v1733 = vpack.c.b16 %v1481, %v1472
        %v1734 = vpack.c.b16 %v1482, %v1473
        %v1735 = vpack.c.b16 %v1483, %v1474
        %v1736 = vpack.c.b16 %v1484, %v1475
        %v1737 = vpack.c.b16 %v1494, %v1485
        %v1738 = vpack.c.b16 %v1495, %v1486
        %v1739 = vpack.c.b16 %v1496, %v1487
        %v1740 = vpack.c.b16 %v1497, %v1488
        %v1741 = vpack.c.b16 %v1498, %v1489
        %v1742 = vpack.c.b16 %v1499, %v1490
        %v1743 = vpack.c.b16 %v1500, %v1491
        %v1744 = vpack.c.b16 %v1501, %v1492
        %v1745 = vpack.c.b16 %v1502, %v1493
        %v1746 = vpack.c.b16 %v1512, %v1503
        %v1747 = vpack.c.b16 %v1513, %v1504
        %v1748 = vpack.c.b16 %v1514, %v1505
        %v1749 = vpack.c.b16 %v1515, %v1506
        %v1750 = vpack.c.b16 %v1516, %v1507
        %v1751 = vpack.c.b16 %v1517, %v1508
        %v1752 = vpack.c.b16 %v1518, %v1509
        %v1753 = vpack.c.b16 %v1519, %v1510
        %v1754 = vpack.c.b16 %v1520, %v1511
        %v1755 = vpack.c.b16 %v1530, %v1521
        %v1756 = vpack.c.b16 %v1531, %v1522
        %v1757 = vpack.c.b16 %v1532, %v1523
        %v1758 = vpack.c.b16 %v1533, %v1524
        %v1759 = vpack.c.b16 %v1534, %v1525
        %v1760 = vpack.c.b16 %v1535, %v1526
        %v1761 = vpack.c.b16 %v1536, %v1527
        %v1762 = vpack.c.b16 %v1537, %v1528
        %v1763 = vpack.c.b16 %v1538, %v1529
        %v1764 = vpack.c.b16 %v1548, %v1539
        %v1765 = vpack.c.b16 %v1549, %v1540
        %v1766 = vpack.c.b16 %v1550, %v1541
        %v1767 = vpack.c.b16 %v1551, %v1542
        %v1768 = vpack.c.b16 %v1552, %v1543
        %v1769 = vpack.c.b16 %v1553, %v1544
        %v1770 = vpack.c.b16 %v1554, %v1545
        %v1771 = vpack.c.b16 %v1555, %v1546
        %v1772 = vpack.c.b16 %v1556, %v1547
        %1989 = vmatprep.subr.bf16.mxu0 %v1621
        %1990 = vmatpush1.bf16.msra.mxu0 %v1620
        %1991 = vmatprep.subr.bf16.mxu0 %v1612
        %1992 = vmatpush1.bf16.msra.mxu0 %v1611
        %1993 = vmatprep.subr.bf16.mxu0 %v1603
        %1994 = vmatpush1.bf16.msra.mxu0 %v1602
        %1995 = vmatprep.subr.bf16.mxu0 %v1594
        %1996 = vmatpush1.bf16.msra.mxu0 %v1593
        %1997 = vmatprep.subr.bf16.mxu0 %v1585
        %1998 = vmatpush1.bf16.msra.mxu0 %v1584
        %1999 = vmatprep.subr.bf16.mxu0 %v1576
        %2000 = vmatpush1.bf16.msra.mxu0 %v1575
        %2001 = vmatprep.subr.bf16.mxu0 %v1567
        %2002 = vmatpush1.bf16.msra.mxu0 %v1566
        %2003 = vmatprep.subr.bf16.mxu0 %v1558
        %2004 = vmatpush1.bf16.msra.mxu0 %v1557
        %2005 = vmatprep.subr.bf16.mxu0 %v1693
        %2006 = vmatpush2.bf16.msra.mxu0 %v1692
        %2007 = vmatprep.subr.bf16.mxu0 %v1684
        %2008 = vmatpush2.bf16.msra.mxu0 %v1683
        %2009 = vmatprep.subr.bf16.mxu0 %v1675
        %2010 = vmatpush2.bf16.msra.mxu0 %v1674
        %2011 = vmatprep.subr.bf16.mxu0 %v1666
        %2012 = vmatpush2.bf16.msra.mxu0 %v1665
        %2013 = vmatprep.subr.bf16.mxu0 %v1657
        %2014 = vmatpush2.bf16.msra.mxu0 %v1656
        %2015 = vmatprep.subr.bf16.mxu0 %v1648
        %2016 = vmatpush2.bf16.msra.mxu0 %v1647
        %2017 = vmatprep.subr.bf16.mxu0 %v1639
        %2018 = vmatpush2.bf16.msra.mxu0 %v1638
        %2019 = vmatprep.subr.bf16.mxu0 %v1630
        %2020 = vmatpush2.bf16.msra.mxu0 %v1629
        %2021 = vmatprep.mubr.bf16.mxu0 %v643
        %2022 = vmatmul.mubr.bf16.gmra.mxu0 %v642
        %v2023 = vpop.f32.mrf.mxu0
        %v2024 = vadd.f32 0.0, %v2023
        %v2025 = vpop.f32.mrf.mxu0
        %v2026 = vadd.f32 0.0, %v2025
        %v2027 = vpop.f32.mrf.mxu0
        %v2028 = vpop.f32.mrf.mxu0
        %2029 = vdwg.mxu0
        %2030 = vmatprep.subr.bf16.mxu0 %v1765
        %2031 = vmatpush1.bf16.msra.mxu0 %v1764
        %2032 = vmatprep.subr.bf16.mxu0 %v1756
        %2033 = vmatpush1.bf16.msra.mxu0 %v1755
        %2034 = vmatprep.subr.bf16.mxu0 %v1747
        %2035 = vmatpush1.bf16.msra.mxu0 %v1746
        %2036 = vmatprep.subr.bf16.mxu0 %v1738
        %2037 = vmatpush1.bf16.msra.mxu0 %v1737
        %2038 = vmatprep.subr.bf16.mxu0 %v1729
        %2039 = vmatpush1.bf16.msra.mxu0 %v1728
        %2040 = vmatprep.subr.bf16.mxu0 %v1720
        %2041 = vmatpush1.bf16.msra.mxu0 %v1719
        %2042 = vmatprep.subr.bf16.mxu0 %v1711
        %2043 = vmatpush1.bf16.msra.mxu0 %v1710
        %2044 = vmatprep.subr.bf16.mxu0 %v1702
        %2045 = vmatpush1.bf16.msra.mxu0 %v1701
        %2046 = vmatprep.subr.bf16.mxu0 0
        %2047 = vmatpush2.bf16.msra.mxu0 0
        %2048 = vmatprep.subr.bf16.mxu0 0
        %2049 = vmatpush2.bf16.msra.mxu0 0
        %2050 = vmatprep.subr.bf16.mxu0 0
        %2051 = vmatpush2.bf16.msra.mxu0 0
        %2052 = vmatprep.subr.bf16.mxu0 0
        %2053 = vmatpush2.bf16.msra.mxu0 0
        %2054 = vmatprep.subr.bf16.mxu0 0
        %2055 = vmatpush2.bf16.msra.mxu0 0
        %2056 = vmatprep.subr.bf16.mxu0 0
        %2057 = vmatpush2.bf16.msra.mxu0 0
        %2058 = vmatprep.subr.bf16.mxu0 0
        %2059 = vmatpush2.bf16.msra.mxu0 0
        %2060 = vmatprep.subr.bf16.mxu0 0
        %2061 = vmatpush2.bf16.msra.mxu0 0
        %2062 = vmatprep.mubr.bf16.mxu0 0
        %2063 = vmatmul.mubr.bf16.gmra.mxu0 %v644
        %v2064 = vpop.f32.mrf.mxu0
        %v2065 = vadd.f32 %v2024, %v2064
        %v2066 = vpop.f32.mrf.mxu0
        %v2067 = vadd.f32 %v2026, %v2066
        %v2068 = vpop.f32.mrf.mxu0
        %v2069 = vpop.f32.mrf.mxu0
        %2070 = vdwg.mxu0
        %2071 = vmatprep.subr.bf16.mxu0 %v1623
        %2072 = vmatpush1.bf16.msra.mxu0 %v1622
        %2073 = vmatprep.subr.bf16.mxu0 %v1614
        %2074 = vmatpush1.bf16.msra.mxu0 %v1613
        %2075 = vmatprep.subr.bf16.mxu0 %v1605
        %2076 = vmatpush1.bf16.msra.mxu0 %v1604
        %2077 = vmatprep.subr.bf16.mxu0 %v1596
        %2078 = vmatpush1.bf16.msra.mxu0 %v1595
        %2079 = vmatprep.subr.bf16.mxu0 %v1587
        %2080 = vmatpush1.bf16.msra.mxu0 %v1586
        %2081 = vmatprep.subr.bf16.mxu0 %v1578
        %2082 = vmatpush1.bf16.msra.mxu0 %v1577
        %2083 = vmatprep.subr.bf16.mxu0 %v1569
        %2084 = vmatpush1.bf16.msra.mxu0 %v1568
        %2085 = vmatprep.subr.bf16.mxu0 %v1560
        %2086 = vmatpush1.bf16.msra.mxu0 %v1559
        %2087 = vmatprep.subr.bf16.mxu0 %v1695
        %2088 = vmatpush2.bf16.msra.mxu0 %v1694
        %2089 = vmatprep.subr.bf16.mxu0 %v1686
        %2090 = vmatpush2.bf16.msra.mxu0 %v1685
        %2091 = vmatprep.subr.bf16.mxu0 %v1677
        %2092 = vmatpush2.bf16.msra.mxu0 %v1676
        %2093 = vmatprep.subr.bf16.mxu0 %v1668
        %2094 = vmatpush2.bf16.msra.mxu0 %v1667
        %2095 = vmatprep.subr.bf16.mxu0 %v1659
        %2096 = vmatpush2.bf16.msra.mxu0 %v1658
        %2097 = vmatprep.subr.bf16.mxu0 %v1650
        %2098 = vmatpush2.bf16.msra.mxu0 %v1649
        %2099 = vmatprep.subr.bf16.mxu0 %v1641
        %2100 = vmatpush2.bf16.msra.mxu0 %v1640
        %2101 = vmatprep.subr.bf16.mxu0 %v1632
        %2102 = vmatpush2.bf16.msra.mxu0 %v1631
        %2103 = vmatprep.mubr.bf16.mxu0 %v643
        %2104 = vmatmul.mubr.bf16.gmra.mxu0 %v642
        %v2105 = vpop.f32.mrf.mxu0
        %v2106 = vadd.f32 0.0, %v2105
        %v2107 = vpop.f32.mrf.mxu0
        %v2108 = vadd.f32 0.0, %v2107
        %v2109 = vpop.f32.mrf.mxu0
        %v2110 = vpop.f32.mrf.mxu0
        %2111 = vdwg.mxu0
        %2112 = vmatprep.subr.bf16.mxu0 %v1767
        %2113 = vmatpush1.bf16.msra.mxu0 %v1766
        %2114 = vmatprep.subr.bf16.mxu0 %v1758
        %2115 = vmatpush1.bf16.msra.mxu0 %v1757
        %2116 = vmatprep.subr.bf16.mxu0 %v1749
        %2117 = vmatpush1.bf16.msra.mxu0 %v1748
        %2118 = vmatprep.subr.bf16.mxu0 %v1740
        %2119 = vmatpush1.bf16.msra.mxu0 %v1739
        %2120 = vmatprep.subr.bf16.mxu0 %v1731
        %2121 = vmatpush1.bf16.msra.mxu0 %v1730
        %2122 = vmatprep.subr.bf16.mxu0 %v1722
        %2123 = vmatpush1.bf16.msra.mxu0 %v1721
        %2124 = vmatprep.subr.bf16.mxu0 %v1713
        %2125 = vmatpush1.bf16.msra.mxu0 %v1712
        %2126 = vmatprep.subr.bf16.mxu0 %v1704
        %2127 = vmatpush1.bf16.msra.mxu0 %v1703
        %2128 = vmatprep.subr.bf16.mxu0 0
        %2129 = vmatpush2.bf16.msra.mxu0 0
        %2130 = vmatprep.subr.bf16.mxu0 0
        %2131 = vmatpush2.bf16.msra.mxu0 0
        %2132 = vmatprep.subr.bf16.mxu0 0
        %2133 = vmatpush2.bf16.msra.mxu0 0
        %2134 = vmatprep.subr.bf16.mxu0 0
        %2135 = vmatpush2.bf16.msra.mxu0 0
        %2136 = vmatprep.subr.bf16.mxu0 0
        %2137 = vmatpush2.bf16.msra.mxu0 0
        %2138 = vmatprep.subr.bf16.mxu0 0
        %2139 = vmatpush2.bf16.msra.mxu0 0
        %2140 = vmatprep.subr.bf16.mxu0 0
        %2141 = vmatpush2.bf16.msra.mxu0 0
        %2142 = vmatprep.subr.bf16.mxu0 0
        %2143 = vmatpush2.bf16.msra.mxu0 0
        %2144 = vmatprep.mubr.bf16.mxu0 0
        %2145 = vmatmul.mubr.bf16.gmra.mxu0 %v644
        %v2146 = vpop.f32.mrf.mxu0
        %v2147 = vadd.f32 %v2106, %v2146
        %v2148 = vpop.f32.mrf.mxu0
        %v2149 = vadd.f32 %v2108, %v2148
        %v2150 = vpop.f32.mrf.mxu0
        %v2151 = vpop.f32.mrf.mxu0
        %2152 = vdwg.mxu0
        %2153 = vmatprep.subr.bf16.mxu0 %v1625
        %2154 = vmatpush1.bf16.msra.mxu0 %v1624
        %2155 = vmatprep.subr.bf16.mxu0 %v1616
        %2156 = vmatpush1.bf16.msra.mxu0 %v1615
        %2157 = vmatprep.subr.bf16.mxu0 %v1607
        %2158 = vmatpush1.bf16.msra.mxu0 %v1606
        %2159 = vmatprep.subr.bf16.mxu0 %v1598
        %2160 = vmatpush1.bf16.msra.mxu0 %v1597
        %2161 = vmatprep.subr.bf16.mxu0 %v1589
        %2162 = vmatpush1.bf16.msra.mxu0 %v1588
        %2163 = vmatprep.subr.bf16.mxu0 %v1580
        %2164 = vmatpush1.bf16.msra.mxu0 %v1579
        %2165 = vmatprep.subr.bf16.mxu0 %v1571
        %2166 = vmatpush1.bf16.msra.mxu0 %v1570
        %2167 = vmatprep.subr.bf16.mxu0 %v1562
        %2168 = vmatpush1.bf16.msra.mxu0 %v1561
        %2169 = vmatprep.subr.bf16.mxu0 %v1697
        %2170 = vmatpush2.bf16.msra.mxu0 %v1696
        %2171 = vmatprep.subr.bf16.mxu0 %v1688
        %2172 = vmatpush2.bf16.msra.mxu0 %v1687
        %2173 = vmatprep.subr.bf16.mxu0 %v1679
        %2174 = vmatpush2.bf16.msra.mxu0 %v1678
        %2175 = vmatprep.subr.bf16.mxu0 %v1670
        %2176 = vmatpush2.bf16.msra.mxu0 %v1669
        %2177 = vmatprep.subr.bf16.mxu0 %v1661
        %2178 = vmatpush2.bf16.msra.mxu0 %v1660
        %2179 = vmatprep.subr.bf16.mxu0 %v1652
        %2180 = vmatpush2.bf16.msra.mxu0 %v1651
        %2181 = vmatprep.subr.bf16.mxu0 %v1643
        %2182 = vmatpush2.bf16.msra.mxu0 %v1642
        %2183 = vmatprep.subr.bf16.mxu0 %v1634
        %2184 = vmatpush2.bf16.msra.mxu0 %v1633
        %2185 = vmatprep.mubr.bf16.mxu0 %v643
        %2186 = vmatmul.mubr.bf16.gmra.mxu0 %v642
        %v2187 = vpop.f32.mrf.mxu0
        %v2188 = vadd.f32 0.0, %v2187
        %v2189 = vpop.f32.mrf.mxu0
        %v2190 = vadd.f32 0.0, %v2189
        %v2191 = vpop.f32.mrf.mxu0
        %v2192 = vpop.f32.mrf.mxu0
        %2193 = vdwg.mxu0
        %2194 = vmatprep.subr.bf16.mxu0 %v1769
        %2195 = vmatpush1.bf16.msra.mxu0 %v1768
        %2196 = vmatprep.subr.bf16.mxu0 %v1760
        %2197 = vmatpush1.bf16.msra.mxu0 %v1759
        %2198 = vmatprep.subr.bf16.mxu0 %v1751
        %2199 = vmatpush1.bf16.msra.mxu0 %v1750
        %2200 = vmatprep.subr.bf16.mxu0 %v1742
        %2201 = vmatpush1.bf16.msra.mxu0 %v1741
        %2202 = vmatprep.subr.bf16.mxu0 %v1733
        %2203 = vmatpush1.bf16.msra.mxu0 %v1732
        %2204 = vmatprep.subr.bf16.mxu0 %v1724
        %2205 = vmatpush1.bf16.msra.mxu0 %v1723
        %2206 = vmatprep.subr.bf16.mxu0 %v1715
        %2207 = vmatpush1.bf16.msra.mxu0 %v1714
        %2208 = vmatprep.subr.bf16.mxu0 %v1706
        %2209 = vmatpush1.bf16.msra.mxu0 %v1705
        %2210 = vmatprep.subr.bf16.mxu0 0
        %2211 = vmatpush2.bf16.msra.mxu0 0
        %2212 = vmatprep.subr.bf16.mxu0 0
        %2213 = vmatpush2.bf16.msra.mxu0 0
        %2214 = vmatprep.subr.bf16.mxu0 0
        %2215 = vmatpush2.bf16.msra.mxu0 0
        %2216 = vmatprep.subr.bf16.mxu0 0
        %2217 = vmatpush2.bf16.msra.mxu0 0
        %2218 = vmatprep.subr.bf16.mxu0 0
        %2219 = vmatpush2.bf16.msra.mxu0 0
        %2220 = vmatprep.subr.bf16.mxu0 0
        %2221 = vmatpush2.bf16.msra.mxu0 0
        %2222 = vmatprep.subr.bf16.mxu0 0
        %2223 = vmatpush2.bf16.msra.mxu0 0
        %2224 = vmatprep.subr.bf16.mxu0 0
        %2225 = vmatpush2.bf16.msra.mxu0 0
        %2226 = vmatprep.mubr.bf16.mxu0 0
        %2227 = vmatmul.mubr.bf16.gmra.mxu0 %v644
        %v2228 = vpop.f32.mrf.mxu0
        %v2229 = vadd.f32 %v2188, %v2228
        %v2230 = vpop.f32.mrf.mxu0
        %v2231 = vadd.f32 %v2190, %v2230
        %v2232 = vpop.f32.mrf.mxu0
        %v2233 = vpop.f32.mrf.mxu0
        %2234 = vdwg.mxu0
        %2235 = vmatprep.subr.bf16.mxu0 %v1627
        %2236 = vmatpush1.bf16.msra.mxu0 %v1626
        %2237 = vmatprep.subr.bf16.mxu0 %v1618
        %2238 = vmatpush1.bf16.msra.mxu0 %v1617
        %2239 = vmatprep.subr.bf16.mxu0 %v1609
        %2240 = vmatpush1.bf16.msra.mxu0 %v1608
        %2241 = vmatprep.subr.bf16.mxu0 %v1600
        %2242 = vmatpush1.bf16.msra.mxu0 %v1599
        %2243 = vmatprep.subr.bf16.mxu0 %v1591
        %2244 = vmatpush1.bf16.msra.mxu0 %v1590
        %2245 = vmatprep.subr.bf16.mxu0 %v1582
        %2246 = vmatpush1.bf16.msra.mxu0 %v1581
        %2247 = vmatprep.subr.bf16.mxu0 %v1573
        %2248 = vmatpush1.bf16.msra.mxu0 %v1572
        %2249 = vmatprep.subr.bf16.mxu0 %v1564
        %2250 = vmatpush1.bf16.msra.mxu0 %v1563
        %2251 = vmatprep.subr.bf16.mxu0 %v1699
        %2252 = vmatpush2.bf16.msra.mxu0 %v1698
        %2253 = vmatprep.subr.bf16.mxu0 %v1690
        %2254 = vmatpush2.bf16.msra.mxu0 %v1689
        %2255 = vmatprep.subr.bf16.mxu0 %v1681
        %2256 = vmatpush2.bf16.msra.mxu0 %v1680
        %2257 = vmatprep.subr.bf16.mxu0 %v1672
        %2258 = vmatpush2.bf16.msra.mxu0 %v1671
        %2259 = vmatprep.subr.bf16.mxu0 %v1663
        %2260 = vmatpush2.bf16.msra.mxu0 %v1662
        %2261 = vmatprep.subr.bf16.mxu0 %v1654
        %2262 = vmatpush2.bf16.msra.mxu0 %v1653
        %2263 = vmatprep.subr.bf16.mxu0 %v1645
        %2264 = vmatpush2.bf16.msra.mxu0 %v1644
        %2265 = vmatprep.subr.bf16.mxu0 %v1636
        %2266 = vmatpush2.bf16.msra.mxu0 %v1635
        %2267 = vmatprep.mubr.bf16.mxu0 %v643
        %2268 = vmatmul.mubr.bf16.gmra.mxu0 %v642
        %v2269 = vpop.f32.mrf.mxu0
        %v2270 = vadd.f32 0.0, %v2269
        %v2271 = vpop.f32.mrf.mxu0
        %v2272 = vadd.f32 0.0, %v2271
        %v2273 = vpop.f32.mrf.mxu0
        %v2274 = vpop.f32.mrf.mxu0
        %2275 = vdwg.mxu0
        %2276 = vmatprep.subr.bf16.mxu0 %v1771
        %2277 = vmatpush1.bf16.msra.mxu0 %v1770
        %2278 = vmatprep.subr.bf16.mxu0 %v1762
        %2279 = vmatpush1.bf16.msra.mxu0 %v1761
        %2280 = vmatprep.subr.bf16.mxu0 %v1753
        %2281 = vmatpush1.bf16.msra.mxu0 %v1752
        %2282 = vmatprep.subr.bf16.mxu0 %v1744
        %2283 = vmatpush1.bf16.msra.mxu0 %v1743
        %2284 = vmatprep.subr.bf16.mxu0 %v1735
        %2285 = vmatpush1.bf16.msra.mxu0 %v1734
        %2286 = vmatprep.subr.bf16.mxu0 %v1726
        %2287 = vmatpush1.bf16.msra.mxu0 %v1725
        %2288 = vmatprep.subr.bf16.mxu0 %v1717
        %2289 = vmatpush1.bf16.msra.mxu0 %v1716
        %2290 = vmatprep.subr.bf16.mxu0 %v1708
        %2291 = vmatpush1.bf16.msra.mxu0 %v1707
        %2292 = vmatprep.subr.bf16.mxu0 0
        %2293 = vmatpush2.bf16.msra.mxu0 0
        %2294 = vmatprep.subr.bf16.mxu0 0
        %2295 = vmatpush2.bf16.msra.mxu0 0
        %2296 = vmatprep.subr.bf16.mxu0 0
        %2297 = vmatpush2.bf16.msra.mxu0 0
        %2298 = vmatprep.subr.bf16.mxu0 0
        %2299 = vmatpush2.bf16.msra.mxu0 0
        %2300 = vmatprep.subr.bf16.mxu0 0
        %2301 = vmatpush2.bf16.msra.mxu0 0
        %2302 = vmatprep.subr.bf16.mxu0 0
        %2303 = vmatpush2.bf16.msra.mxu0 0
        %2304 = vmatprep.subr.bf16.mxu0 0
        %2305 = vmatpush2.bf16.msra.mxu0 0
        %2306 = vmatprep.subr.bf16.mxu0 0
        %2307 = vmatpush2.bf16.msra.mxu0 0
        %2308 = vmatprep.mubr.bf16.mxu0 0
        %2309 = vmatmul.mubr.bf16.gmra.mxu0 %v644
        %v2310 = vpop.f32.mrf.mxu0
        %v2311 = vadd.f32 %v2270, %v2310
        %v2312 = vpop.f32.mrf.mxu0
        %v2313 = vadd.f32 %v2272, %v2312
        %v2314 = vpop.f32.mrf.mxu0
        %v2315 = vpop.f32.mrf.mxu0
        %2316 = vdwg.mxu0
        %2317 = vmatprep.subr.bf16.mxu0 0
        %2318 = vmatpush1.bf16.msra.mxu0 %v1628
        %2319 = vmatprep.subr.bf16.mxu0 0
        %2320 = vmatpush1.bf16.msra.mxu0 %v1619
        %2321 = vmatprep.subr.bf16.mxu0 0
        %2322 = vmatpush1.bf16.msra.mxu0 %v1610
        %2323 = vmatprep.subr.bf16.mxu0 0
        %2324 = vmatpush1.bf16.msra.mxu0 %v1601
        %2325 = vmatprep.subr.bf16.mxu0 0
        %2326 = vmatpush1.bf16.msra.mxu0 %v1592
        %2327 = vmatprep.subr.bf16.mxu0 0
        %2328 = vmatpush1.bf16.msra.mxu0 %v1583
        %2329 = vmatprep.subr.bf16.mxu0 0
        %2330 = vmatpush1.bf16.msra.mxu0 %v1574
        %2331 = vmatprep.subr.bf16.mxu0 0
        %2332 = vmatpush1.bf16.msra.mxu0 %v1565
        %2333 = vmatprep.subr.bf16.mxu0 0
        %2334 = vmatpush2.bf16.msra.mxu0 %v1700
        %2335 = vmatprep.subr.bf16.mxu0 0
        %2336 = vmatpush2.bf16.msra.mxu0 %v1691
        %2337 = vmatprep.subr.bf16.mxu0 0
        %2338 = vmatpush2.bf16.msra.mxu0 %v1682
        %2339 = vmatprep.subr.bf16.mxu0 0
        %2340 = vmatpush2.bf16.msra.mxu0 %v1673
        %2341 = vmatprep.subr.bf16.mxu0 0
        %2342 = vmatpush2.bf16.msra.mxu0 %v1664
        %2343 = vmatprep.subr.bf16.mxu0 0
        %2344 = vmatpush2.bf16.msra.mxu0 %v1655
        %2345 = vmatprep.subr.bf16.mxu0 0
        %2346 = vmatpush2.bf16.msra.mxu0 %v1646
        %2347 = vmatprep.subr.bf16.mxu0 0
        %2348 = vmatpush2.bf16.msra.mxu0 %v1637
        %2349 = vmatprep.mubr.bf16.mxu0 %v643
        %2350 = vmatmul.mubr.bf16.gmra.mxu0 %v642
        %v2351 = vpop.f32.mrf.mxu0
        %v2352 = vadd.f32 0.0, %v2351
        %v2353 = vpop.f32.mrf.mxu0
        %v2354 = vpop.f32.mrf.mxu0
        %v2355 = vpop.f32.mrf.mxu0
        %2356 = vdwg.mxu0
        %2357 = vmatprep.subr.bf16.mxu0 0
        %2358 = vmatpush1.bf16.msra.mxu0 %v1772
        %2359 = vmatprep.subr.bf16.mxu0 0
        %2360 = vmatpush1.bf16.msra.mxu0 %v1763
        %2361 = vmatprep.subr.bf16.mxu0 0
        %2362 = vmatpush1.bf16.msra.mxu0 %v1754
        %2363 = vmatprep.subr.bf16.mxu0 0
        %2364 = vmatpush1.bf16.msra.mxu0 %v1745
        %2365 = vmatprep.subr.bf16.mxu0 0
        %2366 = vmatpush1.bf16.msra.mxu0 %v1736
        %2367 = vmatprep.subr.bf16.mxu0 0
        %2368 = vmatpush1.bf16.msra.mxu0 %v1727
        %2369 = vmatprep.subr.bf16.mxu0 0
        %2370 = vmatpush1.bf16.msra.mxu0 %v1718
        %2371 = vmatprep.subr.bf16.mxu0 0
        %2372 = vmatpush1.bf16.msra.mxu0 %v1709
        %2373 = vmatprep.subr.bf16.mxu0 0
        %2374 = vmatpush2.bf16.msra.mxu0 0
        %2375 = vmatprep.subr.bf16.mxu0 0
        %2376 = vmatpush2.bf16.msra.mxu0 0
        %2377 = vmatprep.subr.bf16.mxu0 0
        %2378 = vmatpush2.bf16.msra.mxu0 0
        %2379 = vmatprep.subr.bf16.mxu0 0
        %2380 = vmatpush2.bf16.msra.mxu0 0
        %2381 = vmatprep.subr.bf16.mxu0 0
        %2382 = vmatpush2.bf16.msra.mxu0 0
        %2383 = vmatprep.subr.bf16.mxu0 0
        %2384 = vmatpush2.bf16.msra.mxu0 0
        %2385 = vmatprep.subr.bf16.mxu0 0
        %2386 = vmatpush2.bf16.msra.mxu0 0
        %2387 = vmatprep.subr.bf16.mxu0 0
        %2388 = vmatpush2.bf16.msra.mxu0 0
        %2389 = vmatprep.mubr.bf16.mxu0 0
        %2390 = vmatmul.mubr.bf16.gmra.mxu0 %v644
        %v2391 = vpop.f32.mrf.mxu0
        %v2392 = vadd.f32 %v2352, %v2391
        %v2393 = vpop.f32.mrf.mxu0
        %v2394 = vpop.f32.mrf.mxu0
        %v2395 = vpop.f32.mrf.mxu0
        %2396 = vdwg.mxu0
        %v2397 = vlaneseq
        %v2398 = vshrl.u32 %v2397, 7
        %v2399 = vlaneseq
        %v2400 = vand.u32 %v2399, 127
        %vm2401 = vcmp.le.s32.totalorder %v2400, %v2398
        %v2402 = vpack.c.bf16 %v2065, %v2065
        %v2403 = vpack.c.bf16 %v2149, %v2149
        %vm2404 = vcmask 523264
        %v2406 = vsel %vm2404, %v2402, 0
        %v2409 = vsel %vm2404, %v2403, 0
        %2411 = vmatprep.subr.bf16.mxu0 0
        %2412 = vmatpush1.bf16.xpose.msra.mxu0 0
        %2413 = vmatprep.subr.bf16.mxu0 0
        %2414 = vmatpush1.bf16.xpose.msra.mxu0 0
        %2415 = vmatprep.subr.bf16.mxu0 0
        %2416 = vmatpush1.bf16.xpose.msra.mxu0 0
        %2417 = vmatprep.subr.bf16.mxu0 0
        %2418 = vmatpush1.bf16.xpose.msra.mxu0 0
        %2419 = vmatprep.subr.bf16.mxu0 0
        %2420 = vmatpush1.bf16.xpose.msra.mxu0 0
        %2421 = vmatprep.subr.bf16.mxu0 0
        %2422 = vmatpush1.bf16.xpose.msra.mxu0 0
        %2423 = vmatprep.subr.bf16.mxu0 0
        %2424 = vmatpush1.bf16.xpose.msra.mxu0 0
        %2425 = vmatprep.subr.bf16.mxu0 0
        %2426 = vmatpush1.bf16.xpose.msra.mxu0 %v2409
        %2427 = vmatprep.subr.bf16.mxu0 0
        %2428 = vmatpush2.bf16.xpose.msra.mxu0 0
        %2429 = vmatprep.subr.bf16.mxu0 0
        %2430 = vmatpush2.bf16.xpose.msra.mxu0 0
        %2431 = vmatprep.subr.bf16.mxu0 0
        %2432 = vmatpush2.bf16.xpose.msra.mxu0 0
        %2433 = vmatprep.subr.bf16.mxu0 0
        %2434 = vmatpush2.bf16.xpose.msra.mxu0 0
        %2435 = vmatprep.subr.bf16.mxu0 0
        %2436 = vmatpush2.bf16.xpose.msra.mxu0 0
        %2437 = vmatprep.subr.bf16.mxu0 0
        %2438 = vmatpush2.bf16.xpose.msra.mxu0 0
        %2439 = vmatprep.subr.bf16.mxu0 0
        %2440 = vmatpush2.bf16.xpose.msra.mxu0 0
        %2441 = vmatprep.subr.bf16.mxu0 0
        %2442 = vmatpush2.bf16.xpose.msra.mxu0 0
        %2443 = vmatprep.mubr.bf16.mxu0 0
        %2444 = vmatmul.mubr.bf16.gmra.mxu0 %v2406
        %v2445 = vpop.f32.mrf.mxu0
        %v2446 = vadd.f32 0.0, %v2445
        %v2447 = vpop.f32.mrf.mxu0
        %v2448 = vpop.f32.mrf.mxu0
        %v2449 = vpop.f32.mrf.mxu0
        %2450 = vdwg.mxu0
        %v2451 = vmul.f32 %v2446, 0.05103104
        %v2452 = vsel %vm2401, %v2451, -1e+30
        %vm2453 = vcmask 64512
        %v2454 = vsel %vm2453, %v2452, -inf
        %2455 = vmax.xlane.f32.xlu0 %v2454
        %v2456 = vpop.xlane.xlu0 %2455
        %v2457 = vsub.f32 %v2452, %v2456
        %v2458 = vmul.f32 %v2457, 1.442695
        %v2459 = vpow.pop %v2458
        %v2460 = vsel %vm2453, %v2459, 0.0
        %2461 = vadd.xlane.f32.xlu0 %v2460
        %v2462 = vpop.xlane.xlu0 %2461
        %v2463 = vrcp.pop %v2462
        %v2464 = vmul.f32 %v2459, %v2463
        %v2465 = vpack.c.bf16 %v2464, %v2464
        %v2466 = vpack.c.bf16 %v2311, %v2311
        %v2468 = vsel %vm2453, %v2465, 0
        %vm2470 = vcmask 1043456
        %v2472 = vsel %vm2470, %v2466, 0
        %2474 = vmatprep.subr.bf16.mxu0 0
        %2475 = vmatpush1.bf16.msra.mxu0 0
        %2476 = vmatprep.subr.bf16.mxu0 0
        %2477 = vmatpush1.bf16.msra.mxu0 0
        %2478 = vmatprep.subr.bf16.mxu0 0
        %2479 = vmatpush1.bf16.msra.mxu0 0
        %2480 = vmatprep.subr.bf16.mxu0 0
        %2481 = vmatpush1.bf16.msra.mxu0 0
        %2482 = vmatprep.subr.bf16.mxu0 0
        %2483 = vmatpush1.bf16.msra.mxu0 0
        %2484 = vmatprep.subr.bf16.mxu0 0
        %2485 = vmatpush1.bf16.msra.mxu0 0
        %2486 = vmatprep.subr.bf16.mxu0 0
        %2487 = vmatpush1.bf16.msra.mxu0 0
        %2488 = vmatprep.subr.bf16.mxu0 0
        %2489 = vmatpush1.bf16.msra.mxu0 %v2472
        %2490 = vmatprep.subr.bf16.mxu0 0
        %2491 = vmatpush2.bf16.msra.mxu0 0
        %2492 = vmatprep.subr.bf16.mxu0 0
        %2493 = vmatpush2.bf16.msra.mxu0 0
        %2494 = vmatprep.subr.bf16.mxu0 0
        %2495 = vmatpush2.bf16.msra.mxu0 0
        %2496 = vmatprep.subr.bf16.mxu0 0
        %2497 = vmatpush2.bf16.msra.mxu0 0
        %2498 = vmatprep.subr.bf16.mxu0 0
        %2499 = vmatpush2.bf16.msra.mxu0 0
        %2500 = vmatprep.subr.bf16.mxu0 0
        %2501 = vmatpush2.bf16.msra.mxu0 0
        %2502 = vmatprep.subr.bf16.mxu0 0
        %2503 = vmatpush2.bf16.msra.mxu0 0
        %2504 = vmatprep.subr.bf16.mxu0 0
        %2505 = vmatpush2.bf16.msra.mxu0 0
        %2506 = vmatprep.mubr.bf16.mxu0 0
        %2507 = vmatmul.mubr.bf16.gmra.mxu0 %v2468
        %v2508 = vpop.f32.mrf.mxu0
        %v2509 = vadd.f32 0.0, %v2508
        %v2510 = vpop.f32.mrf.mxu0
        %v2511 = vpop.f32.mrf.mxu0
        %v2512 = vpop.f32.mrf.mxu0
        %2513 = vdwg.mxu0
        %2514 = vst.msk [vmem:[#allocation2] sm:$0xff] %vm2404, %v2509
        %2516 = vrot.lane.b32.xlu0 %v2402, 64
        %v2517 = vpop.permute.xlu0 %2516
        %2519 = vrot.lane.b32.xlu0 %v2403, 64
        %v2520 = vpop.permute.xlu0 %2519
        %v2522 = vsel %vm2404, %v2517, 0
        %v2525 = vsel %vm2404, %v2520, 0
        %2527 = vmatprep.subr.bf16.mxu0 0
        %2528 = vmatpush1.bf16.xpose.msra.mxu0 0
        %2529 = vmatprep.subr.bf16.mxu0 0
        %2530 = vmatpush1.bf16.xpose.msra.mxu0 0
        %2531 = vmatprep.subr.bf16.mxu0 0
        %2532 = vmatpush1.bf16.xpose.msra.mxu0 0
        %2533 = vmatprep.subr.bf16.mxu0 0
        %2534 = vmatpush1.bf16.xpose.msra.mxu0 0
        %2535 = vmatprep.subr.bf16.mxu0 0
        %2536 = vmatpush1.bf16.xpose.msra.mxu0 0
        %2537 = vmatprep.subr.bf16.mxu0 0
        %2538 = vmatpush1.bf16.xpose.msra.mxu0 0
        %2539 = vmatprep.subr.bf16.mxu0 0
        %2540 = vmatpush1.bf16.xpose.msra.mxu0 0
        %2541 = vmatprep.subr.bf16.mxu0 0
        %2542 = vmatpush1.bf16.xpose.msra.mxu0 %v2525
        %2543 = vmatprep.subr.bf16.mxu0 0
        %2544 = vmatpush2.bf16.xpose.msra.mxu0 0
        %2545 = vmatprep.subr.bf16.mxu0 0
        %2546 = vmatpush2.bf16.xpose.msra.mxu0 0
        %2547 = vmatprep.subr.bf16.mxu0 0
        %2548 = vmatpush2.bf16.xpose.msra.mxu0 0
        %2549 = vmatprep.subr.bf16.mxu0 0
        %2550 = vmatpush2.bf16.xpose.msra.mxu0 0
        %2551 = vmatprep.subr.bf16.mxu0 0
        %2552 = vmatpush2.bf16.xpose.msra.mxu0 0
        %2553 = vmatprep.subr.bf16.mxu0 0
        %2554 = vmatpush2.bf16.xpose.msra.mxu0 0
        %2555 = vmatprep.subr.bf16.mxu0 0
        %2556 = vmatpush2.bf16.xpose.msra.mxu0 0
        %2557 = vmatprep.subr.bf16.mxu0 0
        %2558 = vmatpush2.bf16.xpose.msra.mxu0 0
        %2559 = vmatprep.mubr.bf16.mxu0 0
        %2560 = vmatmul.mubr.bf16.gmra.mxu0 %v2522
        %v2561 = vpop.f32.mrf.mxu0
        %v2562 = vadd.f32 0.0, %v2561
        %v2563 = vpop.f32.mrf.mxu0
        %v2564 = vpop.f32.mrf.mxu0
        %v2565 = vpop.f32.mrf.mxu0
        %2566 = vdwg.mxu0
        %v2567 = vmul.f32 %v2562, 0.05103104
        %v2568 = vsel %vm2401, %v2567, -1e+30
        %v2569 = vsel %vm2453, %v2568, -inf
        %2570 = vmax.xlane.f32.xlu0 %v2569
        %v2571 = vpop.xlane.xlu0 %2570
        %v2572 = vsub.f32 %v2568, %v2571
        %v2573 = vmul.f32 %v2572, 1.442695
        %v2574 = vpow.pop %v2573
        %v2575 = vsel %vm2453, %v2574, 0.0
        %2576 = vadd.xlane.f32.xlu0 %v2575
        %v2577 = vpop.xlane.xlu0 %2576
        %v2578 = vrcp.pop %v2577
        %v2579 = vmul.f32 %v2574, %v2578
        %v2580 = vpack.c.bf16 %v2579, %v2579
        %2582 = vrot.lane.b32.xlu0 %v2466, 64
        %v2583 = vpop.permute.xlu0 %2582
        %v2585 = vsel %vm2453, %v2580, 0
        %v2588 = vsel %vm2470, %v2583, 0
        %2590 = vmatprep.subr.bf16.mxu0 0
        %2591 = vmatpush1.bf16.msra.mxu0 0
        %2592 = vmatprep.subr.bf16.mxu0 0
        %2593 = vmatpush1.bf16.msra.mxu0 0
        %2594 = vmatprep.subr.bf16.mxu0 0
        %2595 = vmatpush1.bf16.msra.mxu0 0
        %2596 = vmatprep.subr.bf16.mxu0 0
        %2597 = vmatpush1.bf16.msra.mxu0 0
        %2598 = vmatprep.subr.bf16.mxu0 0
        %2599 = vmatpush1.bf16.msra.mxu0 0
        %2600 = vmatprep.subr.bf16.mxu0 0
        %2601 = vmatpush1.bf16.msra.mxu0 0
        %2602 = vmatprep.subr.bf16.mxu0 0
        %2603 = vmatpush1.bf16.msra.mxu0 0
        %2604 = vmatprep.subr.bf16.mxu0 0
        %2605 = vmatpush1.bf16.msra.mxu0 %v2588
        %2606 = vmatprep.subr.bf16.mxu0 0
        %2607 = vmatpush2.bf16.msra.mxu0 0
        %2608 = vmatprep.subr.bf16.mxu0 0
        %2609 = vmatpush2.bf16.msra.mxu0 0
        %2610 = vmatprep.subr.bf16.mxu0 0
        %2611 = vmatpush2.bf16.msra.mxu0 0
        %2612 = vmatprep.subr.bf16.mxu0 0
        %2613 = vmatpush2.bf16.msra.mxu0 0
        %2614 = vmatprep.subr.bf16.mxu0 0
        %2615 = vmatpush2.bf16.msra.mxu0 0
        %2616 = vmatprep.subr.bf16.mxu0 0
        %2617 = vmatpush2.bf16.msra.mxu0 0
        %2618 = vmatprep.subr.bf16.mxu0 0
        %2619 = vmatpush2.bf16.msra.mxu0 0
        %2620 = vmatprep.subr.bf16.mxu0 0
        %2621 = vmatpush2.bf16.msra.mxu0 0
        %2622 = vmatprep.mubr.bf16.mxu0 0
        %2623 = vmatmul.mubr.bf16.gmra.mxu0 %v2585
        %v2624 = vpop.f32.mrf.mxu0
        %v2625 = vadd.f32 0.0, %v2624
        %v2626 = vpop.f32.mrf.mxu0
        %v2627 = vpop.f32.mrf.mxu0
        %v2628 = vpop.f32.mrf.mxu0
        %2629 = vdwg.mxu0
        %2631 = vrot.lane.b32.xlu0 %v2625, 64
        %v2632 = vpop.permute.xlu0 %2631
        %vm2634 = vcmask 1048064
        %2635 = vst.msk [vmem:[#allocation2] sm:$0xff] %vm2634, %v2632
        %v2636 = vpack.c.bf16 %v2067, %v2067
        %v2637 = vpack.c.bf16 %v2229, %v2229
        %v2639 = vsel %vm2404, %v2636, 0
        %v2642 = vsel %vm2404, %v2637, 0
        %2644 = vmatprep.subr.bf16.mxu0 0
        %2645 = vmatpush1.bf16.xpose.msra.mxu0 0
        %2646 = vmatprep.subr.bf16.mxu0 0
        %2647 = vmatpush1.bf16.xpose.msra.mxu0 0
        %2648 = vmatprep.subr.bf16.mxu0 0
        %2649 = vmatpush1.bf16.xpose.msra.mxu0 0
        %2650 = vmatprep.subr.bf16.mxu0 0
        %2651 = vmatpush1.bf16.xpose.msra.mxu0 0
        %2652 = vmatprep.subr.bf16.mxu0 0
        %2653 = vmatpush1.bf16.xpose.msra.mxu0 0
        %2654 = vmatprep.subr.bf16.mxu0 0
        %2655 = vmatpush1.bf16.xpose.msra.mxu0 0
        %2656 = vmatprep.subr.bf16.mxu0 0
        %2657 = vmatpush1.bf16.xpose.msra.mxu0 0
        %2658 = vmatprep.subr.bf16.mxu0 0
        %2659 = vmatpush1.bf16.xpose.msra.mxu0 %v2642
        %2660 = vmatprep.subr.bf16.mxu0 0
        %2661 = vmatpush2.bf16.xpose.msra.mxu0 0
        %2662 = vmatprep.subr.bf16.mxu0 0
        %2663 = vmatpush2.bf16.xpose.msra.mxu0 0
        %2664 = vmatprep.subr.bf16.mxu0 0
        %2665 = vmatpush2.bf16.xpose.msra.mxu0 0
        %2666 = vmatprep.subr.bf16.mxu0 0
        %2667 = vmatpush2.bf16.xpose.msra.mxu0 0
        %2668 = vmatprep.subr.bf16.mxu0 0
        %2669 = vmatpush2.bf16.xpose.msra.mxu0 0
        %2670 = vmatprep.subr.bf16.mxu0 0
        %2671 = vmatpush2.bf16.xpose.msra.mxu0 0
        %2672 = vmatprep.subr.bf16.mxu0 0
        %2673 = vmatpush2.bf16.xpose.msra.mxu0 0
        %2674 = vmatprep.subr.bf16.mxu0 0
        %2675 = vmatpush2.bf16.xpose.msra.mxu0 0
        %2676 = vmatprep.mubr.bf16.mxu0 0
        %2677 = vmatmul.mubr.bf16.gmra.mxu0 %v2639
        %v2678 = vpop.f32.mrf.mxu0
        %v2679 = vadd.f32 0.0, %v2678
        %v2680 = vpop.f32.mrf.mxu0
        %v2681 = vpop.f32.mrf.mxu0
        %v2682 = vpop.f32.mrf.mxu0
        %2683 = vdwg.mxu0
        %v2684 = vmul.f32 %v2679, 0.05103104
        %v2685 = vsel %vm2401, %v2684, -1e+30
        %v2686 = vsel %vm2453, %v2685, -inf
        %2687 = vmax.xlane.f32.xlu0 %v2686
        %v2688 = vpop.xlane.xlu0 %2687
        %v2689 = vsub.f32 %v2685, %v2688
        %v2690 = vmul.f32 %v2689, 1.442695
        %v2691 = vpow.pop %v2690
        %v2692 = vsel %vm2453, %v2691, 0.0
        %2693 = vadd.xlane.f32.xlu0 %v2692
        %v2694 = vpop.xlane.xlu0 %2693
        %v2695 = vrcp.pop %v2694
        %v2696 = vmul.f32 %v2691, %v2695
        %v2697 = vpack.c.bf16 %v2696, %v2696
        %v2698 = vpack.c.bf16 %v2313, %v2313
        %v2700 = vsel %vm2453, %v2697, 0
        %v2703 = vsel %vm2470, %v2698, 0
        %2705 = vmatprep.subr.bf16.mxu0 0
        %2706 = vmatpush1.bf16.msra.mxu0 0
        %2707 = vmatprep.subr.bf16.mxu0 0
        %2708 = vmatpush1.bf16.msra.mxu0 0
        %2709 = vmatprep.subr.bf16.mxu0 0
        %2710 = vmatpush1.bf16.msra.mxu0 0
        %2711 = vmatprep.subr.bf16.mxu0 0
        %2712 = vmatpush1.bf16.msra.mxu0 0
        %2713 = vmatprep.subr.bf16.mxu0 0
        %2714 = vmatpush1.bf16.msra.mxu0 0
        %2715 = vmatprep.subr.bf16.mxu0 0
        %2716 = vmatpush1.bf16.msra.mxu0 0
        %2717 = vmatprep.subr.bf16.mxu0 0
        %2718 = vmatpush1.bf16.msra.mxu0 0
        %2719 = vmatprep.subr.bf16.mxu0 0
        %2720 = vmatpush1.bf16.msra.mxu0 %v2703
        %2721 = vmatprep.subr.bf16.mxu0 0
        %2722 = vmatpush2.bf16.msra.mxu0 0
        %2723 = vmatprep.subr.bf16.mxu0 0
        %2724 = vmatpush2.bf16.msra.mxu0 0
        %2725 = vmatprep.subr.bf16.mxu0 0
        %2726 = vmatpush2.bf16.msra.mxu0 0
        %2727 = vmatprep.subr.bf16.mxu0 0
        %2728 = vmatpush2.bf16.msra.mxu0 0
        %2729 = vmatprep.subr.bf16.mxu0 0
        %2730 = vmatpush2.bf16.msra.mxu0 0
        %2731 = vmatprep.subr.bf16.mxu0 0
        %2732 = vmatpush2.bf16.msra.mxu0 0
        %2733 = vmatprep.subr.bf16.mxu0 0
        %2734 = vmatpush2.bf16.msra.mxu0 0
        %2735 = vmatprep.subr.bf16.mxu0 0
        %2736 = vmatpush2.bf16.msra.mxu0 0
        %2737 = vmatprep.mubr.bf16.mxu0 0
        %2738 = vmatmul.mubr.bf16.gmra.mxu0 %v2700
        %v2739 = vpop.f32.mrf.mxu0
        %v2740 = vadd.f32 0.0, %v2739
        %v2741 = vpop.f32.mrf.mxu0
        %v2742 = vpop.f32.mrf.mxu0
        %v2743 = vpop.f32.mrf.mxu0
        %2744 = vdwg.mxu0
        %2745 = vst.msk [vmem:[#allocation2 + $0x8] sm:$0xff] %vm2404, %v2740
        %2747 = vrot.lane.b32.xlu0 %v2636, 64
        %v2748 = vpop.permute.xlu0 %2747
        %2750 = vrot.lane.b32.xlu0 %v2637, 64
        %v2751 = vpop.permute.xlu0 %2750
        %v2753 = vsel %vm2404, %v2748, 0
        %v2756 = vsel %vm2404, %v2751, 0
        %2758 = vmatprep.subr.bf16.mxu0 0
        %2759 = vmatpush1.bf16.xpose.msra.mxu0 0
        %2760 = vmatprep.subr.bf16.mxu0 0
        %2761 = vmatpush1.bf16.xpose.msra.mxu0 0
        %2762 = vmatprep.subr.bf16.mxu0 0
        %2763 = vmatpush1.bf16.xpose.msra.mxu0 0
        %2764 = vmatprep.subr.bf16.mxu0 0
        %2765 = vmatpush1.bf16.xpose.msra.mxu0 0
        %2766 = vmatprep.subr.bf16.mxu0 0
        %2767 = vmatpush1.bf16.xpose.msra.mxu0 0
        %2768 = vmatprep.subr.bf16.mxu0 0
        %2769 = vmatpush1.bf16.xpose.msra.mxu0 0
        %2770 = vmatprep.subr.bf16.mxu0 0
        %2771 = vmatpush1.bf16.xpose.msra.mxu0 0
        %2772 = vmatprep.subr.bf16.mxu0 0
        %2773 = vmatpush1.bf16.xpose.msra.mxu0 %v2756
        %2774 = vmatprep.subr.bf16.mxu0 0
        %2775 = vmatpush2.bf16.xpose.msra.mxu0 0
        %2776 = vmatprep.subr.bf16.mxu0 0
        %2777 = vmatpush2.bf16.xpose.msra.mxu0 0
        %2778 = vmatprep.subr.bf16.mxu0 0
        %2779 = vmatpush2.bf16.xpose.msra.mxu0 0
        %2780 = vmatprep.subr.bf16.mxu0 0
        %2781 = vmatpush2.bf16.xpose.msra.mxu0 0
        %2782 = vmatprep.subr.bf16.mxu0 0
        %2783 = vmatpush2.bf16.xpose.msra.mxu0 0
        %2784 = vmatprep.subr.bf16.mxu0 0
        %2785 = vmatpush2.bf16.xpose.msra.mxu0 0
        %2786 = vmatprep.subr.bf16.mxu0 0
        %2787 = vmatpush2.bf16.xpose.msra.mxu0 0
        %2788 = vmatprep.subr.bf16.mxu0 0
        %2789 = vmatpush2.bf16.xpose.msra.mxu0 0
        %2790 = vmatprep.mubr.bf16.mxu0 0
        %2791 = vmatmul.mubr.bf16.gmra.mxu0 %v2753
        %v2792 = vpop.f32.mrf.mxu0
        %v2793 = vadd.f32 0.0, %v2792
        %v2794 = vpop.f32.mrf.mxu0
        %v2795 = vpop.f32.mrf.mxu0
        %v2796 = vpop.f32.mrf.mxu0
        %2797 = vdwg.mxu0
        %v2798 = vmul.f32 %v2793, 0.05103104
        %v2799 = vsel %vm2401, %v2798, -1e+30
        %v2800 = vsel %vm2453, %v2799, -inf
        %2801 = vmax.xlane.f32.xlu0 %v2800
        %v2802 = vpop.xlane.xlu0 %2801
        %v2803 = vsub.f32 %v2799, %v2802
        %v2804 = vmul.f32 %v2803, 1.442695
        %v2805 = vpow.pop %v2804
        %v2806 = vsel %vm2453, %v2805, 0.0
        %2807 = vadd.xlane.f32.xlu0 %v2806
        %v2808 = vpop.xlane.xlu0 %2807
        %v2809 = vrcp.pop %v2808
        %v2810 = vmul.f32 %v2805, %v2809
        %v2811 = vpack.c.bf16 %v2810, %v2810
        %2813 = vrot.lane.b32.xlu0 %v2698, 64
        %v2814 = vpop.permute.xlu0 %2813
        %v2816 = vsel %vm2453, %v2811, 0
        %v2819 = vsel %vm2470, %v2814, 0
        %2821 = vmatprep.subr.bf16.mxu0 0
        %2822 = vmatpush1.bf16.msra.mxu0 0
        %2823 = vmatprep.subr.bf16.mxu0 0
        %2824 = vmatpush1.bf16.msra.mxu0 0
        %2825 = vmatprep.subr.bf16.mxu0 0
        %2826 = vmatpush1.bf16.msra.mxu0 0
        %2827 = vmatprep.subr.bf16.mxu0 0
        %2828 = vmatpush1.bf16.msra.mxu0 0
        %2829 = vmatprep.subr.bf16.mxu0 0
        %2830 = vmatpush1.bf16.msra.mxu0 0
        %2831 = vmatprep.subr.bf16.mxu0 0
        %2832 = vmatpush1.bf16.msra.mxu0 0
        %2833 = vmatprep.subr.bf16.mxu0 0
        %2834 = vmatpush1.bf16.msra.mxu0 0
        %2835 = vmatprep.subr.bf16.mxu0 0
        %2836 = vmatpush1.bf16.msra.mxu0 %v2819
        %2837 = vmatprep.subr.bf16.mxu0 0
        %2838 = vmatpush2.bf16.msra.mxu0 0
        %2839 = vmatprep.subr.bf16.mxu0 0
        %2840 = vmatpush2.bf16.msra.mxu0 0
        %2841 = vmatprep.subr.bf16.mxu0 0
        %2842 = vmatpush2.bf16.msra.mxu0 0
        %2843 = vmatprep.subr.bf16.mxu0 0
        %2844 = vmatpush2.bf16.msra.mxu0 0
        %2845 = vmatprep.subr.bf16.mxu0 0
        %2846 = vmatpush2.bf16.msra.mxu0 0
        %2847 = vmatprep.subr.bf16.mxu0 0
        %2848 = vmatpush2.bf16.msra.mxu0 0
        %2849 = vmatprep.subr.bf16.mxu0 0
        %2850 = vmatpush2.bf16.msra.mxu0 0
        %2851 = vmatprep.subr.bf16.mxu0 0
        %2852 = vmatpush2.bf16.msra.mxu0 0
        %2853 = vmatprep.mubr.bf16.mxu0 0
        %2854 = vmatmul.mubr.bf16.gmra.mxu0 %v2816
        %v2855 = vpop.f32.mrf.mxu0
        %v2856 = vadd.f32 0.0, %v2855
        %v2857 = vpop.f32.mrf.mxu0
        %v2858 = vpop.f32.mrf.mxu0
        %v2859 = vpop.f32.mrf.mxu0
        %2860 = vdwg.mxu0
        %2862 = vrot.lane.b32.xlu0 %v2856, 64
        %v2863 = vpop.permute.xlu0 %2862
        %2865 = vst.msk [vmem:[#allocation2 + $0x8] sm:$0xff] %vm2634, %v2863
        %v2866 = vpack.c.bf16 %v2147, %v2147
        %v2867 = vpack.c.bf16 %v2231, %v2231
        %v2869 = vsel %vm2404, %v2866, 0
        %v2872 = vsel %vm2404, %v2867, 0
        %2874 = vmatprep.subr.bf16.mxu0 0
        %2875 = vmatpush1.bf16.xpose.msra.mxu0 0
        %2876 = vmatprep.subr.bf16.mxu0 0
        %2877 = vmatpush1.bf16.xpose.msra.mxu0 0
        %2878 = vmatprep.subr.bf16.mxu0 0
        %2879 = vmatpush1.bf16.xpose.msra.mxu0 0
        %2880 = vmatprep.subr.bf16.mxu0 0
        %2881 = vmatpush1.bf16.xpose.msra.mxu0 0
        %2882 = vmatprep.subr.bf16.mxu0 0
        %2883 = vmatpush1.bf16.xpose.msra.mxu0 0
        %2884 = vmatprep.subr.bf16.mxu0 0
        %2885 = vmatpush1.bf16.xpose.msra.mxu0 0
        %2886 = vmatprep.subr.bf16.mxu0 0
        %2887 = vmatpush1.bf16.xpose.msra.mxu0 0
        %2888 = vmatprep.subr.bf16.mxu0 0
        %2889 = vmatpush1.bf16.xpose.msra.mxu0 %v2872
        %2890 = vmatprep.subr.bf16.mxu0 0
        %2891 = vmatpush2.bf16.xpose.msra.mxu0 0
        %2892 = vmatprep.subr.bf16.mxu0 0
        %2893 = vmatpush2.bf16.xpose.msra.mxu0 0
        %2894 = vmatprep.subr.bf16.mxu0 0
        %2895 = vmatpush2.bf16.xpose.msra.mxu0 0
        %2896 = vmatprep.subr.bf16.mxu0 0
        %2897 = vmatpush2.bf16.xpose.msra.mxu0 0
        %2898 = vmatprep.subr.bf16.mxu0 0
        %2899 = vmatpush2.bf16.xpose.msra.mxu0 0
        %2900 = vmatprep.subr.bf16.mxu0 0
        %2901 = vmatpush2.bf16.xpose.msra.mxu0 0
        %2902 = vmatprep.subr.bf16.mxu0 0
        %2903 = vmatpush2.bf16.xpose.msra.mxu0 0
        %2904 = vmatprep.subr.bf16.mxu0 0
        %2905 = vmatpush2.bf16.xpose.msra.mxu0 0
        %2906 = vmatprep.mubr.bf16.mxu0 0
        %2907 = vmatmul.mubr.bf16.gmra.mxu0 %v2869
        %v2908 = vpop.f32.mrf.mxu0
        %v2909 = vadd.f32 0.0, %v2908
        %v2910 = vpop.f32.mrf.mxu0
        %v2911 = vpop.f32.mrf.mxu0
        %v2912 = vpop.f32.mrf.mxu0
        %2913 = vdwg.mxu0
        %v2914 = vmul.f32 %v2909, 0.05103104
        %v2915 = vsel %vm2401, %v2914, -1e+30
        %v2916 = vsel %vm2453, %v2915, -inf
        %2917 = vmax.xlane.f32.xlu0 %v2916
        %v2918 = vpop.xlane.xlu0 %2917
        %v2919 = vsub.f32 %v2915, %v2918
        %v2920 = vmul.f32 %v2919, 1.442695
        %v2921 = vpow.pop %v2920
        %v2922 = vsel %vm2453, %v2921, 0.0
        %2923 = vadd.xlane.f32.xlu0 %v2922
        %v2924 = vpop.xlane.xlu0 %2923
        %v2925 = vrcp.pop %v2924
        %v2926 = vmul.f32 %v2921, %v2925
        %v2927 = vpack.c.bf16 %v2926, %v2926
        %v2928 = vpack.c.bf16 %v2392, %v2392
        %v2930 = vsel %vm2453, %v2927, 0
        %v2933 = vsel %vm2470, %v2928, 0
        %2935 = vmatprep.subr.bf16.mxu0 0
        %2936 = vmatpush1.bf16.msra.mxu0 0
        %2937 = vmatprep.subr.bf16.mxu0 0
        %2938 = vmatpush1.bf16.msra.mxu0 0
        %2939 = vmatprep.subr.bf16.mxu0 0
        %2940 = vmatpush1.bf16.msra.mxu0 0
        %2941 = vmatprep.subr.bf16.mxu0 0
        %2942 = vmatpush1.bf16.msra.mxu0 0
        %2943 = vmatprep.subr.bf16.mxu0 0
        %2944 = vmatpush1.bf16.msra.mxu0 0
        %2945 = vmatprep.subr.bf16.mxu0 0
        %2946 = vmatpush1.bf16.msra.mxu0 0
        %2947 = vmatprep.subr.bf16.mxu0 0
        %2948 = vmatpush1.bf16.msra.mxu0 0
        %2949 = vmatprep.subr.bf16.mxu0 0
        %2950 = vmatpush1.bf16.msra.mxu0 %v2933
        %2951 = vmatprep.subr.bf16.mxu0 0
        %2952 = vmatpush2.bf16.msra.mxu0 0
        %2953 = vmatprep.subr.bf16.mxu0 0
        %2954 = vmatpush2.bf16.msra.mxu0 0
        %2955 = vmatprep.subr.bf16.mxu0 0
        %2956 = vmatpush2.bf16.msra.mxu0 0
        %2957 = vmatprep.subr.bf16.mxu0 0
        %2958 = vmatpush2.bf16.msra.mxu0 0
        %2959 = vmatprep.subr.bf16.mxu0 0
        %2960 = vmatpush2.bf16.msra.mxu0 0
        %2961 = vmatprep.subr.bf16.mxu0 0
        %2962 = vmatpush2.bf16.msra.mxu0 0
        %2963 = vmatprep.subr.bf16.mxu0 0
        %2964 = vmatpush2.bf16.msra.mxu0 0
        %2965 = vmatprep.subr.bf16.mxu0 0
        %2966 = vmatpush2.bf16.msra.mxu0 0
        %2967 = vmatprep.mubr.bf16.mxu0 0
        %2968 = vmatmul.mubr.bf16.gmra.mxu0 %v2930
        %v2969 = vpop.f32.mrf.mxu0
        %v2970 = vadd.f32 0.0, %v2969
        %v2971 = vpop.f32.mrf.mxu0
        %v2972 = vpop.f32.mrf.mxu0
        %v2973 = vpop.f32.mrf.mxu0
        %2974 = vdwg.mxu0
        %2975 = vst.msk [vmem:[#allocation2 + $0x10] sm:$0xff] %vm2404, %v2970
        %2977 = vrot.lane.b32.xlu0 %v2866, 64
        %v2978 = vpop.permute.xlu0 %2977
        %2980 = vrot.lane.b32.xlu0 %v2867, 64
        %v2981 = vpop.permute.xlu0 %2980
        %v2983 = vsel %vm2404, %v2978, 0
        %v2986 = vsel %vm2404, %v2981, 0
        %2988 = vmatprep.subr.bf16.mxu0 0
        %2989 = vmatpush1.bf16.xpose.msra.mxu0 0
        %2990 = vmatprep.subr.bf16.mxu0 0
        %2991 = vmatpush1.bf16.xpose.msra.mxu0 0
        %2992 = vmatprep.subr.bf16.mxu0 0
        %2993 = vmatpush1.bf16.xpose.msra.mxu0 0
        %2994 = vmatprep.subr.bf16.mxu0 0
        %2995 = vmatpush1.bf16.xpose.msra.mxu0 0
        %2996 = vmatprep.subr.bf16.mxu0 0
        %2997 = vmatpush1.bf16.xpose.msra.mxu0 0
        %2998 = vmatprep.subr.bf16.mxu0 0
        %2999 = vmatpush1.bf16.xpose.msra.mxu0 0
        %3000 = vmatprep.subr.bf16.mxu0 0
        %3001 = vmatpush1.bf16.xpose.msra.mxu0 0
        %3002 = vmatprep.subr.bf16.mxu0 0
        %3003 = vmatpush1.bf16.xpose.msra.mxu0 %v2986
        %3004 = vmatprep.subr.bf16.mxu0 0
        %3005 = vmatpush2.bf16.xpose.msra.mxu0 0
        %3006 = vmatprep.subr.bf16.mxu0 0
        %3007 = vmatpush2.bf16.xpose.msra.mxu0 0
        %3008 = vmatprep.subr.bf16.mxu0 0
        %3009 = vmatpush2.bf16.xpose.msra.mxu0 0
        %3010 = vmatprep.subr.bf16.mxu0 0
        %3011 = vmatpush2.bf16.xpose.msra.mxu0 0
        %3012 = vmatprep.subr.bf16.mxu0 0
        %3013 = vmatpush2.bf16.xpose.msra.mxu0 0
        %3014 = vmatprep.subr.bf16.mxu0 0
        %3015 = vmatpush2.bf16.xpose.msra.mxu0 0
        %3016 = vmatprep.subr.bf16.mxu0 0
        %3017 = vmatpush2.bf16.xpose.msra.mxu0 0
        %3018 = vmatprep.subr.bf16.mxu0 0
        %3019 = vmatpush2.bf16.xpose.msra.mxu0 0
        %3020 = vmatprep.mubr.bf16.mxu0 0
        %3021 = vmatmul.mubr.bf16.gmra.mxu0 %v2983
        %v3022 = vpop.f32.mrf.mxu0
        %v3023 = vadd.f32 0.0, %v3022
        %v3024 = vpop.f32.mrf.mxu0
        %v3025 = vpop.f32.mrf.mxu0
        %v3026 = vpop.f32.mrf.mxu0
        %3027 = vdwg.mxu0
        %v3028 = vmul.f32 %v3023, 0.05103104
        %v3029 = vsel %vm2401, %v3028, -1e+30
        %v3030 = vsel %vm2453, %v3029, -inf
        %3031 = vmax.xlane.f32.xlu0 %v3030
        %v3032 = vpop.xlane.xlu0 %3031
        %v3033 = vsub.f32 %v3029, %v3032
        %v3034 = vmul.f32 %v3033, 1.442695
        %v3035 = vpow.pop %v3034
        %v3036 = vsel %vm2453, %v3035, 0.0
        %3037 = vadd.xlane.f32.xlu0 %v3036
        %v3038 = vpop.xlane.xlu0 %3037
        %v3039 = vrcp.pop %v3038
        %v3040 = vmul.f32 %v3035, %v3039
        %v3041 = vpack.c.bf16 %v3040, %v3040
        %3043 = vrot.lane.b32.xlu0 %v2928, 64
        %v3044 = vpop.permute.xlu0 %3043
        %v3046 = vsel %vm2453, %v3041, 0
        %v3049 = vsel %vm2470, %v3044, 0
        %3051 = vmatprep.subr.bf16.mxu0 0
        %3052 = vmatpush1.bf16.msra.mxu0 0
        %3053 = vmatprep.subr.bf16.mxu0 0
        %3054 = vmatpush1.bf16.msra.mxu0 0
        %3055 = vmatprep.subr.bf16.mxu0 0
        %3056 = vmatpush1.bf16.msra.mxu0 0
        %3057 = vmatprep.subr.bf16.mxu0 0
        %3058 = vmatpush1.bf16.msra.mxu0 0
        %3059 = vmatprep.subr.bf16.mxu0 0
        %3060 = vmatpush1.bf16.msra.mxu0 0
        %3061 = vmatprep.subr.bf16.mxu0 0
        %3062 = vmatpush1.bf16.msra.mxu0 0
        %3063 = vmatprep.subr.bf16.mxu0 0
        %3064 = vmatpush1.bf16.msra.mxu0 0
        %3065 = vmatprep.subr.bf16.mxu0 0
        %3066 = vmatpush1.bf16.msra.mxu0 %v3049
        %3067 = vmatprep.subr.bf16.mxu0 0
        %3068 = vmatpush2.bf16.msra.mxu0 0
        %3069 = vmatprep.subr.bf16.mxu0 0
        %3070 = vmatpush2.bf16.msra.mxu0 0
        %3071 = vmatprep.subr.bf16.mxu0 0
        %3072 = vmatpush2.bf16.msra.mxu0 0
        %3073 = vmatprep.subr.bf16.mxu0 0
        %3074 = vmatpush2.bf16.msra.mxu0 0
        %3075 = vmatprep.subr.bf16.mxu0 0
        %3076 = vmatpush2.bf16.msra.mxu0 0
        %3077 = vmatprep.subr.bf16.mxu0 0
        %3078 = vmatpush2.bf16.msra.mxu0 0
        %3079 = vmatprep.subr.bf16.mxu0 0
        %3080 = vmatpush2.bf16.msra.mxu0 0
        %3081 = vmatprep.subr.bf16.mxu0 0
        %3082 = vmatpush2.bf16.msra.mxu0 0
        %3083 = vmatprep.mubr.bf16.mxu0 0
        %3084 = vmatmul.mubr.bf16.gmra.mxu0 %v3046
        %v3085 = vpop.f32.mrf.mxu0
        %v3086 = vadd.f32 0.0, %v3085
        %v3087 = vpop.f32.mrf.mxu0
        %v3088 = vpop.f32.mrf.mxu0
        %v3089 = vpop.f32.mrf.mxu0
        %3090 = vdwg.mxu0
        %3092 = vrot.lane.b32.xlu0 %v3086, 64
        %v3093 = vpop.permute.xlu0 %3092
        %3095 = vst.msk [vmem:[#allocation2 + $0x10] sm:$0xff] %vm2634, %v3093
        %v3096 = vld [vmem:[#allocation2] sm:$0xff]
        %v3097 = vld [vmem:[#allocation2 + $0x8] sm:$0xff]
        %v3098 = vld [vmem:[#allocation2 + $0x10] sm:$0xff]
        %v3099 = vpack.c.bf16 %v3096, %v3096
        %v3100 = vpack.c.bf16 %v3097, %v3097
        %v3101 = vpack.c.bf16 %v3098, %v3098
        %v3102 = vld [vmem:[#allocation14] sm:$0xff]
        %v3103 = vld [vmem:[#allocation14 + $0x8] sm:$0xf]
        %v3104 = vld [vmem:[#allocation14 + $0xc] sm:$0xff]
        %v3105 = vld [vmem:[#allocation14 + $0x14] sm:$0xf]
        %v3106 = vld [vmem:[#allocation14 + $0x18] sm:$0xff]
        %v3107 = vld [vmem:[#allocation14 + $0x20] sm:$0xf]
        %v3108 = vld [vmem:[#allocation14 + $0x24] sm:$0xff]
        %v3109 = vld [vmem:[#allocation14 + $0x2c] sm:$0xf]
        %v3110 = vld [vmem:[#allocation14 + $0x30] sm:$0xff]
        %v3111 = vld [vmem:[#allocation14 + $0x38] sm:$0xf]
        %v3112 = vld [vmem:[#allocation14 + $0x3c] sm:$0xff]
        %v3113 = vld [vmem:[#allocation14 + $0x44] sm:$0xf]
        %v3114 = vld [vmem:[#allocation14 + $0x48] sm:$0xff]
        %v3115 = vld [vmem:[#allocation14 + $0x50] sm:$0xf]
        %v3116 = vld [vmem:[#allocation14 + $0x54] sm:$0xff]
        %v3117 = vld [vmem:[#allocation14 + $0x5c] sm:$0xf]
        %v3118 = vld [vmem:[#allocation14 + $0x60] sm:$0xff]
        %v3119 = vld [vmem:[#allocation14 + $0x68] sm:$0xf]
        %v3120 = vld [vmem:[#allocation14 + $0x6c] sm:$0xff]
        %v3121 = vld [vmem:[#allocation14 + $0x74] sm:$0xf]
        %v3122 = vld [vmem:[#allocation14 + $0x78] sm:$0xff]
        %v3123 = vld [vmem:[#allocation14 + $0x80] sm:$0xf]
        %v3124 = vld [vmem:[#allocation14 + $0x84] sm:$0xff]
        %v3125 = vld [vmem:[#allocation14 + $0x8c] sm:$0xf]
        %v3126 = vld [vmem:[#allocation14 + $0x90] sm:$0xff]
        %v3127 = vld [vmem:[#allocation14 + $0x98] sm:$0xf]
        %v3128 = vld [vmem:[#allocation14 + $0x9c] sm:$0xff]
        %v3129 = vld [vmem:[#allocation14 + $0xa4] sm:$0xf]
        %v3130 = vld [vmem:[#allocation14 + $0xa8] sm:$0xff]
        %v3131 = vld [vmem:[#allocation14 + $0xb0] sm:$0xf]
        %v3132 = vld [vmem:[#allocation14 + $0xb4] sm:$0xff]
        %v3133 = vld [vmem:[#allocation14 + $0xbc] sm:$0xf]
        %v3134 = vld [vmem:[#allocation14 + $0xc0] sm:$0xff]
        %v3135 = vld [vmem:[#allocation14 + $0xc8] sm:$0xf]
        %v3136 = vld [vmem:[#allocation14 + $0xcc] sm:$0xff]
        %v3137 = vld [vmem:[#allocation14 + $0xd4] sm:$0xf]
        %v3138 = vld [vmem:[#allocation14 + $0xd8] sm:$0xff]
        %v3139 = vld [vmem:[#allocation14 + $0xe0] sm:$0xf]
        %v3140 = vld [vmem:[#allocation14 + $0xe4] sm:$0xff]
        %v3141 = vld [vmem:[#allocation14 + $0xec] sm:$0xf]
        %v3142 = vld [vmem:[#allocation14 + $0xf0] sm:$0xff]
        %v3143 = vld [vmem:[#allocation14 + $0xf8] sm:$0xf]
        %v3144 = vld [vmem:[#allocation14 + $0xfc] sm:$0xff]
        %v3145 = vld [vmem:[#allocation14 + $0x104] sm:$0xf]
        %v3146 = vld [vmem:[#allocation14 + $0x108] sm:$0xff]
        %v3147 = vld [vmem:[#allocation14 + $0x110] sm:$0xf]
        %v3148 = vld [vmem:[#allocation14 + $0x114] sm:$0xff]
        %v3149 = vld [vmem:[#allocation14 + $0x11c] sm:$0xf]
        %v3150 = vld [vmem:[#allocation14 + $0x120] sm:$0xff]
        %v3151 = vld [vmem:[#allocation14 + $0x128] sm:$0xf]
        %v3152 = vld [vmem:[#allocation14 + $0x12c] sm:$0xff]
        %v3153 = vld [vmem:[#allocation14 + $0x134] sm:$0xf]
        %v3154 = vld [vmem:[#allocation14 + $0x138] sm:$0xff]
        %v3155 = vld [vmem:[#allocation14 + $0x140] sm:$0xf]
        %v3156 = vld [vmem:[#allocation14 + $0x144] sm:$0xff]
        %v3157 = vld [vmem:[#allocation14 + $0x14c] sm:$0xf]
        %v3158 = vld [vmem:[#allocation14 + $0x150] sm:$0xff]
        %v3159 = vld [vmem:[#allocation14 + $0x158] sm:$0xf]
        %v3160 = vld [vmem:[#allocation14 + $0x15c] sm:$0xff]
        %v3161 = vld [vmem:[#allocation14 + $0x164] sm:$0xf]
        %v3162 = vld [vmem:[#allocation14 + $0x168] sm:$0xff]
        %v3163 = vld [vmem:[#allocation14 + $0x170] sm:$0xf]
        %v3164 = vld [vmem:[#allocation14 + $0x174] sm:$0xff]
        %v3165 = vld [vmem:[#allocation14 + $0x17c] sm:$0xf]
        %v3166 = vld [vmem:[#allocation14 + $0x180] sm:$0xff]
        %v3167 = vld [vmem:[#allocation14 + $0x188] sm:$0xf]
        %v3168 = vld [vmem:[#allocation14 + $0x18c] sm:$0xff]
        %v3169 = vld [vmem:[#allocation14 + $0x194] sm:$0xf]
        %v3170 = vld [vmem:[#allocation14 + $0x198] sm:$0xff]
        %v3171 = vld [vmem:[#allocation14 + $0x1a0] sm:$0xf]
        %v3172 = vld [vmem:[#allocation14 + $0x1a4] sm:$0xff]
        %v3173 = vld [vmem:[#allocation14 + $0x1ac] sm:$0xf]
        %v3174 = vld [vmem:[#allocation14 + $0x1b0] sm:$0xff]
        %v3175 = vld [vmem:[#allocation14 + $0x1b8] sm:$0xf]
        %v3176 = vld [vmem:[#allocation14 + $0x1bc] sm:$0xff]
        %v3177 = vld [vmem:[#allocation14 + $0x1c4] sm:$0xf]
        %v3178 = vld [vmem:[#allocation14 + $0x1c8] sm:$0xff]
        %v3179 = vld [vmem:[#allocation14 + $0x1d0] sm:$0xf]
        %v3180 = vld [vmem:[#allocation14 + $0x1d4] sm:$0xff]
        %v3181 = vld [vmem:[#allocation14 + $0x1dc] sm:$0xf]
        %v3182 = vld [vmem:[#allocation14 + $0x1e0] sm:$0xff]
        %v3183 = vld [vmem:[#allocation14 + $0x1e8] sm:$0xf]
        %v3184 = vld [vmem:[#allocation14 + $0x1ec] sm:$0xff]
        %v3185 = vld [vmem:[#allocation14 + $0x1f4] sm:$0xf]
        %v3186 = vld [vmem:[#allocation14 + $0x1f8] sm:$0xff]
        %v3187 = vld [vmem:[#allocation14 + $0x200] sm:$0xf]
        %v3188 = vld [vmem:[#allocation14 + $0x204] sm:$0xff]
        %v3189 = vld [vmem:[#allocation14 + $0x20c] sm:$0xf]
        %v3190 = vld [vmem:[#allocation14 + $0x210] sm:$0xff]
        %v3191 = vld [vmem:[#allocation14 + $0x218] sm:$0xf]
        %v3192 = vld [vmem:[#allocation14 + $0x21c] sm:$0xff]
        %v3193 = vld [vmem:[#allocation14 + $0x224] sm:$0xf]
        %v3194 = vld [vmem:[#allocation14 + $0x228] sm:$0xff]
        %v3195 = vld [vmem:[#allocation14 + $0x230] sm:$0xf]
        %v3196 = vld [vmem:[#allocation14 + $0x234] sm:$0xff]
        %v3197 = vld [vmem:[#allocation14 + $0x23c] sm:$0xf]
        %v3198 = vld [vmem:[#allocation15] sm:$0x7]
        %v3200 = vlaneseq
        %v3201 = vshrl.u32 %v3200, 7
        %v3202 = vsub.s32 0, %v3201
        %v3203 = vrot.slane %v3198, %v3202
        %v3204 = vlaneseq
        %v3205 = vshrl.u32 %v3204, 7
        %v3206 = vsub.s32 1, %v3205
        %v3207 = vrot.slane %v3198, %v3206
        %v3208 = vlaneseq
        %v3209 = vshrl.u32 %v3208, 7
        %v3210 = vsub.s32 2, %v3209
        %v3211 = vrot.slane %v3198, %v3210
        %v3311 = vunpack.c.l.b16 %v3102
        %v3312 = vunpack.c.h.b16 %v3102
        %v3313 = vunpack.c.l.b16 %v3103
        %v3314 = vunpack.c.l.b16 %v3104
        %v3315 = vunpack.c.h.b16 %v3104
        %v3316 = vunpack.c.l.b16 %v3105
        %v3317 = vunpack.c.l.b16 %v3106
        %v3318 = vunpack.c.h.b16 %v3106
        %v3319 = vunpack.c.l.b16 %v3107
        %v3320 = vunpack.c.l.b16 %v3108
        %v3321 = vunpack.c.h.b16 %v3108
        %v3322 = vunpack.c.l.b16 %v3109
        %v3323 = vunpack.c.l.b16 %v3110
        %v3324 = vunpack.c.h.b16 %v3110
        %v3325 = vunpack.c.l.b16 %v3111
        %v3326 = vunpack.c.l.b16 %v3112
        %v3327 = vunpack.c.h.b16 %v3112
        %v3328 = vunpack.c.l.b16 %v3113
        %v3329 = vunpack.c.l.b16 %v3114
        %v3330 = vunpack.c.h.b16 %v3114
        %v3331 = vunpack.c.l.b16 %v3115
        %v3332 = vunpack.c.l.b16 %v3116
        %v3333 = vunpack.c.h.b16 %v3116
        %v3334 = vunpack.c.l.b16 %v3117
        %v3335 = vunpack.c.l.b16 %v3118
        %v3336 = vunpack.c.h.b16 %v3118
        %v3337 = vunpack.c.l.b16 %v3119
        %v3338 = vunpack.c.l.b16 %v3120
        %v3339 = vunpack.c.h.b16 %v3120
        %v3340 = vunpack.c.l.b16 %v3121
        %v3341 = vunpack.c.l.b16 %v3122
        %v3342 = vunpack.c.h.b16 %v3122
        %v3343 = vunpack.c.l.b16 %v3123
        %v3344 = vunpack.c.l.b16 %v3124
        %v3345 = vunpack.c.h.b16 %v3124
        %v3346 = vunpack.c.l.b16 %v3125
        %v3347 = vunpack.c.l.b16 %v3126
        %v3348 = vunpack.c.h.b16 %v3126
        %v3349 = vunpack.c.l.b16 %v3127
        %v3350 = vunpack.c.l.b16 %v3128
        %v3351 = vunpack.c.h.b16 %v3128
        %v3352 = vunpack.c.l.b16 %v3129
        %v3353 = vunpack.c.l.b16 %v3130
        %v3354 = vunpack.c.h.b16 %v3130
        %v3355 = vunpack.c.l.b16 %v3131
        %v3356 = vunpack.c.l.b16 %v3132
        %v3357 = vunpack.c.h.b16 %v3132
        %v3358 = vunpack.c.l.b16 %v3133
        %v3359 = vunpack.c.l.b16 %v3134
        %v3360 = vunpack.c.h.b16 %v3134
        %v3361 = vunpack.c.l.b16 %v3135
        %v3362 = vunpack.c.l.b16 %v3136
        %v3363 = vunpack.c.h.b16 %v3136
        %v3364 = vunpack.c.l.b16 %v3137
        %v3365 = vunpack.c.l.b16 %v3138
        %v3366 = vunpack.c.h.b16 %v3138
        %v3367 = vunpack.c.l.b16 %v3139
        %v3368 = vunpack.c.l.b16 %v3140
        %v3369 = vunpack.c.h.b16 %v3140
        %v3370 = vunpack.c.l.b16 %v3141
        %v3371 = vunpack.c.l.b16 %v3142
        %v3372 = vunpack.c.h.b16 %v3142
        %v3373 = vunpack.c.l.b16 %v3143
        %v3374 = vunpack.c.l.b16 %v3144
        %v3375 = vunpack.c.h.b16 %v3144
        %v3376 = vunpack.c.l.b16 %v3145
        %v3377 = vunpack.c.l.b16 %v3146
        %v3378 = vunpack.c.h.b16 %v3146
        %v3379 = vunpack.c.l.b16 %v3147
        %v3380 = vunpack.c.l.b16 %v3148
        %v3381 = vunpack.c.h.b16 %v3148
        %v3382 = vunpack.c.l.b16 %v3149
        %v3383 = vunpack.c.l.b16 %v3150
        %v3384 = vunpack.c.h.b16 %v3150
        %v3385 = vunpack.c.l.b16 %v3151
        %v3386 = vunpack.c.l.b16 %v3152
        %v3387 = vunpack.c.h.b16 %v3152
        %v3388 = vunpack.c.l.b16 %v3153
        %v3389 = vunpack.c.l.b16 %v3154
        %v3390 = vunpack.c.h.b16 %v3154
        %v3391 = vunpack.c.l.b16 %v3155
        %v3392 = vunpack.c.l.b16 %v3156
        %v3393 = vunpack.c.h.b16 %v3156
        %v3394 = vunpack.c.l.b16 %v3157
        %v3395 = vunpack.c.l.b16 %v3158
        %v3396 = vunpack.c.h.b16 %v3158
        %v3397 = vunpack.c.l.b16 %v3159
        %v3398 = vunpack.c.l.b16 %v3160
        %v3399 = vunpack.c.h.b16 %v3160
        %v3400 = vunpack.c.l.b16 %v3161
        %v3401 = vunpack.c.l.b16 %v3162
        %v3402 = vunpack.c.h.b16 %v3162
        %v3403 = vunpack.c.l.b16 %v3163
        %v3404 = vunpack.c.l.b16 %v3164
        %v3405 = vunpack.c.h.b16 %v3164
        %v3406 = vunpack.c.l.b16 %v3165
        %v3407 = vunpack.c.l.b16 %v3166
        %v3408 = vunpack.c.h.b16 %v3166
        %v3409 = vunpack.c.l.b16 %v3167
        %v3410 = vunpack.c.l.b16 %v3168
        %v3411 = vunpack.c.h.b16 %v3168
        %v3412 = vunpack.c.l.b16 %v3169
        %v3413 = vunpack.c.l.b16 %v3170
        %v3414 = vunpack.c.h.b16 %v3170
        %v3415 = vunpack.c.l.b16 %v3171
        %v3416 = vunpack.c.l.b16 %v3172
        %v3417 = vunpack.c.h.b16 %v3172
        %v3418 = vunpack.c.l.b16 %v3173
        %v3419 = vunpack.c.l.b16 %v3174
        %v3420 = vunpack.c.h.b16 %v3174
        %v3421 = vunpack.c.l.b16 %v3175
        %v3422 = vunpack.c.l.b16 %v3176
        %v3423 = vunpack.c.h.b16 %v3176
        %v3424 = vunpack.c.l.b16 %v3177
        %v3425 = vunpack.c.l.b16 %v3178
        %v3426 = vunpack.c.h.b16 %v3178
        %v3427 = vunpack.c.l.b16 %v3179
        %v3428 = vunpack.c.l.b16 %v3180
        %v3429 = vunpack.c.h.b16 %v3180
        %v3430 = vunpack.c.l.b16 %v3181
        %v3431 = vunpack.c.l.b16 %v3182
        %v3432 = vunpack.c.h.b16 %v3182
        %v3433 = vunpack.c.l.b16 %v3183
        %v3434 = vunpack.c.l.b16 %v3184
        %v3435 = vunpack.c.h.b16 %v3184
        %v3436 = vunpack.c.l.b16 %v3185
        %v3437 = vunpack.c.l.b16 %v3186
        %v3438 = vunpack.c.h.b16 %v3186
        %v3439 = vunpack.c.l.b16 %v3187
        %v3440 = vunpack.c.l.b16 %v3188
        %v3441 = vunpack.c.h.b16 %v3188
        %v3442 = vunpack.c.l.b16 %v3189
        %v3443 = vunpack.c.l.b16 %v3190
        %v3444 = vunpack.c.h.b16 %v3190
        %v3445 = vunpack.c.l.b16 %v3191
        %v3446 = vunpack.c.l.b16 %v3192
        %v3447 = vunpack.c.h.b16 %v3192
        %v3448 = vunpack.c.l.b16 %v3193
        %v3449 = vunpack.c.l.b16 %v3194
        %v3450 = vunpack.c.h.b16 %v3194
        %v3451 = vunpack.c.l.b16 %v3195
        %v3452 = vunpack.c.l.b16 %v3196
        %v3453 = vunpack.c.h.b16 %v3196
        %v3454 = vunpack.c.l.b16 %v3197
        %v3455 = vpack.c.b16 %v3314, %v3311
        %v3456 = vpack.c.b16 %v3315, %v3312
        %v3457 = vpack.c.b16 %v3316, %v3313
        %v3458 = vpack.c.b16 %v3320, %v3317
        %v3459 = vpack.c.b16 %v3321, %v3318
        %v3460 = vpack.c.b16 %v3322, %v3319
        %v3461 = vpack.c.b16 %v3326, %v3323
        %v3462 = vpack.c.b16 %v3327, %v3324
        %v3463 = vpack.c.b16 %v3328, %v3325
        %v3464 = vpack.c.b16 %v3332, %v3329
        %v3465 = vpack.c.b16 %v3333, %v3330
        %v3466 = vpack.c.b16 %v3334, %v3331
        %v3467 = vpack.c.b16 %v3338, %v3335
        %v3468 = vpack.c.b16 %v3339, %v3336
        %v3469 = vpack.c.b16 %v3340, %v3337
        %v3470 = vpack.c.b16 %v3344, %v3341
        %v3471 = vpack.c.b16 %v3345, %v3342
        %v3472 = vpack.c.b16 %v3346, %v3343
        %v3473 = vpack.c.b16 %v3350, %v3347
        %v3474 = vpack.c.b16 %v3351, %v3348
        %v3475 = vpack.c.b16 %v3352, %v3349
        %v3476 = vpack.c.b16 %v3356, %v3353
        %v3477 = vpack.c.b16 %v3357, %v3354
        %v3478 = vpack.c.b16 %v3358, %v3355
        %v3479 = vpack.c.b16 %v3362, %v3359
        %v3480 = vpack.c.b16 %v3363, %v3360
        %v3481 = vpack.c.b16 %v3364, %v3361
        %v3482 = vpack.c.b16 %v3368, %v3365
        %v3483 = vpack.c.b16 %v3369, %v3366
        %v3484 = vpack.c.b16 %v3370, %v3367
        %v3485 = vpack.c.b16 %v3374, %v3371
        %v3486 = vpack.c.b16 %v3375, %v3372
        %v3487 = vpack.c.b16 %v3376, %v3373
        %v3488 = vpack.c.b16 %v3380, %v3377
        %v3489 = vpack.c.b16 %v3381, %v3378
        %v3490 = vpack.c.b16 %v3382, %v3379
        %v3491 = vpack.c.b16 %v3386, %v3383
        %v3492 = vpack.c.b16 %v3387, %v3384
        %v3493 = vpack.c.b16 %v3388, %v3385
        %v3494 = vpack.c.b16 %v3392, %v3389
        %v3495 = vpack.c.b16 %v3393, %v3390
        %v3496 = vpack.c.b16 %v3394, %v3391
        %v3497 = vpack.c.b16 %v3398, %v3395
        %v3498 = vpack.c.b16 %v3399, %v3396
        %v3499 = vpack.c.b16 %v3400, %v3397
        %v3500 = vpack.c.b16 %v3404, %v3401
        %v3501 = vpack.c.b16 %v3405, %v3402
        %v3502 = vpack.c.b16 %v3406, %v3403
        %v3503 = vpack.c.b16 %v3410, %v3407
        %v3504 = vpack.c.b16 %v3411, %v3408
        %v3505 = vpack.c.b16 %v3412, %v3409
        %v3506 = vpack.c.b16 %v3416, %v3413
        %v3507 = vpack.c.b16 %v3417, %v3414
        %v3508 = vpack.c.b16 %v3418, %v3415
        %v3509 = vpack.c.b16 %v3422, %v3419
        %v3510 = vpack.c.b16 %v3423, %v3420
        %v3511 = vpack.c.b16 %v3424, %v3421
        %v3512 = vpack.c.b16 %v3428, %v3425
        %v3513 = vpack.c.b16 %v3429, %v3426
        %v3514 = vpack.c.b16 %v3430, %v3427
        %v3515 = vpack.c.b16 %v3434, %v3431
        %v3516 = vpack.c.b16 %v3435, %v3432
        %v3517 = vpack.c.b16 %v3436, %v3433
        %v3518 = vpack.c.b16 %v3440, %v3437
        %v3519 = vpack.c.b16 %v3441, %v3438
        %v3520 = vpack.c.b16 %v3442, %v3439
        %v3521 = vpack.c.b16 %v3446, %v3443
        %v3522 = vpack.c.b16 %v3447, %v3444
        %v3523 = vpack.c.b16 %v3448, %v3445
        %v3524 = vpack.c.b16 %v3452, %v3449
        %v3525 = vpack.c.b16 %v3453, %v3450
        %v3526 = vpack.c.b16 %v3454, %v3451
        %3599 = vmatprep.subr.bf16.mxu0 %v3477
        %3600 = vmatpush1.bf16.msra.mxu0 %v3476
        %3601 = vmatprep.subr.bf16.mxu0 %v3474
        %3602 = vmatpush1.bf16.msra.mxu0 %v3473
        %3603 = vmatprep.subr.bf16.mxu0 %v3471
        %3604 = vmatpush1.bf16.msra.mxu0 %v3470
        %3605 = vmatprep.subr.bf16.mxu0 %v3468
        %3606 = vmatpush1.bf16.msra.mxu0 %v3467
        %3607 = vmatprep.subr.bf16.mxu0 %v3465
        %3608 = vmatpush1.bf16.msra.mxu0 %v3464
        %3609 = vmatprep.subr.bf16.mxu0 %v3462
        %3610 = vmatpush1.bf16.msra.mxu0 %v3461
        %3611 = vmatprep.subr.bf16.mxu0 %v3459
        %3612 = vmatpush1.bf16.msra.mxu0 %v3458
        %3613 = vmatprep.subr.bf16.mxu0 %v3456
        %3614 = vmatpush1.bf16.msra.mxu0 %v3455
        %3615 = vmatprep.subr.bf16.mxu0 %v3501
        %3616 = vmatpush2.bf16.msra.mxu0 %v3500
        %3617 = vmatprep.subr.bf16.mxu0 %v3498
        %3618 = vmatpush2.bf16.msra.mxu0 %v3497
        %3619 = vmatprep.subr.bf16.mxu0 %v3495
        %3620 = vmatpush2.bf16.msra.mxu0 %v3494
        %3621 = vmatprep.subr.bf16.mxu0 %v3492
        %3622 = vmatpush2.bf16.msra.mxu0 %v3491
        %3623 = vmatprep.subr.bf16.mxu0 %v3489
        %3624 = vmatpush2.bf16.msra.mxu0 %v3488
        %3625 = vmatprep.subr.bf16.mxu0 %v3486
        %3626 = vmatpush2.bf16.msra.mxu0 %v3485
        %3627 = vmatprep.subr.bf16.mxu0 %v3483
        %3628 = vmatpush2.bf16.msra.mxu0 %v3482
        %3629 = vmatprep.subr.bf16.mxu0 %v3480
        %3630 = vmatpush2.bf16.msra.mxu0 %v3479
        %3631 = vmatprep.mubr.bf16.mxu0 %v3100
        %3632 = vmatmul.mubr.bf16.gmra.mxu0 %v3099
        %v3633 = vpop.f32.mrf.mxu0
        %v3634 = vadd.f32 %v3203, %v3633
        %v3635 = vpop.f32.mrf.mxu0
        %v3636 = vadd.f32 %v3207, %v3635
        %v3637 = vpop.f32.mrf.mxu0
        %v3638 = vpop.f32.mrf.mxu0
        %3639 = vdwg.mxu0
        %3640 = vmatprep.subr.bf16.mxu0 %v3525
        %3641 = vmatpush1.bf16.msra.mxu0 %v3524
        %3642 = vmatprep.subr.bf16.mxu0 %v3522
        %3643 = vmatpush1.bf16.msra.mxu0 %v3521
        %3644 = vmatprep.subr.bf16.mxu0 %v3519
        %3645 = vmatpush1.bf16.msra.mxu0 %v3518
        %3646 = vmatprep.subr.bf16.mxu0 %v3516
        %3647 = vmatpush1.bf16.msra.mxu0 %v3515
        %3648 = vmatprep.subr.bf16.mxu0 %v3513
        %3649 = vmatpush1.bf16.msra.mxu0 %v3512
        %3650 = vmatprep.subr.bf16.mxu0 %v3510
        %3651 = vmatpush1.bf16.msra.mxu0 %v3509
        %3652 = vmatprep.subr.bf16.mxu0 %v3507
        %3653 = vmatpush1.bf16.msra.mxu0 %v3506
        %3654 = vmatprep.subr.bf16.mxu0 %v3504
        %3655 = vmatpush1.bf16.msra.mxu0 %v3503
        %3656 = vmatprep.subr.bf16.mxu0 0
        %3657 = vmatpush2.bf16.msra.mxu0 0
        %3658 = vmatprep.subr.bf16.mxu0 0
        %3659 = vmatpush2.bf16.msra.mxu0 0
        %3660 = vmatprep.subr.bf16.mxu0 0
        %3661 = vmatpush2.bf16.msra.mxu0 0
        %3662 = vmatprep.subr.bf16.mxu0 0
        %3663 = vmatpush2.bf16.msra.mxu0 0
        %3664 = vmatprep.subr.bf16.mxu0 0
        %3665 = vmatpush2.bf16.msra.mxu0 0
        %3666 = vmatprep.subr.bf16.mxu0 0
        %3667 = vmatpush2.bf16.msra.mxu0 0
        %3668 = vmatprep.subr.bf16.mxu0 0
        %3669 = vmatpush2.bf16.msra.mxu0 0
        %3670 = vmatprep.subr.bf16.mxu0 0
        %3671 = vmatpush2.bf16.msra.mxu0 0
        %3672 = vmatprep.mubr.bf16.mxu0 0
        %3673 = vmatmul.mubr.bf16.gmra.mxu0 %v3101
        %v3674 = vpop.f32.mrf.mxu0
        %v3675 = vadd.f32 %v3634, %v3674
        %v3676 = vpop.f32.mrf.mxu0
        %v3677 = vadd.f32 %v3636, %v3676
        %v3678 = vpop.f32.mrf.mxu0
        %v3679 = vpop.f32.mrf.mxu0
        %3680 = vdwg.mxu0
        %3681 = vmatprep.subr.bf16.mxu0 0
        %3682 = vmatpush1.bf16.msra.mxu0 %v3478
        %3683 = vmatprep.subr.bf16.mxu0 0
        %3684 = vmatpush1.bf16.msra.mxu0 %v3475
        %3685 = vmatprep.subr.bf16.mxu0 0
        %3686 = vmatpush1.bf16.msra.mxu0 %v3472
        %3687 = vmatprep.subr.bf16.mxu0 0
        %3688 = vmatpush1.bf16.msra.mxu0 %v3469
        %3689 = vmatprep.subr.bf16.mxu0 0
        %3690 = vmatpush1.bf16.msra.mxu0 %v3466
        %3691 = vmatprep.subr.bf16.mxu0 0
        %3692 = vmatpush1.bf16.msra.mxu0 %v3463
        %3693 = vmatprep.subr.bf16.mxu0 0
        %3694 = vmatpush1.bf16.msra.mxu0 %v3460
        %3695 = vmatprep.subr.bf16.mxu0 0
        %3696 = vmatpush1.bf16.msra.mxu0 %v3457
        %3697 = vmatprep.subr.bf16.mxu0 0
        %3698 = vmatpush2.bf16.msra.mxu0 %v3502
        %3699 = vmatprep.subr.bf16.mxu0 0
        %3700 = vmatpush2.bf16.msra.mxu0 %v3499
        %3701 = vmatprep.subr.bf16.mxu0 0
        %3702 = vmatpush2.bf16.msra.mxu0 %v3496
        %3703 = vmatprep.subr.bf16.mxu0 0
        %3704 = vmatpush2.bf16.msra.mxu0 %v3493
        %3705 = vmatprep.subr.bf16.mxu0 0
        %3706 = vmatpush2.bf16.msra.mxu0 %v3490
        %3707 = vmatprep.subr.bf16.mxu0 0
        %3708 = vmatpush2.bf16.msra.mxu0 %v3487
        %3709 = vmatprep.subr.bf16.mxu0 0
        %3710 = vmatpush2.bf16.msra.mxu0 %v3484
        %3711 = vmatprep.subr.bf16.mxu0 0
        %3712 = vmatpush2.bf16.msra.mxu0 %v3481
        %3713 = vmatprep.mubr.bf16.mxu0 %v3100
        %3714 = vmatmul.mubr.bf16.gmra.mxu0 %v3099
        %v3715 = vpop.f32.mrf.mxu0
        %v3716 = vadd.f32 %v3211, %v3715
        %v3717 = vpop.f32.mrf.mxu0
        %v3718 = vpop.f32.mrf.mxu0
        %v3719 = vpop.f32.mrf.mxu0
        %3720 = vdwg.mxu0
        %3721 = vmatprep.subr.bf16.mxu0 0
        %3722 = vmatpush1.bf16.msra.mxu0 %v3526
        %3723 = vmatprep.subr.bf16.mxu0 0
        %3724 = vmatpush1.bf16.msra.mxu0 %v3523
        %3725 = vmatprep.subr.bf16.mxu0 0
        %3726 = vmatpush1.bf16.msra.mxu0 %v3520
        %3727 = vmatprep.subr.bf16.mxu0 0
        %3728 = vmatpush1.bf16.msra.mxu0 %v3517
        %3729 = vmatprep.subr.bf16.mxu0 0
        %3730 = vmatpush1.bf16.msra.mxu0 %v3514
        %3731 = vmatprep.subr.bf16.mxu0 0
        %3732 = vmatpush1.bf16.msra.mxu0 %v3511
        %3733 = vmatprep.subr.bf16.mxu0 0
        %3734 = vmatpush1.bf16.msra.mxu0 %v3508
        %3735 = vmatprep.subr.bf16.mxu0 0
        %3736 = vmatpush1.bf16.msra.mxu0 %v3505
        %3737 = vmatprep.subr.bf16.mxu0 0
        %3738 = vmatpush2.bf16.msra.mxu0 0
        %3739 = vmatprep.subr.bf16.mxu0 0
        %3740 = vmatpush2.bf16.msra.mxu0 0
        %3741 = vmatprep.subr.bf16.mxu0 0
        %3742 = vmatpush2.bf16.msra.mxu0 0
        %3743 = vmatprep.subr.bf16.mxu0 0
        %3744 = vmatpush2.bf16.msra.mxu0 0
        %3745 = vmatprep.subr.bf16.mxu0 0
        %3746 = vmatpush2.bf16.msra.mxu0 0
        %3747 = vmatprep.subr.bf16.mxu0 0
        %3748 = vmatpush2.bf16.msra.mxu0 0
        %3749 = vmatprep.subr.bf16.mxu0 0
        %3750 = vmatpush2.bf16.msra.mxu0 0
        %3751 = vmatprep.subr.bf16.mxu0 0
        %3752 = vmatpush2.bf16.msra.mxu0 0
        %3753 = vmatprep.mubr.bf16.mxu0 0
        %3754 = vmatmul.mubr.bf16.gmra.mxu0 %v3101
        %v3755 = vpop.f32.mrf.mxu0
        %v3756 = vadd.f32 %v3716, %v3755
        %v3757 = vpop.f32.mrf.mxu0
        %v3758 = vpop.f32.mrf.mxu0
        %v3759 = vpop.f32.mrf.mxu0
        %3760 = vdwg.mxu0
        %v3761 = vadd.f32 %v577, %v3675
        %v3762 = vadd.f32 %v578, %v3677
        %v3763 = vadd.f32 %v579, %v3756
        %v3764 = vld [vmem:[#allocation9] sm:$0x7]
        %v3765 = vld [vmem:[#allocation11] sm:$0x7]
        %v3766 = vadd.f32 %v3761, %v3762
        %v3767 = vadd.f32 %v3766, %v3763
        %3768 = vadd.xlane.f32.xlu0 %v3767
        %v3769 = vpop.xlane.xlu0 %3768
        %v3770 = vmul.f32 %v3769, %v586
        %v3771 = vsub.f32 %v3761, %v3770
        %v3772 = vsub.f32 %v3762, %v3770
        %v3773 = vsub.f32 %v3763, %v3770
        %v3774 = vmul.f32 %v3771, %v3771
        %v3775 = vmul.f32 %v3772, %v3772
        %v3776 = vmul.f32 %v3773, %v3773
        %v3777 = vadd.f32 %v3774, %v3775
        %v3778 = vadd.f32 %v3777, %v3776
        %3779 = vadd.xlane.f32.xlu0 %v3778
        %v3780 = vpop.xlane.xlu0 %3779
        %v3781 = vmul.f32 %v3780, %v586
        %v3782 = vadd.f32 %v3781, 1e-05
        %v3783 = vrsqrt.pop %v3782
        %v3784 = vmul.f32 %v3771, %v3783
        %v3785 = vmul.f32 %v3772, %v3783
        %v3786 = vmul.f32 %v3773, %v3783
        %v3788 = vlaneseq
        %v3789 = vshrl.u32 %v3788, 7
        %v3790 = vsub.s32 0, %v3789
        %v3791 = vrot.slane %v3764, %v3790
        %v3792 = vlaneseq
        %v3793 = vshrl.u32 %v3792, 7
        %v3794 = vsub.s32 1, %v3793
        %v3795 = vrot.slane %v3764, %v3794
        %v3796 = vlaneseq
        %v3797 = vshrl.u32 %v3796, 7
        %v3798 = vsub.s32 2, %v3797
        %v3799 = vrot.slane %v3764, %v3798
        %v3803 = vmul.f32 %v3784, %v3791
        %v3804 = vmul.f32 %v3785, %v3795
        %v3805 = vmul.f32 %v3786, %v3799
        %v3807 = vlaneseq
        %v3808 = vshrl.u32 %v3807, 7
        %v3809 = vsub.s32 0, %v3808
        %v3810 = vrot.slane %v3765, %v3809
        %v3811 = vlaneseq
        %v3812 = vshrl.u32 %v3811, 7
        %v3813 = vsub.s32 1, %v3812
        %v3814 = vrot.slane %v3765, %v3813
        %v3815 = vlaneseq
        %v3816 = vshrl.u32 %v3815, 7
        %v3817 = vsub.s32 2, %v3816
        %v3818 = vrot.slane %v3765, %v3817
        %v3822 = vadd.f32 %v3803, %v3810
        %v3823 = vadd.f32 %v3804, %v3814
        %v3824 = vadd.f32 %v3805, %v3818
        %v3825 = vpack.c.bf16 %v3822, %v3822
        %v3826 = vpack.c.bf16 %v3823, %v3823
        %v3827 = vpack.c.bf16 %v3824, %v3824
        %v3828 = vld [vmem:[#allocation17] sm:$0xff]
        %v3829 = vld [vmem:[#allocation17 + $0x8] sm:$0xff]
        %v3830 = vld [vmem:[#allocation17 + $0x10] sm:$0xff]
        %v3831 = vld [vmem:[#allocation17 + $0x18] sm:$0xff]
        %v3832 = vld [vmem:[#allocation17 + $0x20] sm:$0xff]
        %v3833 = vld [vmem:[#allocation17 + $0x28] sm:$0xff]
        %v3834 = vld [vmem:[#allocation17 + $0x30] sm:$0xff]
        %v3835 = vld [vmem:[#allocation17 + $0x38] sm:$0xff]
        %v3836 = vld [vmem:[#allocation17 + $0x40] sm:$0xff]
        %v3837 = vld [vmem:[#allocation17 + $0x48] sm:$0xff]
        %v3838 = vld [vmem:[#allocation17 + $0x50] sm:$0xff]
        %v3839 = vld [vmem:[#allocation17 + $0x58] sm:$0xff]
        %v3840 = vld [vmem:[#allocation17 + $0x60] sm:$0xff]
        %v3841 = vld [vmem:[#allocation17 + $0x68] sm:$0xff]
        %v3842 = vld [vmem:[#allocation17 + $0x70] sm:$0xff]
        %v3843 = vld [vmem:[#allocation17 + $0x78] sm:$0xff]
        %v3844 = vld [vmem:[#allocation17 + $0x80] sm:$0xff]
        %v3845 = vld [vmem:[#allocation17 + $0x88] sm:$0xff]
        %v3846 = vld [vmem:[#allocation17 + $0x90] sm:$0xff]
        %v3847 = vld [vmem:[#allocation17 + $0x98] sm:$0xff]
        %v3848 = vld [vmem:[#allocation17 + $0xa0] sm:$0xff]
        %v3849 = vld [vmem:[#allocation17 + $0xa8] sm:$0xff]
        %v3850 = vld [vmem:[#allocation17 + $0xb0] sm:$0xff]
        %v3851 = vld [vmem:[#allocation17 + $0xb8] sm:$0xff]
        %v3852 = vld [vmem:[#allocation17 + $0xc0] sm:$0xff]
        %v3853 = vld [vmem:[#allocation17 + $0xc8] sm:$0xff]
        %v3854 = vld [vmem:[#allocation17 + $0xd0] sm:$0xff]
        %v3855 = vld [vmem:[#allocation17 + $0xd8] sm:$0xff]
        %v3856 = vld [vmem:[#allocation17 + $0xe0] sm:$0xff]
        %v3857 = vld [vmem:[#allocation17 + $0xe8] sm:$0xff]
        %v3858 = vld [vmem:[#allocation17 + $0xf0] sm:$0xff]
        %v3859 = vld [vmem:[#allocation17 + $0xf8] sm:$0xff]
        %v3860 = vld [vmem:[#allocation17 + $0x100] sm:$0xff]
        %v3861 = vld [vmem:[#allocation17 + $0x108] sm:$0xff]
        %v3862 = vld [vmem:[#allocation17 + $0x110] sm:$0xff]
        %v3863 = vld [vmem:[#allocation17 + $0x118] sm:$0xff]
        %v3864 = vld [vmem:[#allocation17 + $0x120] sm:$0xff]
        %v3865 = vld [vmem:[#allocation17 + $0x128] sm:$0xff]
        %v3866 = vld [vmem:[#allocation17 + $0x130] sm:$0xff]
        %v3867 = vld [vmem:[#allocation17 + $0x138] sm:$0xff]
        %v3868 = vld [vmem:[#allocation17 + $0x140] sm:$0xff]
        %v3869 = vld [vmem:[#allocation17 + $0x148] sm:$0xff]
        %v3870 = vld [vmem:[#allocation17 + $0x150] sm:$0xff]
        %v3871 = vld [vmem:[#allocation17 + $0x158] sm:$0xff]
        %v3872 = vld [vmem:[#allocation17 + $0x160] sm:$0xff]
        %v3873 = vld [vmem:[#allocation17 + $0x168] sm:$0xff]
        %v3874 = vld [vmem:[#allocation17 + $0x170] sm:$0xff]
        %v3875 = vld [vmem:[#allocation17 + $0x178] sm:$0xff]
        %v3876 = vld [vmem:[#allocation17 + $0x180] sm:$0xff]
        %v3877 = vld [vmem:[#allocation17 + $0x188] sm:$0xff]
        %v3878 = vld [vmem:[#allocation17 + $0x190] sm:$0xff]
        %v3879 = vld [vmem:[#allocation17 + $0x198] sm:$0xff]
        %v3880 = vld [vmem:[#allocation17 + $0x1a0] sm:$0xff]
        %v3881 = vld [vmem:[#allocation17 + $0x1a8] sm:$0xff]
        %v3882 = vld [vmem:[#allocation17 + $0x1b0] sm:$0xff]
        %v3883 = vld [vmem:[#allocation17 + $0x1b8] sm:$0xff]
        %v3884 = vld [vmem:[#allocation17 + $0x1c0] sm:$0xff]
        %v3885 = vld [vmem:[#allocation17 + $0x1c8] sm:$0xff]
        %v3886 = vld [vmem:[#allocation17 + $0x1d0] sm:$0xff]
        %v3887 = vld [vmem:[#allocation17 + $0x1d8] sm:$0xff]
        %v3888 = vld [vmem:[#allocation17 + $0x1e0] sm:$0xff]
        %v3889 = vld [vmem:[#allocation17 + $0x1e8] sm:$0xff]
        %v3890 = vld [vmem:[#allocation17 + $0x1f0] sm:$0xff]
        %v3891 = vld [vmem:[#allocation17 + $0x1f8] sm:$0xff]
        %v3892 = vld [vmem:[#allocation17 + $0x200] sm:$0xff]
        %v3893 = vld [vmem:[#allocation17 + $0x208] sm:$0xff]
        %v3894 = vld [vmem:[#allocation17 + $0x210] sm:$0xff]
        %v3895 = vld [vmem:[#allocation17 + $0x218] sm:$0xff]
        %v3896 = vld [vmem:[#allocation17 + $0x220] sm:$0xff]
        %v3897 = vld [vmem:[#allocation17 + $0x228] sm:$0xff]
        %v3898 = vld [vmem:[#allocation17 + $0x230] sm:$0xff]
        %v3899 = vld [vmem:[#allocation17 + $0x238] sm:$0xff]
        %v3900 = vld [vmem:[#allocation17 + $0x240] sm:$0xff]
        %v3901 = vld [vmem:[#allocation17 + $0x248] sm:$0xff]
        %v3902 = vld [vmem:[#allocation17 + $0x250] sm:$0xff]
        %v3903 = vld [vmem:[#allocation17 + $0x258] sm:$0xff]
        %v3904 = vld [vmem:[#allocation17 + $0x260] sm:$0xff]
        %v3905 = vld [vmem:[#allocation17 + $0x268] sm:$0xff]
        %v3906 = vld [vmem:[#allocation17 + $0x270] sm:$0xff]
        %v3907 = vld [vmem:[#allocation17 + $0x278] sm:$0xff]
        %v3908 = vld [vmem:[#allocation17 + $0x280] sm:$0xff]
        %v3909 = vld [vmem:[#allocation17 + $0x288] sm:$0xff]
        %v3910 = vld [vmem:[#allocation17 + $0x290] sm:$0xff]
        %v3911 = vld [vmem:[#allocation17 + $0x298] sm:$0xff]
        %v3912 = vld [vmem:[#allocation17 + $0x2a0] sm:$0xff]
        %v3913 = vld [vmem:[#allocation17 + $0x2a8] sm:$0xff]
        %v3914 = vld [vmem:[#allocation17 + $0x2b0] sm:$0xff]
        %v3915 = vld [vmem:[#allocation17 + $0x2b8] sm:$0xff]
        %v3916 = vld [vmem:[#allocation17 + $0x2c0] sm:$0xff]
        %v3917 = vld [vmem:[#allocation17 + $0x2c8] sm:$0xff]
        %v3918 = vld [vmem:[#allocation17 + $0x2d0] sm:$0xff]
        %v3919 = vld [vmem:[#allocation17 + $0x2d8] sm:$0xff]
        %v3920 = vld [vmem:[#allocation17 + $0x2e0] sm:$0xff]
        %v3921 = vld [vmem:[#allocation17 + $0x2e8] sm:$0xff]
        %v3922 = vld [vmem:[#allocation17 + $0x2f0] sm:$0xff]
        %v3923 = vld [vmem:[#allocation17 + $0x2f8] sm:$0xff]
        %v3924 = vld [vmem:[#allocation17 + $0x300] sm:$0xff]
        %v3925 = vld [vmem:[#allocation17 + $0x308] sm:$0xff]
        %v3926 = vld [vmem:[#allocation17 + $0x310] sm:$0xff]
        %v3927 = vld [vmem:[#allocation17 + $0x318] sm:$0xff]
        %v3928 = vld [vmem:[#allocation17 + $0x320] sm:$0xff]
        %v3929 = vld [vmem:[#allocation17 + $0x328] sm:$0xff]
        %v3930 = vld [vmem:[#allocation17 + $0x330] sm:$0xff]
        %v3931 = vld [vmem:[#allocation17 + $0x338] sm:$0xff]
        %v3932 = vld [vmem:[#allocation17 + $0x340] sm:$0xff]
        %v3933 = vld [vmem:[#allocation17 + $0x348] sm:$0xff]
        %v3934 = vld [vmem:[#allocation17 + $0x350] sm:$0xff]
        %v3935 = vld [vmem:[#allocation17 + $0x358] sm:$0xff]
        %v3936 = vld [vmem:[#allocation17 + $0x360] sm:$0xff]
        %v3937 = vld [vmem:[#allocation17 + $0x368] sm:$0xff]
        %v3938 = vld [vmem:[#allocation17 + $0x370] sm:$0xff]
        %v3939 = vld [vmem:[#allocation17 + $0x378] sm:$0xff]
        %v3940 = vld [vmem:[#allocation17 + $0x380] sm:$0xff]
        %v3941 = vld [vmem:[#allocation17 + $0x388] sm:$0xff]
        %v3942 = vld [vmem:[#allocation17 + $0x390] sm:$0xff]
        %v3943 = vld [vmem:[#allocation17 + $0x398] sm:$0xff]
        %v3944 = vld [vmem:[#allocation17 + $0x3a0] sm:$0xff]
        %v3945 = vld [vmem:[#allocation17 + $0x3a8] sm:$0xff]
        %v3946 = vld [vmem:[#allocation17 + $0x3b0] sm:$0xff]
        %v3947 = vld [vmem:[#allocation17 + $0x3b8] sm:$0xff]
        %v3948 = vld [vmem:[#allocation17 + $0x3c0] sm:$0xff]
        %v3949 = vld [vmem:[#allocation17 + $0x3c8] sm:$0xff]
        %v3950 = vld [vmem:[#allocation17 + $0x3d0] sm:$0xff]
        %v3951 = vld [vmem:[#allocation17 + $0x3d8] sm:$0xff]
        %v3952 = vld [vmem:[#allocation17 + $0x3e0] sm:$0xff]
        %v3953 = vld [vmem:[#allocation17 + $0x3e8] sm:$0xff]
        %v3954 = vld [vmem:[#allocation17 + $0x3f0] sm:$0xff]
        %v3955 = vld [vmem:[#allocation17 + $0x3f8] sm:$0xff]
        %v3956 = vld [vmem:[#allocation17 + $0x400] sm:$0xff]
        %v3957 = vld [vmem:[#allocation17 + $0x408] sm:$0xff]
        %v3958 = vld [vmem:[#allocation17 + $0x410] sm:$0xff]
        %v3959 = vld [vmem:[#allocation17 + $0x418] sm:$0xff]
        %v3960 = vld [vmem:[#allocation17 + $0x420] sm:$0xff]
        %v3961 = vld [vmem:[#allocation17 + $0x428] sm:$0xff]
        %v3962 = vld [vmem:[#allocation17 + $0x430] sm:$0xff]
        %v3963 = vld [vmem:[#allocation17 + $0x438] sm:$0xff]
        %v3964 = vld [vmem:[#allocation17 + $0x440] sm:$0xff]
        %v3965 = vld [vmem:[#allocation17 + $0x448] sm:$0xff]
        %v3966 = vld [vmem:[#allocation17 + $0x450] sm:$0xff]
        %v3967 = vld [vmem:[#allocation17 + $0x458] sm:$0xff]
        %v3968 = vld [vmem:[#allocation17 + $0x460] sm:$0xff]
        %v3969 = vld [vmem:[#allocation17 + $0x468] sm:$0xff]
        %v3970 = vld [vmem:[#allocation17 + $0x470] sm:$0xff]
        %v3971 = vld [vmem:[#allocation17 + $0x478] sm:$0xff]
        %v3972 = vld [vmem:[#allocation17 + $0x480] sm:$0xff]
        %v3973 = vld [vmem:[#allocation17 + $0x488] sm:$0xff]
        %v3974 = vld [vmem:[#allocation17 + $0x490] sm:$0xff]
        %v3975 = vld [vmem:[#allocation17 + $0x498] sm:$0xff]
        %v3976 = vld [vmem:[#allocation17 + $0x4a0] sm:$0xff]
        %v3977 = vld [vmem:[#allocation17 + $0x4a8] sm:$0xff]
        %v3978 = vld [vmem:[#allocation17 + $0x4b0] sm:$0xff]
        %v3979 = vld [vmem:[#allocation17 + $0x4b8] sm:$0xff]
        %v3980 = vld [vmem:[#allocation17 + $0x4c0] sm:$0xff]
        %v3981 = vld [vmem:[#allocation17 + $0x4c8] sm:$0xff]
        %v3982 = vld [vmem:[#allocation17 + $0x4d0] sm:$0xff]
        %v3983 = vld [vmem:[#allocation17 + $0x4d8] sm:$0xff]
        %v3984 = vld [vmem:[#allocation17 + $0x4e0] sm:$0xff]
        %v3985 = vld [vmem:[#allocation17 + $0x4e8] sm:$0xff]
        %v3986 = vld [vmem:[#allocation17 + $0x4f0] sm:$0xff]
        %v3987 = vld [vmem:[#allocation17 + $0x4f8] sm:$0xff]
        %v3988 = vld [vmem:[#allocation17 + $0x500] sm:$0xff]
        %v3989 = vld [vmem:[#allocation17 + $0x508] sm:$0xff]
        %v3990 = vld [vmem:[#allocation17 + $0x510] sm:$0xff]
        %v3991 = vld [vmem:[#allocation17 + $0x518] sm:$0xff]
        %v3992 = vld [vmem:[#allocation17 + $0x520] sm:$0xff]
        %v3993 = vld [vmem:[#allocation17 + $0x528] sm:$0xff]
        %v3994 = vld [vmem:[#allocation17 + $0x530] sm:$0xff]
        %v3995 = vld [vmem:[#allocation17 + $0x538] sm:$0xff]
        %v3996 = vld [vmem:[#allocation17 + $0x540] sm:$0xff]
        %v3997 = vld [vmem:[#allocation17 + $0x548] sm:$0xff]
        %v3998 = vld [vmem:[#allocation17 + $0x550] sm:$0xff]
        %v3999 = vld [vmem:[#allocation17 + $0x558] sm:$0xff]
        %v4000 = vld [vmem:[#allocation17 + $0x560] sm:$0xff]
        %v4001 = vld [vmem:[#allocation17 + $0x568] sm:$0xff]
        %v4002 = vld [vmem:[#allocation17 + $0x570] sm:$0xff]
        %v4003 = vld [vmem:[#allocation17 + $0x578] sm:$0xff]
        %v4004 = vld [vmem:[#allocation17 + $0x580] sm:$0xff]
        %v4005 = vld [vmem:[#allocation17 + $0x588] sm:$0xff]
        %v4006 = vld [vmem:[#allocation17 + $0x590] sm:$0xff]
        %v4007 = vld [vmem:[#allocation17 + $0x598] sm:$0xff]
        %v4008 = vld [vmem:[#allocation17 + $0x5a0] sm:$0xff]
        %v4009 = vld [vmem:[#allocation17 + $0x5a8] sm:$0xff]
        %v4010 = vld [vmem:[#allocation17 + $0x5b0] sm:$0xff]
        %v4011 = vld [vmem:[#allocation17 + $0x5b8] sm:$0xff]
        %v4012 = vld [vmem:[#allocation17 + $0x5c0] sm:$0xff]
        %v4013 = vld [vmem:[#allocation17 + $0x5c8] sm:$0xff]
        %v4014 = vld [vmem:[#allocation17 + $0x5d0] sm:$0xff]
        %v4015 = vld [vmem:[#allocation17 + $0x5d8] sm:$0xff]
        %v4016 = vld [vmem:[#allocation17 + $0x5e0] sm:$0xff]
        %v4017 = vld [vmem:[#allocation17 + $0x5e8] sm:$0xff]
        %v4018 = vld [vmem:[#allocation17 + $0x5f0] sm:$0xff]
        %v4019 = vld [vmem:[#allocation17 + $0x5f8] sm:$0xff]
        %v4020 = vld [vmem:[#allocation17 + $0x600] sm:$0xff]
        %v4021 = vld [vmem:[#allocation17 + $0x608] sm:$0xff]
        %v4022 = vld [vmem:[#allocation17 + $0x610] sm:$0xff]
        %v4023 = vld [vmem:[#allocation17 + $0x618] sm:$0xff]
        %v4024 = vld [vmem:[#allocation17 + $0x620] sm:$0xff]
        %v4025 = vld [vmem:[#allocation17 + $0x628] sm:$0xff]
        %v4026 = vld [vmem:[#allocation17 + $0x630] sm:$0xff]
        %v4027 = vld [vmem:[#allocation17 + $0x638] sm:$0xff]
        %v4028 = vld [vmem:[#allocation17 + $0x640] sm:$0xff]
        %v4029 = vld [vmem:[#allocation17 + $0x648] sm:$0xff]
        %v4030 = vld [vmem:[#allocation17 + $0x650] sm:$0xff]
        %v4031 = vld [vmem:[#allocation17 + $0x658] sm:$0xff]
        %v4032 = vld [vmem:[#allocation17 + $0x660] sm:$0xff]
        %v4033 = vld [vmem:[#allocation17 + $0x668] sm:$0xff]
        %v4034 = vld [vmem:[#allocation17 + $0x670] sm:$0xff]
        %v4035 = vld [vmem:[#allocation17 + $0x678] sm:$0xff]
        %v4036 = vld [vmem:[#allocation17 + $0x680] sm:$0xff]
        %v4037 = vld [vmem:[#allocation17 + $0x688] sm:$0xff]
        %v4038 = vld [vmem:[#allocation17 + $0x690] sm:$0xff]
        %v4039 = vld [vmem:[#allocation17 + $0x698] sm:$0xff]
        %v4040 = vld [vmem:[#allocation17 + $0x6a0] sm:$0xff]
        %v4041 = vld [vmem:[#allocation17 + $0x6a8] sm:$0xff]
        %v4042 = vld [vmem:[#allocation17 + $0x6b0] sm:$0xff]
        %v4043 = vld [vmem:[#allocation17 + $0x6b8] sm:$0xff]
        %v4044 = vld [vmem:[#allocation17 + $0x6c0] sm:$0xff]
        %v4045 = vld [vmem:[#allocation17 + $0x6c8] sm:$0xff]
        %v4046 = vld [vmem:[#allocation17 + $0x6d0] sm:$0xff]
        %v4047 = vld [vmem:[#allocation17 + $0x6d8] sm:$0xff]
        %v4048 = vld [vmem:[#allocation17 + $0x6e0] sm:$0xff]
        %v4049 = vld [vmem:[#allocation17 + $0x6e8] sm:$0xff]
        %v4050 = vld [vmem:[#allocation17 + $0x6f0] sm:$0xff]
        %v4051 = vld [vmem:[#allocation17 + $0x6f8] sm:$0xff]
        %v4052 = vld [vmem:[#allocation17 + $0x700] sm:$0xff]
        %v4053 = vld [vmem:[#allocation17 + $0x708] sm:$0xff]
        %v4054 = vld [vmem:[#allocation17 + $0x710] sm:$0xff]
        %v4055 = vld [vmem:[#allocation17 + $0x718] sm:$0xff]
        %v4056 = vld [vmem:[#allocation17 + $0x720] sm:$0xff]
        %v4057 = vld [vmem:[#allocation17 + $0x728] sm:$0xff]
        %v4058 = vld [vmem:[#allocation17 + $0x730] sm:$0xff]
        %v4059 = vld [vmem:[#allocation17 + $0x738] sm:$0xff]
        %v4060 = vld [vmem:[#allocation17 + $0x740] sm:$0xff]
        %v4061 = vld [vmem:[#allocation17 + $0x748] sm:$0xff]
        %v4062 = vld [vmem:[#allocation17 + $0x750] sm:$0xff]
        %v4063 = vld [vmem:[#allocation17 + $0x758] sm:$0xff]
        %v4064 = vld [vmem:[#allocation17 + $0x760] sm:$0xff]
        %v4065 = vld [vmem:[#allocation17 + $0x768] sm:$0xff]
        %v4066 = vld [vmem:[#allocation17 + $0x770] sm:$0xff]
        %v4067 = vld [vmem:[#allocation17 + $0x778] sm:$0xff]
        %v4068 = vld [vmem:[#allocation17 + $0x780] sm:$0xff]
        %v4069 = vld [vmem:[#allocation17 + $0x788] sm:$0xff]
        %v4070 = vld [vmem:[#allocation17 + $0x790] sm:$0xff]
        %v4071 = vld [vmem:[#allocation17 + $0x798] sm:$0xff]
        %v4072 = vld [vmem:[#allocation17 + $0x7a0] sm:$0xff]
        %v4073 = vld [vmem:[#allocation17 + $0x7a8] sm:$0xff]
        %v4074 = vld [vmem:[#allocation17 + $0x7b0] sm:$0xff]
        %v4075 = vld [vmem:[#allocation17 + $0x7b8] sm:$0xff]
        %v4076 = vld [vmem:[#allocation17 + $0x7c0] sm:$0xff]
        %v4077 = vld [vmem:[#allocation17 + $0x7c8] sm:$0xff]
        %v4078 = vld [vmem:[#allocation17 + $0x7d0] sm:$0xff]
        %v4079 = vld [vmem:[#allocation17 + $0x7d8] sm:$0xff]
        %v4080 = vld [vmem:[#allocation17 + $0x7e0] sm:$0xff]
        %v4081 = vld [vmem:[#allocation17 + $0x7e8] sm:$0xff]
        %v4082 = vld [vmem:[#allocation17 + $0x7f0] sm:$0xff]
        %v4083 = vld [vmem:[#allocation17 + $0x7f8] sm:$0xff]
        %v4084 = vld [vmem:[#allocation17 + $0x800] sm:$0xff]
        %v4085 = vld [vmem:[#allocation17 + $0x808] sm:$0xff]
        %v4086 = vld [vmem:[#allocation17 + $0x810] sm:$0xff]
        %v4087 = vld [vmem:[#allocation17 + $0x818] sm:$0xff]
        %v4088 = vld [vmem:[#allocation17 + $0x820] sm:$0xff]
        %v4089 = vld [vmem:[#allocation17 + $0x828] sm:$0xff]
        %v4090 = vld [vmem:[#allocation17 + $0x830] sm:$0xff]
        %v4091 = vld [vmem:[#allocation17 + $0x838] sm:$0xff]
        %v4092 = vld [vmem:[#allocation17 + $0x840] sm:$0xff]
        %v4093 = vld [vmem:[#allocation17 + $0x848] sm:$0xff]
        %v4094 = vld [vmem:[#allocation17 + $0x850] sm:$0xff]
        %v4095 = vld [vmem:[#allocation17 + $0x858] sm:$0xff]
        %v4096 = vld [vmem:[#allocation17 + $0x860] sm:$0xff]
        %v4097 = vld [vmem:[#allocation17 + $0x868] sm:$0xff]
        %v4098 = vld [vmem:[#allocation17 + $0x870] sm:$0xff]
        %v4099 = vld [vmem:[#allocation17 + $0x878] sm:$0xff]
        %v4100 = vld [vmem:[#allocation17 + $0x880] sm:$0xff]
        %v4101 = vld [vmem:[#allocation17 + $0x888] sm:$0xff]
        %v4102 = vld [vmem:[#allocation17 + $0x890] sm:$0xff]
        %v4103 = vld [vmem:[#allocation17 + $0x898] sm:$0xff]
        %v4104 = vld [vmem:[#allocation17 + $0x8a0] sm:$0xff]
        %v4105 = vld [vmem:[#allocation17 + $0x8a8] sm:$0xff]
        %v4106 = vld [vmem:[#allocation17 + $0x8b0] sm:$0xff]
        %v4107 = vld [vmem:[#allocation17 + $0x8b8] sm:$0xff]
        %v4108 = vld [vmem:[#allocation17 + $0x8c0] sm:$0xff]
        %v4109 = vld [vmem:[#allocation17 + $0x8c8] sm:$0xff]
        %v4110 = vld [vmem:[#allocation17 + $0x8d0] sm:$0xff]
        %v4111 = vld [vmem:[#allocation17 + $0x8d8] sm:$0xff]
        %v4112 = vld [vmem:[#allocation17 + $0x8e0] sm:$0xff]
        %v4113 = vld [vmem:[#allocation17 + $0x8e8] sm:$0xff]
        %v4114 = vld [vmem:[#allocation17 + $0x8f0] sm:$0xff]
        %v4115 = vld [vmem:[#allocation17 + $0x8f8] sm:$0xff]
        %v4116 = vld [vmem:[#allocation18] sm:$0xff]
        %v4117 = vld [vmem:[#allocation18 + $0x8] sm:$0xf]
        %v4120 = vlaneseq
        %v4121 = vshrl.u32 %v4120, 7
        %v4122 = vsub.s32 0, %v4121
        %v4123 = vrot.slane %v4116, %v4122
        %v4124 = vlaneseq
        %v4125 = vshrl.u32 %v4124, 7
        %v4126 = vsub.s32 1, %v4125
        %v4127 = vrot.slane %v4116, %v4126
        %v4128 = vlaneseq
        %v4129 = vshrl.u32 %v4128, 7
        %v4130 = vsub.s32 2, %v4129
        %v4131 = vrot.slane %v4116, %v4130
        %v4132 = vlaneseq
        %v4133 = vshrl.u32 %v4132, 7
        %v4134 = vsub.s32 3, %v4133
        %v4135 = vrot.slane %v4116, %v4134
        %v4136 = vlaneseq
        %v4137 = vshrl.u32 %v4136, 7
        %v4138 = vsub.s32 4, %v4137
        %v4139 = vrot.slane %v4116, %v4138
        %v4140 = vlaneseq
        %v4141 = vshrl.u32 %v4140, 7
        %v4142 = vsub.s32 5, %v4141
        %v4143 = vrot.slane %v4116, %v4142
        %v4144 = vlaneseq
        %v4145 = vshrl.u32 %v4144, 7
        %v4146 = vsub.s32 6, %v4145
        %v4147 = vrot.slane %v4116, %v4146
        %v4148 = vlaneseq
        %v4149 = vshrl.u32 %v4148, 7
        %v4150 = vsub.s32 7, %v4149
        %v4151 = vrot.slane %v4116, %v4150
        %v4152 = vlaneseq
        %v4153 = vshrl.u32 %v4152, 7
        %v4154 = vsub.s32 0, %v4153
        %v4155 = vrot.slane %v4117, %v4154
        %v4156 = vlaneseq
        %v4157 = vshrl.u32 %v4156, 7
        %v4158 = vsub.s32 1, %v4157
        %v4159 = vrot.slane %v4117, %v4158
        %v4160 = vlaneseq
        %v4161 = vshrl.u32 %v4160, 7
        %v4162 = vsub.s32 2, %v4161
        %v4163 = vrot.slane %v4117, %v4162
        %v4164 = vlaneseq
        %v4165 = vshrl.u32 %v4164, 7
        %v4166 = vsub.s32 3, %v4165
        %v4167 = vrot.slane %v4117, %v4166
        %v4468 = vunpack.c.l.b16 %v3828
        %v4469 = vunpack.c.h.b16 %v3828
        %v4470 = vunpack.c.l.b16 %v3829
        %v4471 = vunpack.c.h.b16 %v3829
        %v4472 = vunpack.c.l.b16 %v3830
        %v4473 = vunpack.c.h.b16 %v3830
        %v4474 = vunpack.c.l.b16 %v3831
        %v4475 = vunpack.c.h.b16 %v3831
        %v4476 = vunpack.c.l.b16 %v3832
        %v4477 = vunpack.c.h.b16 %v3832
        %v4478 = vunpack.c.l.b16 %v3833
        %v4479 = vunpack.c.h.b16 %v3833
        %v4480 = vunpack.c.l.b16 %v3834
        %v4481 = vunpack.c.h.b16 %v3834
        %v4482 = vunpack.c.l.b16 %v3835
        %v4483 = vunpack.c.h.b16 %v3835
        %v4484 = vunpack.c.l.b16 %v3836
        %v4485 = vunpack.c.h.b16 %v3836
        %v4486 = vunpack.c.l.b16 %v3837
        %v4487 = vunpack.c.h.b16 %v3837
        %v4488 = vunpack.c.l.b16 %v3838
        %v4489 = vunpack.c.h.b16 %v3838
        %v4490 = vunpack.c.l.b16 %v3839
        %v4491 = vunpack.c.h.b16 %v3839
        %v4492 = vunpack.c.l.b16 %v3840
        %v4493 = vunpack.c.h.b16 %v3840
        %v4494 = vunpack.c.l.b16 %v3841
        %v4495 = vunpack.c.h.b16 %v3841
        %v4496 = vunpack.c.l.b16 %v3842
        %v4497 = vunpack.c.h.b16 %v3842
        %v4498 = vunpack.c.l.b16 %v3843
        %v4499 = vunpack.c.h.b16 %v3843
        %v4500 = vunpack.c.l.b16 %v3844
        %v4501 = vunpack.c.h.b16 %v3844
        %v4502 = vunpack.c.l.b16 %v3845
        %v4503 = vunpack.c.h.b16 %v3845
        %v4504 = vunpack.c.l.b16 %v3846
        %v4505 = vunpack.c.h.b16 %v3846
        %v4506 = vunpack.c.l.b16 %v3847
        %v4507 = vunpack.c.h.b16 %v3847
        %v4508 = vunpack.c.l.b16 %v3848
        %v4509 = vunpack.c.h.b16 %v3848
        %v4510 = vunpack.c.l.b16 %v3849
        %v4511 = vunpack.c.h.b16 %v3849
        %v4512 = vunpack.c.l.b16 %v3850
        %v4513 = vunpack.c.h.b16 %v3850
        %v4514 = vunpack.c.l.b16 %v3851
        %v4515 = vunpack.c.h.b16 %v3851
        %v4516 = vunpack.c.l.b16 %v3852
        %v4517 = vunpack.c.h.b16 %v3852
        %v4518 = vunpack.c.l.b16 %v3853
        %v4519 = vunpack.c.h.b16 %v3853
        %v4520 = vunpack.c.l.b16 %v3854
        %v4521 = vunpack.c.h.b16 %v3854
        %v4522 = vunpack.c.l.b16 %v3855
        %v4523 = vunpack.c.h.b16 %v3855
        %v4524 = vunpack.c.l.b16 %v3856
        %v4525 = vunpack.c.h.b16 %v3856
        %v4526 = vunpack.c.l.b16 %v3857
        %v4527 = vunpack.c.h.b16 %v3857
        %v4528 = vunpack.c.l.b16 %v3858
        %v4529 = vunpack.c.h.b16 %v3858
        %v4530 = vunpack.c.l.b16 %v3859
        %v4531 = vunpack.c.h.b16 %v3859
        %v4532 = vunpack.c.l.b16 %v3860
        %v4533 = vunpack.c.h.b16 %v3860
        %v4534 = vunpack.c.l.b16 %v3861
        %v4535 = vunpack.c.h.b16 %v3861
        %v4536 = vunpack.c.l.b16 %v3862
        %v4537 = vunpack.c.h.b16 %v3862
        %v4538 = vunpack.c.l.b16 %v3863
        %v4539 = vunpack.c.h.b16 %v3863
        %v4540 = vunpack.c.l.b16 %v3864
        %v4541 = vunpack.c.h.b16 %v3864
        %v4542 = vunpack.c.l.b16 %v3865
        %v4543 = vunpack.c.h.b16 %v3865
        %v4544 = vunpack.c.l.b16 %v3866
        %v4545 = vunpack.c.h.b16 %v3866
        %v4546 = vunpack.c.l.b16 %v3867
        %v4547 = vunpack.c.h.b16 %v3867
        %v4548 = vunpack.c.l.b16 %v3868
        %v4549 = vunpack.c.h.b16 %v3868
        %v4550 = vunpack.c.l.b16 %v3869
        %v4551 = vunpack.c.h.b16 %v3869
        %v4552 = vunpack.c.l.b16 %v3870
        %v4553 = vunpack.c.h.b16 %v3870
        %v4554 = vunpack.c.l.b16 %v3871
        %v4555 = vunpack.c.h.b16 %v3871
        %v4556 = vunpack.c.l.b16 %v3872
        %v4557 = vunpack.c.h.b16 %v3872
        %v4558 = vunpack.c.l.b16 %v3873
        %v4559 = vunpack.c.h.b16 %v3873
        %v4560 = vunpack.c.l.b16 %v3874
        %v4561 = vunpack.c.h.b16 %v3874
        %v4562 = vunpack.c.l.b16 %v3875
        %v4563 = vunpack.c.h.b16 %v3875
        %v4564 = vunpack.c.l.b16 %v3876
        %v4565 = vunpack.c.h.b16 %v3876
        %v4566 = vunpack.c.l.b16 %v3877
        %v4567 = vunpack.c.h.b16 %v3877
        %v4568 = vunpack.c.l.b16 %v3878
        %v4569 = vunpack.c.h.b16 %v3878
        %v4570 = vunpack.c.l.b16 %v3879
        %v4571 = vunpack.c.h.b16 %v3879
        %v4572 = vunpack.c.l.b16 %v3880
        %v4573 = vunpack.c.h.b16 %v3880
        %v4574 = vunpack.c.l.b16 %v3881
        %v4575 = vunpack.c.h.b16 %v3881
        %v4576 = vunpack.c.l.b16 %v3882
        %v4577 = vunpack.c.h.b16 %v3882
        %v4578 = vunpack.c.l.b16 %v3883
        %v4579 = vunpack.c.h.b16 %v3883
        %v4580 = vunpack.c.l.b16 %v3884
        %v4581 = vunpack.c.h.b16 %v3884
        %v4582 = vunpack.c.l.b16 %v3885
        %v4583 = vunpack.c.h.b16 %v3885
        %v4584 = vunpack.c.l.b16 %v3886
        %v4585 = vunpack.c.h.b16 %v3886
        %v4586 = vunpack.c.l.b16 %v3887
        %v4587 = vunpack.c.h.b16 %v3887
        %v4588 = vunpack.c.l.b16 %v3888
        %v4589 = vunpack.c.h.b16 %v3888
        %v4590 = vunpack.c.l.b16 %v3889
        %v4591 = vunpack.c.h.b16 %v3889
        %v4592 = vunpack.c.l.b16 %v3890
        %v4593 = vunpack.c.h.b16 %v3890
        %v4594 = vunpack.c.l.b16 %v3891
        %v4595 = vunpack.c.h.b16 %v3891
        %v4596 = vunpack.c.l.b16 %v3892
        %v4597 = vunpack.c.h.b16 %v3892
        %v4598 = vunpack.c.l.b16 %v3893
        %v4599 = vunpack.c.h.b16 %v3893
        %v4600 = vunpack.c.l.b16 %v3894
        %v4601 = vunpack.c.h.b16 %v3894
        %v4602 = vunpack.c.l.b16 %v3895
        %v4603 = vunpack.c.h.b16 %v3895
        %v4604 = vunpack.c.l.b16 %v3896
        %v4605 = vunpack.c.h.b16 %v3896
        %v4606 = vunpack.c.l.b16 %v3897
        %v4607 = vunpack.c.h.b16 %v3897
        %v4608 = vunpack.c.l.b16 %v3898
        %v4609 = vunpack.c.h.b16 %v3898
        %v4610 = vunpack.c.l.b16 %v3899
        %v4611 = vunpack.c.h.b16 %v3899
        %v4612 = vunpack.c.l.b16 %v3900
        %v4613 = vunpack.c.h.b16 %v3900
        %v4614 = vunpack.c.l.b16 %v3901
        %v4615 = vunpack.c.h.b16 %v3901
        %v4616 = vunpack.c.l.b16 %v3902
        %v4617 = vunpack.c.h.b16 %v3902
        %v4618 = vunpack.c.l.b16 %v3903
        %v4619 = vunpack.c.h.b16 %v3903
        %v4620 = vunpack.c.l.b16 %v3904
        %v4621 = vunpack.c.h.b16 %v3904
        %v4622 = vunpack.c.l.b16 %v3905
        %v4623 = vunpack.c.h.b16 %v3905
        %v4624 = vunpack.c.l.b16 %v3906
        %v4625 = vunpack.c.h.b16 %v3906
        %v4626 = vunpack.c.l.b16 %v3907
        %v4627 = vunpack.c.h.b16 %v3907
        %v4628 = vunpack.c.l.b16 %v3908
        %v4629 = vunpack.c.h.b16 %v3908
        %v4630 = vunpack.c.l.b16 %v3909
        %v4631 = vunpack.c.h.b16 %v3909
        %v4632 = vunpack.c.l.b16 %v3910
        %v4633 = vunpack.c.h.b16 %v3910
        %v4634 = vunpack.c.l.b16 %v3911
        %v4635 = vunpack.c.h.b16 %v3911
        %v4636 = vunpack.c.l.b16 %v3912
        %v4637 = vunpack.c.h.b16 %v3912
        %v4638 = vunpack.c.l.b16 %v3913
        %v4639 = vunpack.c.h.b16 %v3913
        %v4640 = vunpack.c.l.b16 %v3914
        %v4641 = vunpack.c.h.b16 %v3914
        %v4642 = vunpack.c.l.b16 %v3915
        %v4643 = vunpack.c.h.b16 %v3915
        %v4644 = vunpack.c.l.b16 %v3916
        %v4645 = vunpack.c.h.b16 %v3916
        %v4646 = vunpack.c.l.b16 %v3917
        %v4647 = vunpack.c.h.b16 %v3917
        %v4648 = vunpack.c.l.b16 %v3918
        %v4649 = vunpack.c.h.b16 %v3918
        %v4650 = vunpack.c.l.b16 %v3919
        %v4651 = vunpack.c.h.b16 %v3919
        %v4652 = vunpack.c.l.b16 %v3920
        %v4653 = vunpack.c.h.b16 %v3920
        %v4654 = vunpack.c.l.b16 %v3921
        %v4655 = vunpack.c.h.b16 %v3921
        %v4656 = vunpack.c.l.b16 %v3922
        %v4657 = vunpack.c.h.b16 %v3922
        %v4658 = vunpack.c.l.b16 %v3923
        %v4659 = vunpack.c.h.b16 %v3923
        %v4660 = vunpack.c.l.b16 %v3924
        %v4661 = vunpack.c.h.b16 %v3924
        %v4662 = vunpack.c.l.b16 %v3925
        %v4663 = vunpack.c.h.b16 %v3925
        %v4664 = vunpack.c.l.b16 %v3926
        %v4665 = vunpack.c.h.b16 %v3926
        %v4666 = vunpack.c.l.b16 %v3927
        %v4667 = vunpack.c.h.b16 %v3927
        %v4668 = vunpack.c.l.b16 %v3928
        %v4669 = vunpack.c.h.b16 %v3928
        %v4670 = vunpack.c.l.b16 %v3929
        %v4671 = vunpack.c.h.b16 %v3929
        %v4672 = vunpack.c.l.b16 %v3930
        %v4673 = vunpack.c.h.b16 %v3930
        %v4674 = vunpack.c.l.b16 %v3931
        %v4675 = vunpack.c.h.b16 %v3931
        %v4676 = vunpack.c.l.b16 %v3932
        %v4677 = vunpack.c.h.b16 %v3932
        %v4678 = vunpack.c.l.b16 %v3933
        %v4679 = vunpack.c.h.b16 %v3933
        %v4680 = vunpack.c.l.b16 %v3934
        %v4681 = vunpack.c.h.b16 %v3934
        %v4682 = vunpack.c.l.b16 %v3935
        %v4683 = vunpack.c.h.b16 %v3935
        %v4684 = vunpack.c.l.b16 %v3936
        %v4685 = vunpack.c.h.b16 %v3936
        %v4686 = vunpack.c.l.b16 %v3937
        %v4687 = vunpack.c.h.b16 %v3937
        %v4688 = vunpack.c.l.b16 %v3938
        %v4689 = vunpack.c.h.b16 %v3938
        %v4690 = vunpack.c.l.b16 %v3939
        %v4691 = vunpack.c.h.b16 %v3939
        %v4692 = vunpack.c.l.b16 %v3940
        %v4693 = vunpack.c.h.b16 %v3940
        %v4694 = vunpack.c.l.b16 %v3941
        %v4695 = vunpack.c.h.b16 %v3941
        %v4696 = vunpack.c.l.b16 %v3942
        %v4697 = vunpack.c.h.b16 %v3942
        %v4698 = vunpack.c.l.b16 %v3943
        %v4699 = vunpack.c.h.b16 %v3943
        %v4700 = vunpack.c.l.b16 %v3944
        %v4701 = vunpack.c.h.b16 %v3944
        %v4702 = vunpack.c.l.b16 %v3945
        %v4703 = vunpack.c.h.b16 %v3945
        %v4704 = vunpack.c.l.b16 %v3946
        %v4705 = vunpack.c.h.b16 %v3946
        %v4706 = vunpack.c.l.b16 %v3947
        %v4707 = vunpack.c.h.b16 %v3947
        %v4708 = vunpack.c.l.b16 %v3948
        %v4709 = vunpack.c.h.b16 %v3948
        %v4710 = vunpack.c.l.b16 %v3949
        %v4711 = vunpack.c.h.b16 %v3949
        %v4712 = vunpack.c.l.b16 %v3950
        %v4713 = vunpack.c.h.b16 %v3950
        %v4714 = vunpack.c.l.b16 %v3951
        %v4715 = vunpack.c.h.b16 %v3951
        %v4716 = vunpack.c.l.b16 %v3952
        %v4717 = vunpack.c.h.b16 %v3952
        %v4718 = vunpack.c.l.b16 %v3953
        %v4719 = vunpack.c.h.b16 %v3953
        %v4720 = vunpack.c.l.b16 %v3954
        %v4721 = vunpack.c.h.b16 %v3954
        %v4722 = vunpack.c.l.b16 %v3955
        %v4723 = vunpack.c.h.b16 %v3955
        %v4724 = vunpack.c.l.b16 %v3956
        %v4725 = vunpack.c.h.b16 %v3956
        %v4726 = vunpack.c.l.b16 %v3957
        %v4727 = vunpack.c.h.b16 %v3957
        %v4728 = vunpack.c.l.b16 %v3958
        %v4729 = vunpack.c.h.b16 %v3958
        %v4730 = vunpack.c.l.b16 %v3959
        %v4731 = vunpack.c.h.b16 %v3959
        %v4732 = vunpack.c.l.b16 %v3960
        %v4733 = vunpack.c.h.b16 %v3960
        %v4734 = vunpack.c.l.b16 %v3961
        %v4735 = vunpack.c.h.b16 %v3961
        %v4736 = vunpack.c.l.b16 %v3962
        %v4737 = vunpack.c.h.b16 %v3962
        %v4738 = vunpack.c.l.b16 %v3963
        %v4739 = vunpack.c.h.b16 %v3963
        %v4740 = vunpack.c.l.b16 %v3964
        %v4741 = vunpack.c.h.b16 %v3964
        %v4742 = vunpack.c.l.b16 %v3965
        %v4743 = vunpack.c.h.b16 %v3965
        %v4744 = vunpack.c.l.b16 %v3966
        %v4745 = vunpack.c.h.b16 %v3966
        %v4746 = vunpack.c.l.b16 %v3967
        %v4747 = vunpack.c.h.b16 %v3967
        %v4748 = vunpack.c.l.b16 %v3968
        %v4749 = vunpack.c.h.b16 %v3968
        %v4750 = vunpack.c.l.b16 %v3969
        %v4751 = vunpack.c.h.b16 %v3969
        %v4752 = vunpack.c.l.b16 %v3970
        %v4753 = vunpack.c.h.b16 %v3970
        %v4754 = vunpack.c.l.b16 %v3971
        %v4755 = vunpack.c.h.b16 %v3971
        %v4756 = vunpack.c.l.b16 %v3972
        %v4757 = vunpack.c.h.b16 %v3972
        %v4758 = vunpack.c.l.b16 %v3973
        %v4759 = vunpack.c.h.b16 %v3973
        %v4760 = vunpack.c.l.b16 %v3974
        %v4761 = vunpack.c.h.b16 %v3974
        %v4762 = vunpack.c.l.b16 %v3975
        %v4763 = vunpack.c.h.b16 %v3975
        %v4764 = vunpack.c.l.b16 %v3976
        %v4765 = vunpack.c.h.b16 %v3976
        %v4766 = vunpack.c.l.b16 %v3977
        %v4767 = vunpack.c.h.b16 %v3977
        %v4768 = vunpack.c.l.b16 %v3978
        %v4769 = vunpack.c.h.b16 %v3978
        %v4770 = vunpack.c.l.b16 %v3979
        %v4771 = vunpack.c.h.b16 %v3979
        %v4772 = vunpack.c.l.b16 %v3980
        %v4773 = vunpack.c.h.b16 %v3980
        %v4774 = vunpack.c.l.b16 %v3981
        %v4775 = vunpack.c.h.b16 %v3981
        %v4776 = vunpack.c.l.b16 %v3982
        %v4777 = vunpack.c.h.b16 %v3982
        %v4778 = vunpack.c.l.b16 %v3983
        %v4779 = vunpack.c.h.b16 %v3983
        %v4780 = vunpack.c.l.b16 %v3984
        %v4781 = vunpack.c.h.b16 %v3984
        %v4782 = vunpack.c.l.b16 %v3985
        %v4783 = vunpack.c.h.b16 %v3985
        %v4784 = vunpack.c.l.b16 %v3986
        %v4785 = vunpack.c.h.b16 %v3986
        %v4786 = vunpack.c.l.b16 %v3987
        %v4787 = vunpack.c.h.b16 %v3987
        %v4788 = vunpack.c.l.b16 %v3988
        %v4789 = vunpack.c.h.b16 %v3988
        %v4790 = vunpack.c.l.b16 %v3989
        %v4791 = vunpack.c.h.b16 %v3989
        %v4792 = vunpack.c.l.b16 %v3990
        %v4793 = vunpack.c.h.b16 %v3990
        %v4794 = vunpack.c.l.b16 %v3991
        %v4795 = vunpack.c.h.b16 %v3991
        %v4796 = vunpack.c.l.b16 %v3992
        %v4797 = vunpack.c.h.b16 %v3992
        %v4798 = vunpack.c.l.b16 %v3993
        %v4799 = vunpack.c.h.b16 %v3993
        %v4800 = vunpack.c.l.b16 %v3994
        %v4801 = vunpack.c.h.b16 %v3994
        %v4802 = vunpack.c.l.b16 %v3995
        %v4803 = vunpack.c.h.b16 %v3995
        %v4804 = vunpack.c.l.b16 %v3996
        %v4805 = vunpack.c.h.b16 %v3996
        %v4806 = vunpack.c.l.b16 %v3997
        %v4807 = vunpack.c.h.b16 %v3997
        %v4808 = vunpack.c.l.b16 %v3998
        %v4809 = vunpack.c.h.b16 %v3998
        %v4810 = vunpack.c.l.b16 %v3999
        %v4811 = vunpack.c.h.b16 %v3999
        %v4812 = vunpack.c.l.b16 %v4000
        %v4813 = vunpack.c.h.b16 %v4000
        %v4814 = vunpack.c.l.b16 %v4001
        %v4815 = vunpack.c.h.b16 %v4001
        %v4816 = vunpack.c.l.b16 %v4002
        %v4817 = vunpack.c.h.b16 %v4002
        %v4818 = vunpack.c.l.b16 %v4003
        %v4819 = vunpack.c.h.b16 %v4003
        %v4820 = vunpack.c.l.b16 %v4004
        %v4821 = vunpack.c.h.b16 %v4004
        %v4822 = vunpack.c.l.b16 %v4005
        %v4823 = vunpack.c.h.b16 %v4005
        %v4824 = vunpack.c.l.b16 %v4006
        %v4825 = vunpack.c.h.b16 %v4006
        %v4826 = vunpack.c.l.b16 %v4007
        %v4827 = vunpack.c.h.b16 %v4007
        %v4828 = vunpack.c.l.b16 %v4008
        %v4829 = vunpack.c.h.b16 %v4008
        %v4830 = vunpack.c.l.b16 %v4009
        %v4831 = vunpack.c.h.b16 %v4009
        %v4832 = vunpack.c.l.b16 %v4010
        %v4833 = vunpack.c.h.b16 %v4010
        %v4834 = vunpack.c.l.b16 %v4011
        %v4835 = vunpack.c.h.b16 %v4011
        %v4836 = vunpack.c.l.b16 %v4012
        %v4837 = vunpack.c.h.b16 %v4012
        %v4838 = vunpack.c.l.b16 %v4013
        %v4839 = vunpack.c.h.b16 %v4013
        %v4840 = vunpack.c.l.b16 %v4014
        %v4841 = vunpack.c.h.b16 %v4014
        %v4842 = vunpack.c.l.b16 %v4015
        %v4843 = vunpack.c.h.b16 %v4015
        %v4844 = vunpack.c.l.b16 %v4016
        %v4845 = vunpack.c.h.b16 %v4016
        %v4846 = vunpack.c.l.b16 %v4017
        %v4847 = vunpack.c.h.b16 %v4017
        %v4848 = vunpack.c.l.b16 %v4018
        %v4849 = vunpack.c.h.b16 %v4018
        %v4850 = vunpack.c.l.b16 %v4019
        %v4851 = vunpack.c.h.b16 %v4019
        %v4852 = vunpack.c.l.b16 %v4020
        %v4853 = vunpack.c.h.b16 %v4020
        %v4854 = vunpack.c.l.b16 %v4021
        %v4855 = vunpack.c.h.b16 %v4021
        %v4856 = vunpack.c.l.b16 %v4022
        %v4857 = vunpack.c.h.b16 %v4022
        %v4858 = vunpack.c.l.b16 %v4023
        %v4859 = vunpack.c.h.b16 %v4023
        %v4860 = vunpack.c.l.b16 %v4024
        %v4861 = vunpack.c.h.b16 %v4024
        %v4862 = vunpack.c.l.b16 %v4025
        %v4863 = vunpack.c.h.b16 %v4025
        %v4864 = vunpack.c.l.b16 %v4026
        %v4865 = vunpack.c.h.b16 %v4026
        %v4866 = vunpack.c.l.b16 %v4027
        %v4867 = vunpack.c.h.b16 %v4027
        %v4868 = vunpack.c.l.b16 %v4028
        %v4869 = vunpack.c.h.b16 %v4028
        %v4870 = vunpack.c.l.b16 %v4029
        %v4871 = vunpack.c.h.b16 %v4029
        %v4872 = vunpack.c.l.b16 %v4030
        %v4873 = vunpack.c.h.b16 %v4030
        %v4874 = vunpack.c.l.b16 %v4031
        %v4875 = vunpack.c.h.b16 %v4031
        %v4876 = vunpack.c.l.b16 %v4032
        %v4877 = vunpack.c.h.b16 %v4032
        %v4878 = vunpack.c.l.b16 %v4033
        %v4879 = vunpack.c.h.b16 %v4033
        %v4880 = vunpack.c.l.b16 %v4034
        %v4881 = vunpack.c.h.b16 %v4034
        %v4882 = vunpack.c.l.b16 %v4035
        %v4883 = vunpack.c.h.b16 %v4035
        %v4884 = vunpack.c.l.b16 %v4036
        %v4885 = vunpack.c.h.b16 %v4036
        %v4886 = vunpack.c.l.b16 %v4037
        %v4887 = vunpack.c.h.b16 %v4037
        %v4888 = vunpack.c.l.b16 %v4038
        %v4889 = vunpack.c.h.b16 %v4038
        %v4890 = vunpack.c.l.b16 %v4039
        %v4891 = vunpack.c.h.b16 %v4039
        %v4892 = vunpack.c.l.b16 %v4040
        %v4893 = vunpack.c.h.b16 %v4040
        %v4894 = vunpack.c.l.b16 %v4041
        %v4895 = vunpack.c.h.b16 %v4041
        %v4896 = vunpack.c.l.b16 %v4042
        %v4897 = vunpack.c.h.b16 %v4042
        %v4898 = vunpack.c.l.b16 %v4043
        %v4899 = vunpack.c.h.b16 %v4043
        %v4900 = vunpack.c.l.b16 %v4044
        %v4901 = vunpack.c.h.b16 %v4044
        %v4902 = vunpack.c.l.b16 %v4045
        %v4903 = vunpack.c.h.b16 %v4045
        %v4904 = vunpack.c.l.b16 %v4046
        %v4905 = vunpack.c.h.b16 %v4046
        %v4906 = vunpack.c.l.b16 %v4047
        %v4907 = vunpack.c.h.b16 %v4047
        %v4908 = vunpack.c.l.b16 %v4048
        %v4909 = vunpack.c.h.b16 %v4048
        %v4910 = vunpack.c.l.b16 %v4049
        %v4911 = vunpack.c.h.b16 %v4049
        %v4912 = vunpack.c.l.b16 %v4050
        %v4913 = vunpack.c.h.b16 %v4050
        %v4914 = vunpack.c.l.b16 %v4051
        %v4915 = vunpack.c.h.b16 %v4051
        %v4916 = vunpack.c.l.b16 %v4052
        %v4917 = vunpack.c.h.b16 %v4052
        %v4918 = vunpack.c.l.b16 %v4053
        %v4919 = vunpack.c.h.b16 %v4053
        %v4920 = vunpack.c.l.b16 %v4054
        %v4921 = vunpack.c.h.b16 %v4054
        %v4922 = vunpack.c.l.b16 %v4055
        %v4923 = vunpack.c.h.b16 %v4055
        %v4924 = vunpack.c.l.b16 %v4056
        %v4925 = vunpack.c.h.b16 %v4056
        %v4926 = vunpack.c.l.b16 %v4057
        %v4927 = vunpack.c.h.b16 %v4057
        %v4928 = vunpack.c.l.b16 %v4058
        %v4929 = vunpack.c.h.b16 %v4058
        %v4930 = vunpack.c.l.b16 %v4059
        %v4931 = vunpack.c.h.b16 %v4059
        %v4932 = vunpack.c.l.b16 %v4060
        %v4933 = vunpack.c.h.b16 %v4060
        %v4934 = vunpack.c.l.b16 %v4061
        %v4935 = vunpack.c.h.b16 %v4061
        %v4936 = vunpack.c.l.b16 %v4062
        %v4937 = vunpack.c.h.b16 %v4062
        %v4938 = vunpack.c.l.b16 %v4063
        %v4939 = vunpack.c.h.b16 %v4063
        %v4940 = vunpack.c.l.b16 %v4064
        %v4941 = vunpack.c.h.b16 %v4064
        %v4942 = vunpack.c.l.b16 %v4065
        %v4943 = vunpack.c.h.b16 %v4065
        %v4944 = vunpack.c.l.b16 %v4066
        %v4945 = vunpack.c.h.b16 %v4066
        %v4946 = vunpack.c.l.b16 %v4067
        %v4947 = vunpack.c.h.b16 %v4067
        %v4948 = vunpack.c.l.b16 %v4068
        %v4949 = vunpack.c.h.b16 %v4068
        %v4950 = vunpack.c.l.b16 %v4069
        %v4951 = vunpack.c.h.b16 %v4069
        %v4952 = vunpack.c.l.b16 %v4070
        %v4953 = vunpack.c.h.b16 %v4070
        %v4954 = vunpack.c.l.b16 %v4071
        %v4955 = vunpack.c.h.b16 %v4071
        %v4956 = vunpack.c.l.b16 %v4072
        %v4957 = vunpack.c.h.b16 %v4072
        %v4958 = vunpack.c.l.b16 %v4073
        %v4959 = vunpack.c.h.b16 %v4073
        %v4960 = vunpack.c.l.b16 %v4074
        %v4961 = vunpack.c.h.b16 %v4074
        %v4962 = vunpack.c.l.b16 %v4075
        %v4963 = vunpack.c.h.b16 %v4075
        %v4964 = vunpack.c.l.b16 %v4076
        %v4965 = vunpack.c.h.b16 %v4076
        %v4966 = vunpack.c.l.b16 %v4077
        %v4967 = vunpack.c.h.b16 %v4077
        %v4968 = vunpack.c.l.b16 %v4078
        %v4969 = vunpack.c.h.b16 %v4078
        %v4970 = vunpack.c.l.b16 %v4079
        %v4971 = vunpack.c.h.b16 %v4079
        %v4972 = vunpack.c.l.b16 %v4080
        %v4973 = vunpack.c.h.b16 %v4080
        %v4974 = vunpack.c.l.b16 %v4081
        %v4975 = vunpack.c.h.b16 %v4081
        %v4976 = vunpack.c.l.b16 %v4082
        %v4977 = vunpack.c.h.b16 %v4082
        %v4978 = vunpack.c.l.b16 %v4083
        %v4979 = vunpack.c.h.b16 %v4083
        %v4980 = vunpack.c.l.b16 %v4084
        %v4981 = vunpack.c.h.b16 %v4084
        %v4982 = vunpack.c.l.b16 %v4085
        %v4983 = vunpack.c.h.b16 %v4085
        %v4984 = vunpack.c.l.b16 %v4086
        %v4985 = vunpack.c.h.b16 %v4086
        %v4986 = vunpack.c.l.b16 %v4087
        %v4987 = vunpack.c.h.b16 %v4087
        %v4988 = vunpack.c.l.b16 %v4088
        %v4989 = vunpack.c.h.b16 %v4088
        %v4990 = vunpack.c.l.b16 %v4089
        %v4991 = vunpack.c.h.b16 %v4089
        %v4992 = vunpack.c.l.b16 %v4090
        %v4993 = vunpack.c.h.b16 %v4090
        %v4994 = vunpack.c.l.b16 %v4091
        %v4995 = vunpack.c.h.b16 %v4091
        %v4996 = vunpack.c.l.b16 %v4092
        %v4997 = vunpack.c.h.b16 %v4092
        %v4998 = vunpack.c.l.b16 %v4093
        %v4999 = vunpack.c.h.b16 %v4093
        %v5000 = vunpack.c.l.b16 %v4094
        %v5001 = vunpack.c.h.b16 %v4094
        %v5002 = vunpack.c.l.b16 %v4095
        %v5003 = vunpack.c.h.b16 %v4095
        %v5004 = vunpack.c.l.b16 %v4096
        %v5005 = vunpack.c.h.b16 %v4096
        %v5006 = vunpack.c.l.b16 %v4097
        %v5007 = vunpack.c.h.b16 %v4097
        %v5008 = vunpack.c.l.b16 %v4098
        %v5009 = vunpack.c.h.b16 %v4098
        %v5010 = vunpack.c.l.b16 %v4099
        %v5011 = vunpack.c.h.b16 %v4099
        %v5012 = vunpack.c.l.b16 %v4100
        %v5013 = vunpack.c.h.b16 %v4100
        %v5014 = vunpack.c.l.b16 %v4101
        %v5015 = vunpack.c.h.b16 %v4101
        %v5016 = vunpack.c.l.b16 %v4102
        %v5017 = vunpack.c.h.b16 %v4102
        %v5018 = vunpack.c.l.b16 %v4103
        %v5019 = vunpack.c.h.b16 %v4103
        %v5020 = vunpack.c.l.b16 %v4104
        %v5021 = vunpack.c.h.b16 %v4104
        %v5022 = vunpack.c.l.b16 %v4105
        %v5023 = vunpack.c.h.b16 %v4105
        %v5024 = vunpack.c.l.b16 %v4106
        %v5025 = vunpack.c.h.b16 %v4106
        %v5026 = vunpack.c.l.b16 %v4107
        %v5027 = vunpack.c.h.b16 %v4107
        %v5028 = vunpack.c.l.b16 %v4108
        %v5029 = vunpack.c.h.b16 %v4108
        %v5030 = vunpack.c.l.b16 %v4109
        %v5031 = vunpack.c.h.b16 %v4109
        %v5032 = vunpack.c.l.b16 %v4110
        %v5033 = vunpack.c.h.b16 %v4110
        %v5034 = vunpack.c.l.b16 %v4111
        %v5035 = vunpack.c.h.b16 %v4111
        %v5036 = vunpack.c.l.b16 %v4112
        %v5037 = vunpack.c.h.b16 %v4112
        %v5038 = vunpack.c.l.b16 %v4113
        %v5039 = vunpack.c.h.b16 %v4113
        %v5040 = vunpack.c.l.b16 %v4114
        %v5041 = vunpack.c.h.b16 %v4114
        %v5042 = vunpack.c.l.b16 %v4115
        %v5043 = vunpack.c.h.b16 %v4115
        %v5044 = vpack.c.b16 %v4480, %v4468
        %v5045 = vpack.c.b16 %v4481, %v4469
        %v5046 = vpack.c.b16 %v4482, %v4470
        %v5047 = vpack.c.b16 %v4483, %v4471
        %v5048 = vpack.c.b16 %v4484, %v4472
        %v5049 = vpack.c.b16 %v4485, %v4473
        %v5050 = vpack.c.b16 %v4486, %v4474
        %v5051 = vpack.c.b16 %v4487, %v4475
        %v5052 = vpack.c.b16 %v4488, %v4476
        %v5053 = vpack.c.b16 %v4489, %v4477
        %v5054 = vpack.c.b16 %v4490, %v4478
        %v5055 = vpack.c.b16 %v4491, %v4479
        %v5056 = vpack.c.b16 %v4504, %v4492
        %v5057 = vpack.c.b16 %v4505, %v4493
        %v5058 = vpack.c.b16 %v4506, %v4494
        %v5059 = vpack.c.b16 %v4507, %v4495
        %v5060 = vpack.c.b16 %v4508, %v4496
        %v5061 = vpack.c.b16 %v4509, %v4497
        %v5062 = vpack.c.b16 %v4510, %v4498
        %v5063 = vpack.c.b16 %v4511, %v4499
        %v5064 = vpack.c.b16 %v4512, %v4500
        %v5065 = vpack.c.b16 %v4513, %v4501
        %v5066 = vpack.c.b16 %v4514, %v4502
        %v5067 = vpack.c.b16 %v4515, %v4503
        %v5068 = vpack.c.b16 %v4528, %v4516
        %v5069 = vpack.c.b16 %v4529, %v4517
        %v5070 = vpack.c.b16 %v4530, %v4518
        %v5071 = vpack.c.b16 %v4531, %v4519
        %v5072 = vpack.c.b16 %v4532, %v4520
        %v5073 = vpack.c.b16 %v4533, %v4521
        %v5074 = vpack.c.b16 %v4534, %v4522
        %v5075 = vpack.c.b16 %v4535, %v4523
        %v5076 = vpack.c.b16 %v4536, %v4524
        %v5077 = vpack.c.b16 %v4537, %v4525
        %v5078 = vpack.c.b16 %v4538, %v4526
        %v5079 = vpack.c.b16 %v4539, %v4527
        %v5080 = vpack.c.b16 %v4552, %v4540
        %v5081 = vpack.c.b16 %v4553, %v4541
        %v5082 = vpack.c.b16 %v4554, %v4542
        %v5083 = vpack.c.b16 %v4555, %v4543
        %v5084 = vpack.c.b16 %v4556, %v4544
        %v5085 = vpack.c.b16 %v4557, %v4545
        %v5086 = vpack.c.b16 %v4558, %v4546
        %v5087 = vpack.c.b16 %v4559, %v4547
        %v5088 = vpack.c.b16 %v4560, %v4548
        %v5089 = vpack.c.b16 %v4561, %v4549
        %v5090 = vpack.c.b16 %v4562, %v4550
        %v5091 = vpack.c.b16 %v4563, %v4551
        %v5092 = vpack.c.b16 %v4576, %v4564
        %v5093 = vpack.c.b16 %v4577, %v4565
        %v5094 = vpack.c.b16 %v4578, %v4566
        %v5095 = vpack.c.b16 %v4579, %v4567
        %v5096 = vpack.c.b16 %v4580, %v4568
        %v5097 = vpack.c.b16 %v4581, %v4569
        %v5098 = vpack.c.b16 %v4582, %v4570
        %v5099 = vpack.c.b16 %v4583, %v4571
        %v5100 = vpack.c.b16 %v4584, %v4572
        %v5101 = vpack.c.b16 %v4585, %v4573
        %v5102 = vpack.c.b16 %v4586, %v4574
        %v5103 = vpack.c.b16 %v4587, %v4575
        %v5104 = vpack.c.b16 %v4600, %v4588
        %v5105 = vpack.c.b16 %v4601, %v4589
        %v5106 = vpack.c.b16 %v4602, %v4590
        %v5107 = vpack.c.b16 %v4603, %v4591
        %v5108 = vpack.c.b16 %v4604, %v4592
        %v5109 = vpack.c.b16 %v4605, %v4593
        %v5110 = vpack.c.b16 %v4606, %v4594
        %v5111 = vpack.c.b16 %v4607, %v4595
        %v5112 = vpack.c.b16 %v4608, %v4596
        %v5113 = vpack.c.b16 %v4609, %v4597
        %v5114 = vpack.c.b16 %v4610, %v4598
        %v5115 = vpack.c.b16 %v4611, %v4599
        %v5116 = vpack.c.b16 %v4624, %v4612
        %v5117 = vpack.c.b16 %v4625, %v4613
        %v5118 = vpack.c.b16 %v4626, %v4614
        %v5119 = vpack.c.b16 %v4627, %v4615
        %v5120 = vpack.c.b16 %v4628, %v4616
        %v5121 = vpack.c.b16 %v4629, %v4617
        %v5122 = vpack.c.b16 %v4630, %v4618
        %v5123 = vpack.c.b16 %v4631, %v4619
        %v5124 = vpack.c.b16 %v4632, %v4620
        %v5125 = vpack.c.b16 %v4633, %v4621
        %v5126 = vpack.c.b16 %v4634, %v4622
        %v5127 = vpack.c.b16 %v4635, %v4623
        %v5128 = vpack.c.b16 %v4648, %v4636
        %v5129 = vpack.c.b16 %v4649, %v4637
        %v5130 = vpack.c.b16 %v4650, %v4638
        %v5131 = vpack.c.b16 %v4651, %v4639
        %v5132 = vpack.c.b16 %v4652, %v4640
        %v5133 = vpack.c.b16 %v4653, %v4641
        %v5134 = vpack.c.b16 %v4654, %v4642
        %v5135 = vpack.c.b16 %v4655, %v4643
        %v5136 = vpack.c.b16 %v4656, %v4644
        %v5137 = vpack.c.b16 %v4657, %v4645
        %v5138 = vpack.c.b16 %v4658, %v4646
        %v5139 = vpack.c.b16 %v4659, %v4647
        %v5140 = vpack.c.b16 %v4672, %v4660
        %v5141 = vpack.c.b16 %v4673, %v4661
        %v5142 = vpack.c.b16 %v4674, %v4662
        %v5143 = vpack.c.b16 %v4675, %v4663
        %v5144 = vpack.c.b16 %v4676, %v4664
        %v5145 = vpack.c.b16 %v4677, %v4665
        %v5146 = vpack.c.b16 %v4678, %v4666
        %v5147 = vpack.c.b16 %v4679, %v4667
        %v5148 = vpack.c.b16 %v4680, %v4668
        %v5149 = vpack.c.b16 %v4681, %v4669
        %v5150 = vpack.c.b16 %v4682, %v4670
        %v5151 = vpack.c.b16 %v4683, %v4671
        %v5152 = vpack.c.b16 %v4696, %v4684
        %v5153 = vpack.c.b16 %v4697, %v4685
        %v5154 = vpack.c.b16 %v4698, %v4686
        %v5155 = vpack.c.b16 %v4699, %v4687
        %v5156 = vpack.c.b16 %v4700, %v4688
        %v5157 = vpack.c.b16 %v4701, %v4689
        %v5158 = vpack.c.b16 %v4702, %v4690
        %v5159 = vpack.c.b16 %v4703, %v4691
        %v5160 = vpack.c.b16 %v4704, %v4692
        %v5161 = vpack.c.b16 %v4705, %v4693
        %v5162 = vpack.c.b16 %v4706, %v4694
        %v5163 = vpack.c.b16 %v4707, %v4695
        %v5164 = vpack.c.b16 %v4720, %v4708
        %v5165 = vpack.c.b16 %v4721, %v4709
        %v5166 = vpack.c.b16 %v4722, %v4710
        %v5167 = vpack.c.b16 %v4723, %v4711
        %v5168 = vpack.c.b16 %v4724, %v4712
        %v5169 = vpack.c.b16 %v4725, %v4713
        %v5170 = vpack.c.b16 %v4726, %v4714
        %v5171 = vpack.c.b16 %v4727, %v4715
        %v5172 = vpack.c.b16 %v4728, %v4716
        %v5173 = vpack.c.b16 %v4729, %v4717
        %v5174 = vpack.c.b16 %v4730, %v4718
        %v5175 = vpack.c.b16 %v4731, %v4719
        %v5176 = vpack.c.b16 %v4744, %v4732
        %v5177 = vpack.c.b16 %v4745, %v4733
        %v5178 = vpack.c.b16 %v4746, %v4734
        %v5179 = vpack.c.b16 %v4747, %v4735
        %v5180 = vpack.c.b16 %v4748, %v4736
        %v5181 = vpack.c.b16 %v4749, %v4737
        %v5182 = vpack.c.b16 %v4750, %v4738
        %v5183 = vpack.c.b16 %v4751, %v4739
        %v5184 = vpack.c.b16 %v4752, %v4740
        %v5185 = vpack.c.b16 %v4753, %v4741
        %v5186 = vpack.c.b16 %v4754, %v4742
        %v5187 = vpack.c.b16 %v4755, %v4743
        %v5188 = vpack.c.b16 %v4768, %v4756
        %v5189 = vpack.c.b16 %v4769, %v4757
        %v5190 = vpack.c.b16 %v4770, %v4758
        %v5191 = vpack.c.b16 %v4771, %v4759
        %v5192 = vpack.c.b16 %v4772, %v4760
        %v5193 = vpack.c.b16 %v4773, %v4761
        %v5194 = vpack.c.b16 %v4774, %v4762
        %v5195 = vpack.c.b16 %v4775, %v4763
        %v5196 = vpack.c.b16 %v4776, %v4764
        %v5197 = vpack.c.b16 %v4777, %v4765
        %v5198 = vpack.c.b16 %v4778, %v4766
        %v5199 = vpack.c.b16 %v4779, %v4767
        %v5200 = vpack.c.b16 %v4792, %v4780
        %v5201 = vpack.c.b16 %v4793, %v4781
        %v5202 = vpack.c.b16 %v4794, %v4782
        %v5203 = vpack.c.b16 %v4795, %v4783
        %v5204 = vpack.c.b16 %v4796, %v4784
        %v5205 = vpack.c.b16 %v4797, %v4785
        %v5206 = vpack.c.b16 %v4798, %v4786
        %v5207 = vpack.c.b16 %v4799, %v4787
        %v5208 = vpack.c.b16 %v4800, %v4788
        %v5209 = vpack.c.b16 %v4801, %v4789
        %v5210 = vpack.c.b16 %v4802, %v4790
        %v5211 = vpack.c.b16 %v4803, %v4791
        %v5212 = vpack.c.b16 %v4816, %v4804
        %v5213 = vpack.c.b16 %v4817, %v4805
        %v5214 = vpack.c.b16 %v4818, %v4806
        %v5215 = vpack.c.b16 %v4819, %v4807
        %v5216 = vpack.c.b16 %v4820, %v4808
        %v5217 = vpack.c.b16 %v4821, %v4809
        %v5218 = vpack.c.b16 %v4822, %v4810
        %v5219 = vpack.c.b16 %v4823, %v4811
        %v5220 = vpack.c.b16 %v4824, %v4812
        %v5221 = vpack.c.b16 %v4825, %v4813
        %v5222 = vpack.c.b16 %v4826, %v4814
        %v5223 = vpack.c.b16 %v4827, %v4815
        %v5224 = vpack.c.b16 %v4840, %v4828
        %v5225 = vpack.c.b16 %v4841, %v4829
        %v5226 = vpack.c.b16 %v4842, %v4830
        %v5227 = vpack.c.b16 %v4843, %v4831
        %v5228 = vpack.c.b16 %v4844, %v4832
        %v5229 = vpack.c.b16 %v4845, %v4833
        %v5230 = vpack.c.b16 %v4846, %v4834
        %v5231 = vpack.c.b16 %v4847, %v4835
        %v5232 = vpack.c.b16 %v4848, %v4836
        %v5233 = vpack.c.b16 %v4849, %v4837
        %v5234 = vpack.c.b16 %v4850, %v4838
        %v5235 = vpack.c.b16 %v4851, %v4839
        %v5236 = vpack.c.b16 %v4864, %v4852
        %v5237 = vpack.c.b16 %v4865, %v4853
        %v5238 = vpack.c.b16 %v4866, %v4854
        %v5239 = vpack.c.b16 %v4867, %v4855
        %v5240 = vpack.c.b16 %v4868, %v4856
        %v5241 = vpack.c.b16 %v4869, %v4857
        %v5242 = vpack.c.b16 %v4870, %v4858
        %v5243 = vpack.c.b16 %v4871, %v4859
        %v5244 = vpack.c.b16 %v4872, %v4860
        %v5245 = vpack.c.b16 %v4873, %v4861
        %v5246 = vpack.c.b16 %v4874, %v4862
        %v5247 = vpack.c.b16 %v4875, %v4863
        %v5248 = vpack.c.b16 %v4888, %v4876
        %v5249 = vpack.c.b16 %v4889, %v4877
        %v5250 = vpack.c.b16 %v4890, %v4878
        %v5251 = vpack.c.b16 %v4891, %v4879
        %v5252 = vpack.c.b16 %v4892, %v4880
        %v5253 = vpack.c.b16 %v4893, %v4881
        %v5254 = vpack.c.b16 %v4894, %v4882
        %v5255 = vpack.c.b16 %v4895, %v4883
        %v5256 = vpack.c.b16 %v4896, %v4884
        %v5257 = vpack.c.b16 %v4897, %v4885
        %v5258 = vpack.c.b16 %v4898, %v4886
        %v5259 = vpack.c.b16 %v4899, %v4887
        %v5260 = vpack.c.b16 %v4912, %v4900
        %v5261 = vpack.c.b16 %v4913, %v4901
        %v5262 = vpack.c.b16 %v4914, %v4902
        %v5263 = vpack.c.b16 %v4915, %v4903
        %v5264 = vpack.c.b16 %v4916, %v4904
        %v5265 = vpack.c.b16 %v4917, %v4905
        %v5266 = vpack.c.b16 %v4918, %v4906
        %v5267 = vpack.c.b16 %v4919, %v4907
        %v5268 = vpack.c.b16 %v4920, %v4908
        %v5269 = vpack.c.b16 %v4921, %v4909
        %v5270 = vpack.c.b16 %v4922, %v4910
        %v5271 = vpack.c.b16 %v4923, %v4911
        %v5272 = vpack.c.b16 %v4936, %v4924
        %v5273 = vpack.c.b16 %v4937, %v4925
        %v5274 = vpack.c.b16 %v4938, %v4926
        %v5275 = vpack.c.b16 %v4939, %v4927
        %v5276 = vpack.c.b16 %v4940, %v4928
        %v5277 = vpack.c.b16 %v4941, %v4929
        %v5278 = vpack.c.b16 %v4942, %v4930
        %v5279 = vpack.c.b16 %v4943, %v4931
        %v5280 = vpack.c.b16 %v4944, %v4932
        %v5281 = vpack.c.b16 %v4945, %v4933
        %v5282 = vpack.c.b16 %v4946, %v4934
        %v5283 = vpack.c.b16 %v4947, %v4935
        %v5284 = vpack.c.b16 %v4960, %v4948
        %v5285 = vpack.c.b16 %v4961, %v4949
        %v5286 = vpack.c.b16 %v4962, %v4950
        %v5287 = vpack.c.b16 %v4963, %v4951
        %v5288 = vpack.c.b16 %v4964, %v4952
        %v5289 = vpack.c.b16 %v4965, %v4953
        %v5290 = vpack.c.b16 %v4966, %v4954
        %v5291 = vpack.c.b16 %v4967, %v4955
        %v5292 = vpack.c.b16 %v4968, %v4956
        %v5293 = vpack.c.b16 %v4969, %v4957
        %v5294 = vpack.c.b16 %v4970, %v4958
        %v5295 = vpack.c.b16 %v4971, %v4959
        %v5296 = vpack.c.b16 %v4984, %v4972
        %v5297 = vpack.c.b16 %v4985, %v4973
        %v5298 = vpack.c.b16 %v4986, %v4974
        %v5299 = vpack.c.b16 %v4987, %v4975
        %v5300 = vpack.c.b16 %v4988, %v4976
        %v5301 = vpack.c.b16 %v4989, %v4977
        %v5302 = vpack.c.b16 %v4990, %v4978
        %v5303 = vpack.c.b16 %v4991, %v4979
        %v5304 = vpack.c.b16 %v4992, %v4980
        %v5305 = vpack.c.b16 %v4993, %v4981
        %v5306 = vpack.c.b16 %v4994, %v4982
        %v5307 = vpack.c.b16 %v4995, %v4983
        %v5308 = vpack.c.b16 %v5008, %v4996
        %v5309 = vpack.c.b16 %v5009, %v4997
        %v5310 = vpack.c.b16 %v5010, %v4998
        %v5311 = vpack.c.b16 %v5011, %v4999
        %v5312 = vpack.c.b16 %v5012, %v5000
        %v5313 = vpack.c.b16 %v5013, %v5001
        %v5314 = vpack.c.b16 %v5014, %v5002
        %v5315 = vpack.c.b16 %v5015, %v5003
        %v5316 = vpack.c.b16 %v5016, %v5004
        %v5317 = vpack.c.b16 %v5017, %v5005
        %v5318 = vpack.c.b16 %v5018, %v5006
        %v5319 = vpack.c.b16 %v5019, %v5007
        %v5320 = vpack.c.b16 %v5032, %v5020
        %v5321 = vpack.c.b16 %v5033, %v5021
        %v5322 = vpack.c.b16 %v5034, %v5022
        %v5323 = vpack.c.b16 %v5035, %v5023
        %v5324 = vpack.c.b16 %v5036, %v5024
        %v5325 = vpack.c.b16 %v5037, %v5025
        %v5326 = vpack.c.b16 %v5038, %v5026
        %v5327 = vpack.c.b16 %v5039, %v5027
        %v5328 = vpack.c.b16 %v5040, %v5028
        %v5329 = vpack.c.b16 %v5041, %v5029
        %v5330 = vpack.c.b16 %v5042, %v5030
        %v5331 = vpack.c.b16 %v5043, %v5031
        %5620 = vmatprep.subr.bf16.mxu0 %v5129
        %5621 = vmatpush1.bf16.msra.mxu0 %v5128
        %5622 = vmatprep.subr.bf16.mxu0 %v5117
        %5623 = vmatpush1.bf16.msra.mxu0 %v5116
        %5624 = vmatprep.subr.bf16.mxu0 %v5105
        %5625 = vmatpush1.bf16.msra.mxu0 %v5104
        %5626 = vmatprep.subr.bf16.mxu0 %v5093
        %5627 = vmatpush1.bf16.msra.mxu0 %v5092
        %5628 = vmatprep.subr.bf16.mxu0 %v5081
        %5629 = vmatpush1.bf16.msra.mxu0 %v5080
        %5630 = vmatprep.subr.bf16.mxu0 %v5069
        %5631 = vmatpush1.bf16.msra.mxu0 %v5068
        %5632 = vmatprep.subr.bf16.mxu0 %v5057
        %5633 = vmatpush1.bf16.msra.mxu0 %v5056
        %5634 = vmatprep.subr.bf16.mxu0 %v5045
        %5635 = vmatpush1.bf16.msra.mxu0 %v5044
        %5636 = vmatprep.subr.bf16.mxu0 %v5225
        %5637 = vmatpush2.bf16.msra.mxu0 %v5224
        %5638 = vmatprep.subr.bf16.mxu0 %v5213
        %5639 = vmatpush2.bf16.msra.mxu0 %v5212
        %5640 = vmatprep.subr.bf16.mxu0 %v5201
        %5641 = vmatpush2.bf16.msra.mxu0 %v5200
        %5642 = vmatprep.subr.bf16.mxu0 %v5189
        %5643 = vmatpush2.bf16.msra.mxu0 %v5188
        %5644 = vmatprep.subr.bf16.mxu0 %v5177
        %5645 = vmatpush2.bf16.msra.mxu0 %v5176
        %5646 = vmatprep.subr.bf16.mxu0 %v5165
        %5647 = vmatpush2.bf16.msra.mxu0 %v5164
        %5648 = vmatprep.subr.bf16.mxu0 %v5153
        %5649 = vmatpush2.bf16.msra.mxu0 %v5152
        %5650 = vmatprep.subr.bf16.mxu0 %v5141
        %5651 = vmatpush2.bf16.msra.mxu0 %v5140
        %5652 = vmatprep.mubr.bf16.mxu0 %v3826
        %5653 = vmatmul.mubr.bf16.gmra.mxu0 %v3825
        %v5654 = vpop.f32.mrf.mxu0
        %v5655 = vadd.f32 %v4123, %v5654
        %v5656 = vpop.f32.mrf.mxu0
        %v5657 = vadd.f32 %v4127, %v5656
        %v5658 = vpop.f32.mrf.mxu0
        %v5659 = vpop.f32.mrf.mxu0
        %5660 = vdwg.mxu0
        %5661 = vmatprep.subr.bf16.mxu0 %v5321
        %5662 = vmatpush1.bf16.msra.mxu0 %v5320
        %5663 = vmatprep.subr.bf16.mxu0 %v5309
        %5664 = vmatpush1.bf16.msra.mxu0 %v5308
        %5665 = vmatprep.subr.bf16.mxu0 %v5297
        %5666 = vmatpush1.bf16.msra.mxu0 %v5296
        %5667 = vmatprep.subr.bf16.mxu0 %v5285
        %5668 = vmatpush1.bf16.msra.mxu0 %v5284
        %5669 = vmatprep.subr.bf16.mxu0 %v5273
        %5670 = vmatpush1.bf16.msra.mxu0 %v5272
        %5671 = vmatprep.subr.bf16.mxu0 %v5261
        %5672 = vmatpush1.bf16.msra.mxu0 %v5260
        %5673 = vmatprep.subr.bf16.mxu0 %v5249
        %5674 = vmatpush1.bf16.msra.mxu0 %v5248
        %5675 = vmatprep.subr.bf16.mxu0 %v5237
        %5676 = vmatpush1.bf16.msra.mxu0 %v5236
        %5677 = vmatprep.subr.bf16.mxu0 0
        %5678 = vmatpush2.bf16.msra.mxu0 0
        %5679 = vmatprep.subr.bf16.mxu0 0
        %5680 = vmatpush2.bf16.msra.mxu0 0
        %5681 = vmatprep.subr.bf16.mxu0 0
        %5682 = vmatpush2.bf16.msra.mxu0 0
        %5683 = vmatprep.subr.bf16.mxu0 0
        %5684 = vmatpush2.bf16.msra.mxu0 0
        %5685 = vmatprep.subr.bf16.mxu0 0
        %5686 = vmatpush2.bf16.msra.mxu0 0
        %5687 = vmatprep.subr.bf16.mxu0 0
        %5688 = vmatpush2.bf16.msra.mxu0 0
        %5689 = vmatprep.subr.bf16.mxu0 0
        %5690 = vmatpush2.bf16.msra.mxu0 0
        %5691 = vmatprep.subr.bf16.mxu0 0
        %5692 = vmatpush2.bf16.msra.mxu0 0
        %5693 = vmatprep.mubr.bf16.mxu0 0
        %5694 = vmatmul.mubr.bf16.gmra.mxu0 %v3827
        %v5695 = vpop.f32.mrf.mxu0
        %v5696 = vadd.f32 %v5655, %v5695
        %v5697 = vpop.f32.mrf.mxu0
        %v5698 = vadd.f32 %v5657, %v5697
        %v5699 = vpop.f32.mrf.mxu0
        %v5700 = vpop.f32.mrf.mxu0
        %5701 = vdwg.mxu0
        %5702 = vmatprep.subr.bf16.mxu0 %v5131
        %5703 = vmatpush1.bf16.msra.mxu0 %v5130
        %5704 = vmatprep.subr.bf16.mxu0 %v5119
        %5705 = vmatpush1.bf16.msra.mxu0 %v5118
        %5706 = vmatprep.subr.bf16.mxu0 %v5107
        %5707 = vmatpush1.bf16.msra.mxu0 %v5106
        %5708 = vmatprep.subr.bf16.mxu0 %v5095
        %5709 = vmatpush1.bf16.msra.mxu0 %v5094
        %5710 = vmatprep.subr.bf16.mxu0 %v5083
        %5711 = vmatpush1.bf16.msra.mxu0 %v5082
        %5712 = vmatprep.subr.bf16.mxu0 %v5071
        %5713 = vmatpush1.bf16.msra.mxu0 %v5070
        %5714 = vmatprep.subr.bf16.mxu0 %v5059
        %5715 = vmatpush1.bf16.msra.mxu0 %v5058
        %5716 = vmatprep.subr.bf16.mxu0 %v5047
        %5717 = vmatpush1.bf16.msra.mxu0 %v5046
        %5718 = vmatprep.subr.bf16.mxu0 %v5227
        %5719 = vmatpush2.bf16.msra.mxu0 %v5226
        %5720 = vmatprep.subr.bf16.mxu0 %v5215
        %5721 = vmatpush2.bf16.msra.mxu0 %v5214
        %5722 = vmatprep.subr.bf16.mxu0 %v5203
        %5723 = vmatpush2.bf16.msra.mxu0 %v5202
        %5724 = vmatprep.subr.bf16.mxu0 %v5191
        %5725 = vmatpush2.bf16.msra.mxu0 %v5190
        %5726 = vmatprep.subr.bf16.mxu0 %v5179
        %5727 = vmatpush2.bf16.msra.mxu0 %v5178
        %5728 = vmatprep.subr.bf16.mxu0 %v5167
        %5729 = vmatpush2.bf16.msra.mxu0 %v5166
        %5730 = vmatprep.subr.bf16.mxu0 %v5155
        %5731 = vmatpush2.bf16.msra.mxu0 %v5154
        %5732 = vmatprep.subr.bf16.mxu0 %v5143
        %5733 = vmatpush2.bf16.msra.mxu0 %v5142
        %5734 = vmatprep.mubr.bf16.mxu0 %v3826
        %5735 = vmatmul.mubr.bf16.gmra.mxu0 %v3825
        %v5736 = vpop.f32.mrf.mxu0
        %v5737 = vadd.f32 %v4131, %v5736
        %v5738 = vpop.f32.mrf.mxu0
        %v5739 = vadd.f32 %v4135, %v5738
        %v5740 = vpop.f32.mrf.mxu0
        %v5741 = vpop.f32.mrf.mxu0
        %5742 = vdwg.mxu0
        %5743 = vmatprep.subr.bf16.mxu0 %v5323
        %5744 = vmatpush1.bf16.msra.mxu0 %v5322
        %5745 = vmatprep.subr.bf16.mxu0 %v5311
        %5746 = vmatpush1.bf16.msra.mxu0 %v5310
        %5747 = vmatprep.subr.bf16.mxu0 %v5299
        %5748 = vmatpush1.bf16.msra.mxu0 %v5298
        %5749 = vmatprep.subr.bf16.mxu0 %v5287
        %5750 = vmatpush1.bf16.msra.mxu0 %v5286
        %5751 = vmatprep.subr.bf16.mxu0 %v5275
        %5752 = vmatpush1.bf16.msra.mxu0 %v5274
        %5753 = vmatprep.subr.bf16.mxu0 %v5263
        %5754 = vmatpush1.bf16.msra.mxu0 %v5262
        %5755 = vmatprep.subr.bf16.mxu0 %v5251
        %5756 = vmatpush1.bf16.msra.mxu0 %v5250
        %5757 = vmatprep.subr.bf16.mxu0 %v5239
        %5758 = vmatpush1.bf16.msra.mxu0 %v5238
        %5759 = vmatprep.subr.bf16.mxu0 0
        %5760 = vmatpush2.bf16.msra.mxu0 0
        %5761 = vmatprep.subr.bf16.mxu0 0
        %5762 = vmatpush2.bf16.msra.mxu0 0
        %5763 = vmatprep.subr.bf16.mxu0 0
        %5764 = vmatpush2.bf16.msra.mxu0 0
        %5765 = vmatprep.subr.bf16.mxu0 0
        %5766 = vmatpush2.bf16.msra.mxu0 0
        %5767 = vmatprep.subr.bf16.mxu0 0
        %5768 = vmatpush2.bf16.msra.mxu0 0
        %5769 = vmatprep.subr.bf16.mxu0 0
        %5770 = vmatpush2.bf16.msra.mxu0 0
        %5771 = vmatprep.subr.bf16.mxu0 0
        %5772 = vmatpush2.bf16.msra.mxu0 0
        %5773 = vmatprep.subr.bf16.mxu0 0
        %5774 = vmatpush2.bf16.msra.mxu0 0
        %5775 = vmatprep.mubr.bf16.mxu0 0
        %5776 = vmatmul.mubr.bf16.gmra.mxu0 %v3827
        %v5777 = vpop.f32.mrf.mxu0
        %v5778 = vadd.f32 %v5737, %v5777
        %v5779 = vpop.f32.mrf.mxu0
        %v5780 = vadd.f32 %v5739, %v5779
        %v5781 = vpop.f32.mrf.mxu0
        %v5782 = vpop.f32.mrf.mxu0
        %5783 = vdwg.mxu0
        %5784 = vmatprep.subr.bf16.mxu0 %v5133
        %5785 = vmatpush1.bf16.msra.mxu0 %v5132
        %5786 = vmatprep.subr.bf16.mxu0 %v5121
        %5787 = vmatpush1.bf16.msra.mxu0 %v5120
        %5788 = vmatprep.subr.bf16.mxu0 %v5109
        %5789 = vmatpush1.bf16.msra.mxu0 %v5108
        %5790 = vmatprep.subr.bf16.mxu0 %v5097
        %5791 = vmatpush1.bf16.msra.mxu0 %v5096
        %5792 = vmatprep.subr.bf16.mxu0 %v5085
        %5793 = vmatpush1.bf16.msra.mxu0 %v5084
        %5794 = vmatprep.subr.bf16.mxu0 %v5073
        %5795 = vmatpush1.bf16.msra.mxu0 %v5072
        %5796 = vmatprep.subr.bf16.mxu0 %v5061
        %5797 = vmatpush1.bf16.msra.mxu0 %v5060
        %5798 = vmatprep.subr.bf16.mxu0 %v5049
        %5799 = vmatpush1.bf16.msra.mxu0 %v5048
        %5800 = vmatprep.subr.bf16.mxu0 %v5229
        %5801 = vmatpush2.bf16.msra.mxu0 %v5228
        %5802 = vmatprep.subr.bf16.mxu0 %v5217
        %5803 = vmatpush2.bf16.msra.mxu0 %v5216
        %5804 = vmatprep.subr.bf16.mxu0 %v5205
        %5805 = vmatpush2.bf16.msra.mxu0 %v5204
        %5806 = vmatprep.subr.bf16.mxu0 %v5193
        %5807 = vmatpush2.bf16.msra.mxu0 %v5192
        %5808 = vmatprep.subr.bf16.mxu0 %v5181
        %5809 = vmatpush2.bf16.msra.mxu0 %v5180
        %5810 = vmatprep.subr.bf16.mxu0 %v5169
        %5811 = vmatpush2.bf16.msra.mxu0 %v5168
        %5812 = vmatprep.subr.bf16.mxu0 %v5157
        %5813 = vmatpush2.bf16.msra.mxu0 %v5156
        %5814 = vmatprep.subr.bf16.mxu0 %v5145
        %5815 = vmatpush2.bf16.msra.mxu0 %v5144
        %5816 = vmatprep.mubr.bf16.mxu0 %v3826
        %5817 = vmatmul.mubr.bf16.gmra.mxu0 %v3825
        %v5818 = vpop.f32.mrf.mxu0
        %v5819 = vadd.f32 %v4139, %v5818
        %v5820 = vpop.f32.mrf.mxu0
        %v5821 = vadd.f32 %v4143, %v5820
        %v5822 = vpop.f32.mrf.mxu0
        %v5823 = vpop.f32.mrf.mxu0
        %5824 = vdwg.mxu0
        %5825 = vmatprep.subr.bf16.mxu0 %v5325
        %5826 = vmatpush1.bf16.msra.mxu0 %v5324
        %5827 = vmatprep.subr.bf16.mxu0 %v5313
        %5828 = vmatpush1.bf16.msra.mxu0 %v5312
        %5829 = vmatprep.subr.bf16.mxu0 %v5301
        %5830 = vmatpush1.bf16.msra.mxu0 %v5300
        %5831 = vmatprep.subr.bf16.mxu0 %v5289
        %5832 = vmatpush1.bf16.msra.mxu0 %v5288
        %5833 = vmatprep.subr.bf16.mxu0 %v5277
        %5834 = vmatpush1.bf16.msra.mxu0 %v5276
        %5835 = vmatprep.subr.bf16.mxu0 %v5265
        %5836 = vmatpush1.bf16.msra.mxu0 %v5264
        %5837 = vmatprep.subr.bf16.mxu0 %v5253
        %5838 = vmatpush1.bf16.msra.mxu0 %v5252
        %5839 = vmatprep.subr.bf16.mxu0 %v5241
        %5840 = vmatpush1.bf16.msra.mxu0 %v5240
        %5841 = vmatprep.subr.bf16.mxu0 0
        %5842 = vmatpush2.bf16.msra.mxu0 0
        %5843 = vmatprep.subr.bf16.mxu0 0
        %5844 = vmatpush2.bf16.msra.mxu0 0
        %5845 = vmatprep.subr.bf16.mxu0 0
        %5846 = vmatpush2.bf16.msra.mxu0 0
        %5847 = vmatprep.subr.bf16.mxu0 0
        %5848 = vmatpush2.bf16.msra.mxu0 0
        %5849 = vmatprep.subr.bf16.mxu0 0
        %5850 = vmatpush2.bf16.msra.mxu0 0
        %5851 = vmatprep.subr.bf16.mxu0 0
        %5852 = vmatpush2.bf16.msra.mxu0 0
        %5853 = vmatprep.subr.bf16.mxu0 0
        %5854 = vmatpush2.bf16.msra.mxu0 0
        %5855 = vmatprep.subr.bf16.mxu0 0
        %5856 = vmatpush2.bf16.msra.mxu0 0
        %5857 = vmatprep.mubr.bf16.mxu0 0
        %5858 = vmatmul.mubr.bf16.gmra.mxu0 %v3827
        %v5859 = vpop.f32.mrf.mxu0
        %v5860 = vadd.f32 %v5819, %v5859
        %v5861 = vpop.f32.mrf.mxu0
        %v5862 = vadd.f32 %v5821, %v5861
        %v5863 = vpop.f32.mrf.mxu0
        %v5864 = vpop.f32.mrf.mxu0
        %5865 = vdwg.mxu0
        %5866 = vmatprep.subr.bf16.mxu0 %v5135
        %5867 = vmatpush1.bf16.msra.mxu0 %v5134
        %5868 = vmatprep.subr.bf16.mxu0 %v5123
        %5869 = vmatpush1.bf16.msra.mxu0 %v5122
        %5870 = vmatprep.subr.bf16.mxu0 %v5111
        %5871 = vmatpush1.bf16.msra.mxu0 %v5110
        %5872 = vmatprep.subr.bf16.mxu0 %v5099
        %5873 = vmatpush1.bf16.msra.mxu0 %v5098
        %5874 = vmatprep.subr.bf16.mxu0 %v5087
        %5875 = vmatpush1.bf16.msra.mxu0 %v5086
        %5876 = vmatprep.subr.bf16.mxu0 %v5075
        %5877 = vmatpush1.bf16.msra.mxu0 %v5074
        %5878 = vmatprep.subr.bf16.mxu0 %v5063
        %5879 = vmatpush1.bf16.msra.mxu0 %v5062
        %5880 = vmatprep.subr.bf16.mxu0 %v5051
        %5881 = vmatpush1.bf16.msra.mxu0 %v5050
        %5882 = vmatprep.subr.bf16.mxu0 %v5231
        %5883 = vmatpush2.bf16.msra.mxu0 %v5230
        %5884 = vmatprep.subr.bf16.mxu0 %v5219
        %5885 = vmatpush2.bf16.msra.mxu0 %v5218
        %5886 = vmatprep.subr.bf16.mxu0 %v5207
        %5887 = vmatpush2.bf16.msra.mxu0 %v5206
        %5888 = vmatprep.subr.bf16.mxu0 %v5195
        %5889 = vmatpush2.bf16.msra.mxu0 %v5194
        %5890 = vmatprep.subr.bf16.mxu0 %v5183
        %5891 = vmatpush2.bf16.msra.mxu0 %v5182
        %5892 = vmatprep.subr.bf16.mxu0 %v5171
        %5893 = vmatpush2.bf16.msra.mxu0 %v5170
        %5894 = vmatprep.subr.bf16.mxu0 %v5159
        %5895 = vmatpush2.bf16.msra.mxu0 %v5158
        %5896 = vmatprep.subr.bf16.mxu0 %v5147
        %5897 = vmatpush2.bf16.msra.mxu0 %v5146
        %5898 = vmatprep.mubr.bf16.mxu0 %v3826
        %5899 = vmatmul.mubr.bf16.gmra.mxu0 %v3825
        %v5900 = vpop.f32.mrf.mxu0
        %v5901 = vadd.f32 %v4147, %v5900
        %v5902 = vpop.f32.mrf.mxu0
        %v5903 = vadd.f32 %v4151, %v5902
        %v5904 = vpop.f32.mrf.mxu0
        %v5905 = vpop.f32.mrf.mxu0
        %5906 = vdwg.mxu0
        %5907 = vmatprep.subr.bf16.mxu0 %v5327
        %5908 = vmatpush1.bf16.msra.mxu0 %v5326
        %5909 = vmatprep.subr.bf16.mxu0 %v5315
        %5910 = vmatpush1.bf16.msra.mxu0 %v5314
        %5911 = vmatprep.subr.bf16.mxu0 %v5303
        %5912 = vmatpush1.bf16.msra.mxu0 %v5302
        %5913 = vmatprep.subr.bf16.mxu0 %v5291
        %5914 = vmatpush1.bf16.msra.mxu0 %v5290
        %5915 = vmatprep.subr.bf16.mxu0 %v5279
        %5916 = vmatpush1.bf16.msra.mxu0 %v5278
        %5917 = vmatprep.subr.bf16.mxu0 %v5267
        %5918 = vmatpush1.bf16.msra.mxu0 %v5266
        %5919 = vmatprep.subr.bf16.mxu0 %v5255
        %5920 = vmatpush1.bf16.msra.mxu0 %v5254
        %5921 = vmatprep.subr.bf16.mxu0 %v5243
        %5922 = vmatpush1.bf16.msra.mxu0 %v5242
        %5923 = vmatprep.subr.bf16.mxu0 0
        %5924 = vmatpush2.bf16.msra.mxu0 0
        %5925 = vmatprep.subr.bf16.mxu0 0
        %5926 = vmatpush2.bf16.msra.mxu0 0
        %5927 = vmatprep.subr.bf16.mxu0 0
        %5928 = vmatpush2.bf16.msra.mxu0 0
        %5929 = vmatprep.subr.bf16.mxu0 0
        %5930 = vmatpush2.bf16.msra.mxu0 0
        %5931 = vmatprep.subr.bf16.mxu0 0
        %5932 = vmatpush2.bf16.msra.mxu0 0
        %5933 = vmatprep.subr.bf16.mxu0 0
        %5934 = vmatpush2.bf16.msra.mxu0 0
        %5935 = vmatprep.subr.bf16.mxu0 0
        %5936 = vmatpush2.bf16.msra.mxu0 0
        %5937 = vmatprep.subr.bf16.mxu0 0
        %5938 = vmatpush2.bf16.msra.mxu0 0
        %5939 = vmatprep.mubr.bf16.mxu0 0
        %5940 = vmatmul.mubr.bf16.gmra.mxu0 %v3827
        %v5941 = vpop.f32.mrf.mxu0
        %v5942 = vadd.f32 %v5901, %v5941
        %v5943 = vpop.f32.mrf.mxu0
        %v5944 = vadd.f32 %v5903, %v5943
        %v5945 = vpop.f32.mrf.mxu0
        %v5946 = vpop.f32.mrf.mxu0
        %5947 = vdwg.mxu0
        %5948 = vmatprep.subr.bf16.mxu0 %v5137
        %5949 = vmatpush1.bf16.msra.mxu0 %v5136
        %5950 = vmatprep.subr.bf16.mxu0 %v5125
        %5951 = vmatpush1.bf16.msra.mxu0 %v5124
        %5952 = vmatprep.subr.bf16.mxu0 %v5113
        %5953 = vmatpush1.bf16.msra.mxu0 %v5112
        %5954 = vmatprep.subr.bf16.mxu0 %v5101
        %5955 = vmatpush1.bf16.msra.mxu0 %v5100
        %5956 = vmatprep.subr.bf16.mxu0 %v5089
        %5957 = vmatpush1.bf16.msra.mxu0 %v5088
        %5958 = vmatprep.subr.bf16.mxu0 %v5077
        %5959 = vmatpush1.bf16.msra.mxu0 %v5076
        %5960 = vmatprep.subr.bf16.mxu0 %v5065
        %5961 = vmatpush1.bf16.msra.mxu0 %v5064
        %5962 = vmatprep.subr.bf16.mxu0 %v5053
        %5963 = vmatpush1.bf16.msra.mxu0 %v5052
        %5964 = vmatprep.subr.bf16.mxu0 %v5233
        %5965 = vmatpush2.bf16.msra.mxu0 %v5232
        %5966 = vmatprep.subr.bf16.mxu0 %v5221
        %5967 = vmatpush2.bf16.msra.mxu0 %v5220
        %5968 = vmatprep.subr.bf16.mxu0 %v5209
        %5969 = vmatpush2.bf16.msra.mxu0 %v5208
        %5970 = vmatprep.subr.bf16.mxu0 %v5197
        %5971 = vmatpush2.bf16.msra.mxu0 %v5196
        %5972 = vmatprep.subr.bf16.mxu0 %v5185
        %5973 = vmatpush2.bf16.msra.mxu0 %v5184
        %5974 = vmatprep.subr.bf16.mxu0 %v5173
        %5975 = vmatpush2.bf16.msra.mxu0 %v5172
        %5976 = vmatprep.subr.bf16.mxu0 %v5161
        %5977 = vmatpush2.bf16.msra.mxu0 %v5160
        %5978 = vmatprep.subr.bf16.mxu0 %v5149
        %5979 = vmatpush2.bf16.msra.mxu0 %v5148
        %5980 = vmatprep.mubr.bf16.mxu0 %v3826
        %5981 = vmatmul.mubr.bf16.gmra.mxu0 %v3825
        %v5982 = vpop.f32.mrf.mxu0
        %v5983 = vadd.f32 %v4155, %v5982
        %v5984 = vpop.f32.mrf.mxu0
        %v5985 = vadd.f32 %v4159, %v5984
        %v5986 = vpop.f32.mrf.mxu0
        %v5987 = vpop.f32.mrf.mxu0
        %5988 = vdwg.mxu0
        %5989 = vmatprep.subr.bf16.mxu0 %v5329
        %5990 = vmatpush1.bf16.msra.mxu0 %v5328
        %5991 = vmatprep.subr.bf16.mxu0 %v5317
        %5992 = vmatpush1.bf16.msra.mxu0 %v5316
        %5993 = vmatprep.subr.bf16.mxu0 %v5305
        %5994 = vmatpush1.bf16.msra.mxu0 %v5304
        %5995 = vmatprep.subr.bf16.mxu0 %v5293
        %5996 = vmatpush1.bf16.msra.mxu0 %v5292
        %5997 = vmatprep.subr.bf16.mxu0 %v5281
        %5998 = vmatpush1.bf16.msra.mxu0 %v5280
        %5999 = vmatprep.subr.bf16.mxu0 %v5269
        %6000 = vmatpush1.bf16.msra.mxu0 %v5268
        %6001 = vmatprep.subr.bf16.mxu0 %v5257
        %6002 = vmatpush1.bf16.msra.mxu0 %v5256
        %6003 = vmatprep.subr.bf16.mxu0 %v5245
        %6004 = vmatpush1.bf16.msra.mxu0 %v5244
        %6005 = vmatprep.subr.bf16.mxu0 0
        %6006 = vmatpush2.bf16.msra.mxu0 0
        %6007 = vmatprep.subr.bf16.mxu0 0
        %6008 = vmatpush2.bf16.msra.mxu0 0
        %6009 = vmatprep.subr.bf16.mxu0 0
        %6010 = vmatpush2.bf16.msra.mxu0 0
        %6011 = vmatprep.subr.bf16.mxu0 0
        %6012 = vmatpush2.bf16.msra.mxu0 0
        %6013 = vmatprep.subr.bf16.mxu0 0
        %6014 = vmatpush2.bf16.msra.mxu0 0
        %6015 = vmatprep.subr.bf16.mxu0 0
        %6016 = vmatpush2.bf16.msra.mxu0 0
        %6017 = vmatprep.subr.bf16.mxu0 0
        %6018 = vmatpush2.bf16.msra.mxu0 0
        %6019 = vmatprep.subr.bf16.mxu0 0
        %6020 = vmatpush2.bf16.msra.mxu0 0
        %6021 = vmatprep.mubr.bf16.mxu0 0
        %6022 = vmatmul.mubr.bf16.gmra.mxu0 %v3827
        %v6023 = vpop.f32.mrf.mxu0
        %v6024 = vadd.f32 %v5983, %v6023
        %v6025 = vpop.f32.mrf.mxu0
        %v6026 = vadd.f32 %v5985, %v6025
        %v6027 = vpop.f32.mrf.mxu0
        %v6028 = vpop.f32.mrf.mxu0
        %6029 = vdwg.mxu0
        %6030 = vmatprep.subr.bf16.mxu0 %v5139
        %6031 = vmatpush1.bf16.msra.mxu0 %v5138
        %6032 = vmatprep.subr.bf16.mxu0 %v5127
        %6033 = vmatpush1.bf16.msra.mxu0 %v5126
        %6034 = vmatprep.subr.bf16.mxu0 %v5115
        %6035 = vmatpush1.bf16.msra.mxu0 %v5114
        %6036 = vmatprep.subr.bf16.mxu0 %v5103
        %6037 = vmatpush1.bf16.msra.mxu0 %v5102
        %6038 = vmatprep.subr.bf16.mxu0 %v5091
        %6039 = vmatpush1.bf16.msra.mxu0 %v5090
        %6040 = vmatprep.subr.bf16.mxu0 %v5079
        %6041 = vmatpush1.bf16.msra.mxu0 %v5078
        %6042 = vmatprep.subr.bf16.mxu0 %v5067
        %6043 = vmatpush1.bf16.msra.mxu0 %v5066
        %6044 = vmatprep.subr.bf16.mxu0 %v5055
        %6045 = vmatpush1.bf16.msra.mxu0 %v5054
        %6046 = vmatprep.subr.bf16.mxu0 %v5235
        %6047 = vmatpush2.bf16.msra.mxu0 %v5234
        %6048 = vmatprep.subr.bf16.mxu0 %v5223
        %6049 = vmatpush2.bf16.msra.mxu0 %v5222
        %6050 = vmatprep.subr.bf16.mxu0 %v5211
        %6051 = vmatpush2.bf16.msra.mxu0 %v5210
        %6052 = vmatprep.subr.bf16.mxu0 %v5199
        %6053 = vmatpush2.bf16.msra.mxu0 %v5198
        %6054 = vmatprep.subr.bf16.mxu0 %v5187
        %6055 = vmatpush2.bf16.msra.mxu0 %v5186
        %6056 = vmatprep.subr.bf16.mxu0 %v5175
        %6057 = vmatpush2.bf16.msra.mxu0 %v5174
        %6058 = vmatprep.subr.bf16.mxu0 %v5163
        %6059 = vmatpush2.bf16.msra.mxu0 %v5162
        %6060 = vmatprep.subr.bf16.mxu0 %v5151
        %6061 = vmatpush2.bf16.msra.mxu0 %v5150
        %6062 = vmatprep.mubr.bf16.mxu0 %v3826
        %6063 = vmatmul.mubr.bf16.gmra.mxu0 %v3825
        %v6064 = vpop.f32.mrf.mxu0
        %v6065 = vadd.f32 %v4163, %v6064
        %v6066 = vpop.f32.mrf.mxu0
        %v6067 = vadd.f32 %v4167, %v6066
        %v6068 = vpop.f32.mrf.mxu0
        %v6069 = vpop.f32.mrf.mxu0
        %6070 = vdwg.mxu0
        %6071 = vmatprep.subr.bf16.mxu0 %v5331
        %6072 = vmatpush1.bf16.msra.mxu0 %v5330
        %6073 = vmatprep.subr.bf16.mxu0 %v5319
        %6074 = vmatpush1.bf16.msra.mxu0 %v5318
        %6075 = vmatprep.subr.bf16.mxu0 %v5307
        %6076 = vmatpush1.bf16.msra.mxu0 %v5306
        %6077 = vmatprep.subr.bf16.mxu0 %v5295
        %6078 = vmatpush1.bf16.msra.mxu0 %v5294
        %6079 = vmatprep.subr.bf16.mxu0 %v5283
        %6080 = vmatpush1.bf16.msra.mxu0 %v5282
        %6081 = vmatprep.subr.bf16.mxu0 %v5271
        %6082 = vmatpush1.bf16.msra.mxu0 %v5270
        %6083 = vmatprep.subr.bf16.mxu0 %v5259
        %6084 = vmatpush1.bf16.msra.mxu0 %v5258
        %6085 = vmatprep.subr.bf16.mxu0 %v5247
        %6086 = vmatpush1.bf16.msra.mxu0 %v5246
        %6087 = vmatprep.subr.bf16.mxu0 0
        %6088 = vmatpush2.bf16.msra.mxu0 0
        %6089 = vmatprep.subr.bf16.mxu0 0
        %6090 = vmatpush2.bf16.msra.mxu0 0
        %6091 = vmatprep.subr.bf16.mxu0 0
        %6092 = vmatpush2.bf16.msra.mxu0 0
        %6093 = vmatprep.subr.bf16.mxu0 0
        %6094 = vmatpush2.bf16.msra.mxu0 0
        %6095 = vmatprep.subr.bf16.mxu0 0
        %6096 = vmatpush2.bf16.msra.mxu0 0
        %6097 = vmatprep.subr.bf16.mxu0 0
        %6098 = vmatpush2.bf16.msra.mxu0 0
        %6099 = vmatprep.subr.bf16.mxu0 0
        %6100 = vmatpush2.bf16.msra.mxu0 0
        %6101 = vmatprep.subr.bf16.mxu0 0
        %6102 = vmatpush2.bf16.msra.mxu0 0
        %6103 = vmatprep.mubr.bf16.mxu0 0
        %6104 = vmatmul.mubr.bf16.gmra.mxu0 %v3827
        %v6105 = vpop.f32.mrf.mxu0
        %v6106 = vadd.f32 %v6065, %v6105
        %v6107 = vpop.f32.mrf.mxu0
        %v6108 = vadd.f32 %v6067, %v6107
        %v6109 = vpop.f32.mrf.mxu0
        %v6110 = vpop.f32.mrf.mxu0
        %6111 = vdwg.mxu0
        %v6112 = vmax.f32 %v5696, 0.0
        %v6113 = vmax.f32 %v5698, 0.0
        %v6114 = vmax.f32 %v5778, 0.0
        %v6115 = vmax.f32 %v5780, 0.0
        %v6116 = vmax.f32 %v5860, 0.0
        %v6117 = vmax.f32 %v5862, 0.0
        %v6118 = vmax.f32 %v5942, 0.0
        %v6119 = vmax.f32 %v5944, 0.0
        %v6120 = vmax.f32 %v6024, 0.0
        %v6121 = vmax.f32 %v6026, 0.0
        %v6122 = vmax.f32 %v6106, 0.0
        %v6123 = vmax.f32 %v6108, 0.0
        %v6124 = vpack.c.bf16 %v6112, %v6112
        %v6125 = vpack.c.bf16 %v6113, %v6113
        %v6126 = vpack.c.bf16 %v6114, %v6114
        %v6127 = vpack.c.bf16 %v6115, %v6115
        %v6128 = vpack.c.bf16 %v6116, %v6116
        %v6129 = vpack.c.bf16 %v6117, %v6117
        %v6130 = vpack.c.bf16 %v6118, %v6118
        %v6131 = vpack.c.bf16 %v6119, %v6119
        %v6132 = vpack.c.bf16 %v6120, %v6120
        %v6133 = vpack.c.bf16 %v6121, %v6121
        %v6134 = vpack.c.bf16 %v6122, %v6122
        %v6135 = vpack.c.bf16 %v6123, %v6123
        %v6136 = vld [vmem:[#allocation20] sm:$0xff]
        %v6137 = vld [vmem:[#allocation20 + $0x8] sm:$0xf]
        %v6138 = vld [vmem:[#allocation20 + $0xc] sm:$0xff]
        %v6139 = vld [vmem:[#allocation20 + $0x14] sm:$0xf]
        %v6140 = vld [vmem:[#allocation20 + $0x18] sm:$0xff]
        %v6141 = vld [vmem:[#allocation20 + $0x20] sm:$0xf]
        %v6142 = vld [vmem:[#allocation20 + $0x24] sm:$0xff]
        %v6143 = vld [vmem:[#allocation20 + $0x2c] sm:$0xf]
        %v6144 = vld [vmem:[#allocation20 + $0x30] sm:$0xff]
        %v6145 = vld [vmem:[#allocation20 + $0x38] sm:$0xf]
        %v6146 = vld [vmem:[#allocation20 + $0x3c] sm:$0xff]
        %v6147 = vld [vmem:[#allocation20 + $0x44] sm:$0xf]
        %v6148 = vld [vmem:[#allocation20 + $0x48] sm:$0xff]
        %v6149 = vld [vmem:[#allocation20 + $0x50] sm:$0xf]
        %v6150 = vld [vmem:[#allocation20 + $0x54] sm:$0xff]
        %v6151 = vld [vmem:[#allocation20 + $0x5c] sm:$0xf]
        %v6152 = vld [vmem:[#allocation20 + $0x60] sm:$0xff]
        %v6153 = vld [vmem:[#allocation20 + $0x68] sm:$0xf]
        %v6154 = vld [vmem:[#allocation20 + $0x6c] sm:$0xff]
        %v6155 = vld [vmem:[#allocation20 + $0x74] sm:$0xf]
        %v6156 = vld [vmem:[#allocation20 + $0x78] sm:$0xff]
        %v6157 = vld [vmem:[#allocation20 + $0x80] sm:$0xf]
        %v6158 = vld [vmem:[#allocation20 + $0x84] sm:$0xff]
        %v6159 = vld [vmem:[#allocation20 + $0x8c] sm:$0xf]
        %v6160 = vld [vmem:[#allocation20 + $0x90] sm:$0xff]
        %v6161 = vld [vmem:[#allocation20 + $0x98] sm:$0xf]
        %v6162 = vld [vmem:[#allocation20 + $0x9c] sm:$0xff]
        %v6163 = vld [vmem:[#allocation20 + $0xa4] sm:$0xf]
        %v6164 = vld [vmem:[#allocation20 + $0xa8] sm:$0xff]
        %v6165 = vld [vmem:[#allocation20 + $0xb0] sm:$0xf]
        %v6166 = vld [vmem:[#allocation20 + $0xb4] sm:$0xff]
        %v6167 = vld [vmem:[#allocation20 + $0xbc] sm:$0xf]
        %v6168 = vld [vmem:[#allocation20 + $0xc0] sm:$0xff]
        %v6169 = vld [vmem:[#allocation20 + $0xc8] sm:$0xf]
        %v6170 = vld [vmem:[#allocation20 + $0xcc] sm:$0xff]
        %v6171 = vld [vmem:[#allocation20 + $0xd4] sm:$0xf]
        %v6172 = vld [vmem:[#allocation20 + $0xd8] sm:$0xff]
        %v6173 = vld [vmem:[#allocation20 + $0xe0] sm:$0xf]
        %v6174 = vld [vmem:[#allocation20 + $0xe4] sm:$0xff]
        %v6175 = vld [vmem:[#allocation20 + $0xec] sm:$0xf]
        %v6176 = vld [vmem:[#allocation20 + $0xf0] sm:$0xff]
        %v6177 = vld [vmem:[#allocation20 + $0xf8] sm:$0xf]
        %v6178 = vld [vmem:[#allocation20 + $0xfc] sm:$0xff]
        %v6179 = vld [vmem:[#allocation20 + $0x104] sm:$0xf]
        %v6180 = vld [vmem:[#allocation20 + $0x108] sm:$0xff]
        %v6181 = vld [vmem:[#allocation20 + $0x110] sm:$0xf]
        %v6182 = vld [vmem:[#allocation20 + $0x114] sm:$0xff]
        %v6183 = vld [vmem:[#allocation20 + $0x11c] sm:$0xf]
        %v6184 = vld [vmem:[#allocation20 + $0x120] sm:$0xff]
        %v6185 = vld [vmem:[#allocation20 + $0x128] sm:$0xf]
        %v6186 = vld [vmem:[#allocation20 + $0x12c] sm:$0xff]
        %v6187 = vld [vmem:[#allocation20 + $0x134] sm:$0xf]
        %v6188 = vld [vmem:[#allocation20 + $0x138] sm:$0xff]
        %v6189 = vld [vmem:[#allocation20 + $0x140] sm:$0xf]
        %v6190 = vld [vmem:[#allocation20 + $0x144] sm:$0xff]
        %v6191 = vld [vmem:[#allocation20 + $0x14c] sm:$0xf]
        %v6192 = vld [vmem:[#allocation20 + $0x150] sm:$0xff]
        %v6193 = vld [vmem:[#allocation20 + $0x158] sm:$0xf]
        %v6194 = vld [vmem:[#allocation20 + $0x15c] sm:$0xff]
        %v6195 = vld [vmem:[#allocation20 + $0x164] sm:$0xf]
        %v6196 = vld [vmem:[#allocation20 + $0x168] sm:$0xff]
        %v6197 = vld [vmem:[#allocation20 + $0x170] sm:$0xf]
        %v6198 = vld [vmem:[#allocation20 + $0x174] sm:$0xff]
        %v6199 = vld [vmem:[#allocation20 + $0x17c] sm:$0xf]
        %v6200 = vld [vmem:[#allocation20 + $0x180] sm:$0xff]
        %v6201 = vld [vmem:[#allocation20 + $0x188] sm:$0xf]
        %v6202 = vld [vmem:[#allocation20 + $0x18c] sm:$0xff]
        %v6203 = vld [vmem:[#allocation20 + $0x194] sm:$0xf]
        %v6204 = vld [vmem:[#allocation20 + $0x198] sm:$0xff]
        %v6205 = vld [vmem:[#allocation20 + $0x1a0] sm:$0xf]
        %v6206 = vld [vmem:[#allocation20 + $0x1a4] sm:$0xff]
        %v6207 = vld [vmem:[#allocation20 + $0x1ac] sm:$0xf]
        %v6208 = vld [vmem:[#allocation20 + $0x1b0] sm:$0xff]
        %v6209 = vld [vmem:[#allocation20 + $0x1b8] sm:$0xf]
        %v6210 = vld [vmem:[#allocation20 + $0x1bc] sm:$0xff]
        %v6211 = vld [vmem:[#allocation20 + $0x1c4] sm:$0xf]
        %v6212 = vld [vmem:[#allocation20 + $0x1c8] sm:$0xff]
        %v6213 = vld [vmem:[#allocation20 + $0x1d0] sm:$0xf]
        %v6214 = vld [vmem:[#allocation20 + $0x1d4] sm:$0xff]
        %v6215 = vld [vmem:[#allocation20 + $0x1dc] sm:$0xf]
        %v6216 = vld [vmem:[#allocation20 + $0x1e0] sm:$0xff]
        %v6217 = vld [vmem:[#allocation20 + $0x1e8] sm:$0xf]
        %v6218 = vld [vmem:[#allocation20 + $0x1ec] sm:$0xff]
        %v6219 = vld [vmem:[#allocation20 + $0x1f4] sm:$0xf]
        %v6220 = vld [vmem:[#allocation20 + $0x1f8] sm:$0xff]
        %v6221 = vld [vmem:[#allocation20 + $0x200] sm:$0xf]
        %v6222 = vld [vmem:[#allocation20 + $0x204] sm:$0xff]
        %v6223 = vld [vmem:[#allocation20 + $0x20c] sm:$0xf]
        %v6224 = vld [vmem:[#allocation20 + $0x210] sm:$0xff]
        %v6225 = vld [vmem:[#allocation20 + $0x218] sm:$0xf]
        %v6226 = vld [vmem:[#allocation20 + $0x21c] sm:$0xff]
        %v6227 = vld [vmem:[#allocation20 + $0x224] sm:$0xf]
        %v6228 = vld [vmem:[#allocation20 + $0x228] sm:$0xff]
        %v6229 = vld [vmem:[#allocation20 + $0x230] sm:$0xf]
        %v6230 = vld [vmem:[#allocation20 + $0x234] sm:$0xff]
        %v6231 = vld [vmem:[#allocation20 + $0x23c] sm:$0xf]
        %v6232 = vld [vmem:[#allocation20 + $0x240] sm:$0xff]
        %v6233 = vld [vmem:[#allocation20 + $0x248] sm:$0xf]
        %v6234 = vld [vmem:[#allocation20 + $0x24c] sm:$0xff]
        %v6235 = vld [vmem:[#allocation20 + $0x254] sm:$0xf]
        %v6236 = vld [vmem:[#allocation20 + $0x258] sm:$0xff]
        %v6237 = vld [vmem:[#allocation20 + $0x260] sm:$0xf]
        %v6238 = vld [vmem:[#allocation20 + $0x264] sm:$0xff]
        %v6239 = vld [vmem:[#allocation20 + $0x26c] sm:$0xf]
        %v6240 = vld [vmem:[#allocation20 + $0x270] sm:$0xff]
        %v6241 = vld [vmem:[#allocation20 + $0x278] sm:$0xf]
        %v6242 = vld [vmem:[#allocation20 + $0x27c] sm:$0xff]
        %v6243 = vld [vmem:[#allocation20 + $0x284] sm:$0xf]
        %v6244 = vld [vmem:[#allocation20 + $0x288] sm:$0xff]
        %v6245 = vld [vmem:[#allocation20 + $0x290] sm:$0xf]
        %v6246 = vld [vmem:[#allocation20 + $0x294] sm:$0xff]
        %v6247 = vld [vmem:[#allocation20 + $0x29c] sm:$0xf]
        %v6248 = vld [vmem:[#allocation20 + $0x2a0] sm:$0xff]
        %v6249 = vld [vmem:[#allocation20 + $0x2a8] sm:$0xf]
        %v6250 = vld [vmem:[#allocation20 + $0x2ac] sm:$0xff]
        %v6251 = vld [vmem:[#allocation20 + $0x2b4] sm:$0xf]
        %v6252 = vld [vmem:[#allocation20 + $0x2b8] sm:$0xff]
        %v6253 = vld [vmem:[#allocation20 + $0x2c0] sm:$0xf]
        %v6254 = vld [vmem:[#allocation20 + $0x2c4] sm:$0xff]
        %v6255 = vld [vmem:[#allocation20 + $0x2cc] sm:$0xf]
        %v6256 = vld [vmem:[#allocation20 + $0x2d0] sm:$0xff]
        %v6257 = vld [vmem:[#allocation20 + $0x2d8] sm:$0xf]
        %v6258 = vld [vmem:[#allocation20 + $0x2dc] sm:$0xff]
        %v6259 = vld [vmem:[#allocation20 + $0x2e4] sm:$0xf]
        %v6260 = vld [vmem:[#allocation20 + $0x2e8] sm:$0xff]
        %v6261 = vld [vmem:[#allocation20 + $0x2f0] sm:$0xf]
        %v6262 = vld [vmem:[#allocation20 + $0x2f4] sm:$0xff]
        %v6263 = vld [vmem:[#allocation20 + $0x2fc] sm:$0xf]
        %v6264 = vld [vmem:[#allocation20 + $0x300] sm:$0xff]
        %v6265 = vld [vmem:[#allocation20 + $0x308] sm:$0xf]
        %v6266 = vld [vmem:[#allocation20 + $0x30c] sm:$0xff]
        %v6267 = vld [vmem:[#allocation20 + $0x314] sm:$0xf]
        %v6268 = vld [vmem:[#allocation20 + $0x318] sm:$0xff]
        %v6269 = vld [vmem:[#allocation20 + $0x320] sm:$0xf]
        %v6270 = vld [vmem:[#allocation20 + $0x324] sm:$0xff]
        %v6271 = vld [vmem:[#allocation20 + $0x32c] sm:$0xf]
        %v6272 = vld [vmem:[#allocation20 + $0x330] sm:$0xff]
        %v6273 = vld [vmem:[#allocation20 + $0x338] sm:$0xf]
        %v6274 = vld [vmem:[#allocation20 + $0x33c] sm:$0xff]
        %v6275 = vld [vmem:[#allocation20 + $0x344] sm:$0xf]
        %v6276 = vld [vmem:[#allocation20 + $0x348] sm:$0xff]
        %v6277 = vld [vmem:[#allocation20 + $0x350] sm:$0xf]
        %v6278 = vld [vmem:[#allocation20 + $0x354] sm:$0xff]
        %v6279 = vld [vmem:[#allocation20 + $0x35c] sm:$0xf]
        %v6280 = vld [vmem:[#allocation20 + $0x360] sm:$0xff]
        %v6281 = vld [vmem:[#allocation20 + $0x368] sm:$0xf]
        %v6282 = vld [vmem:[#allocation20 + $0x36c] sm:$0xff]
        %v6283 = vld [vmem:[#allocation20 + $0x374] sm:$0xf]
        %v6284 = vld [vmem:[#allocation20 + $0x378] sm:$0xff]
        %v6285 = vld [vmem:[#allocation20 + $0x380] sm:$0xf]
        %v6286 = vld [vmem:[#allocation20 + $0x384] sm:$0xff]
        %v6287 = vld [vmem:[#allocation20 + $0x38c] sm:$0xf]
        %v6288 = vld [vmem:[#allocation20 + $0x390] sm:$0xff]
        %v6289 = vld [vmem:[#allocation20 + $0x398] sm:$0xf]
        %v6290 = vld [vmem:[#allocation20 + $0x39c] sm:$0xff]
        %v6291 = vld [vmem:[#allocation20 + $0x3a4] sm:$0xf]
        %v6292 = vld [vmem:[#allocation20 + $0x3a8] sm:$0xff]
        %v6293 = vld [vmem:[#allocation20 + $0x3b0] sm:$0xf]
        %v6294 = vld [vmem:[#allocation20 + $0x3b4] sm:$0xff]
        %v6295 = vld [vmem:[#allocation20 + $0x3bc] sm:$0xf]
        %v6296 = vld [vmem:[#allocation20 + $0x3c0] sm:$0xff]
        %v6297 = vld [vmem:[#allocation20 + $0x3c8] sm:$0xf]
        %v6298 = vld [vmem:[#allocation20 + $0x3cc] sm:$0xff]
        %v6299 = vld [vmem:[#allocation20 + $0x3d4] sm:$0xf]
        %v6300 = vld [vmem:[#allocation20 + $0x3d8] sm:$0xff]
        %v6301 = vld [vmem:[#allocation20 + $0x3e0] sm:$0xf]
        %v6302 = vld [vmem:[#allocation20 + $0x3e4] sm:$0xff]
        %v6303 = vld [vmem:[#allocation20 + $0x3ec] sm:$0xf]
        %v6304 = vld [vmem:[#allocation20 + $0x3f0] sm:$0xff]
        %v6305 = vld [vmem:[#allocation20 + $0x3f8] sm:$0xf]
        %v6306 = vld [vmem:[#allocation20 + $0x3fc] sm:$0xff]
        %v6307 = vld [vmem:[#allocation20 + $0x404] sm:$0xf]
        %v6308 = vld [vmem:[#allocation20 + $0x408] sm:$0xff]
        %v6309 = vld [vmem:[#allocation20 + $0x410] sm:$0xf]
        %v6310 = vld [vmem:[#allocation20 + $0x414] sm:$0xff]
        %v6311 = vld [vmem:[#allocation20 + $0x41c] sm:$0xf]
        %v6312 = vld [vmem:[#allocation20 + $0x420] sm:$0xff]
        %v6313 = vld [vmem:[#allocation20 + $0x428] sm:$0xf]
        %v6314 = vld [vmem:[#allocation20 + $0x42c] sm:$0xff]
        %v6315 = vld [vmem:[#allocation20 + $0x434] sm:$0xf]
        %v6316 = vld [vmem:[#allocation20 + $0x438] sm:$0xff]
        %v6317 = vld [vmem:[#allocation20 + $0x440] sm:$0xf]
        %v6318 = vld [vmem:[#allocation20 + $0x444] sm:$0xff]
        %v6319 = vld [vmem:[#allocation20 + $0x44c] sm:$0xf]
        %v6320 = vld [vmem:[#allocation20 + $0x450] sm:$0xff]
        %v6321 = vld [vmem:[#allocation20 + $0x458] sm:$0xf]
        %v6322 = vld [vmem:[#allocation20 + $0x45c] sm:$0xff]
        %v6323 = vld [vmem:[#allocation20 + $0x464] sm:$0xf]
        %v6324 = vld [vmem:[#allocation20 + $0x468] sm:$0xff]
        %v6325 = vld [vmem:[#allocation20 + $0x470] sm:$0xf]
        %v6326 = vld [vmem:[#allocation20 + $0x474] sm:$0xff]
        %v6327 = vld [vmem:[#allocation20 + $0x47c] sm:$0xf]
        %v6328 = vld [vmem:[#allocation20 + $0x480] sm:$0xff]
        %v6329 = vld [vmem:[#allocation20 + $0x488] sm:$0xf]
        %v6330 = vld [vmem:[#allocation20 + $0x48c] sm:$0xff]
        %v6331 = vld [vmem:[#allocation20 + $0x494] sm:$0xf]
        %v6332 = vld [vmem:[#allocation20 + $0x498] sm:$0xff]
        %v6333 = vld [vmem:[#allocation20 + $0x4a0] sm:$0xf]
        %v6334 = vld [vmem:[#allocation20 + $0x4a4] sm:$0xff]
        %v6335 = vld [vmem:[#allocation20 + $0x4ac] sm:$0xf]
        %v6336 = vld [vmem:[#allocation20 + $0x4b0] sm:$0xff]
        %v6337 = vld [vmem:[#allocation20 + $0x4b8] sm:$0xf]
        %v6338 = vld [vmem:[#allocation20 + $0x4bc] sm:$0xff]
        %v6339 = vld [vmem:[#allocation20 + $0x4c4] sm:$0xf]
        %v6340 = vld [vmem:[#allocation20 + $0x4c8] sm:$0xff]
        %v6341 = vld [vmem:[#allocation20 + $0x4d0] sm:$0xf]
        %v6342 = vld [vmem:[#allocation20 + $0x4d4] sm:$0xff]
        %v6343 = vld [vmem:[#allocation20 + $0x4dc] sm:$0xf]
        %v6344 = vld [vmem:[#allocation20 + $0x4e0] sm:$0xff]
        %v6345 = vld [vmem:[#allocation20 + $0x4e8] sm:$0xf]
        %v6346 = vld [vmem:[#allocation20 + $0x4ec] sm:$0xff]
        %v6347 = vld [vmem:[#allocation20 + $0x4f4] sm:$0xf]
        %v6348 = vld [vmem:[#allocation20 + $0x4f8] sm:$0xff]
        %v6349 = vld [vmem:[#allocation20 + $0x500] sm:$0xf]
        %v6350 = vld [vmem:[#allocation20 + $0x504] sm:$0xff]
        %v6351 = vld [vmem:[#allocation20 + $0x50c] sm:$0xf]
        %v6352 = vld [vmem:[#allocation20 + $0x510] sm:$0xff]
        %v6353 = vld [vmem:[#allocation20 + $0x518] sm:$0xf]
        %v6354 = vld [vmem:[#allocation20 + $0x51c] sm:$0xff]
        %v6355 = vld [vmem:[#allocation20 + $0x524] sm:$0xf]
        %v6356 = vld [vmem:[#allocation20 + $0x528] sm:$0xff]
        %v6357 = vld [vmem:[#allocation20 + $0x530] sm:$0xf]
        %v6358 = vld [vmem:[#allocation20 + $0x534] sm:$0xff]
        %v6359 = vld [vmem:[#allocation20 + $0x53c] sm:$0xf]
        %v6360 = vld [vmem:[#allocation20 + $0x540] sm:$0xff]
        %v6361 = vld [vmem:[#allocation20 + $0x548] sm:$0xf]
        %v6362 = vld [vmem:[#allocation20 + $0x54c] sm:$0xff]
        %v6363 = vld [vmem:[#allocation20 + $0x554] sm:$0xf]
        %v6364 = vld [vmem:[#allocation20 + $0x558] sm:$0xff]
        %v6365 = vld [vmem:[#allocation20 + $0x560] sm:$0xf]
        %v6366 = vld [vmem:[#allocation20 + $0x564] sm:$0xff]
        %v6367 = vld [vmem:[#allocation20 + $0x56c] sm:$0xf]
        %v6368 = vld [vmem:[#allocation20 + $0x570] sm:$0xff]
        %v6369 = vld [vmem:[#allocation20 + $0x578] sm:$0xf]
        %v6370 = vld [vmem:[#allocation20 + $0x57c] sm:$0xff]
        %v6371 = vld [vmem:[#allocation20 + $0x584] sm:$0xf]
        %v6372 = vld [vmem:[#allocation20 + $0x588] sm:$0xff]
        %v6373 = vld [vmem:[#allocation20 + $0x590] sm:$0xf]
        %v6374 = vld [vmem:[#allocation20 + $0x594] sm:$0xff]
        %v6375 = vld [vmem:[#allocation20 + $0x59c] sm:$0xf]
        %v6376 = vld [vmem:[#allocation20 + $0x5a0] sm:$0xff]
        %v6377 = vld [vmem:[#allocation20 + $0x5a8] sm:$0xf]
        %v6378 = vld [vmem:[#allocation20 + $0x5ac] sm:$0xff]
        %v6379 = vld [vmem:[#allocation20 + $0x5b4] sm:$0xf]
        %v6380 = vld [vmem:[#allocation20 + $0x5b8] sm:$0xff]
        %v6381 = vld [vmem:[#allocation20 + $0x5c0] sm:$0xf]
        %v6382 = vld [vmem:[#allocation20 + $0x5c4] sm:$0xff]
        %v6383 = vld [vmem:[#allocation20 + $0x5cc] sm:$0xf]
        %v6384 = vld [vmem:[#allocation20 + $0x5d0] sm:$0xff]
        %v6385 = vld [vmem:[#allocation20 + $0x5d8] sm:$0xf]
        %v6386 = vld [vmem:[#allocation20 + $0x5dc] sm:$0xff]
        %v6387 = vld [vmem:[#allocation20 + $0x5e4] sm:$0xf]
        %v6388 = vld [vmem:[#allocation20 + $0x5e8] sm:$0xff]
        %v6389 = vld [vmem:[#allocation20 + $0x5f0] sm:$0xf]
        %v6390 = vld [vmem:[#allocation20 + $0x5f4] sm:$0xff]
        %v6391 = vld [vmem:[#allocation20 + $0x5fc] sm:$0xf]
        %v6392 = vld [vmem:[#allocation20 + $0x600] sm:$0xff]
        %v6393 = vld [vmem:[#allocation20 + $0x608] sm:$0xf]
        %v6394 = vld [vmem:[#allocation20 + $0x60c] sm:$0xff]
        %v6395 = vld [vmem:[#allocation20 + $0x614] sm:$0xf]
        %v6396 = vld [vmem:[#allocation20 + $0x618] sm:$0xff]
        %v6397 = vld [vmem:[#allocation20 + $0x620] sm:$0xf]
        %v6398 = vld [vmem:[#allocation20 + $0x624] sm:$0xff]
        %v6399 = vld [vmem:[#allocation20 + $0x62c] sm:$0xf]
        %v6400 = vld [vmem:[#allocation20 + $0x630] sm:$0xff]
        %v6401 = vld [vmem:[#allocation20 + $0x638] sm:$0xf]
        %v6402 = vld [vmem:[#allocation20 + $0x63c] sm:$0xff]
        %v6403 = vld [vmem:[#allocation20 + $0x644] sm:$0xf]
        %v6404 = vld [vmem:[#allocation20 + $0x648] sm:$0xff]
        %v6405 = vld [vmem:[#allocation20 + $0x650] sm:$0xf]
        %v6406 = vld [vmem:[#allocation20 + $0x654] sm:$0xff]
        %v6407 = vld [vmem:[#allocation20 + $0x65c] sm:$0xf]
        %v6408 = vld [vmem:[#allocation20 + $0x660] sm:$0xff]
        %v6409 = vld [vmem:[#allocation20 + $0x668] sm:$0xf]
        %v6410 = vld [vmem:[#allocation20 + $0x66c] sm:$0xff]
        %v6411 = vld [vmem:[#allocation20 + $0x674] sm:$0xf]
        %v6412 = vld [vmem:[#allocation20 + $0x678] sm:$0xff]
        %v6413 = vld [vmem:[#allocation20 + $0x680] sm:$0xf]
        %v6414 = vld [vmem:[#allocation20 + $0x684] sm:$0xff]
        %v6415 = vld [vmem:[#allocation20 + $0x68c] sm:$0xf]
        %v6416 = vld [vmem:[#allocation20 + $0x690] sm:$0xff]
        %v6417 = vld [vmem:[#allocation20 + $0x698] sm:$0xf]
        %v6418 = vld [vmem:[#allocation20 + $0x69c] sm:$0xff]
        %v6419 = vld [vmem:[#allocation20 + $0x6a4] sm:$0xf]
        %v6420 = vld [vmem:[#allocation20 + $0x6a8] sm:$0xff]
        %v6421 = vld [vmem:[#allocation20 + $0x6b0] sm:$0xf]
        %v6422 = vld [vmem:[#allocation20 + $0x6b4] sm:$0xff]
        %v6423 = vld [vmem:[#allocation20 + $0x6bc] sm:$0xf]
        %v6424 = vld [vmem:[#allocation20 + $0x6c0] sm:$0xff]
        %v6425 = vld [vmem:[#allocation20 + $0x6c8] sm:$0xf]
        %v6426 = vld [vmem:[#allocation20 + $0x6cc] sm:$0xff]
        %v6427 = vld [vmem:[#allocation20 + $0x6d4] sm:$0xf]
        %v6428 = vld [vmem:[#allocation20 + $0x6d8] sm:$0xff]
        %v6429 = vld [vmem:[#allocation20 + $0x6e0] sm:$0xf]
        %v6430 = vld [vmem:[#allocation20 + $0x6e4] sm:$0xff]
        %v6431 = vld [vmem:[#allocation20 + $0x6ec] sm:$0xf]
        %v6432 = vld [vmem:[#allocation20 + $0x6f0] sm:$0xff]
        %v6433 = vld [vmem:[#allocation20 + $0x6f8] sm:$0xf]
        %v6434 = vld [vmem:[#allocation20 + $0x6fc] sm:$0xff]
        %v6435 = vld [vmem:[#allocation20 + $0x704] sm:$0xf]
        %v6436 = vld [vmem:[#allocation20 + $0x708] sm:$0xff]
        %v6437 = vld [vmem:[#allocation20 + $0x710] sm:$0xf]
        %v6438 = vld [vmem:[#allocation20 + $0x714] sm:$0xff]
        %v6439 = vld [vmem:[#allocation20 + $0x71c] sm:$0xf]
        %v6440 = vld [vmem:[#allocation20 + $0x720] sm:$0xff]
        %v6441 = vld [vmem:[#allocation20 + $0x728] sm:$0xf]
        %v6442 = vld [vmem:[#allocation20 + $0x72c] sm:$0xff]
        %v6443 = vld [vmem:[#allocation20 + $0x734] sm:$0xf]
        %v6444 = vld [vmem:[#allocation20 + $0x738] sm:$0xff]
        %v6445 = vld [vmem:[#allocation20 + $0x740] sm:$0xf]
        %v6446 = vld [vmem:[#allocation20 + $0x744] sm:$0xff]
        %v6447 = vld [vmem:[#allocation20 + $0x74c] sm:$0xf]
        %v6448 = vld [vmem:[#allocation20 + $0x750] sm:$0xff]
        %v6449 = vld [vmem:[#allocation20 + $0x758] sm:$0xf]
        %v6450 = vld [vmem:[#allocation20 + $0x75c] sm:$0xff]
        %v6451 = vld [vmem:[#allocation20 + $0x764] sm:$0xf]
        %v6452 = vld [vmem:[#allocation20 + $0x768] sm:$0xff]
        %v6453 = vld [vmem:[#allocation20 + $0x770] sm:$0xf]
        %v6454 = vld [vmem:[#allocation20 + $0x774] sm:$0xff]
        %v6455 = vld [vmem:[#allocation20 + $0x77c] sm:$0xf]
        %v6456 = vld [vmem:[#allocation20 + $0x780] sm:$0xff]
        %v6457 = vld [vmem:[#allocation20 + $0x788] sm:$0xf]
        %v6458 = vld [vmem:[#allocation20 + $0x78c] sm:$0xff]
        %v6459 = vld [vmem:[#allocation20 + $0x794] sm:$0xf]
        %v6460 = vld [vmem:[#allocation20 + $0x798] sm:$0xff]
        %v6461 = vld [vmem:[#allocation20 + $0x7a0] sm:$0xf]
        %v6462 = vld [vmem:[#allocation20 + $0x7a4] sm:$0xff]
        %v6463 = vld [vmem:[#allocation20 + $0x7ac] sm:$0xf]
        %v6464 = vld [vmem:[#allocation20 + $0x7b0] sm:$0xff]
        %v6465 = vld [vmem:[#allocation20 + $0x7b8] sm:$0xf]
        %v6466 = vld [vmem:[#allocation20 + $0x7bc] sm:$0xff]
        %v6467 = vld [vmem:[#allocation20 + $0x7c4] sm:$0xf]
        %v6468 = vld [vmem:[#allocation20 + $0x7c8] sm:$0xff]
        %v6469 = vld [vmem:[#allocation20 + $0x7d0] sm:$0xf]
        %v6470 = vld [vmem:[#allocation20 + $0x7d4] sm:$0xff]
        %v6471 = vld [vmem:[#allocation20 + $0x7dc] sm:$0xf]
        %v6472 = vld [vmem:[#allocation20 + $0x7e0] sm:$0xff]
        %v6473 = vld [vmem:[#allocation20 + $0x7e8] sm:$0xf]
        %v6474 = vld [vmem:[#allocation20 + $0x7ec] sm:$0xff]
        %v6475 = vld [vmem:[#allocation20 + $0x7f4] sm:$0xf]
        %v6476 = vld [vmem:[#allocation20 + $0x7f8] sm:$0xff]
        %v6477 = vld [vmem:[#allocation20 + $0x800] sm:$0xf]
        %v6478 = vld [vmem:[#allocation20 + $0x804] sm:$0xff]
        %v6479 = vld [vmem:[#allocation20 + $0x80c] sm:$0xf]
        %v6480 = vld [vmem:[#allocation20 + $0x810] sm:$0xff]
        %v6481 = vld [vmem:[#allocation20 + $0x818] sm:$0xf]
        %v6482 = vld [vmem:[#allocation20 + $0x81c] sm:$0xff]
        %v6483 = vld [vmem:[#allocation20 + $0x824] sm:$0xf]
        %v6484 = vld [vmem:[#allocation20 + $0x828] sm:$0xff]
        %v6485 = vld [vmem:[#allocation20 + $0x830] sm:$0xf]
        %v6486 = vld [vmem:[#allocation20 + $0x834] sm:$0xff]
        %v6487 = vld [vmem:[#allocation20 + $0x83c] sm:$0xf]
        %v6488 = vld [vmem:[#allocation20 + $0x840] sm:$0xff]
        %v6489 = vld [vmem:[#allocation20 + $0x848] sm:$0xf]
        %v6490 = vld [vmem:[#allocation20 + $0x84c] sm:$0xff]
        %v6491 = vld [vmem:[#allocation20 + $0x854] sm:$0xf]
        %v6492 = vld [vmem:[#allocation20 + $0x858] sm:$0xff]
        %v6493 = vld [vmem:[#allocation20 + $0x860] sm:$0xf]
        %v6494 = vld [vmem:[#allocation20 + $0x864] sm:$0xff]
        %v6495 = vld [vmem:[#allocation20 + $0x86c] sm:$0xf]
        %v6496 = vld [vmem:[#allocation20 + $0x870] sm:$0xff]
        %v6497 = vld [vmem:[#allocation20 + $0x878] sm:$0xf]
        %v6498 = vld [vmem:[#allocation20 + $0x87c] sm:$0xff]
        %v6499 = vld [vmem:[#allocation20 + $0x884] sm:$0xf]
        %v6500 = vld [vmem:[#allocation20 + $0x888] sm:$0xff]
        %v6501 = vld [vmem:[#allocation20 + $0x890] sm:$0xf]
        %v6502 = vld [vmem:[#allocation20 + $0x894] sm:$0xff]
        %v6503 = vld [vmem:[#allocation20 + $0x89c] sm:$0xf]
        %v6504 = vld [vmem:[#allocation20 + $0x8a0] sm:$0xff]
        %v6505 = vld [vmem:[#allocation20 + $0x8a8] sm:$0xf]
        %v6506 = vld [vmem:[#allocation20 + $0x8ac] sm:$0xff]
        %v6507 = vld [vmem:[#allocation20 + $0x8b4] sm:$0xf]
        %v6508 = vld [vmem:[#allocation20 + $0x8b8] sm:$0xff]
        %v6509 = vld [vmem:[#allocation20 + $0x8c0] sm:$0xf]
        %v6510 = vld [vmem:[#allocation20 + $0x8c4] sm:$0xff]
        %v6511 = vld [vmem:[#allocation20 + $0x8cc] sm:$0xf]
        %v6512 = vld [vmem:[#allocation20 + $0x8d0] sm:$0xff]
        %v6513 = vld [vmem:[#allocation20 + $0x8d8] sm:$0xf]
        %v6514 = vld [vmem:[#allocation20 + $0x8dc] sm:$0xff]
        %v6515 = vld [vmem:[#allocation20 + $0x8e4] sm:$0xf]
        %v6516 = vld [vmem:[#allocation20 + $0x8e8] sm:$0xff]
        %v6517 = vld [vmem:[#allocation20 + $0x8f0] sm:$0xf]
        %v6518 = vld [vmem:[#allocation20 + $0x8f4] sm:$0xff]
        %v6519 = vld [vmem:[#allocation20 + $0x8fc] sm:$0xf]
        %v6520 = vld [vmem:[#allocation21] sm:$0x7]
        %v6522 = vlaneseq
        %v6523 = vshrl.u32 %v6522, 7
        %v6524 = vsub.s32 0, %v6523
        %v6525 = vrot.slane %v6520, %v6524
        %v6526 = vlaneseq
        %v6527 = vshrl.u32 %v6526, 7
        %v6528 = vsub.s32 1, %v6527
        %v6529 = vrot.slane %v6520, %v6528
        %v6530 = vlaneseq
        %v6531 = vshrl.u32 %v6530, 7
        %v6532 = vsub.s32 2, %v6531
        %v6533 = vrot.slane %v6520, %v6532
        %v6921 = vunpack.c.l.b16 %v6136
        %v6922 = vunpack.c.h.b16 %v6136
        %v6923 = vunpack.c.l.b16 %v6137
        %v6924 = vunpack.c.l.b16 %v6138
        %v6925 = vunpack.c.h.b16 %v6138
        %v6926 = vunpack.c.l.b16 %v6139
        %v6927 = vunpack.c.l.b16 %v6140
        %v6928 = vunpack.c.h.b16 %v6140
        %v6929 = vunpack.c.l.b16 %v6141
        %v6930 = vunpack.c.l.b16 %v6142
        %v6931 = vunpack.c.h.b16 %v6142
        %v6932 = vunpack.c.l.b16 %v6143
        %v6933 = vunpack.c.l.b16 %v6144
        %v6934 = vunpack.c.h.b16 %v6144
        %v6935 = vunpack.c.l.b16 %v6145
        %v6936 = vunpack.c.l.b16 %v6146
        %v6937 = vunpack.c.h.b16 %v6146
        %v6938 = vunpack.c.l.b16 %v6147
        %v6939 = vunpack.c.l.b16 %v6148
        %v6940 = vunpack.c.h.b16 %v6148
        %v6941 = vunpack.c.l.b16 %v6149
        %v6942 = vunpack.c.l.b16 %v6150
        %v6943 = vunpack.c.h.b16 %v6150
        %v6944 = vunpack.c.l.b16 %v6151
        %v6945 = vunpack.c.l.b16 %v6152
        %v6946 = vunpack.c.h.b16 %v6152
        %v6947 = vunpack.c.l.b16 %v6153
        %v6948 = vunpack.c.l.b16 %v6154
        %v6949 = vunpack.c.h.b16 %v6154
        %v6950 = vunpack.c.l.b16 %v6155
        %v6951 = vunpack.c.l.b16 %v6156
        %v6952 = vunpack.c.h.b16 %v6156
        %v6953 = vunpack.c.l.b16 %v6157
        %v6954 = vunpack.c.l.b16 %v6158
        %v6955 = vunpack.c.h.b16 %v6158
        %v6956 = vunpack.c.l.b16 %v6159
        %v6957 = vunpack.c.l.b16 %v6160
        %v6958 = vunpack.c.h.b16 %v6160
        %v6959 = vunpack.c.l.b16 %v6161
        %v6960 = vunpack.c.l.b16 %v6162
        %v6961 = vunpack.c.h.b16 %v6162
        %v6962 = vunpack.c.l.b16 %v6163
        %v6963 = vunpack.c.l.b16 %v6164
        %v6964 = vunpack.c.h.b16 %v6164
        %v6965 = vunpack.c.l.b16 %v6165
        %v6966 = vunpack.c.l.b16 %v6166
        %v6967 = vunpack.c.h.b16 %v6166
        %v6968 = vunpack.c.l.b16 %v6167
        %v6969 = vunpack.c.l.b16 %v6168
        %v6970 = vunpack.c.h.b16 %v6168
        %v6971 = vunpack.c.l.b16 %v6169
        %v6972 = vunpack.c.l.b16 %v6170
        %v6973 = vunpack.c.h.b16 %v6170
        %v6974 = vunpack.c.l.b16 %v6171
        %v6975 = vunpack.c.l.b16 %v6172
        %v6976 = vunpack.c.h.b16 %v6172
        %v6977 = vunpack.c.l.b16 %v6173
        %v6978 = vunpack.c.l.b16 %v6174
        %v6979 = vunpack.c.h.b16 %v6174
        %v6980 = vunpack.c.l.b16 %v6175
        %v6981 = vunpack.c.l.b16 %v6176
        %v6982 = vunpack.c.h.b16 %v6176
        %v6983 = vunpack.c.l.b16 %v6177
        %v6984 = vunpack.c.l.b16 %v6178
        %v6985 = vunpack.c.h.b16 %v6178
        %v6986 = vunpack.c.l.b16 %v6179
        %v6987 = vunpack.c.l.b16 %v6180
        %v6988 = vunpack.c.h.b16 %v6180
        %v6989 = vunpack.c.l.b16 %v6181
        %v6990 = vunpack.c.l.b16 %v6182
        %v6991 = vunpack.c.h.b16 %v6182
        %v6992 = vunpack.c.l.b16 %v6183
        %v6993 = vunpack.c.l.b16 %v6184
        %v6994 = vunpack.c.h.b16 %v6184
        %v6995 = vunpack.c.l.b16 %v6185
        %v6996 = vunpack.c.l.b16 %v6186
        %v6997 = vunpack.c.h.b16 %v6186
        %v6998 = vunpack.c.l.b16 %v6187
        %v6999 = vunpack.c.l.b16 %v6188
        %v7000 = vunpack.c.h.b16 %v6188
        %v7001 = vunpack.c.l.b16 %v6189
        %v7002 = vunpack.c.l.b16 %v6190
        %v7003 = vunpack.c.h.b16 %v6190
        %v7004 = vunpack.c.l.b16 %v6191
        %v7005 = vunpack.c.l.b16 %v6192
        %v7006 = vunpack.c.h.b16 %v6192
        %v7007 = vunpack.c.l.b16 %v6193
        %v7008 = vunpack.c.l.b16 %v6194
        %v7009 = vunpack.c.h.b16 %v6194
        %v7010 = vunpack.c.l.b16 %v6195
        %v7011 = vunpack.c.l.b16 %v6196
        %v7012 = vunpack.c.h.b16 %v6196
        %v7013 = vunpack.c.l.b16 %v6197
        %v7014 = vunpack.c.l.b16 %v6198
        %v7015 = vunpack.c.h.b16 %v6198
        %v7016 = vunpack.c.l.b16 %v6199
        %v7017 = vunpack.c.l.b16 %v6200
        %v7018 = vunpack.c.h.b16 %v6200
        %v7019 = vunpack.c.l.b16 %v6201
        %v7020 = vunpack.c.l.b16 %v6202
        %v7021 = vunpack.c.h.b16 %v6202
        %v7022 = vunpack.c.l.b16 %v6203
        %v7023 = vunpack.c.l.b16 %v6204
        %v7024 = vunpack.c.h.b16 %v6204
        %v7025 = vunpack.c.l.b16 %v6205
        %v7026 = vunpack.c.l.b16 %v6206
        %v7027 = vunpack.c.h.b16 %v6206
        %v7028 = vunpack.c.l.b16 %v6207
        %v7029 = vunpack.c.l.b16 %v6208
        %v7030 = vunpack.c.h.b16 %v6208
        %v7031 = vunpack.c.l.b16 %v6209
        %v7032 = vunpack.c.l.b16 %v6210
        %v7033 = vunpack.c.h.b16 %v6210
        %v7034 = vunpack.c.l.b16 %v6211
        %v7035 = vunpack.c.l.b16 %v6212
        %v7036 = vunpack.c.h.b16 %v6212
        %v7037 = vunpack.c.l.b16 %v6213
        %v7038 = vunpack.c.l.b16 %v6214
        %v7039 = vunpack.c.h.b16 %v6214
        %v7040 = vunpack.c.l.b16 %v6215
        %v7041 = vunpack.c.l.b16 %v6216
        %v7042 = vunpack.c.h.b16 %v6216
        %v7043 = vunpack.c.l.b16 %v6217
        %v7044 = vunpack.c.l.b16 %v6218
        %v7045 = vunpack.c.h.b16 %v6218
        %v7046 = vunpack.c.l.b16 %v6219
        %v7047 = vunpack.c.l.b16 %v6220
        %v7048 = vunpack.c.h.b16 %v6220
        %v7049 = vunpack.c.l.b16 %v6221
        %v7050 = vunpack.c.l.b16 %v6222
        %v7051 = vunpack.c.h.b16 %v6222
        %v7052 = vunpack.c.l.b16 %v6223
        %v7053 = vunpack.c.l.b16 %v6224
        %v7054 = vunpack.c.h.b16 %v6224
        %v7055 = vunpack.c.l.b16 %v6225
        %v7056 = vunpack.c.l.b16 %v6226
        %v7057 = vunpack.c.h.b16 %v6226
        %v7058 = vunpack.c.l.b16 %v6227
        %v7059 = vunpack.c.l.b16 %v6228
        %v7060 = vunpack.c.h.b16 %v6228
        %v7061 = vunpack.c.l.b16 %v6229
        %v7062 = vunpack.c.l.b16 %v6230
        %v7063 = vunpack.c.h.b16 %v6230
        %v7064 = vunpack.c.l.b16 %v6231
        %v7065 = vunpack.c.l.b16 %v6232
        %v7066 = vunpack.c.h.b16 %v6232
        %v7067 = vunpack.c.l.b16 %v6233
        %v7068 = vunpack.c.l.b16 %v6234
        %v7069 = vunpack.c.h.b16 %v6234
        %v7070 = vunpack.c.l.b16 %v6235
        %v7071 = vunpack.c.l.b16 %v6236
        %v7072 = vunpack.c.h.b16 %v6236
        %v7073 = vunpack.c.l.b16 %v6237
        %v7074 = vunpack.c.l.b16 %v6238
        %v7075 = vunpack.c.h.b16 %v6238
        %v7076 = vunpack.c.l.b16 %v6239
        %v7077 = vunpack.c.l.b16 %v6240
        %v7078 = vunpack.c.h.b16 %v6240
        %v7079 = vunpack.c.l.b16 %v6241
        %v7080 = vunpack.c.l.b16 %v6242
        %v7081 = vunpack.c.h.b16 %v6242
        %v7082 = vunpack.c.l.b16 %v6243
        %v7083 = vunpack.c.l.b16 %v6244
        %v7084 = vunpack.c.h.b16 %v6244
        %v7085 = vunpack.c.l.b16 %v6245
        %v7086 = vunpack.c.l.b16 %v6246
        %v7087 = vunpack.c.h.b16 %v6246
        %v7088 = vunpack.c.l.b16 %v6247
        %v7089 = vunpack.c.l.b16 %v6248
        %v7090 = vunpack.c.h.b16 %v6248
        %v7091 = vunpack.c.l.b16 %v6249
        %v7092 = vunpack.c.l.b16 %v6250
        %v7093 = vunpack.c.h.b16 %v6250
        %v7094 = vunpack.c.l.b16 %v6251
        %v7095 = vunpack.c.l.b16 %v6252
        %v7096 = vunpack.c.h.b16 %v6252
        %v7097 = vunpack.c.l.b16 %v6253
        %v7098 = vunpack.c.l.b16 %v6254
        %v7099 = vunpack.c.h.b16 %v6254
        %v7100 = vunpack.c.l.b16 %v6255
        %v7101 = vunpack.c.l.b16 %v6256
        %v7102 = vunpack.c.h.b16 %v6256
        %v7103 = vunpack.c.l.b16 %v6257
        %v7104 = vunpack.c.l.b16 %v6258
        %v7105 = vunpack.c.h.b16 %v6258
        %v7106 = vunpack.c.l.b16 %v6259
        %v7107 = vunpack.c.l.b16 %v6260
        %v7108 = vunpack.c.h.b16 %v6260
        %v7109 = vunpack.c.l.b16 %v6261
        %v7110 = vunpack.c.l.b16 %v6262
        %v7111 = vunpack.c.h.b16 %v6262
        %v7112 = vunpack.c.l.b16 %v6263
        %v7113 = vunpack.c.l.b16 %v6264
        %v7114 = vunpack.c.h.b16 %v6264
        %v7115 = vunpack.c.l.b16 %v6265
        %v7116 = vunpack.c.l.b16 %v6266
        %v7117 = vunpack.c.h.b16 %v6266
        %v7118 = vunpack.c.l.b16 %v6267
        %v7119 = vunpack.c.l.b16 %v6268
        %v7120 = vunpack.c.h.b16 %v6268
        %v7121 = vunpack.c.l.b16 %v6269
        %v7122 = vunpack.c.l.b16 %v6270
        %v7123 = vunpack.c.h.b16 %v6270
        %v7124 = vunpack.c.l.b16 %v6271
        %v7125 = vunpack.c.l.b16 %v6272
        %v7126 = vunpack.c.h.b16 %v6272
        %v7127 = vunpack.c.l.b16 %v6273
        %v7128 = vunpack.c.l.b16 %v6274
        %v7129 = vunpack.c.h.b16 %v6274
        %v7130 = vunpack.c.l.b16 %v6275
        %v7131 = vunpack.c.l.b16 %v6276
        %v7132 = vunpack.c.h.b16 %v6276
        %v7133 = vunpack.c.l.b16 %v6277
        %v7134 = vunpack.c.l.b16 %v6278
        %v7135 = vunpack.c.h.b16 %v6278
        %v7136 = vunpack.c.l.b16 %v6279
        %v7137 = vunpack.c.l.b16 %v6280
        %v7138 = vunpack.c.h.b16 %v6280
        %v7139 = vunpack.c.l.b16 %v6281
        %v7140 = vunpack.c.l.b16 %v6282
        %v7141 = vunpack.c.h.b16 %v6282
        %v7142 = vunpack.c.l.b16 %v6283
        %v7143 = vunpack.c.l.b16 %v6284
        %v7144 = vunpack.c.h.b16 %v6284
        %v7145 = vunpack.c.l.b16 %v6285
        %v7146 = vunpack.c.l.b16 %v6286
        %v7147 = vunpack.c.h.b16 %v6286
        %v7148 = vunpack.c.l.b16 %v6287
        %v7149 = vunpack.c.l.b16 %v6288
        %v7150 = vunpack.c.h.b16 %v6288
        %v7151 = vunpack.c.l.b16 %v6289
        %v7152 = vunpack.c.l.b16 %v6290
        %v7153 = vunpack.c.h.b16 %v6290
        %v7154 = vunpack.c.l.b16 %v6291
        %v7155 = vunpack.c.l.b16 %v6292
        %v7156 = vunpack.c.h.b16 %v6292
        %v7157 = vunpack.c.l.b16 %v6293
        %v7158 = vunpack.c.l.b16 %v6294
        %v7159 = vunpack.c.h.b16 %v6294
        %v7160 = vunpack.c.l.b16 %v6295
        %v7161 = vunpack.c.l.b16 %v6296
        %v7162 = vunpack.c.h.b16 %v6296
        %v7163 = vunpack.c.l.b16 %v6297
        %v7164 = vunpack.c.l.b16 %v6298
        %v7165 = vunpack.c.h.b16 %v6298
        %v7166 = vunpack.c.l.b16 %v6299
        %v7167 = vunpack.c.l.b16 %v6300
        %v7168 = vunpack.c.h.b16 %v6300
        %v7169 = vunpack.c.l.b16 %v6301
        %v7170 = vunpack.c.l.b16 %v6302
        %v7171 = vunpack.c.h.b16 %v6302
        %v7172 = vunpack.c.l.b16 %v6303
        %v7173 = vunpack.c.l.b16 %v6304
        %v7174 = vunpack.c.h.b16 %v6304
        %v7175 = vunpack.c.l.b16 %v6305
        %v7176 = vunpack.c.l.b16 %v6306
        %v7177 = vunpack.c.h.b16 %v6306
        %v7178 = vunpack.c.l.b16 %v6307
        %v7179 = vunpack.c.l.b16 %v6308
        %v7180 = vunpack.c.h.b16 %v6308
        %v7181 = vunpack.c.l.b16 %v6309
        %v7182 = vunpack.c.l.b16 %v6310
        %v7183 = vunpack.c.h.b16 %v6310
        %v7184 = vunpack.c.l.b16 %v6311
        %v7185 = vunpack.c.l.b16 %v6312
        %v7186 = vunpack.c.h.b16 %v6312
        %v7187 = vunpack.c.l.b16 %v6313
        %v7188 = vunpack.c.l.b16 %v6314
        %v7189 = vunpack.c.h.b16 %v6314
        %v7190 = vunpack.c.l.b16 %v6315
        %v7191 = vunpack.c.l.b16 %v6316
        %v7192 = vunpack.c.h.b16 %v6316
        %v7193 = vunpack.c.l.b16 %v6317
        %v7194 = vunpack.c.l.b16 %v6318
        %v7195 = vunpack.c.h.b16 %v6318
        %v7196 = vunpack.c.l.b16 %v6319
        %v7197 = vunpack.c.l.b16 %v6320
        %v7198 = vunpack.c.h.b16 %v6320
        %v7199 = vunpack.c.l.b16 %v6321
        %v7200 = vunpack.c.l.b16 %v6322
        %v7201 = vunpack.c.h.b16 %v6322
        %v7202 = vunpack.c.l.b16 %v6323
        %v7203 = vunpack.c.l.b16 %v6324
        %v7204 = vunpack.c.h.b16 %v6324
        %v7205 = vunpack.c.l.b16 %v6325
        %v7206 = vunpack.c.l.b16 %v6326
        %v7207 = vunpack.c.h.b16 %v6326
        %v7208 = vunpack.c.l.b16 %v6327
        %v7209 = vunpack.c.l.b16 %v6328
        %v7210 = vunpack.c.h.b16 %v6328
        %v7211 = vunpack.c.l.b16 %v6329
        %v7212 = vunpack.c.l.b16 %v6330
        %v7213 = vunpack.c.h.b16 %v6330
        %v7214 = vunpack.c.l.b16 %v6331
        %v7215 = vunpack.c.l.b16 %v6332
        %v7216 = vunpack.c.h.b16 %v6332
        %v7217 = vunpack.c.l.b16 %v6333
        %v7218 = vunpack.c.l.b16 %v6334
        %v7219 = vunpack.c.h.b16 %v6334
        %v7220 = vunpack.c.l.b16 %v6335
        %v7221 = vunpack.c.l.b16 %v6336
        %v7222 = vunpack.c.h.b16 %v6336
        %v7223 = vunpack.c.l.b16 %v6337
        %v7224 = vunpack.c.l.b16 %v6338
        %v7225 = vunpack.c.h.b16 %v6338
        %v7226 = vunpack.c.l.b16 %v6339
        %v7227 = vunpack.c.l.b16 %v6340
        %v7228 = vunpack.c.h.b16 %v6340
        %v7229 = vunpack.c.l.b16 %v6341
        %v7230 = vunpack.c.l.b16 %v6342
        %v7231 = vunpack.c.h.b16 %v6342
        %v7232 = vunpack.c.l.b16 %v6343
        %v7233 = vunpack.c.l.b16 %v6344
        %v7234 = vunpack.c.h.b16 %v6344
        %v7235 = vunpack.c.l.b16 %v6345
        %v7236 = vunpack.c.l.b16 %v6346
        %v7237 = vunpack.c.h.b16 %v6346
        %v7238 = vunpack.c.l.b16 %v6347
        %v7239 = vunpack.c.l.b16 %v6348
        %v7240 = vunpack.c.h.b16 %v6348
        %v7241 = vunpack.c.l.b16 %v6349
        %v7242 = vunpack.c.l.b16 %v6350
        %v7243 = vunpack.c.h.b16 %v6350
        %v7244 = vunpack.c.l.b16 %v6351
        %v7245 = vunpack.c.l.b16 %v6352
        %v7246 = vunpack.c.h.b16 %v6352
        %v7247 = vunpack.c.l.b16 %v6353
        %v7248 = vunpack.c.l.b16 %v6354
        %v7249 = vunpack.c.h.b16 %v6354
        %v7250 = vunpack.c.l.b16 %v6355
        %v7251 = vunpack.c.l.b16 %v6356
        %v7252 = vunpack.c.h.b16 %v6356
        %v7253 = vunpack.c.l.b16 %v6357
        %v7254 = vunpack.c.l.b16 %v6358
        %v7255 = vunpack.c.h.b16 %v6358
        %v7256 = vunpack.c.l.b16 %v6359
        %v7257 = vunpack.c.l.b16 %v6360
        %v7258 = vunpack.c.h.b16 %v6360
        %v7259 = vunpack.c.l.b16 %v6361
        %v7260 = vunpack.c.l.b16 %v6362
        %v7261 = vunpack.c.h.b16 %v6362
        %v7262 = vunpack.c.l.b16 %v6363
        %v7263 = vunpack.c.l.b16 %v6364
        %v7264 = vunpack.c.h.b16 %v6364
        %v7265 = vunpack.c.l.b16 %v6365
        %v7266 = vunpack.c.l.b16 %v6366
        %v7267 = vunpack.c.h.b16 %v6366
        %v7268 = vunpack.c.l.b16 %v6367
        %v7269 = vunpack.c.l.b16 %v6368
        %v7270 = vunpack.c.h.b16 %v6368
        %v7271 = vunpack.c.l.b16 %v6369
        %v7272 = vunpack.c.l.b16 %v6370
        %v7273 = vunpack.c.h.b16 %v6370
        %v7274 = vunpack.c.l.b16 %v6371
        %v7275 = vunpack.c.l.b16 %v6372
        %v7276 = vunpack.c.h.b16 %v6372
        %v7277 = vunpack.c.l.b16 %v6373
        %v7278 = vunpack.c.l.b16 %v6374
        %v7279 = vunpack.c.h.b16 %v6374
        %v7280 = vunpack.c.l.b16 %v6375
        %v7281 = vunpack.c.l.b16 %v6376
        %v7282 = vunpack.c.h.b16 %v6376
        %v7283 = vunpack.c.l.b16 %v6377
        %v7284 = vunpack.c.l.b16 %v6378
        %v7285 = vunpack.c.h.b16 %v6378
        %v7286 = vunpack.c.l.b16 %v6379
        %v7287 = vunpack.c.l.b16 %v6380
        %v7288 = vunpack.c.h.b16 %v6380
        %v7289 = vunpack.c.l.b16 %v6381
        %v7290 = vunpack.c.l.b16 %v6382
        %v7291 = vunpack.c.h.b16 %v6382
        %v7292 = vunpack.c.l.b16 %v6383
        %v7293 = vunpack.c.l.b16 %v6384
        %v7294 = vunpack.c.h.b16 %v6384
        %v7295 = vunpack.c.l.b16 %v6385
        %v7296 = vunpack.c.l.b16 %v6386
        %v7297 = vunpack.c.h.b16 %v6386
        %v7298 = vunpack.c.l.b16 %v6387
        %v7299 = vunpack.c.l.b16 %v6388
        %v7300 = vunpack.c.h.b16 %v6388
        %v7301 = vunpack.c.l.b16 %v6389
        %v7302 = vunpack.c.l.b16 %v6390
        %v7303 = vunpack.c.h.b16 %v6390
        %v7304 = vunpack.c.l.b16 %v6391
        %v7305 = vunpack.c.l.b16 %v6392
        %v7306 = vunpack.c.h.b16 %v6392
        %v7307 = vunpack.c.l.b16 %v6393
        %v7308 = vunpack.c.l.b16 %v6394
        %v7309 = vunpack.c.h.b16 %v6394
        %v7310 = vunpack.c.l.b16 %v6395
        %v7311 = vunpack.c.l.b16 %v6396
        %v7312 = vunpack.c.h.b16 %v6396
        %v7313 = vunpack.c.l.b16 %v6397
        %v7314 = vunpack.c.l.b16 %v6398
        %v7315 = vunpack.c.h.b16 %v6398
        %v7316 = vunpack.c.l.b16 %v6399
        %v7317 = vunpack.c.l.b16 %v6400
        %v7318 = vunpack.c.h.b16 %v6400
        %v7319 = vunpack.c.l.b16 %v6401
        %v7320 = vunpack.c.l.b16 %v6402
        %v7321 = vunpack.c.h.b16 %v6402
        %v7322 = vunpack.c.l.b16 %v6403
        %v7323 = vunpack.c.l.b16 %v6404
        %v7324 = vunpack.c.h.b16 %v6404
        %v7325 = vunpack.c.l.b16 %v6405
        %v7326 = vunpack.c.l.b16 %v6406
        %v7327 = vunpack.c.h.b16 %v6406
        %v7328 = vunpack.c.l.b16 %v6407
        %v7329 = vunpack.c.l.b16 %v6408
        %v7330 = vunpack.c.h.b16 %v6408
        %v7331 = vunpack.c.l.b16 %v6409
        %v7332 = vunpack.c.l.b16 %v6410
        %v7333 = vunpack.c.h.b16 %v6410
        %v7334 = vunpack.c.l.b16 %v6411
        %v7335 = vunpack.c.l.b16 %v6412
        %v7336 = vunpack.c.h.b16 %v6412
        %v7337 = vunpack.c.l.b16 %v6413
        %v7338 = vunpack.c.l.b16 %v6414
        %v7339 = vunpack.c.h.b16 %v6414
        %v7340 = vunpack.c.l.b16 %v6415
        %v7341 = vunpack.c.l.b16 %v6416
        %v7342 = vunpack.c.h.b16 %v6416
        %v7343 = vunpack.c.l.b16 %v6417
        %v7344 = vunpack.c.l.b16 %v6418
        %v7345 = vunpack.c.h.b16 %v6418
        %v7346 = vunpack.c.l.b16 %v6419
        %v7347 = vunpack.c.l.b16 %v6420
        %v7348 = vunpack.c.h.b16 %v6420
        %v7349 = vunpack.c.l.b16 %v6421
        %v7350 = vunpack.c.l.b16 %v6422
        %v7351 = vunpack.c.h.b16 %v6422
        %v7352 = vunpack.c.l.b16 %v6423
        %v7353 = vunpack.c.l.b16 %v6424
        %v7354 = vunpack.c.h.b16 %v6424
        %v7355 = vunpack.c.l.b16 %v6425
        %v7356 = vunpack.c.l.b16 %v6426
        %v7357 = vunpack.c.h.b16 %v6426
        %v7358 = vunpack.c.l.b16 %v6427
        %v7359 = vunpack.c.l.b16 %v6428
        %v7360 = vunpack.c.h.b16 %v6428
        %v7361 = vunpack.c.l.b16 %v6429
        %v7362 = vunpack.c.l.b16 %v6430
        %v7363 = vunpack.c.h.b16 %v6430
        %v7364 = vunpack.c.l.b16 %v6431
        %v7365 = vunpack.c.l.b16 %v6432
        %v7366 = vunpack.c.h.b16 %v6432
        %v7367 = vunpack.c.l.b16 %v6433
        %v7368 = vunpack.c.l.b16 %v6434
        %v7369 = vunpack.c.h.b16 %v6434
        %v7370 = vunpack.c.l.b16 %v6435
        %v7371 = vunpack.c.l.b16 %v6436
        %v7372 = vunpack.c.h.b16 %v6436
        %v7373 = vunpack.c.l.b16 %v6437
        %v7374 = vunpack.c.l.b16 %v6438
        %v7375 = vunpack.c.h.b16 %v6438
        %v7376 = vunpack.c.l.b16 %v6439
        %v7377 = vunpack.c.l.b16 %v6440
        %v7378 = vunpack.c.h.b16 %v6440
        %v7379 = vunpack.c.l.b16 %v6441
        %v7380 = vunpack.c.l.b16 %v6442
        %v7381 = vunpack.c.h.b16 %v6442
        %v7382 = vunpack.c.l.b16 %v6443
        %v7383 = vunpack.c.l.b16 %v6444
        %v7384 = vunpack.c.h.b16 %v6444
        %v7385 = vunpack.c.l.b16 %v6445
        %v7386 = vunpack.c.l.b16 %v6446
        %v7387 = vunpack.c.h.b16 %v6446
        %v7388 = vunpack.c.l.b16 %v6447
        %v7389 = vunpack.c.l.b16 %v6448
        %v7390 = vunpack.c.h.b16 %v6448
        %v7391 = vunpack.c.l.b16 %v6449
        %v7392 = vunpack.c.l.b16 %v6450
        %v7393 = vunpack.c.h.b16 %v6450
        %v7394 = vunpack.c.l.b16 %v6451
        %v7395 = vunpack.c.l.b16 %v6452
        %v7396 = vunpack.c.h.b16 %v6452
        %v7397 = vunpack.c.l.b16 %v6453
        %v7398 = vunpack.c.l.b16 %v6454
        %v7399 = vunpack.c.h.b16 %v6454
        %v7400 = vunpack.c.l.b16 %v6455
        %v7401 = vunpack.c.l.b16 %v6456
        %v7402 = vunpack.c.h.b16 %v6456
        %v7403 = vunpack.c.l.b16 %v6457
        %v7404 = vunpack.c.l.b16 %v6458
        %v7405 = vunpack.c.h.b16 %v6458
        %v7406 = vunpack.c.l.b16 %v6459
        %v7407 = vunpack.c.l.b16 %v6460
        %v7408 = vunpack.c.h.b16 %v6460
        %v7409 = vunpack.c.l.b16 %v6461
        %v7410 = vunpack.c.l.b16 %v6462
        %v7411 = vunpack.c.h.b16 %v6462
        %v7412 = vunpack.c.l.b16 %v6463
        %v7413 = vunpack.c.l.b16 %v6464
        %v7414 = vunpack.c.h.b16 %v6464
        %v7415 = vunpack.c.l.b16 %v6465
        %v7416 = vunpack.c.l.b16 %v6466
        %v7417 = vunpack.c.h.b16 %v6466
        %v7418 = vunpack.c.l.b16 %v6467
        %v7419 = vunpack.c.l.b16 %v6468
        %v7420 = vunpack.c.h.b16 %v6468
        %v7421 = vunpack.c.l.b16 %v6469
        %v7422 = vunpack.c.l.b16 %v6470
        %v7423 = vunpack.c.h.b16 %v6470
        %v7424 = vunpack.c.l.b16 %v6471
        %v7425 = vunpack.c.l.b16 %v6472
        %v7426 = vunpack.c.h.b16 %v6472
        %v7427 = vunpack.c.l.b16 %v6473
        %v7428 = vunpack.c.l.b16 %v6474
        %v7429 = vunpack.c.h.b16 %v6474
        %v7430 = vunpack.c.l.b16 %v6475
        %v7431 = vunpack.c.l.b16 %v6476
        %v7432 = vunpack.c.h.b16 %v6476
        %v7433 = vunpack.c.l.b16 %v6477
        %v7434 = vunpack.c.l.b16 %v6478
        %v7435 = vunpack.c.h.b16 %v6478
        %v7436 = vunpack.c.l.b16 %v6479
        %v7437 = vunpack.c.l.b16 %v6480
        %v7438 = vunpack.c.h.b16 %v6480
        %v7439 = vunpack.c.l.b16 %v6481
        %v7440 = vunpack.c.l.b16 %v6482
        %v7441 = vunpack.c.h.b16 %v6482
        %v7442 = vunpack.c.l.b16 %v6483
        %v7443 = vunpack.c.l.b16 %v6484
        %v7444 = vunpack.c.h.b16 %v6484
        %v7445 = vunpack.c.l.b16 %v6485
        %v7446 = vunpack.c.l.b16 %v6486
        %v7447 = vunpack.c.h.b16 %v6486
        %v7448 = vunpack.c.l.b16 %v6487
        %v7449 = vunpack.c.l.b16 %v6488
        %v7450 = vunpack.c.h.b16 %v6488
        %v7451 = vunpack.c.l.b16 %v6489
        %v7452 = vunpack.c.l.b16 %v6490
        %v7453 = vunpack.c.h.b16 %v6490
        %v7454 = vunpack.c.l.b16 %v6491
        %v7455 = vunpack.c.l.b16 %v6492
        %v7456 = vunpack.c.h.b16 %v6492
        %v7457 = vunpack.c.l.b16 %v6493
        %v7458 = vunpack.c.l.b16 %v6494
        %v7459 = vunpack.c.h.b16 %v6494
        %v7460 = vunpack.c.l.b16 %v6495
        %v7461 = vunpack.c.l.b16 %v6496
        %v7462 = vunpack.c.h.b16 %v6496
        %v7463 = vunpack.c.l.b16 %v6497
        %v7464 = vunpack.c.l.b16 %v6498
        %v7465 = vunpack.c.h.b16 %v6498
        %v7466 = vunpack.c.l.b16 %v6499
        %v7467 = vunpack.c.l.b16 %v6500
        %v7468 = vunpack.c.h.b16 %v6500
        %v7469 = vunpack.c.l.b16 %v6501
        %v7470 = vunpack.c.l.b16 %v6502
        %v7471 = vunpack.c.h.b16 %v6502
        %v7472 = vunpack.c.l.b16 %v6503
        %v7473 = vunpack.c.l.b16 %v6504
        %v7474 = vunpack.c.h.b16 %v6504
        %v7475 = vunpack.c.l.b16 %v6505
        %v7476 = vunpack.c.l.b16 %v6506
        %v7477 = vunpack.c.h.b16 %v6506
        %v7478 = vunpack.c.l.b16 %v6507
        %v7479 = vunpack.c.l.b16 %v6508
        %v7480 = vunpack.c.h.b16 %v6508
        %v7481 = vunpack.c.l.b16 %v6509
        %v7482 = vunpack.c.l.b16 %v6510
        %v7483 = vunpack.c.h.b16 %v6510
        %v7484 = vunpack.c.l.b16 %v6511
        %v7485 = vunpack.c.l.b16 %v6512
        %v7486 = vunpack.c.h.b16 %v6512
        %v7487 = vunpack.c.l.b16 %v6513
        %v7488 = vunpack.c.l.b16 %v6514
        %v7489 = vunpack.c.h.b16 %v6514
        %v7490 = vunpack.c.l.b16 %v6515
        %v7491 = vunpack.c.l.b16 %v6516
        %v7492 = vunpack.c.h.b16 %v6516
        %v7493 = vunpack.c.l.b16 %v6517
        %v7494 = vunpack.c.l.b16 %v6518
        %v7495 = vunpack.c.h.b16 %v6518
        %v7496 = vunpack.c.l.b16 %v6519
        %v7497 = vpack.c.b16 %v6924, %v6921
        %v7498 = vpack.c.b16 %v6925, %v6922
        %v7499 = vpack.c.b16 %v6926, %v6923
        %v7500 = vpack.c.b16 %v6930, %v6927
        %v7501 = vpack.c.b16 %v6931, %v6928
        %v7502 = vpack.c.b16 %v6932, %v6929
        %v7503 = vpack.c.b16 %v6936, %v6933
        %v7504 = vpack.c.b16 %v6937, %v6934
        %v7505 = vpack.c.b16 %v6938, %v6935
        %v7506 = vpack.c.b16 %v6942, %v6939
        %v7507 = vpack.c.b16 %v6943, %v6940
        %v7508 = vpack.c.b16 %v6944, %v6941
        %v7509 = vpack.c.b16 %v6948, %v6945
        %v7510 = vpack.c.b16 %v6949, %v6946
        %v7511 = vpack.c.b16 %v6950, %v6947
        %v7512 = vpack.c.b16 %v6954, %v6951
        %v7513 = vpack.c.b16 %v6955, %v6952
        %v7514 = vpack.c.b16 %v6956, %v6953
        %v7515 = vpack.c.b16 %v6960, %v6957
        %v7516 = vpack.c.b16 %v6961, %v6958
        %v7517 = vpack.c.b16 %v6962, %v6959
        %v7518 = vpack.c.b16 %v6966, %v6963
        %v7519 = vpack.c.b16 %v6967, %v6964
        %v7520 = vpack.c.b16 %v6968, %v6965
        %v7521 = vpack.c.b16 %v6972, %v6969
        %v7522 = vpack.c.b16 %v6973, %v6970
        %v7523 = vpack.c.b16 %v6974, %v6971
        %v7524 = vpack.c.b16 %v6978, %v6975
        %v7525 = vpack.c.b16 %v6979, %v6976
        %v7526 = vpack.c.b16 %v6980, %v6977
        %v7527 = vpack.c.b16 %v6984, %v6981
        %v7528 = vpack.c.b16 %v6985, %v6982
        %v7529 = vpack.c.b16 %v6986, %v6983
        %v7530 = vpack.c.b16 %v6990, %v6987
        %v7531 = vpack.c.b16 %v6991, %v6988
        %v7532 = vpack.c.b16 %v6992, %v6989
        %v7533 = vpack.c.b16 %v6996, %v6993
        %v7534 = vpack.c.b16 %v6997, %v6994
        %v7535 = vpack.c.b16 %v6998, %v6995
        %v7536 = vpack.c.b16 %v7002, %v6999
        %v7537 = vpack.c.b16 %v7003, %v7000
        %v7538 = vpack.c.b16 %v7004, %v7001
        %v7539 = vpack.c.b16 %v7008, %v7005
        %v7540 = vpack.c.b16 %v7009, %v7006
        %v7541 = vpack.c.b16 %v7010, %v7007
        %v7542 = vpack.c.b16 %v7014, %v7011
        %v7543 = vpack.c.b16 %v7015, %v7012
        %v7544 = vpack.c.b16 %v7016, %v7013
        %v7545 = vpack.c.b16 %v7020, %v7017
        %v7546 = vpack.c.b16 %v7021, %v7018
        %v7547 = vpack.c.b16 %v7022, %v7019
        %v7548 = vpack.c.b16 %v7026, %v7023
        %v7549 = vpack.c.b16 %v7027, %v7024
        %v7550 = vpack.c.b16 %v7028, %v7025
        %v7551 = vpack.c.b16 %v7032, %v7029
        %v7552 = vpack.c.b16 %v7033, %v7030
        %v7553 = vpack.c.b16 %v7034, %v7031
        %v7554 = vpack.c.b16 %v7038, %v7035
        %v7555 = vpack.c.b16 %v7039, %v7036
        %v7556 = vpack.c.b16 %v7040, %v7037
        %v7557 = vpack.c.b16 %v7044, %v7041
        %v7558 = vpack.c.b16 %v7045, %v7042
        %v7559 = vpack.c.b16 %v7046, %v7043
        %v7560 = vpack.c.b16 %v7050, %v7047
        %v7561 = vpack.c.b16 %v7051, %v7048
        %v7562 = vpack.c.b16 %v7052, %v7049
        %v7563 = vpack.c.b16 %v7056, %v7053
        %v7564 = vpack.c.b16 %v7057, %v7054
        %v7565 = vpack.c.b16 %v7058, %v7055
        %v7566 = vpack.c.b16 %v7062, %v7059
        %v7567 = vpack.c.b16 %v7063, %v7060
        %v7568 = vpack.c.b16 %v7064, %v7061
        %v7569 = vpack.c.b16 %v7068, %v7065
        %v7570 = vpack.c.b16 %v7069, %v7066
        %v7571 = vpack.c.b16 %v7070, %v7067
        %v7572 = vpack.c.b16 %v7074, %v7071
        %v7573 = vpack.c.b16 %v7075, %v7072
        %v7574 = vpack.c.b16 %v7076, %v7073
        %v7575 = vpack.c.b16 %v7080, %v7077
        %v7576 = vpack.c.b16 %v7081, %v7078
        %v7577 = vpack.c.b16 %v7082, %v7079
        %v7578 = vpack.c.b16 %v7086, %v7083
        %v7579 = vpack.c.b16 %v7087, %v7084
        %v7580 = vpack.c.b16 %v7088, %v7085
        %v7581 = vpack.c.b16 %v7092, %v7089
        %v7582 = vpack.c.b16 %v7093, %v7090
        %v7583 = vpack.c.b16 %v7094, %v7091
        %v7584 = vpack.c.b16 %v7098, %v7095
        %v7585 = vpack.c.b16 %v7099, %v7096
        %v7586 = vpack.c.b16 %v7100, %v7097
        %v7587 = vpack.c.b16 %v7104, %v7101
        %v7588 = vpack.c.b16 %v7105, %v7102
        %v7589 = vpack.c.b16 %v7106, %v7103
        %v7590 = vpack.c.b16 %v7110, %v7107
        %v7591 = vpack.c.b16 %v7111, %v7108
        %v7592 = vpack.c.b16 %v7112, %v7109
        %v7593 = vpack.c.b16 %v7116, %v7113
        %v7594 = vpack.c.b16 %v7117, %v7114
        %v7595 = vpack.c.b16 %v7118, %v7115
        %v7596 = vpack.c.b16 %v7122, %v7119
        %v7597 = vpack.c.b16 %v7123, %v7120
        %v7598 = vpack.c.b16 %v7124, %v7121
        %v7599 = vpack.c.b16 %v7128, %v7125
        %v7600 = vpack.c.b16 %v7129, %v7126
        %v7601 = vpack.c.b16 %v7130, %v7127
        %v7602 = vpack.c.b16 %v7134, %v7131
        %v7603 = vpack.c.b16 %v7135, %v7132
        %v7604 = vpack.c.b16 %v7136, %v7133
        %v7605 = vpack.c.b16 %v7140, %v7137
        %v7606 = vpack.c.b16 %v7141, %v7138
        %v7607 = vpack.c.b16 %v7142, %v7139
        %v7608 = vpack.c.b16 %v7146, %v7143
        %v7609 = vpack.c.b16 %v7147, %v7144
        %v7610 = vpack.c.b16 %v7148, %v7145
        %v7611 = vpack.c.b16 %v7152, %v7149
        %v7612 = vpack.c.b16 %v7153, %v7150
        %v7613 = vpack.c.b16 %v7154, %v7151
        %v7614 = vpack.c.b16 %v7158, %v7155
        %v7615 = vpack.c.b16 %v7159, %v7156
        %v7616 = vpack.c.b16 %v7160, %v7157
        %v7617 = vpack.c.b16 %v7164, %v7161
        %v7618 = vpack.c.b16 %v7165, %v7162
        %v7619 = vpack.c.b16 %v7166, %v7163
        %v7620 = vpack.c.b16 %v7170, %v7167
        %v7621 = vpack.c.b16 %v7171, %v7168
        %v7622 = vpack.c.b16 %v7172, %v7169
        %v7623 = vpack.c.b16 %v7176, %v7173
        %v7624 = vpack.c.b16 %v7177, %v7174
        %v7625 = vpack.c.b16 %v7178, %v7175
        %v7626 = vpack.c.b16 %v7182, %v7179
        %v7627 = vpack.c.b16 %v7183, %v7180
        %v7628 = vpack.c.b16 %v7184, %v7181
        %v7629 = vpack.c.b16 %v7188, %v7185
        %v7630 = vpack.c.b16 %v7189, %v7186
        %v7631 = vpack.c.b16 %v7190, %v7187
        %v7632 = vpack.c.b16 %v7194, %v7191
        %v7633 = vpack.c.b16 %v7195, %v7192
        %v7634 = vpack.c.b16 %v7196, %v7193
        %v7635 = vpack.c.b16 %v7200, %v7197
        %v7636 = vpack.c.b16 %v7201, %v7198
        %v7637 = vpack.c.b16 %v7202, %v7199
        %v7638 = vpack.c.b16 %v7206, %v7203
        %v7639 = vpack.c.b16 %v7207, %v7204
        %v7640 = vpack.c.b16 %v7208, %v7205
        %v7641 = vpack.c.b16 %v7212, %v7209
        %v7642 = vpack.c.b16 %v7213, %v7210
        %v7643 = vpack.c.b16 %v7214, %v7211
        %v7644 = vpack.c.b16 %v7218, %v7215
        %v7645 = vpack.c.b16 %v7219, %v7216
        %v7646 = vpack.c.b16 %v7220, %v7217
        %v7647 = vpack.c.b16 %v7224, %v7221
        %v7648 = vpack.c.b16 %v7225, %v7222
        %v7649 = vpack.c.b16 %v7226, %v7223
        %v7650 = vpack.c.b16 %v7230, %v7227
        %v7651 = vpack.c.b16 %v7231, %v7228
        %v7652 = vpack.c.b16 %v7232, %v7229
        %v7653 = vpack.c.b16 %v7236, %v7233
        %v7654 = vpack.c.b16 %v7237, %v7234
        %v7655 = vpack.c.b16 %v7238, %v7235
        %v7656 = vpack.c.b16 %v7242, %v7239
        %v7657 = vpack.c.b16 %v7243, %v7240
        %v7658 = vpack.c.b16 %v7244, %v7241
        %v7659 = vpack.c.b16 %v7248, %v7245
        %v7660 = vpack.c.b16 %v7249, %v7246
        %v7661 = vpack.c.b16 %v7250, %v7247
        %v7662 = vpack.c.b16 %v7254, %v7251
        %v7663 = vpack.c.b16 %v7255, %v7252
        %v7664 = vpack.c.b16 %v7256, %v7253
        %v7665 = vpack.c.b16 %v7260, %v7257
        %v7666 = vpack.c.b16 %v7261, %v7258
        %v7667 = vpack.c.b16 %v7262, %v7259
        %v7668 = vpack.c.b16 %v7266, %v7263
        %v7669 = vpack.c.b16 %v7267, %v7264
        %v7670 = vpack.c.b16 %v7268, %v7265
        %v7671 = vpack.c.b16 %v7272, %v7269
        %v7672 = vpack.c.b16 %v7273, %v7270
        %v7673 = vpack.c.b16 %v7274, %v7271
        %v7674 = vpack.c.b16 %v7278, %v7275
        %v7675 = vpack.c.b16 %v7279, %v7276
        %v7676 = vpack.c.b16 %v7280, %v7277
        %v7677 = vpack.c.b16 %v7284, %v7281
        %v7678 = vpack.c.b16 %v7285, %v7282
        %v7679 = vpack.c.b16 %v7286, %v7283
        %v7680 = vpack.c.b16 %v7290, %v7287
        %v7681 = vpack.c.b16 %v7291, %v7288
        %v7682 = vpack.c.b16 %v7292, %v7289
        %v7683 = vpack.c.b16 %v7296, %v7293
        %v7684 = vpack.c.b16 %v7297, %v7294
        %v7685 = vpack.c.b16 %v7298, %v7295
        %v7686 = vpack.c.b16 %v7302, %v7299
        %v7687 = vpack.c.b16 %v7303, %v7300
        %v7688 = vpack.c.b16 %v7304, %v7301
        %v7689 = vpack.c.b16 %v7308, %v7305
        %v7690 = vpack.c.b16 %v7309, %v7306
        %v7691 = vpack.c.b16 %v7310, %v7307
        %v7692 = vpack.c.b16 %v7314, %v7311
        %v7693 = vpack.c.b16 %v7315, %v7312
        %v7694 = vpack.c.b16 %v7316, %v7313
        %v7695 = vpack.c.b16 %v7320, %v7317
        %v7696 = vpack.c.b16 %v7321, %v7318
        %v7697 = vpack.c.b16 %v7322, %v7319
        %v7698 = vpack.c.b16 %v7326, %v7323
        %v7699 = vpack.c.b16 %v7327, %v7324
        %v7700 = vpack.c.b16 %v7328, %v7325
        %v7701 = vpack.c.b16 %v7332, %v7329
        %v7702 = vpack.c.b16 %v7333, %v7330
        %v7703 = vpack.c.b16 %v7334, %v7331
        %v7704 = vpack.c.b16 %v7338, %v7335
        %v7705 = vpack.c.b16 %v7339, %v7336
        %v7706 = vpack.c.b16 %v7340, %v7337
        %v7707 = vpack.c.b16 %v7344, %v7341
        %v7708 = vpack.c.b16 %v7345, %v7342
        %v7709 = vpack.c.b16 %v7346, %v7343
        %v7710 = vpack.c.b16 %v7350, %v7347
        %v7711 = vpack.c.b16 %v7351, %v7348
        %v7712 = vpack.c.b16 %v7352, %v7349
        %v7713 = vpack.c.b16 %v7356, %v7353
        %v7714 = vpack.c.b16 %v7357, %v7354
        %v7715 = vpack.c.b16 %v7358, %v7355
        %v7716 = vpack.c.b16 %v7362, %v7359
        %v7717 = vpack.c.b16 %v7363, %v7360
        %v7718 = vpack.c.b16 %v7364, %v7361
        %v7719 = vpack.c.b16 %v7368, %v7365
        %v7720 = vpack.c.b16 %v7369, %v7366
        %v7721 = vpack.c.b16 %v7370, %v7367
        %v7722 = vpack.c.b16 %v7374, %v7371
        %v7723 = vpack.c.b16 %v7375, %v7372
        %v7724 = vpack.c.b16 %v7376, %v7373
        %v7725 = vpack.c.b16 %v7380, %v7377
        %v7726 = vpack.c.b16 %v7381, %v7378
        %v7727 = vpack.c.b16 %v7382, %v7379
        %v7728 = vpack.c.b16 %v7386, %v7383
        %v7729 = vpack.c.b16 %v7387, %v7384
        %v7730 = vpack.c.b16 %v7388, %v7385
        %v7731 = vpack.c.b16 %v7392, %v7389
        %v7732 = vpack.c.b16 %v7393, %v7390
        %v7733 = vpack.c.b16 %v7394, %v7391
        %v7734 = vpack.c.b16 %v7398, %v7395
        %v7735 = vpack.c.b16 %v7399, %v7396
        %v7736 = vpack.c.b16 %v7400, %v7397
        %v7737 = vpack.c.b16 %v7404, %v7401
        %v7738 = vpack.c.b16 %v7405, %v7402
        %v7739 = vpack.c.b16 %v7406, %v7403
        %v7740 = vpack.c.b16 %v7410, %v7407
        %v7741 = vpack.c.b16 %v7411, %v7408
        %v7742 = vpack.c.b16 %v7412, %v7409
        %v7743 = vpack.c.b16 %v7416, %v7413
        %v7744 = vpack.c.b16 %v7417, %v7414
        %v7745 = vpack.c.b16 %v7418, %v7415
        %v7746 = vpack.c.b16 %v7422, %v7419
        %v7747 = vpack.c.b16 %v7423, %v7420
        %v7748 = vpack.c.b16 %v7424, %v7421
        %v7749 = vpack.c.b16 %v7428, %v7425
        %v7750 = vpack.c.b16 %v7429, %v7426
        %v7751 = vpack.c.b16 %v7430, %v7427
        %v7752 = vpack.c.b16 %v7434, %v7431
        %v7753 = vpack.c.b16 %v7435, %v7432
        %v7754 = vpack.c.b16 %v7436, %v7433
        %v7755 = vpack.c.b16 %v7440, %v7437
        %v7756 = vpack.c.b16 %v7441, %v7438
        %v7757 = vpack.c.b16 %v7442, %v7439
        %v7758 = vpack.c.b16 %v7446, %v7443
        %v7759 = vpack.c.b16 %v7447, %v7444
        %v7760 = vpack.c.b16 %v7448, %v7445
        %v7761 = vpack.c.b16 %v7452, %v7449
        %v7762 = vpack.c.b16 %v7453, %v7450
        %v7763 = vpack.c.b16 %v7454, %v7451
        %v7764 = vpack.c.b16 %v7458, %v7455
        %v7765 = vpack.c.b16 %v7459, %v7456
        %v7766 = vpack.c.b16 %v7460, %v7457
        %v7767 = vpack.c.b16 %v7464, %v7461
        %v7768 = vpack.c.b16 %v7465, %v7462
        %v7769 = vpack.c.b16 %v7466, %v7463
        %v7770 = vpack.c.b16 %v7470, %v7467
        %v7771 = vpack.c.b16 %v7471, %v7468
        %v7772 = vpack.c.b16 %v7472, %v7469
        %v7773 = vpack.c.b16 %v7476, %v7473
        %v7774 = vpack.c.b16 %v7477, %v7474
        %v7775 = vpack.c.b16 %v7478, %v7475
        %v7776 = vpack.c.b16 %v7482, %v7479
        %v7777 = vpack.c.b16 %v7483, %v7480
        %v7778 = vpack.c.b16 %v7484, %v7481
        %v7779 = vpack.c.b16 %v7488, %v7485
        %v7780 = vpack.c.b16 %v7489, %v7486
        %v7781 = vpack.c.b16 %v7490, %v7487
        %v7782 = vpack.c.b16 %v7494, %v7491
        %v7783 = vpack.c.b16 %v7495, %v7492
        %v7784 = vpack.c.b16 %v7496, %v7493
        %8073 = vmatprep.subr.bf16.mxu0 %v7519
        %8074 = vmatpush1.bf16.msra.mxu0 %v7518
        %8075 = vmatprep.subr.bf16.mxu0 %v7516
        %8076 = vmatpush1.bf16.msra.mxu0 %v7515
        %8077 = vmatprep.subr.bf16.mxu0 %v7513
        %8078 = vmatpush1.bf16.msra.mxu0 %v7512
        %8079 = vmatprep.subr.bf16.mxu0 %v7510
        %8080 = vmatpush1.bf16.msra.mxu0 %v7509
        %8081 = vmatprep.subr.bf16.mxu0 %v7507
        %8082 = vmatpush1.bf16.msra.mxu0 %v7506
        %8083 = vmatprep.subr.bf16.mxu0 %v7504
        %8084 = vmatpush1.bf16.msra.mxu0 %v7503
        %8085 = vmatprep.subr.bf16.mxu0 %v7501
        %8086 = vmatpush1.bf16.msra.mxu0 %v7500
        %8087 = vmatprep.subr.bf16.mxu0 %v7498
        %8088 = vmatpush1.bf16.msra.mxu0 %v7497
        %8089 = vmatprep.subr.bf16.mxu0 %v7543
        %8090 = vmatpush2.bf16.msra.mxu0 %v7542
        %8091 = vmatprep.subr.bf16.mxu0 %v7540
        %8092 = vmatpush2.bf16.msra.mxu0 %v7539
        %8093 = vmatprep.subr.bf16.mxu0 %v7537
        %8094 = vmatpush2.bf16.msra.mxu0 %v7536
        %8095 = vmatprep.subr.bf16.mxu0 %v7534
        %8096 = vmatpush2.bf16.msra.mxu0 %v7533
        %8097 = vmatprep.subr.bf16.mxu0 %v7531
        %8098 = vmatpush2.bf16.msra.mxu0 %v7530
        %8099 = vmatprep.subr.bf16.mxu0 %v7528
        %8100 = vmatpush2.bf16.msra.mxu0 %v7527
        %8101 = vmatprep.subr.bf16.mxu0 %v7525
        %8102 = vmatpush2.bf16.msra.mxu0 %v7524
        %8103 = vmatprep.subr.bf16.mxu0 %v7522
        %8104 = vmatpush2.bf16.msra.mxu0 %v7521
        %8105 = vmatprep.mubr.bf16.mxu0 %v6125
        %8106 = vmatmul.mubr.bf16.gmra.mxu0 %v6124
        %v8107 = vpop.f32.mrf.mxu0
        %v8108 = vadd.f32 %v6525, %v8107
        %v8109 = vpop.f32.mrf.mxu0
        %v8110 = vadd.f32 %v6529, %v8109
        %v8111 = vpop.f32.mrf.mxu0
        %v8112 = vpop.f32.mrf.mxu0
        %8113 = vdwg.mxu0
        %8114 = vmatprep.subr.bf16.mxu0 %v7567
        %8115 = vmatpush1.bf16.msra.mxu0 %v7566
        %8116 = vmatprep.subr.bf16.mxu0 %v7564
        %8117 = vmatpush1.bf16.msra.mxu0 %v7563
        %8118 = vmatprep.subr.bf16.mxu0 %v7561
        %8119 = vmatpush1.bf16.msra.mxu0 %v7560
        %8120 = vmatprep.subr.bf16.mxu0 %v7558
        %8121 = vmatpush1.bf16.msra.mxu0 %v7557
        %8122 = vmatprep.subr.bf16.mxu0 %v7555
        %8123 = vmatpush1.bf16.msra.mxu0 %v7554
        %8124 = vmatprep.subr.bf16.mxu0 %v7552
        %8125 = vmatpush1.bf16.msra.mxu0 %v7551
        %8126 = vmatprep.subr.bf16.mxu0 %v7549
        %8127 = vmatpush1.bf16.msra.mxu0 %v7548
        %8128 = vmatprep.subr.bf16.mxu0 %v7546
        %8129 = vmatpush1.bf16.msra.mxu0 %v7545
        %8130 = vmatprep.subr.bf16.mxu0 %v7591
        %8131 = vmatpush2.bf16.msra.mxu0 %v7590
        %8132 = vmatprep.subr.bf16.mxu0 %v7588
        %8133 = vmatpush2.bf16.msra.mxu0 %v7587
        %8134 = vmatprep.subr.bf16.mxu0 %v7585
        %8135 = vmatpush2.bf16.msra.mxu0 %v7584
        %8136 = vmatprep.subr.bf16.mxu0 %v7582
        %8137 = vmatpush2.bf16.msra.mxu0 %v7581
        %8138 = vmatprep.subr.bf16.mxu0 %v7579
        %8139 = vmatpush2.bf16.msra.mxu0 %v7578
        %8140 = vmatprep.subr.bf16.mxu0 %v7576
        %8141 = vmatpush2.bf16.msra.mxu0 %v7575
        %8142 = vmatprep.subr.bf16.mxu0 %v7573
        %8143 = vmatpush2.bf16.msra.mxu0 %v7572
        %8144 = vmatprep.subr.bf16.mxu0 %v7570
        %8145 = vmatpush2.bf16.msra.mxu0 %v7569
        %8146 = vmatprep.mubr.bf16.mxu0 %v6127
        %8147 = vmatmul.mubr.bf16.gmra.mxu0 %v6126
        %v8148 = vpop.f32.mrf.mxu0
        %v8149 = vadd.f32 %v8108, %v8148
        %v8150 = vpop.f32.mrf.mxu0
        %v8151 = vadd.f32 %v8110, %v8150
        %v8152 = vpop.f32.mrf.mxu0
        %v8153 = vpop.f32.mrf.mxu0
        %8154 = vdwg.mxu0
        %8155 = vmatprep.subr.bf16.mxu0 %v7615
        %8156 = vmatpush1.bf16.msra.mxu0 %v7614
        %8157 = vmatprep.subr.bf16.mxu0 %v7612
        %8158 = vmatpush1.bf16.msra.mxu0 %v7611
        %8159 = vmatprep.subr.bf16.mxu0 %v7609
        %8160 = vmatpush1.bf16.msra.mxu0 %v7608
        %8161 = vmatprep.subr.bf16.mxu0 %v7606
        %8162 = vmatpush1.bf16.msra.mxu0 %v7605
        %8163 = vmatprep.subr.bf16.mxu0 %v7603
        %8164 = vmatpush1.bf16.msra.mxu0 %v7602
        %8165 = vmatprep.subr.bf16.mxu0 %v7600
        %8166 = vmatpush1.bf16.msra.mxu0 %v7599
        %8167 = vmatprep.subr.bf16.mxu0 %v7597
        %8168 = vmatpush1.bf16.msra.mxu0 %v7596
        %8169 = vmatprep.subr.bf16.mxu0 %v7594
        %8170 = vmatpush1.bf16.msra.mxu0 %v7593
        %8171 = vmatprep.subr.bf16.mxu0 %v7639
        %8172 = vmatpush2.bf16.msra.mxu0 %v7638
        %8173 = vmatprep.subr.bf16.mxu0 %v7636
        %8174 = vmatpush2.bf16.msra.mxu0 %v7635
        %8175 = vmatprep.subr.bf16.mxu0 %v7633
        %8176 = vmatpush2.bf16.msra.mxu0 %v7632
        %8177 = vmatprep.subr.bf16.mxu0 %v7630
        %8178 = vmatpush2.bf16.msra.mxu0 %v7629
        %8179 = vmatprep.subr.bf16.mxu0 %v7627
        %8180 = vmatpush2.bf16.msra.mxu0 %v7626
        %8181 = vmatprep.subr.bf16.mxu0 %v7624
        %8182 = vmatpush2.bf16.msra.mxu0 %v7623
        %8183 = vmatprep.subr.bf16.mxu0 %v7621
        %8184 = vmatpush2.bf16.msra.mxu0 %v7620
        %8185 = vmatprep.subr.bf16.mxu0 %v7618
        %8186 = vmatpush2.bf16.msra.mxu0 %v7617
        %8187 = vmatprep.mubr.bf16.mxu0 %v6129
        %8188 = vmatmul.mubr.bf16.gmra.mxu0 %v6128
        %v8189 = vpop.f32.mrf.mxu0
        %v8190 = vadd.f32 %v8149, %v8189
        %v8191 = vpop.f32.mrf.mxu0
        %v8192 = vadd.f32 %v8151, %v8191
        %v8193 = vpop.f32.mrf.mxu0
        %v8194 = vpop.f32.mrf.mxu0
        %8195 = vdwg.mxu0
        %8196 = vmatprep.subr.bf16.mxu0 %v7663
        %8197 = vmatpush1.bf16.msra.mxu0 %v7662
        %8198 = vmatprep.subr.bf16.mxu0 %v7660
        %8199 = vmatpush1.bf16.msra.mxu0 %v7659
        %8200 = vmatprep.subr.bf16.mxu0 %v7657
        %8201 = vmatpush1.bf16.msra.mxu0 %v7656
        %8202 = vmatprep.subr.bf16.mxu0 %v7654
        %8203 = vmatpush1.bf16.msra.mxu0 %v7653
        %8204 = vmatprep.subr.bf16.mxu0 %v7651
        %8205 = vmatpush1.bf16.msra.mxu0 %v7650
        %8206 = vmatprep.subr.bf16.mxu0 %v7648
        %8207 = vmatpush1.bf16.msra.mxu0 %v7647
        %8208 = vmatprep.subr.bf16.mxu0 %v7645
        %8209 = vmatpush1.bf16.msra.mxu0 %v7644
        %8210 = vmatprep.subr.bf16.mxu0 %v7642
        %8211 = vmatpush1.bf16.msra.mxu0 %v7641
        %8212 = vmatprep.subr.bf16.mxu0 %v7687
        %8213 = vmatpush2.bf16.msra.mxu0 %v7686
        %8214 = vmatprep.subr.bf16.mxu0 %v7684
        %8215 = vmatpush2.bf16.msra.mxu0 %v7683
        %8216 = vmatprep.subr.bf16.mxu0 %v7681
        %8217 = vmatpush2.bf16.msra.mxu0 %v7680
        %8218 = vmatprep.subr.bf16.mxu0 %v7678
        %8219 = vmatpush2.bf16.msra.mxu0 %v7677
        %8220 = vmatprep.subr.bf16.mxu0 %v7675
        %8221 = vmatpush2.bf16.msra.mxu0 %v7674
        %8222 = vmatprep.subr.bf16.mxu0 %v7672
        %8223 = vmatpush2.bf16.msra.mxu0 %v7671
        %8224 = vmatprep.subr.bf16.mxu0 %v7669
        %8225 = vmatpush2.bf16.msra.mxu0 %v7668
        %8226 = vmatprep.subr.bf16.mxu0 %v7666
        %8227 = vmatpush2.bf16.msra.mxu0 %v7665
        %8228 = vmatprep.mubr.bf16.mxu0 %v6131
        %8229 = vmatmul.mubr.bf16.gmra.mxu0 %v6130
        %v8230 = vpop.f32.mrf.mxu0
        %v8231 = vadd.f32 %v8190, %v8230
        %v8232 = vpop.f32.mrf.mxu0
        %v8233 = vadd.f32 %v8192, %v8232
        %v8234 = vpop.f32.mrf.mxu0
        %v8235 = vpop.f32.mrf.mxu0
        %8236 = vdwg.mxu0
        %8237 = vmatprep.subr.bf16.mxu0 %v7711
        %8238 = vmatpush1.bf16.msra.mxu0 %v7710
        %8239 = vmatprep.subr.bf16.mxu0 %v7708
        %8240 = vmatpush1.bf16.msra.mxu0 %v7707
        %8241 = vmatprep.subr.bf16.mxu0 %v7705
        %8242 = vmatpush1.bf16.msra.mxu0 %v7704
        %8243 = vmatprep.subr.bf16.mxu0 %v7702
        %8244 = vmatpush1.bf16.msra.mxu0 %v7701
        %8245 = vmatprep.subr.bf16.mxu0 %v7699
        %8246 = vmatpush1.bf16.msra.mxu0 %v7698
        %8247 = vmatprep.subr.bf16.mxu0 %v7696
        %8248 = vmatpush1.bf16.msra.mxu0 %v7695
        %8249 = vmatprep.subr.bf16.mxu0 %v7693
        %8250 = vmatpush1.bf16.msra.mxu0 %v7692
        %8251 = vmatprep.subr.bf16.mxu0 %v7690
        %8252 = vmatpush1.bf16.msra.mxu0 %v7689
        %8253 = vmatprep.subr.bf16.mxu0 %v7735
        %8254 = vmatpush2.bf16.msra.mxu0 %v7734
        %8255 = vmatprep.subr.bf16.mxu0 %v7732
        %8256 = vmatpush2.bf16.msra.mxu0 %v7731
        %8257 = vmatprep.subr.bf16.mxu0 %v7729
        %8258 = vmatpush2.bf16.msra.mxu0 %v7728
        %8259 = vmatprep.subr.bf16.mxu0 %v7726
        %8260 = vmatpush2.bf16.msra.mxu0 %v7725
        %8261 = vmatprep.subr.bf16.mxu0 %v7723
        %8262 = vmatpush2.bf16.msra.mxu0 %v7722
        %8263 = vmatprep.subr.bf16.mxu0 %v7720
        %8264 = vmatpush2.bf16.msra.mxu0 %v7719
        %8265 = vmatprep.subr.bf16.mxu0 %v7717
        %8266 = vmatpush2.bf16.msra.mxu0 %v7716
        %8267 = vmatprep.subr.bf16.mxu0 %v7714
        %8268 = vmatpush2.bf16.msra.mxu0 %v7713
        %8269 = vmatprep.mubr.bf16.mxu0 %v6133
        %8270 = vmatmul.mubr.bf16.gmra.mxu0 %v6132
        %v8271 = vpop.f32.mrf.mxu0
        %v8272 = vadd.f32 %v8231, %v8271
        %v8273 = vpop.f32.mrf.mxu0
        %v8274 = vadd.f32 %v8233, %v8273
        %v8275 = vpop.f32.mrf.mxu0
        %v8276 = vpop.f32.mrf.mxu0
        %8277 = vdwg.mxu0
        %8278 = vmatprep.subr.bf16.mxu0 %v7759
        %8279 = vmatpush1.bf16.msra.mxu0 %v7758
        %8280 = vmatprep.subr.bf16.mxu0 %v7756
        %8281 = vmatpush1.bf16.msra.mxu0 %v7755
        %8282 = vmatprep.subr.bf16.mxu0 %v7753
        %8283 = vmatpush1.bf16.msra.mxu0 %v7752
        %8284 = vmatprep.subr.bf16.mxu0 %v7750
        %8285 = vmatpush1.bf16.msra.mxu0 %v7749
        %8286 = vmatprep.subr.bf16.mxu0 %v7747
        %8287 = vmatpush1.bf16.msra.mxu0 %v7746
        %8288 = vmatprep.subr.bf16.mxu0 %v7744
        %8289 = vmatpush1.bf16.msra.mxu0 %v7743
        %8290 = vmatprep.subr.bf16.mxu0 %v7741
        %8291 = vmatpush1.bf16.msra.mxu0 %v7740
        %8292 = vmatprep.subr.bf16.mxu0 %v7738
        %8293 = vmatpush1.bf16.msra.mxu0 %v7737
        %8294 = vmatprep.subr.bf16.mxu0 %v7783
        %8295 = vmatpush2.bf16.msra.mxu0 %v7782
        %8296 = vmatprep.subr.bf16.mxu0 %v7780
        %8297 = vmatpush2.bf16.msra.mxu0 %v7779
        %8298 = vmatprep.subr.bf16.mxu0 %v7777
        %8299 = vmatpush2.bf16.msra.mxu0 %v7776
        %8300 = vmatprep.subr.bf16.mxu0 %v7774
        %8301 = vmatpush2.bf16.msra.mxu0 %v7773
        %8302 = vmatprep.subr.bf16.mxu0 %v7771
        %8303 = vmatpush2.bf16.msra.mxu0 %v7770
        %8304 = vmatprep.subr.bf16.mxu0 %v7768
        %8305 = vmatpush2.bf16.msra.mxu0 %v7767
        %8306 = vmatprep.subr.bf16.mxu0 %v7765
        %8307 = vmatpush2.bf16.msra.mxu0 %v7764
        %8308 = vmatprep.subr.bf16.mxu0 %v7762
        %8309 = vmatpush2.bf16.msra.mxu0 %v7761
        %8310 = vmatprep.mubr.bf16.mxu0 %v6135
        %8311 = vmatmul.mubr.bf16.gmra.mxu0 %v6134
        %v8312 = vpop.f32.mrf.mxu0
        %v8313 = vadd.f32 %v8272, %v8312
        %v8314 = vpop.f32.mrf.mxu0
        %v8315 = vadd.f32 %v8274, %v8314
        %v8316 = vpop.f32.mrf.mxu0
        %v8317 = vpop.f32.mrf.mxu0
        %8318 = vdwg.mxu0
        %8319 = vmatprep.subr.bf16.mxu0 0
        %8320 = vmatpush1.bf16.msra.mxu0 %v7520
        %8321 = vmatprep.subr.bf16.mxu0 0
        %8322 = vmatpush1.bf16.msra.mxu0 %v7517
        %8323 = vmatprep.subr.bf16.mxu0 0
        %8324 = vmatpush1.bf16.msra.mxu0 %v7514
        %8325 = vmatprep.subr.bf16.mxu0 0
        %8326 = vmatpush1.bf16.msra.mxu0 %v7511
        %8327 = vmatprep.subr.bf16.mxu0 0
        %8328 = vmatpush1.bf16.msra.mxu0 %v7508
        %8329 = vmatprep.subr.bf16.mxu0 0
        %8330 = vmatpush1.bf16.msra.mxu0 %v7505
        %8331 = vmatprep.subr.bf16.mxu0 0
        %8332 = vmatpush1.bf16.msra.mxu0 %v7502
        %8333 = vmatprep.subr.bf16.mxu0 0
        %8334 = vmatpush1.bf16.msra.mxu0 %v7499
        %8335 = vmatprep.subr.bf16.mxu0 0
        %8336 = vmatpush2.bf16.msra.mxu0 %v7544
        %8337 = vmatprep.subr.bf16.mxu0 0
        %8338 = vmatpush2.bf16.msra.mxu0 %v7541
        %8339 = vmatprep.subr.bf16.mxu0 0
        %8340 = vmatpush2.bf16.msra.mxu0 %v7538
        %8341 = vmatprep.subr.bf16.mxu0 0
        %8342 = vmatpush2.bf16.msra.mxu0 %v7535
        %8343 = vmatprep.subr.bf16.mxu0 0
        %8344 = vmatpush2.bf16.msra.mxu0 %v7532
        %8345 = vmatprep.subr.bf16.mxu0 0
        %8346 = vmatpush2.bf16.msra.mxu0 %v7529
        %8347 = vmatprep.subr.bf16.mxu0 0
        %8348 = vmatpush2.bf16.msra.mxu0 %v7526
        %8349 = vmatprep.subr.bf16.mxu0 0
        %8350 = vmatpush2.bf16.msra.mxu0 %v7523
        %8351 = vmatprep.mubr.bf16.mxu0 %v6125
        %8352 = vmatmul.mubr.bf16.gmra.mxu0 %v6124
        %v8353 = vpop.f32.mrf.mxu0
        %v8354 = vadd.f32 %v6533, %v8353
        %v8355 = vpop.f32.mrf.mxu0
        %v8356 = vpop.f32.mrf.mxu0
        %v8357 = vpop.f32.mrf.mxu0
        %8358 = vdwg.mxu0
        %8359 = vmatprep.subr.bf16.mxu0 0
        %8360 = vmatpush1.bf16.msra.mxu0 %v7568
        %8361 = vmatprep.subr.bf16.mxu0 0
        %8362 = vmatpush1.bf16.msra.mxu0 %v7565
        %8363 = vmatprep.subr.bf16.mxu0 0
        %8364 = vmatpush1.bf16.msra.mxu0 %v7562
        %8365 = vmatprep.subr.bf16.mxu0 0
        %8366 = vmatpush1.bf16.msra.mxu0 %v7559
        %8367 = vmatprep.subr.bf16.mxu0 0
        %8368 = vmatpush1.bf16.msra.mxu0 %v7556
        %8369 = vmatprep.subr.bf16.mxu0 0
        %8370 = vmatpush1.bf16.msra.mxu0 %v7553
        %8371 = vmatprep.subr.bf16.mxu0 0
        %8372 = vmatpush1.bf16.msra.mxu0 %v7550
        %8373 = vmatprep.subr.bf16.mxu0 0
        %8374 = vmatpush1.bf16.msra.mxu0 %v7547
        %8375 = vmatprep.subr.bf16.mxu0 0
        %8376 = vmatpush2.bf16.msra.mxu0 %v7592
        %8377 = vmatprep.subr.bf16.mxu0 0
        %8378 = vmatpush2.bf16.msra.mxu0 %v7589
        %8379 = vmatprep.subr.bf16.mxu0 0
        %8380 = vmatpush2.bf16.msra.mxu0 %v7586
        %8381 = vmatprep.subr.bf16.mxu0 0
        %8382 = vmatpush2.bf16.msra.mxu0 %v7583
        %8383 = vmatprep.subr.bf16.mxu0 0
        %8384 = vmatpush2.bf16.msra.mxu0 %v7580
        %8385 = vmatprep.subr.bf16.mxu0 0
        %8386 = vmatpush2.bf16.msra.mxu0 %v7577
        %8387 = vmatprep.subr.bf16.mxu0 0
        %8388 = vmatpush2.bf16.msra.mxu0 %v7574
        %8389 = vmatprep.subr.bf16.mxu0 0
        %8390 = vmatpush2.bf16.msra.mxu0 %v7571
        %8391 = vmatprep.mubr.bf16.mxu0 %v6127
        %8392 = vmatmul.mubr.bf16.gmra.mxu0 %v6126
        %v8393 = vpop.f32.mrf.mxu0
        %v8394 = vadd.f32 %v8354, %v8393
        %v8395 = vpop.f32.mrf.mxu0
        %v8396 = vpop.f32.mrf.mxu0
        %v8397 = vpop.f32.mrf.mxu0
        %8398 = vdwg.mxu0
        %8399 = vmatprep.subr.bf16.mxu0 0
        %8400 = vmatpush1.bf16.msra.mxu0 %v7616
        %8401 = vmatprep.subr.bf16.mxu0 0
        %8402 = vmatpush1.bf16.msra.mxu0 %v7613
        %8403 = vmatprep.subr.bf16.mxu0 0
        %8404 = vmatpush1.bf16.msra.mxu0 %v7610
        %8405 = vmatprep.subr.bf16.mxu0 0
        %8406 = vmatpush1.bf16.msra.mxu0 %v7607
        %8407 = vmatprep.subr.bf16.mxu0 0
        %8408 = vmatpush1.bf16.msra.mxu0 %v7604
        %8409 = vmatprep.subr.bf16.mxu0 0
        %8410 = vmatpush1.bf16.msra.mxu0 %v7601
        %8411 = vmatprep.subr.bf16.mxu0 0
        %8412 = vmatpush1.bf16.msra.mxu0 %v7598
        %8413 = vmatprep.subr.bf16.mxu0 0
        %8414 = vmatpush1.bf16.msra.mxu0 %v7595
        %8415 = vmatprep.subr.bf16.mxu0 0
        %8416 = vmatpush2.bf16.msra.mxu0 %v7640
        %8417 = vmatprep.subr.bf16.mxu0 0
        %8418 = vmatpush2.bf16.msra.mxu0 %v7637
        %8419 = vmatprep.subr.bf16.mxu0 0
        %8420 = vmatpush2.bf16.msra.mxu0 %v7634
        %8421 = vmatprep.subr.bf16.mxu0 0
        %8422 = vmatpush2.bf16.msra.mxu0 %v7631
        %8423 = vmatprep.subr.bf16.mxu0 0
        %8424 = vmatpush2.bf16.msra.mxu0 %v7628
        %8425 = vmatprep.subr.bf16.mxu0 0
        %8426 = vmatpush2.bf16.msra.mxu0 %v7625
        %8427 = vmatprep.subr.bf16.mxu0 0
        %8428 = vmatpush2.bf16.msra.mxu0 %v7622
        %8429 = vmatprep.subr.bf16.mxu0 0
        %8430 = vmatpush2.bf16.msra.mxu0 %v7619
        %8431 = vmatprep.mubr.bf16.mxu0 %v6129
        %8432 = vmatmul.mubr.bf16.gmra.mxu0 %v6128
        %v8433 = vpop.f32.mrf.mxu0
        %v8434 = vadd.f32 %v8394, %v8433
        %v8435 = vpop.f32.mrf.mxu0
        %v8436 = vpop.f32.mrf.mxu0
        %v8437 = vpop.f32.mrf.mxu0
        %8438 = vdwg.mxu0
        %8439 = vmatprep.subr.bf16.mxu0 0
        %8440 = vmatpush1.bf16.msra.mxu0 %v7664
        %8441 = vmatprep.subr.bf16.mxu0 0
        %8442 = vmatpush1.bf16.msra.mxu0 %v7661
        %8443 = vmatprep.subr.bf16.mxu0 0
        %8444 = vmatpush1.bf16.msra.mxu0 %v7658
        %8445 = vmatprep.subr.bf16.mxu0 0
        %8446 = vmatpush1.bf16.msra.mxu0 %v7655
        %8447 = vmatprep.subr.bf16.mxu0 0
        %8448 = vmatpush1.bf16.msra.mxu0 %v7652
        %8449 = vmatprep.subr.bf16.mxu0 0
        %8450 = vmatpush1.bf16.msra.mxu0 %v7649
        %8451 = vmatprep.subr.bf16.mxu0 0
        %8452 = vmatpush1.bf16.msra.mxu0 %v7646
        %8453 = vmatprep.subr.bf16.mxu0 0
        %8454 = vmatpush1.bf16.msra.mxu0 %v7643
        %8455 = vmatprep.subr.bf16.mxu0 0
        %8456 = vmatpush2.bf16.msra.mxu0 %v7688
        %8457 = vmatprep.subr.bf16.mxu0 0
        %8458 = vmatpush2.bf16.msra.mxu0 %v7685
        %8459 = vmatprep.subr.bf16.mxu0 0
        %8460 = vmatpush2.bf16.msra.mxu0 %v7682
        %8461 = vmatprep.subr.bf16.mxu0 0
        %8462 = vmatpush2.bf16.msra.mxu0 %v7679
        %8463 = vmatprep.subr.bf16.mxu0 0
        %8464 = vmatpush2.bf16.msra.mxu0 %v7676
        %8465 = vmatprep.subr.bf16.mxu0 0
        %8466 = vmatpush2.bf16.msra.mxu0 %v7673
        %8467 = vmatprep.subr.bf16.mxu0 0
        %8468 = vmatpush2.bf16.msra.mxu0 %v7670
        %8469 = vmatprep.subr.bf16.mxu0 0
        %8470 = vmatpush2.bf16.msra.mxu0 %v7667
        %8471 = vmatprep.mubr.bf16.mxu0 %v6131
        %8472 = vmatmul.mubr.bf16.gmra.mxu0 %v6130
        %v8473 = vpop.f32.mrf.mxu0
        %v8474 = vadd.f32 %v8434, %v8473
        %v8475 = vpop.f32.mrf.mxu0
        %v8476 = vpop.f32.mrf.mxu0
        %v8477 = vpop.f32.mrf.mxu0
        %8478 = vdwg.mxu0
        %8479 = vmatprep.subr.bf16.mxu0 0
        %8480 = vmatpush1.bf16.msra.mxu0 %v7712
        %8481 = vmatprep.subr.bf16.mxu0 0
        %8482 = vmatpush1.bf16.msra.mxu0 %v7709
        %8483 = vmatprep.subr.bf16.mxu0 0
        %8484 = vmatpush1.bf16.msra.mxu0 %v7706
        %8485 = vmatprep.subr.bf16.mxu0 0
        %8486 = vmatpush1.bf16.msra.mxu0 %v7703
        %8487 = vmatprep.subr.bf16.mxu0 0
        %8488 = vmatpush1.bf16.msra.mxu0 %v7700
        %8489 = vmatprep.subr.bf16.mxu0 0
        %8490 = vmatpush1.bf16.msra.mxu0 %v7697
        %8491 = vmatprep.subr.bf16.mxu0 0
        %8492 = vmatpush1.bf16.msra.mxu0 %v7694
        %8493 = vmatprep.subr.bf16.mxu0 0
        %8494 = vmatpush1.bf16.msra.mxu0 %v7691
        %8495 = vmatprep.subr.bf16.mxu0 0
        %8496 = vmatpush2.bf16.msra.mxu0 %v7736
        %8497 = vmatprep.subr.bf16.mxu0 0
        %8498 = vmatpush2.bf16.msra.mxu0 %v7733
        %8499 = vmatprep.subr.bf16.mxu0 0
        %8500 = vmatpush2.bf16.msra.mxu0 %v7730
        %8501 = vmatprep.subr.bf16.mxu0 0
        %8502 = vmatpush2.bf16.msra.mxu0 %v7727
        %8503 = vmatprep.subr.bf16.mxu0 0
        %8504 = vmatpush2.bf16.msra.mxu0 %v7724
        %8505 = vmatprep.subr.bf16.mxu0 0
        %8506 = vmatpush2.bf16.msra.mxu0 %v7721
        %8507 = vmatprep.subr.bf16.mxu0 0
        %8508 = vmatpush2.bf16.msra.mxu0 %v7718
        %8509 = vmatprep.subr.bf16.mxu0 0
        %8510 = vmatpush2.bf16.msra.mxu0 %v7715
        %8511 = vmatprep.mubr.bf16.mxu0 %v6133
        %8512 = vmatmul.mubr.bf16.gmra.mxu0 %v6132
        %v8513 = vpop.f32.mrf.mxu0
        %v8514 = vadd.f32 %v8474, %v8513
        %v8515 = vpop.f32.mrf.mxu0
        %v8516 = vpop.f32.mrf.mxu0
        %v8517 = vpop.f32.mrf.mxu0
        %8518 = vdwg.mxu0
        %8519 = vmatprep.subr.bf16.mxu0 0
        %8520 = vmatpush1.bf16.msra.mxu0 %v7760
        %8521 = vmatprep.subr.bf16.mxu0 0
        %8522 = vmatpush1.bf16.msra.mxu0 %v7757
        %8523 = vmatprep.subr.bf16.mxu0 0
        %8524 = vmatpush1.bf16.msra.mxu0 %v7754
        %8525 = vmatprep.subr.bf16.mxu0 0
        %8526 = vmatpush1.bf16.msra.mxu0 %v7751
        %8527 = vmatprep.subr.bf16.mxu0 0
        %8528 = vmatpush1.bf16.msra.mxu0 %v7748
        %8529 = vmatprep.subr.bf16.mxu0 0
        %8530 = vmatpush1.bf16.msra.mxu0 %v7745
        %8531 = vmatprep.subr.bf16.mxu0 0
        %8532 = vmatpush1.bf16.msra.mxu0 %v7742
        %8533 = vmatprep.subr.bf16.mxu0 0
        %8534 = vmatpush1.bf16.msra.mxu0 %v7739
        %8535 = vmatprep.subr.bf16.mxu0 0
        %8536 = vmatpush2.bf16.msra.mxu0 %v7784
        %8537 = vmatprep.subr.bf16.mxu0 0
        %8538 = vmatpush2.bf16.msra.mxu0 %v7781
        %8539 = vmatprep.subr.bf16.mxu0 0
        %8540 = vmatpush2.bf16.msra.mxu0 %v7778
        %8541 = vmatprep.subr.bf16.mxu0 0
        %8542 = vmatpush2.bf16.msra.mxu0 %v7775
        %8543 = vmatprep.subr.bf16.mxu0 0
        %8544 = vmatpush2.bf16.msra.mxu0 %v7772
        %8545 = vmatprep.subr.bf16.mxu0 0
        %8546 = vmatpush2.bf16.msra.mxu0 %v7769
        %8547 = vmatprep.subr.bf16.mxu0 0
        %8548 = vmatpush2.bf16.msra.mxu0 %v7766
        %8549 = vmatprep.subr.bf16.mxu0 0
        %8550 = vmatpush2.bf16.msra.mxu0 %v7763
        %8551 = vmatprep.mubr.bf16.mxu0 %v6135
        %8552 = vmatmul.mubr.bf16.gmra.mxu0 %v6134
        %v8553 = vpop.f32.mrf.mxu0
        %v8554 = vadd.f32 %v8514, %v8553
        %v8555 = vpop.f32.mrf.mxu0
        %v8556 = vpop.f32.mrf.mxu0
        %v8557 = vpop.f32.mrf.mxu0
        %8558 = vdwg.mxu0
        %v8559 = vadd.f32 %v3761, %v8313
        %v8560 = vadd.f32 %v3762, %v8315
        %v8561 = vadd.f32 %v3763, %v8554
        %8562 = vst [vmem:[%s575] sm:$0xff] %v8559
        %8563 = vst [vmem:[%s575 + $0x8] sm:$0xff] %v8560
        %8564 = vst [vmem:[%s575 + $0x10] sm:$0xff] %v8561
        %s8565 = sand.u32 %s300, 1
        %s8566 = scalar_lea.sflag [#allocation5], %s8565
        %s8567 = sand.u32 %s300, 1
        %s8568 = smul.addr %s8567, 24
        %s8569 = scalar_lea.vmem [#allocation23], %s8568
        // Predicated region
        $region117: #{tpu_custom_call.1} parent=67 // pred_check
          %p8570 = pneg %p310
        $region118: #{tpu_custom_call.1} parent=67 // pred_check_branch
          %8572 = sbr.rel (%p8570) target = $region120
        $region119: #{tpu_custom_call.1} parent=67 // pred_region
          %s8574 = ssub.s32 384, 384
          %8575 = vsyncadd %s8566, %s8574
          %s8576 = smul.addr %s35, 3
          %s8577 = smul.addr %s8576, 128
          %s8578 = scalar_lea.hbm %s12, %s8577
          %s8580 = sshll.u32 %s8569, 4
          %s8581 = int_to_ptr.vmem [resolvable:$true] %s8580
          %8583 = dma.vmem_to_hbm [thread:$0]  %s8581, 384, %s8578, %s8566
        $region120: #{tpu_custom_call.1} parent=67 // pred_fallthru
          _
      $region68: #{tpu_custom_call.1} parent=5 // pred_fallthru
        _
      %p8584 = scmp.le.s32.totalorder 2, %s30
      // Predicated region
      $region121: #{tpu_custom_call.1} parent=5 // pred_check
        %p8585 = pneg %p8584
      $region122: #{tpu_custom_call.1} parent=5 // pred_check_branch
        %8587 = sbr.rel (%p8585) target = $region124
      $region123: #{tpu_custom_call.1} parent=5 // pred_region
        %s8588 = ssub.s32 %s30, 2
        // Predicated region
        $region125: #{tpu_custom_call.1} parent=123 // pred_check
          %p8589 = pneg %p316
        $region126: #{tpu_custom_call.1} parent=123 // pred_check_branch
          %8591 = sbr.rel (%p8589) target = $region128
        $region127: #{tpu_custom_call.1} parent=123 // pred_region
          %s8592 = sand.u32 %s301, 1
          %s8593 = scalar_lea.sflag [#allocation5], %s8592
          %s8594 = sand.u32 %s301, 1
          %s8595 = smul.addr %s8594, 24
          %s8596 = scalar_lea.vmem [#allocation23], %s8595
          %8597 = dma.done %s8593, 384
        $region128: #{tpu_custom_call.1} parent=123 // pred_fallthru
          _
      $region124: #{tpu_custom_call.1} parent=5 // pred_fallthru
        _
    $region6: #{tpu_custom_call.1} parent=1 // loop_footer
      %s34 = sadd.s32 1, %s30
    $region7: #{tpu_custom_call.1} parent=1 // loop_footer_branch
      %29 = sbr.rel target = $region3
    $region8: #{tpu_custom_call.1} parent=1 // loop_exit
      _
    %8598 = vsyncpa [#allocation4], 1
    %s8599 = scalar_lea.sflag [#allocation4], 1
    %8600 = vsyncpa %s8599, 1
    %8601 = vsyncpa [#allocation7], 1
    %8602 = vsyncpa [#allocation10], 1
    %8603 = vsyncpa [#allocation13], 1
    %8604 = vsyncpa [#allocation16], 1
    %8605 = vsyncpa [#allocation19], 1
    %8606 = vsyncpa [#allocation22], 1
    %8607 = vsyncpa [#allocation5], 1
    %s8608 = scalar_lea.sflag [#allocation5], 1
    %8609 = vsyncpa %s8608, 1

</llo_original>
